<compile_context>
chip_gen: v7x
topology: tpu7x:2x2x1
jax: 0.10.0
libtpu: 0.0.40
codegen_flags: <defaults>
</compile_context>

<pallas_src>
import jax
import jax.numpy as jnp
from jax.experimental import pallas as pl
from jax.experimental.pallas import tpu as pltpu

NUM_PLANES = 17
INPUT_DIM = NUM_PLANES * 8 * 8          # 1088
MOVE_TYPES = {'move', 'top_nonblunder', 'top_blunder'}
UNBOUNDED_TYPES = {'cp_rel', 'active_elo', 'opponent_elo'}
MOVE_OUT_DIM = 2 ** 12                  # 4096

LANE = 128
SUBLANE = 8


def _round_up(x, m):
    return ((x + m - 1) // m) * m


def _device_kind():
    try:
        return jax.devices()[0].device_kind.lower()
    except Exception:
        return ""


def _vmem_capacity_bytes():
    """Physical VMEM per core, with a conservative fallback."""
    try:
        return int(pltpu.get_tpu_info().vmem_capacity_bytes)
    except Exception:
        kind = _device_kind()
        if ("v5" in kind) or ("v6" in kind):
            return 128 << 20
        return 64 << 20          # v7x / unknown generation: be conservative


# --------------------------------------------------------------------------
# Fused forward kernel builder
# --------------------------------------------------------------------------
def _build_fused_kernel(num_lower, has_extras, d_pad, has_scalar,
                        move_positions, exp_dtype):
    """Builds a kernel computing the whole forward for one batch tile.

    Ref order (inputs): x, [Wl_i, bl_i]*num_lower, [extras_slab], Wh_all, bh_all,
                        [Wo_scalar, bo_scalar, sigmoid_mask], [Wo_m, bo_m]*n_move
    Ref order (outputs): [scalar_slab], move head outputs (in move_positions order)
    """
    n_move = len(move_positions)

    def kernel(*refs):
        idx = 0
        x_ref = refs[idx]; idx += 1
        lower = []
        for _ in range(num_lower):
            lower.append((refs[idx], refs[idx + 1])); idx += 2
        extras_ref = None
        if has_extras:
            extras_ref = refs[idx]; idx += 1
        wh_ref, bh_ref = refs[idx], refs[idx + 1]; idx += 2
        wos_ref = bos_ref = mask_ref = None
        if has_scalar:
            wos_ref, bos_ref, mask_ref = refs[idx], refs[idx + 1], refs[idx + 2]
            idx += 3
        move_params = []
        for _ in range(n_move):
            move_params.append((refs[idx], refs[idx + 1])); idx += 2

        out_refs = refs[idx:]
        oi = 0
        scalar_out_ref = None
        if has_scalar:
            scalar_out_ref = out_refs[oi]; oi += 1
        move_out_refs = out_refs[oi:]

        # ---- lower MLP: tanh(Linear) chain, activation kept in f32 ----
        y = x_ref[...]                               # streamed in weight dtype (bf16)
        for (w_ref, b_ref) in lower:
            w = w_ref[...]
            z = jnp.dot(y.astype(w.dtype), w, preferred_element_type=jnp.float32)
            y = jnp.tanh(z + b_ref[...])

        # optional extra scalar inputs occupy the zero-padded tail columns of y
        if extras_ref is not None:
            y = y + extras_ref[...].astype(jnp.float32)

        # ---- all head hidden projections fused into one matmul ----
        wh = wh_ref[...]
        h = jnp.tanh(
            jnp.dot(y.astype(wh.dtype), wh, preferred_element_type=jnp.float32)
            + bh_ref[...])
        h_c = h.astype(wh.dtype)

        # ---- scalar heads (sigmoid / unbounded), lane-dense (tb, 128) f32 slab ----
        if has_scalar:
            z = jnp.dot(h_c, wos_ref[...], preferred_element_type=jnp.float32)
            z = z + bos_ref[...]
            sig = 1.0 / (1.0 + jnp.exp(-z))          # exact: slab is tiny
            m = mask_ref[...]                        # 1.0 -> sigmoid, 0.0 -> identity
            scalar_out_ref[...] = (m * sig + (1.0 - m) * z).astype(
                scalar_out_ref.dtype)

        # ---- move-type heads: Linear(d, 4096) + stable softmax, exp in place ----
        for k, (wo_ref, bo_ref) in enumerate(move_params):
            pos = move_positions[k]
            hm = h_c[:, pos * d_pad:(pos + 1) * d_pad]
            logits = jnp.dot(hm, wo_ref[...], preferred_element_type=jnp.float32)
            logits = logits + bo_ref[...]
            mx = jnp.max(logits, axis=-1, keepdims=True)
            out_ref = move_out_refs[k]
            # write unnormalized exp straight into the output block (bf16), then
            # normalize in place -- no separate (tb, 4096) f32 intermediate.
            out_ref[...] = jnp.exp((logits - mx).astype(exp_dtype)).astype(out_ref.dtype)
            denom = jnp.sum(out_ref[...].astype(jnp.float32), axis=-1, keepdims=True)
            inv = pl.reciprocal(denom, approx=True)
            out_ref[...] = (out_ref[...].astype(jnp.float32) * inv).astype(out_ref.dtype)

    return kernel


# --------------------------------------------------------------------------
# Parameter init (mimics torch.nn.Linear: uniform +-1/sqrt(in_dim))
# --------------------------------------------------------------------------
def _raw_linear(key, in_dim, out_dim):
    kw, kb = jax.random.split(key)
    bound = 1.0 / float(in_dim) ** 0.5
    w = jax.random.uniform(kw, (in_dim, out_dim), jnp.float32, -bound, bound)
    b = jax.random.uniform(kb, (1, out_dim), jnp.float32, -bound, bound)
    return w, b


# --------------------------------------------------------------------------
# Model
# --------------------------------------------------------------------------
class FullyConnectedNetNew:
    def __init__(self, layer_dims, outputs, extra_inputs=None, dropout=0.0,
                 key=None, param_dtype=jnp.bfloat16, batch_tile=None):
        if key is None:
            key = jax.random.PRNGKey(0)
        self.outputs = list(outputs)
        self.layer_dims = list(layer_dims)
        self.extra_inputs = list(extra_inputs) if extra_inputs is not None else None
        self.n_extras = len(self.extra_inputs) if self.extra_inputs else 0
        self.dropout = dropout              # eval mode: dropout is identity
        self.param_dtype = param_dtype

        # ---- hardware-aware knobs ----
        kind = _device_kind()
        self._vmem_cap = _vmem_capacity_bytes()
        # bf16 transcendentals only where the EUP supports them (v6e / v7x)
        self._exp_dtype = (jnp.bfloat16
                           if any(t in kind for t in ("v6", "v7", "7x"))
                           else jnp.float32)
        if batch_tile is None:
            batch_tile = 512 if self._vmem_cap >= (100 << 20) else 256
        self.batch_tile = batch_tile

        keys = jax.random.split(key, len(layer_dims) + 2 * len(self.outputs))
        ki = iter(range(len(keys)))

        # ---- padded dims (hidden widths -> multiples of 128 lanes; input stays 1088) ----
        self.head_in = self.layer_dims[-1] + self.n_extras  # head input width
        self.d_pad = _round_up(self.head_in, LANE)

        lower_in = [INPUT_DIM] + self.layer_dims[:-1]
        lower_in_pad = [INPUT_DIM] + [_round_up(d, LANE) for d in self.layer_dims[:-1]]
        lower_out_pad = [_round_up(d, LANE) for d in self.layer_dims]
        lower_out_pad[-1] = self.d_pad      # last layer widened to head input pad

        # ---- lower layers (zero-padded, weights in param_dtype, bias f32) ----
        self.lower_params = []
        for i, d in enumerate(self.layer_dims):
            w, b = _raw_linear(keys[next(ki)], lower_in[i], d)
            wp = jnp.zeros((lower_in_pad[i], lower_out_pad[i]), jnp.float32)
            wp = wp.at[:lower_in[i], :d].set(w).astype(param_dtype)
            bp = jnp.zeros((1, lower_out_pad[i]), jnp.float32).at[:, :d].set(b)
            self.lower_params.append((wp, bp))

        # ---- heads ----
        n_heads = len(self.outputs)
        d_pad = self.d_pad
        self.move_positions = [i for i, n in enumerate(self.outputs) if n in MOVE_TYPES]

        # TODO(synk): the many tiny (1,N) resident bias blocks could be packed into a
        # single (8,K) slab to cut DMA-descriptor count; skipped (negligible bytes).
        wh_all = jnp.zeros((d_pad, n_heads * d_pad), jnp.float32)
        bh_all = jnp.zeros((1, n_heads * d_pad), jnp.float32)
        wo_sc = jnp.zeros((n_heads * d_pad, LANE), jnp.float32)
        bo_sc = jnp.zeros((1, LANE), jnp.float32)
        mask_sc = jnp.zeros((1, LANE), jnp.float32)
        move_params = []
        self.scalar_col = {}
        sc_j = 0
        for p, name in enumerate(self.outputs):
            kh, ko = keys[next(ki)], keys[next(ki)]
            wh, bh = _raw_linear(kh, self.head_in, self.head_in)
            wh_all = wh_all.at[:self.head_in, p * d_pad:p * d_pad + self.head_in].set(wh)
            bh_all = bh_all.at[:, p * d_pad:p * d_pad + self.head_in].set(bh)
            if name in MOVE_TYPES:
                wo, bo = _raw_linear(ko, self.head_in, MOVE_OUT_DIM)
                wop = jnp.zeros((d_pad, MOVE_OUT_DIM), jnp.float32)
                wop = wop.at[:self.head_in, :].set(wo).astype(param_dtype)
                move_params.append((wop, bo))           # bias kept f32
            else:
                wo, bo = _raw_linear(ko, self.head_in, 1)
                wo_sc = wo_sc.at[p * d_pad:p * d_pad + self.head_in,
                                 sc_j:sc_j + 1].set(wo)
                bo_sc = bo_sc.at[:, sc_j].set(bo[0, 0])
                mask_sc = mask_sc.at[:, sc_j].set(
                    0.0 if name in UNBOUNDED_TYPES else 1.0)
                self.scalar_col[name] = sc_j
                sc_j += 1
        assert sc_j <= LANE, "more than 128 scalar heads not supported"
        self.n_scalar = sc_j
        self.has_scalar = sc_j > 0
        self.wh_all = wh_all.astype(param_dtype)
        self.bh_all = bh_all
        if self.has_scalar:
            self.wo_sc = wo_sc.astype(param_dtype)
            self.bo_sc = bo_sc
            self.mask_sc = mask_sc
        self.move_params = move_params

    # ------------------------------------------------------------------
    def __call__(self, input_x, extra_x=None):
        B = input_x.shape[0]
        # flatten NCHW -> (B, 1088) like torch .view(B, -1); stream in weight dtype
        # (no pad to 1152: first weight keeps exactly 1088 rows, block uses full dim)
        x = jnp.reshape(input_x, (B, -1)).astype(self.param_dtype)
        assert x.shape[1] == INPUT_DIM

        # ---- batch tiling: always >= 2 tiles so the "parallel" axis can split
        #      across v7x's 2 TensorCores (harmless on 1-TC chips) ----
        half = (B + 1) // 2
        tb = max(SUBLANE, min(self.batch_tile, _round_up(half, SUBLANE)))
        b_pad = _round_up(B, tb)
        if b_pad // tb < 2:
            b_pad = 2 * tb
        n_tiles = b_pad // tb
        if b_pad != B:
            x = jnp.pad(x, ((0, b_pad - B), (0, 0)))

        has_extras = self.extra_inputs is not None
        extras_slab = None
        if has_extras:
            cols = [jnp.reshape(extra_x[k], (-1, 1)).astype(jnp.float32)
                    for k in self.extra_inputs]
            ev = jnp.concatenate(cols, axis=1)           # (B, n_extras)
            extras_slab = jnp.zeros((b_pad, self.d_pad), jnp.float32)
            extras_slab = extras_slab.at[:B, self.layer_dims[-1]:
                                         self.layer_dims[-1] + self.n_extras].set(ev)

        n_move = len(self.move_positions)

        # ---- outputs: f32 (tb,128) scalar slab + bf16 (tb,4096) slab per move head ----
        out_shapes = []
        if self.has_scalar:
            out_shapes.append(jax.ShapeDtypeStruct((b_pad, LANE), jnp.float32))
        for _ in range(n_move):
            out_shapes.append(jax.ShapeDtypeStruct((b_pad, MOVE_OUT_DIM), jnp.bfloat16))

        kernel = _build_fused_kernel(
            num_lower=len(self.lower_params),
            has_extras=has_extras,
            d_pad=self.d_pad,
            has_scalar=self.has_scalar,
            move_positions=tuple(self.move_positions),
            exp_dtype=self._exp_dtype,
        )

        def launch(single_buffer):
            inputs = [x]
            in_specs = [pl.BlockSpec((tb, INPUT_DIM), lambda i: (i, 0))]
            resident_bytes = 0

            def add_resident(arr):
                nonlocal resident_bytes
                inputs.append(arr)
                if single_buffer:
                    # constant index_map: fetched once, single VMEM buffer
                    in_specs.append(pl.BlockSpec(arr.shape, lambda i: (0, 0),
                                                 pipeline_mode=pl.Buffered(1)))
                else:
                    in_specs.append(pl.BlockSpec(arr.shape, lambda i: (0, 0)))
                resident_bytes += arr.size * arr.dtype.itemsize

            for (w, b) in self.lower_params:
                add_resident(w)
                add_resident(b)
            if has_extras:
                inputs.append(extras_slab)
                in_specs.append(pl.BlockSpec((tb, self.d_pad), lambda i: (i, 0)))
            add_resident(self.wh_all)
            add_resident(self.bh_all)
            if self.has_scalar:
                add_resident(self.wo_sc)
                add_resident(self.bo_sc)
                add_resident(self.mask_sc)
            for (wo, bo) in self.move_params:
                add_resident(wo)
                add_resident(bo)

            out_specs = []
            if self.has_scalar:
                out_specs.append(pl.BlockSpec((tb, LANE), lambda i: (i, 0)))
            for _ in range(n_move):
                out_specs.append(pl.BlockSpec((tb, MOVE_OUT_DIM), lambda i: (i, 0)))

            # ---- VMEM budget: resident weights (single- or double-buffered) +
            #      double-buffered streamed tiles + f32 logits scratch + headroom ----
            item = jnp.dtype(self.param_dtype).itemsize
            stream = tb * INPUT_DIM * item
            if has_extras:
                stream += tb * self.d_pad * 4
            if self.has_scalar:
                stream += tb * LANE * 4
            stream += n_move * tb * MOVE_OUT_DIM * 2            # bf16 move outputs
            scratch = (2 * tb * MOVE_OUT_DIM * 4) if n_move else 0
            scratch += 6 * tb * self.d_pad * max(1, len(self.outputs)) * 4
            needed = ((1 if single_buffer else 2) * resident_bytes
                      + 2 * stream + scratch + (8 << 20))
            vmem_limit = int(max(min(needed, self._vmem_cap - (4 << 20)), 32 << 20))

            return pl.pallas_call(
                kernel,
                out_shape=tuple(out_shapes),
                grid=(n_tiles,),
                in_specs=in_specs,
                out_specs=tuple(out_specs),
                compiler_params=pltpu.CompilerParams(
                    dimension_semantics=("parallel",),
                    vmem_limit_bytes=vmem_limit,
                ),
            )(*inputs)

        try:
            outs = launch(True)
        except Exception:
            # pipeline_mode=pl.Buffered(1) unsupported on this build -> default buffering
            outs = launch(False)

        if not isinstance(outs, (tuple, list)):
            outs = (outs,)

        # ---- slice per-head results (plain-JAX glue) ----
        oi = 0
        scalar_slab = None
        if self.has_scalar:
            scalar_slab = outs[0][:B]
            oi = 1
        move_outs = list(outs[oi:])

        results = []
        mi = 0
        for name in self.outputs:
            if name in MOVE_TYPES:
                results.append(move_outs[mi][:B])       # bf16 softmax probabilities
                mi += 1
            else:
                c = self.scalar_col[name]
                results.append(scalar_slab[:, c:c + 1])  # f32
        return tuple(results)

    def dict_forward(self, input_x, extra_x=None):
        return dict(zip(self.outputs, self(input_x, extra_x=extra_x)))

    # TODO(synk): train_batch / test_batch / validate_batch are host-side PyTorch
    # training utilities (losses, optimizer steps) and are not part of the forward
    # kernel; dropout in training mode is likewise not implemented (eval = identity).


# --------------------------------------------------------------------------
if __name__ == "__main__":
    key = jax.random.PRNGKey(0)
    k_x, k_params = jax.random.split(key)

    batch = 2
    layer_dims = [32, 32]
    outputs = ['is_blunder_wr', 'move', 'cp_rel']  # sigmoid / softmax / no-op heads

    model = FullyConnectedNetNew(layer_dims, outputs, extra_inputs=None,
                                 dropout=0.0, key=k_params)

    x = jax.random.normal(k_x, (batch, NUM_PLANES, 8, 8), dtype=jnp.float32)

    y_vals = model(x)
    for y in y_vals:
        jax.block_until_ready(y)

    # shape sanity
    assert y_vals[0].shape == (batch, 1)             # sigmoid head
    assert y_vals[1].shape == (batch, MOVE_OUT_DIM)  # softmax head over 2**12 moves
    assert y_vals[2].shape == (batch, 1)             # unbounded (no-op) head

    # numeric sanity: softmax rows ~ sum to 1 (bf16 output + approx reciprocal
    # tolerance), sigmoid head strictly within (0, 1) (exact f32 sigmoid)
    row_sums = jnp.sum(y_vals[1].astype(jnp.float32), axis=-1)
    assert bool(jnp.all(jnp.abs(row_sums - 1.0) < 2e-2))
    assert bool(jnp.all((y_vals[0] > 0.0) & (y_vals[0] < 1.0)))

    print("KERNEL_OK")
</pallas_src>

<mosaic_0001>
module attributes {stable_mosaic.version = 11 : i64} {
  func.func @kernel(%arg0: i32, %arg1: memref<8x1088xbf16, #tpu.memory_space<vmem>>, %arg2: memref<1088x128xbf16, #tpu.memory_space<vmem>>, %arg3: memref<1x128xf32, #tpu.memory_space<vmem>>, %arg4: memref<128x128xbf16, #tpu.memory_space<vmem>>, %arg5: memref<1x128xf32, #tpu.memory_space<vmem>>, %arg6: memref<128x384xbf16, #tpu.memory_space<vmem>>, %arg7: memref<1x384xf32, #tpu.memory_space<vmem>>, %arg8: memref<384x128xbf16, #tpu.memory_space<vmem>>, %arg9: memref<1x128xf32, #tpu.memory_space<vmem>>, %arg10: memref<1x128xf32, #tpu.memory_space<vmem>>, %arg11: memref<128x4096xbf16, #tpu.memory_space<vmem>>, %arg12: memref<1x4096xf32, #tpu.memory_space<vmem>>, %arg13: memref<8x128xf32, #tpu.memory_space<vmem>>, %arg14: memref<8x4096xbf16, #tpu.memory_space<vmem>>) attributes {dimension_semantics = [#tpu.dimension_semantics<parallel>], iteration_bounds = array<i64: 2>, scalar_prefetch = 0 : i64, scratch_operands = 0 : i64, tpu.core_type = #tpu.core_type<tc>, window_params = [{transform_indices = @transform_0, window_bounds = array<i64: 8, 1088>}, {pipeline_mode = #tpu.pipeline_mode<synchronous>, transform_indices = @transform_1, window_bounds = array<i64: 1088, 128>}, {pipeline_mode = #tpu.pipeline_mode<synchronous>, transform_indices = @transform_2, window_bounds = array<i64: 1, 128>}, {pipeline_mode = #tpu.pipeline_mode<synchronous>, transform_indices = @transform_3, window_bounds = array<i64: 128, 128>}, {pipeline_mode = #tpu.pipeline_mode<synchronous>, transform_indices = @transform_4, window_bounds = array<i64: 1, 128>}, {pipeline_mode = #tpu.pipeline_mode<synchronous>, transform_indices = @transform_5, window_bounds = array<i64: 128, 384>}, {pipeline_mode = #tpu.pipeline_mode<synchronous>, transform_indices = @transform_6, window_bounds = array<i64: 1, 384>}, {pipeline_mode = #tpu.pipeline_mode<synchronous>, transform_indices = @transform_7, window_bounds = array<i64: 384, 128>}, {pipeline_mode = #tpu.pipeline_mode<synchronous>, transform_indices = @transform_8, window_bounds = array<i64: 1, 128>}, {pipeline_mode = #tpu.pipeline_mode<synchronous>, transform_indices = @transform_9, window_bounds = array<i64: 1, 128>}, {pipeline_mode = #tpu.pipeline_mode<synchronous>, transform_indices = @transform_10, window_bounds = array<i64: 128, 4096>}, {pipeline_mode = #tpu.pipeline_mode<synchronous>, transform_indices = @transform_11, window_bounds = array<i64: 1, 4096>}, {transform_indices = @transform_12, window_bounds = array<i64: 8, 128>}, {transform_indices = @transform_13, window_bounds = array<i64: 8, 4096>}]} {
    %c0 = arith.constant 0 : index
    %c0_0 = arith.constant 0 : index
    %0 = vector.load %arg1[%c0, %c0_0] : memref<8x1088xbf16, #tpu.memory_space<vmem>>, vector<8x1088xbf16>
    %c0_1 = arith.constant 0 : index
    %c0_2 = arith.constant 0 : index
    %1 = vector.load %arg2[%c0_1, %c0_2] : memref<1088x128xbf16, #tpu.memory_space<vmem>>, vector<1088x128xbf16>
    %cst = arith.constant dense<0.000000e+00> : vector<8x128xf32>
    %2 = tpu.matmul %0, %1, %cst {dimension_numbers = #tpu.dot_dimension_numbers<[1], [0], [0], [1], [0, 0, 1, 1], [], []>} : vector<8x1088xbf16>, vector<1088x128xbf16>, vector<8x128xf32> -> vector<8x128xf32>
    %c0_3 = arith.constant 0 : index
    %c0_4 = arith.constant 0 : index
    %3 = vector.load %arg3[%c0_3, %c0_4] : memref<1x128xf32, #tpu.memory_space<vmem>>, vector<1x128xf32>
    %4 = vector.broadcast %3 : vector<1x128xf32> to vector<8x128xf32>
    %5 = arith.addf %2, %4 : vector<8x128xf32>
    %6 = math.tanh %5 : vector<8x128xf32>
    %c0_5 = arith.constant 0 : index
    %c0_6 = arith.constant 0 : index
    %7 = vector.load %arg4[%c0_5, %c0_6] : memref<128x128xbf16, #tpu.memory_space<vmem>>, vector<128x128xbf16>
    %8 = arith.truncf %6 : vector<8x128xf32> to vector<8x128xbf16>
    %cst_7 = arith.constant dense<0.000000e+00> : vector<8x128xf32>
    %9 = tpu.matmul %8, %7, %cst_7 {dimension_numbers = #tpu.dot_dimension_numbers<[1], [0], [0], [1], [0, 0, 1, 1], [], []>} : vector<8x128xbf16>, vector<128x128xbf16>, vector<8x128xf32> -> vector<8x128xf32>
    %c0_8 = arith.constant 0 : index
    %c0_9 = arith.constant 0 : index
    %10 = vector.load %arg5[%c0_8, %c0_9] : memref<1x128xf32, #tpu.memory_space<vmem>>, vector<1x128xf32>
    %11 = vector.broadcast %10 : vector<1x128xf32> to vector<8x128xf32>
    %12 = arith.addf %9, %11 : vector<8x128xf32>
    %13 = math.tanh %12 : vector<8x128xf32>
    %c0_10 = arith.constant 0 : index
    %c0_11 = arith.constant 0 : index
    %14 = vector.load %arg6[%c0_10, %c0_11] : memref<128x384xbf16, #tpu.memory_space<vmem>>, vector<128x384xbf16>
    %15 = arith.truncf %13 : vector<8x128xf32> to vector<8x128xbf16>
    %cst_12 = arith.constant dense<0.000000e+00> : vector<8x384xf32>
    %16 = tpu.matmul %15, %14, %cst_12 {dimension_numbers = #tpu.dot_dimension_numbers<[1], [0], [0], [1], [0, 0, 1, 1], [], []>} : vector<8x128xbf16>, vector<128x384xbf16>, vector<8x384xf32> -> vector<8x384xf32>
    %c0_13 = arith.constant 0 : index
    %c0_14 = arith.constant 0 : index
    %17 = vector.load %arg7[%c0_13, %c0_14] : memref<1x384xf32, #tpu.memory_space<vmem>>, vector<1x384xf32>
    %18 = vector.broadcast %17 : vector<1x384xf32> to vector<8x384xf32>
    %19 = arith.addf %16, %18 : vector<8x384xf32>
    %20 = math.tanh %19 : vector<8x384xf32>
    %21 = arith.truncf %20 : vector<8x384xf32> to vector<8x384xbf16>
    %c0_15 = arith.constant 0 : index
    %c0_16 = arith.constant 0 : index
    %22 = vector.load %arg8[%c0_15, %c0_16] : memref<384x128xbf16, #tpu.memory_space<vmem>>, vector<384x128xbf16>
    %cst_17 = arith.constant dense<0.000000e+00> : vector<8x128xf32>
    %23 = tpu.matmul %21, %22, %cst_17 {dimension_numbers = #tpu.dot_dimension_numbers<[1], [0], [0], [1], [0, 0, 1, 1], [], []>} : vector<8x384xbf16>, vector<384x128xbf16>, vector<8x128xf32> -> vector<8x128xf32>
    %c0_18 = arith.constant 0 : index
    %c0_19 = arith.constant 0 : index
    %24 = vector.load %arg9[%c0_18, %c0_19] : memref<1x128xf32, #tpu.memory_space<vmem>>, vector<1x128xf32>
    %25 = vector.broadcast %24 : vector<1x128xf32> to vector<8x128xf32>
    %26 = arith.addf %23, %25 : vector<8x128xf32>
    %cst_20 = arith.constant 0.000000e+00 : f32
    %27 = vector.broadcast %cst_20 : f32 to vector<8x128xf32>
    %28 = arith.subf %27, %26 : vector<8x128xf32>
    %29 = math.exp %28 : vector<8x128xf32>
    %cst_21 = arith.constant 1.000000e+00 : f32
    %30 = vector.broadcast %cst_21 : f32 to vector<8x128xf32>
    %31 = arith.addf %30, %29 : vector<8x128xf32>
    %cst_22 = arith.constant 1.000000e+00 : f32
    %32 = vector.broadcast %cst_22 : f32 to vector<8x128xf32>
    %33 = arith.divf %32, %31 : vector<8x128xf32>
    %c0_23 = arith.constant 0 : index
    %c0_24 = arith.constant 0 : index
    %34 = vector.load %arg10[%c0_23, %c0_24] : memref<1x128xf32, #tpu.memory_space<vmem>>, vector<1x128xf32>
    %35 = vector.broadcast %34 : vector<1x128xf32> to vector<8x128xf32>
    %36 = arith.mulf %35, %33 : vector<8x128xf32>
    %cst_25 = arith.constant 1.000000e+00 : f32
    %37 = vector.broadcast %cst_25 : f32 to vector<1x128xf32>
    %38 = arith.subf %37, %34 : vector<1x128xf32>
    %39 = vector.broadcast %38 : vector<1x128xf32> to vector<8x128xf32>
    %40 = arith.mulf %39, %26 : vector<8x128xf32>
    %41 = arith.addf %36, %40 : vector<8x128xf32>
    %c0_26 = arith.constant 0 : index
    %c0_27 = arith.constant 0 : index
    %42 = vector.load %arg13[%c0_26, %c0_27] : memref<8x128xf32, #tpu.memory_space<vmem>>, vector<8x128xf32>
    tpu.vector_store %arg13[%c0_26, %c0_27], %41 {strides = array<i32>} : memref<8x128xf32, #tpu.memory_space<vmem>>, vector<8x128xf32>,
    %43 = vector.extract_strided_slice %21 {offsets = [0, 128], sizes = [8, 128], strides = [1, 1]} : vector<8x384xbf16> to vector<8x128xbf16>
    %c0_28 = arith.constant 0 : index
    %c0_29 = arith.constant 0 : index
    %44 = vector.load %arg11[%c0_28, %c0_29] : memref<128x4096xbf16, #tpu.memory_space<vmem>>, vector<128x4096xbf16>
    %cst_30 = arith.constant dense<0.000000e+00> : vector<8x4096xf32>
    %45 = tpu.matmul %43, %44, %cst_30 {dimension_numbers = #tpu.dot_dimension_numbers<[1], [0], [0], [1], [0, 0, 1, 1], [], []>} : vector<8x128xbf16>, vector<128x4096xbf16>, vector<8x4096xf32> -> vector<8x4096xf32>
    %c0_31 = arith.constant 0 : index
    %c0_32 = arith.constant 0 : index
    %46 = vector.load %arg12[%c0_31, %c0_32] : memref<1x4096xf32, #tpu.memory_space<vmem>>, vector<1x4096xf32>
    %47 = vector.broadcast %46 : vector<1x4096xf32> to vector<8x4096xf32>
    %48 = arith.addf %45, %47 : vector<8x4096xf32>
    %cst_33 = arith.constant dense<0xFF800000> : vector<8xf32>
    %49 = vector.multi_reduction <maximumf>, %48, %cst_33 [1] : vector<8x4096xf32> to vector<8xf32>
    %50 = vector.shape_cast %49 : vector<8xf32> to vector<8x1xf32>
    %51 = vector.broadcast %50 : vector<8x1xf32> to vector<8x4096xf32>
    %52 = arith.subf %48, %51 : vector<8x4096xf32>
    %53 = math.exp %52 : vector<8x4096xf32>
    %54 = arith.truncf %53 : vector<8x4096xf32> to vector<8x4096xbf16>
    %c0_34 = arith.constant 0 : index
    %c0_35 = arith.constant 0 : index
    %55 = vector.load %arg14[%c0_34, %c0_35] : memref<8x4096xbf16, #tpu.memory_space<vmem>>, vector<8x4096xbf16>
    tpu.vector_store %arg14[%c0_34, %c0_35], %54 {strides = array<i32>} : memref<8x4096xbf16, #tpu.memory_space<vmem>>, vector<8x4096xbf16>,
    %c0_36 = arith.constant 0 : index
    %c0_37 = arith.constant 0 : index
    %56 = vector.load %arg14[%c0_36, %c0_37] : memref<8x4096xbf16, #tpu.memory_space<vmem>>, vector<8x4096xbf16>
    %57 = arith.extf %56 : vector<8x4096xbf16> to vector<8x4096xf32>
    %cst_38 = arith.constant dense<0.000000e+00> : vector<8xf32>
    %58 = vector.multi_reduction <add>, %57, %cst_38 [1] : vector<8x4096xf32> to vector<8xf32>
    %59 = vector.shape_cast %58 : vector<8xf32> to vector<8x1xf32>
    %60 = tpu.reciprocal %59 {approx = true} : vector<8x1xf32> -> vector<8x1xf32>
    %c0_39 = arith.constant 0 : index
    %c0_40 = arith.constant 0 : index
    %61 = vector.load %arg14[%c0_39, %c0_40] : memref<8x4096xbf16, #tpu.memory_space<vmem>>, vector<8x4096xbf16>
    %62 = arith.extf %61 : vector<8x4096xbf16> to vector<8x4096xf32>
    %63 = vector.broadcast %60 : vector<8x1xf32> to vector<8x4096xf32>
    %64 = arith.mulf %62, %63 : vector<8x4096xf32>
    %65 = arith.truncf %64 : vector<8x4096xf32> to vector<8x4096xbf16>
    %c0_41 = arith.constant 0 : index
    %c0_42 = arith.constant 0 : index
    %66 = vector.load %arg14[%c0_41, %c0_42] : memref<8x4096xbf16, #tpu.memory_space<vmem>>, vector<8x4096xbf16>
    tpu.vector_store %arg14[%c0_41, %c0_42], %65 {strides = array<i32>} : memref<8x4096xbf16, #tpu.memory_space<vmem>>, vector<8x4096xbf16>,
    return
  }
  func.func @transform_0(%arg0: i32) -> (i32, i32) {
    %c0_i32 = arith.constant 0 : i32
    %c0_i32_0 = arith.constant 0 : i32
    return %arg0, %c0_i32 : i32, i32
  }
  func.func @transform_1(%arg0: i32) -> (i32, i32) {
    %c0_i32 = arith.constant 0 : i32
    %c0_i32_0 = arith.constant 0 : i32
    %c0_i32_1 = arith.constant 0 : i32
    return %c0_i32, %c0_i32_0 : i32, i32
  }
  func.func @transform_2(%arg0: i32) -> (i32, i32) {
    %c0_i32 = arith.constant 0 : i32
    %c0_i32_0 = arith.constant 0 : i32
    %c0_i32_1 = arith.constant 0 : i32
    return %c0_i32, %c0_i32_0 : i32, i32
  }
  func.func @transform_3(%arg0: i32) -> (i32, i32) {
    %c0_i32 = arith.constant 0 : i32
    %c0_i32_0 = arith.constant 0 : i32
    %c0_i32_1 = arith.constant 0 : i32
    return %c0_i32, %c0_i32_0 : i32, i32
  }
  func.func @transform_4(%arg0: i32) -> (i32, i32) {
    %c0_i32 = arith.constant 0 : i32
    %c0_i32_0 = arith.constant 0 : i32
    %c0_i32_1 = arith.constant 0 : i32
    return %c0_i32, %c0_i32_0 : i32, i32
  }
  func.func @transform_5(%arg0: i32) -> (i32, i32) {
    %c0_i32 = arith.constant 0 : i32
    %c0_i32_0 = arith.constant 0 : i32
    %c0_i32_1 = arith.constant 0 : i32
    return %c0_i32, %c0_i32_0 : i32, i32
  }
  func.func @transform_6(%arg0: i32) -> (i32, i32) {
    %c0_i32 = arith.constant 0 : i32
    %c0_i32_0 = arith.constant 0 : i32
    %c0_i32_1 = arith.constant 0 : i32
    return %c0_i32, %c0_i32_0 : i32, i32
  }
  func.func @transform_7(%arg0: i32) -> (i32, i32) {
    %c0_i32 = arith.constant 0 : i32
    %c0_i32_0 = arith.constant 0 : i32
    %c0_i32_1 = arith.constant 0 : i32
    return %c0_i32, %c0_i32_0 : i32, i32
  }
  func.func @transform_8(%arg0: i32) -> (i32, i32) {
    %c0_i32 = arith.constant 0 : i32
    %c0_i32_0 = arith.constant 0 : i32
    %c0_i32_1 = arith.constant 0 : i32
    return %c0_i32, %c0_i32_0 : i32, i32
  }
  func.func @transform_9(%arg0: i32) -> (i32, i32) {
    %c0_i32 = arith.constant 0 : i32
    %c0_i32_0 = arith.constant 0 : i32
    %c0_i32_1 = arith.constant 0 : i32
    return %c0_i32, %c0_i32_0 : i32, i32
  }
  func.func @transform_10(%arg0: i32) -> (i32, i32) {
    %c0_i32 = arith.constant 0 : i32
    %c0_i32_0 = arith.constant 0 : i32
    %c0_i32_1 = arith.constant 0 : i32
    return %c0_i32, %c0_i32_0 : i32, i32
  }
  func.func @transform_11(%arg0: i32) -> (i32, i32) {
    %c0_i32 = arith.constant 0 : i32
    %c0_i32_0 = arith.constant 0 : i32
    %c0_i32_1 = arith.constant 0 : i32
    return %c0_i32, %c0_i32_0 : i32, i32
  }
  func.func @transform_12(%arg0: i32) -> (i32, i32) {
    %c0_i32 = arith.constant 0 : i32
    %c0_i32_0 = arith.constant 0 : i32
    return %arg0, %c0_i32 : i32, i32
  }
  func.func @transform_13(%arg0: i32) -> (i32, i32) {
    %c0_i32 = arith.constant 0 : i32
    %c0_i32_0 = arith.constant 0 : i32
    return %arg0, %c0_i32 : i32, i32
  }
}

module attributes {stable_mosaic.version = 11 : i64} {
  func.func @kernel(%arg0: i32, %arg1: memref<8x1088xbf16, #tpu.memory_space<vmem>>, %arg2: memref<1088x128xbf16, #tpu.memory_space<vmem>>, %arg3: memref<1x128xf32, #tpu.memory_space<vmem>>, %arg4: memref<128x128xbf16, #tpu.memory_space<vmem>>, %arg5: memref<1x128xf32, #tpu.memory_space<vmem>>, %arg6: memref<128x384xbf16, #tpu.memory_space<vmem>>, %arg7: memref<1x384xf32, #tpu.memory_space<vmem>>, %arg8: memref<384x128xbf16, #tpu.memory_space<vmem>>, %arg9: memref<1x128xf32, #tpu.memory_space<vmem>>, %arg10: memref<1x128xf32, #tpu.memory_space<vmem>>, %arg11: memref<128x4096xbf16, #tpu.memory_space<vmem>>, %arg12: memref<1x4096xf32, #tpu.memory_space<vmem>>, %arg13: memref<8x128xf32, #tpu.memory_space<vmem>>, %arg14: memref<8x4096xbf16, #tpu.memory_space<vmem>>) attributes {dimension_semantics = [#tpu.dimension_semantics<parallel>], iteration_bounds = array<i64: 2>, scalar_prefetch = 0 : i64, scratch_operands = 0 : i64, tpu.core_type = #tpu.core_type<tc>, window_params = [{transform_indices = @transform_0, window_bounds = array<i64: 8, 1088>}, {pipeline_mode = #tpu.pipeline_mode<synchronous>, transform_indices = @transform_1, window_bounds = array<i64: 1088, 128>}, {pipeline_mode = #tpu.pipeline_mode<synchronous>, transform_indices = @transform_2, window_bounds = array<i64: 1, 128>}, {pipeline_mode = #tpu.pipeline_mode<synchronous>, transform_indices = @transform_3, window_bounds = array<i64: 128, 128>}, {pipeline_mode = #tpu.pipeline_mode<synchronous>, transform_indices = @transform_4, window_bounds = array<i64: 1, 128>}, {pipeline_mode = #tpu.pipeline_mode<synchronous>, transform_indices = @transform_5, window_bounds = array<i64: 128, 384>}, {pipeline_mode = #tpu.pipeline_mode<synchronous>, transform_indices = @transform_6, window_bounds = array<i64: 1, 384>}, {pipeline_mode = #tpu.pipeline_mode<synchronous>, transform_indices = @transform_7, window_bounds = array<i64: 384, 128>}, {pipeline_mode = #tpu.pipeline_mode<synchronous>, transform_indices = @transform_8, window_bounds = array<i64: 1, 128>}, {pipeline_mode = #tpu.pipeline_mode<synchronous>, transform_indices = @transform_9, window_bounds = array<i64: 1, 128>}, {pipeline_mode = #tpu.pipeline_mode<synchronous>, transform_indices = @transform_10, window_bounds = array<i64: 128, 4096>}, {pipeline_mode = #tpu.pipeline_mode<synchronous>, transform_indices = @transform_11, window_bounds = array<i64: 1, 4096>}, {transform_indices = @transform_12, window_bounds = array<i64: 8, 128>}, {transform_indices = @transform_13, window_bounds = array<i64: 8, 4096>}]} {
    %c0 = arith.constant 0 : index
    %c0_0 = arith.constant 0 : index
    %0 = vector.load %arg1[%c0, %c0_0] : memref<8x1088xbf16, #tpu.memory_space<vmem>>, vector<8x1088xbf16>
    %c0_1 = arith.constant 0 : index
    %c0_2 = arith.constant 0 : index
    %1 = vector.load %arg2[%c0_1, %c0_2] : memref<1088x128xbf16, #tpu.memory_space<vmem>>, vector<1088x128xbf16>
    %cst = arith.constant dense<0.000000e+00> : vector<8x128xf32>
    %2 = tpu.matmul %0, %1, %cst {dimension_numbers = #tpu.dot_dimension_numbers<[1], [0], [0], [1], [0, 0, 1, 1], [], []>} : vector<8x1088xbf16>, vector<1088x128xbf16>, vector<8x128xf32> -> vector<8x128xf32>
    %c0_3 = arith.constant 0 : index
    %c0_4 = arith.constant 0 : index
    %3 = vector.load %arg3[%c0_3, %c0_4] : memref<1x128xf32, #tpu.memory_space<vmem>>, vector<1x128xf32>
    %4 = vector.broadcast %3 : vector<1x128xf32> to vector<8x128xf32>
    %5 = arith.addf %2, %4 : vector<8x128xf32>
    %6 = math.tanh %5 : vector<8x128xf32>
    %c0_5 = arith.constant 0 : index
    %c0_6 = arith.constant 0 : index
    %7 = vector.load %arg4[%c0_5, %c0_6] : memref<128x128xbf16, #tpu.memory_space<vmem>>, vector<128x128xbf16>
    %8 = arith.truncf %6 : vector<8x128xf32> to vector<8x128xbf16>
    %cst_7 = arith.constant dense<0.000000e+00> : vector<8x128xf32>
    %9 = tpu.matmul %8, %7, %cst_7 {dimension_numbers = #tpu.dot_dimension_numbers<[1], [0], [0], [1], [0, 0, 1, 1], [], []>} : vector<8x128xbf16>, vector<128x128xbf16>, vector<8x128xf32> -> vector<8x128xf32>
    %c0_8 = arith.constant 0 : index
    %c0_9 = arith.constant 0 : index
    %10 = vector.load %arg5[%c0_8, %c0_9] : memref<1x128xf32, #tpu.memory_space<vmem>>, vector<1x128xf32>
    %11 = vector.broadcast %10 : vector<1x128xf32> to vector<8x128xf32>
    %12 = arith.addf %9, %11 : vector<8x128xf32>
    %13 = math.tanh %12 : vector<8x128xf32>
    %c0_10 = arith.constant 0 : index
    %c0_11 = arith.constant 0 : index
    %14 = vector.load %arg6[%c0_10, %c0_11] : memref<128x384xbf16, #tpu.memory_space<vmem>>, vector<128x384xbf16>
    %15 = arith.truncf %13 : vector<8x128xf32> to vector<8x128xbf16>
    %cst_12 = arith.constant dense<0.000000e+00> : vector<8x384xf32>
    %16 = tpu.matmul %15, %14, %cst_12 {dimension_numbers = #tpu.dot_dimension_numbers<[1], [0], [0], [1], [0, 0, 1, 1], [], []>} : vector<8x128xbf16>, vector<128x384xbf16>, vector<8x384xf32> -> vector<8x384xf32>
    %c0_13 = arith.constant 0 : index
    %c0_14 = arith.constant 0 : index
    %17 = vector.load %arg7[%c0_13, %c0_14] : memref<1x384xf32, #tpu.memory_space<vmem>>, vector<1x384xf32>
    %18 = vector.broadcast %17 : vector<1x384xf32> to vector<8x384xf32>
    %19 = arith.addf %16, %18 : vector<8x384xf32>
    %20 = math.tanh %19 : vector<8x384xf32>
    %21 = arith.truncf %20 : vector<8x384xf32> to vector<8x384xbf16>
    %c0_15 = arith.constant 0 : index
    %c0_16 = arith.constant 0 : index
    %22 = vector.load %arg8[%c0_15, %c0_16] : memref<384x128xbf16, #tpu.memory_space<vmem>>, vector<384x128xbf16>
    %cst_17 = arith.constant dense<0.000000e+00> : vector<8x128xf32>
    %23 = tpu.matmul %21, %22, %cst_17 {dimension_numbers = #tpu.dot_dimension_numbers<[1], [0], [0], [1], [0, 0, 1, 1], [], []>} : vector<8x384xbf16>, vector<384x128xbf16>, vector<8x128xf32> -> vector<8x128xf32>
    %c0_18 = arith.constant 0 : index
    %c0_19 = arith.constant 0 : index
    %24 = vector.load %arg9[%c0_18, %c0_19] : memref<1x128xf32, #tpu.memory_space<vmem>>, vector<1x128xf32>
    %25 = vector.broadcast %24 : vector<1x128xf32> to vector<8x128xf32>
    %26 = arith.addf %23, %25 : vector<8x128xf32>
    %cst_20 = arith.constant 0.000000e+00 : f32
    %27 = vector.broadcast %cst_20 : f32 to vector<8x128xf32>
    %28 = arith.subf %27, %26 : vector<8x128xf32>
    %29 = math.exp %28 : vector<8x128xf32>
    %cst_21 = arith.constant 1.000000e+00 : f32
    %30 = vector.broadcast %cst_21 : f32 to vector<8x128xf32>
    %31 = arith.addf %30, %29 : vector<8x128xf32>
    %cst_22 = arith.constant 1.000000e+00 : f32
    %32 = vector.broadcast %cst_22 : f32 to vector<8x128xf32>
    %33 = arith.divf %32, %31 : vector<8x128xf32>
    %c0_23 = arith.constant 0 : index
    %c0_24 = arith.constant 0 : index
    %34 = vector.load %arg10[%c0_23, %c0_24] : memref<1x128xf32, #tpu.memory_space<vmem>>, vector<1x128xf32>
    %35 = vector.broadcast %34 : vector<1x128xf32> to vector<8x128xf32>
    %36 = arith.mulf %35, %33 : vector<8x128xf32>
    %cst_25 = arith.constant 1.000000e+00 : f32
    %37 = vector.broadcast %cst_25 : f32 to vector<1x128xf32>
    %38 = arith.subf %37, %34 : vector<1x128xf32>
    %39 = vector.broadcast %38 : vector<1x128xf32> to vector<8x128xf32>
    %40 = arith.mulf %39, %26 : vector<8x128xf32>
    %41 = arith.addf %36, %40 : vector<8x128xf32>
    %c0_26 = arith.constant 0 : index
    %c0_27 = arith.constant 0 : index
    %42 = vector.load %arg13[%c0_26, %c0_27] : memref<8x128xf32, #tpu.memory_space<vmem>>, vector<8x128xf32>
    tpu.vector_store %arg13[%c0_26, %c0_27], %41 {strides = array<i32>} : memref<8x128xf32, #tpu.memory_space<vmem>>, vector<8x128xf32>,
    %43 = vector.extract_strided_slice %21 {offsets = [0, 128], sizes = [8, 128], strides = [1, 1]} : vector<8x384xbf16> to vector<8x128xbf16>
    %c0_28 = arith.constant 0 : index
    %c0_29 = arith.constant 0 : index
    %44 = vector.load %arg11[%c0_28, %c0_29] : memref<128x4096xbf16, #tpu.memory_space<vmem>>, vector<128x4096xbf16>
    %cst_30 = arith.constant dense<0.000000e+00> : vector<8x4096xf32>
    %45 = tpu.matmul %43, %44, %cst_30 {dimension_numbers = #tpu.dot_dimension_numbers<[1], [0], [0], [1], [0, 0, 1, 1], [], []>} : vector<8x128xbf16>, vector<128x4096xbf16>, vector<8x4096xf32> -> vector<8x4096xf32>
    %c0_31 = arith.constant 0 : index
    %c0_32 = arith.constant 0 : index
    %46 = vector.load %arg12[%c0_31, %c0_32] : memref<1x4096xf32, #tpu.memory_space<vmem>>, vector<1x4096xf32>
    %47 = vector.broadcast %46 : vector<1x4096xf32> to vector<8x4096xf32>
    %48 = arith.addf %45, %47 : vector<8x4096xf32>
    %cst_33 = arith.constant dense<0xFF800000> : vector<8xf32>
    %49 = vector.multi_reduction <maximumf>, %48, %cst_33 [1] : vector<8x4096xf32> to vector<8xf32>
    %50 = vector.shape_cast %49 : vector<8xf32> to vector<8x1xf32>
    %51 = vector.broadcast %50 : vector<8x1xf32> to vector<8x4096xf32>
    %52 = arith.subf %48, %51 : vector<8x4096xf32>
    %53 = math.exp %52 : vector<8x4096xf32>
    %54 = arith.truncf %53 : vector<8x4096xf32> to vector<8x4096xbf16>
    %c0_34 = arith.constant 0 : index
    %c0_35 = arith.constant 0 : index
    %55 = vector.load %arg14[%c0_34, %c0_35] : memref<8x4096xbf16, #tpu.memory_space<vmem>>, vector<8x4096xbf16>
    tpu.vector_store %arg14[%c0_34, %c0_35], %54 {strides = array<i32>} : memref<8x4096xbf16, #tpu.memory_space<vmem>>, vector<8x4096xbf16>,
    %c0_36 = arith.constant 0 : index
    %c0_37 = arith.constant 0 : index
    %56 = vector.load %arg14[%c0_36, %c0_37] : memref<8x4096xbf16, #tpu.memory_space<vmem>>, vector<8x4096xbf16>
    %57 = arith.extf %56 : vector<8x4096xbf16> to vector<8x4096xf32>
    %cst_38 = arith.constant dense<0.000000e+00> : vector<8xf32>
    %58 = vector.multi_reduction <add>, %57, %cst_38 [1] : vector<8x4096xf32> to vector<8xf32>
    %59 = vector.shape_cast %58 : vector<8xf32> to vector<8x1xf32>
    %60 = tpu.reciprocal %59 {approx = true} : vector<8x1xf32> -> vector<8x1xf32>
    %c0_39 = arith.constant 0 : index
    %c0_40 = arith.constant 0 : index
    %61 = vector.load %arg14[%c0_39, %c0_40] : memref<8x4096xbf16, #tpu.memory_space<vmem>>, vector<8x4096xbf16>
    %62 = arith.extf %61 : vector<8x4096xbf16> to vector<8x4096xf32>
    %63 = vector.broadcast %60 : vector<8x1xf32> to vector<8x4096xf32>
    %64 = arith.mulf %62, %63 : vector<8x4096xf32>
    %65 = arith.truncf %64 : vector<8x4096xf32> to vector<8x4096xbf16>
    %c0_41 = arith.constant 0 : index
    %c0_42 = arith.constant 0 : index
    %66 = vector.load %arg14[%c0_41, %c0_42] : memref<8x4096xbf16, #tpu.memory_space<vmem>>, vector<8x4096xbf16>
    tpu.vector_store %arg14[%c0_41, %c0_42], %65 {strides = array<i32>} : memref<8x4096xbf16, #tpu.memory_space<vmem>>, vector<8x4096xbf16>,
    return
  }
  func.func @transform_0(%arg0: i32) -> (i32, i32) {
    %c0_i32 = arith.constant 0 : i32
    %c0_i32_0 = arith.constant 0 : i32
    return %arg0, %c0_i32 : i32, i32
  }
  func.func @transform_1(%arg0: i32) -> (i32, i32) {
    %c0_i32 = arith.constant 0 : i32
    %c0_i32_0 = arith.constant 0 : i32
    %c0_i32_1 = arith.constant 0 : i32
    return %c0_i32, %c0_i32_0 : i32, i32
  }
  func.func @transform_2(%arg0: i32) -> (i32, i32) {
    %c0_i32 = arith.constant 0 : i32
    %c0_i32_0 = arith.constant 0 : i32
    %c0_i32_1 = arith.constant 0 : i32
    return %c0_i32, %c0_i32_0 : i32, i32
  }
  func.func @transform_3(%arg0: i32) -> (i32, i32) {
    %c0_i32 = arith.constant 0 : i32
    %c0_i32_0 = arith.constant 0 : i32
    %c0_i32_1 = arith.constant 0 : i32
    return %c0_i32, %c0_i32_0 : i32, i32
  }
  func.func @transform_4(%arg0: i32) -> (i32, i32) {
    %c0_i32 = arith.constant 0 : i32
    %c0_i32_0 = arith.constant 0 : i32
    %c0_i32_1 = arith.constant 0 : i32
    return %c0_i32, %c0_i32_0 : i32, i32
  }
  func.func @transform_5(%arg0: i32) -> (i32, i32) {
    %c0_i32 = arith.constant 0 : i32
    %c0_i32_0 = arith.constant 0 : i32
    %c0_i32_1 = arith.constant 0 : i32
    return %c0_i32, %c0_i32_0 : i32, i32
  }
  func.func @transform_6(%arg0: i32) -> (i32, i32) {
    %c0_i32 = arith.constant 0 : i32
    %c0_i32_0 = arith.constant 0 : i32
    %c0_i32_1 = arith.constant 0 : i32
    return %c0_i32, %c0_i32_0 : i32, i32
  }
  func.func @transform_7(%arg0: i32) -> (i32, i32) {
    %c0_i32 = arith.constant 0 : i32
    %c0_i32_0 = arith.constant 0 : i32
    %c0_i32_1 = arith.constant 0 : i32
    return %c0_i32, %c0_i32_0 : i32, i32
  }
  func.func @transform_8(%arg0: i32) -> (i32, i32) {
    %c0_i32 = arith.constant 0 : i32
    %c0_i32_0 = arith.constant 0 : i32
    %c0_i32_1 = arith.constant 0 : i32
    return %c0_i32, %c0_i32_0 : i32, i32
  }
  func.func @transform_9(%arg0: i32) -> (i32, i32) {
    %c0_i32 = arith.constant 0 : i32
    %c0_i32_0 = arith.constant 0 : i32
    %c0_i32_1 = arith.constant 0 : i32
    return %c0_i32, %c0_i32_0 : i32, i32
  }
  func.func @transform_10(%arg0: i32) -> (i32, i32) {
    %c0_i32 = arith.constant 0 : i32
    %c0_i32_0 = arith.constant 0 : i32
    %c0_i32_1 = arith.constant 0 : i32
    return %c0_i32, %c0_i32_0 : i32, i32
  }
  func.func @transform_11(%arg0: i32) -> (i32, i32) {
    %c0_i32 = arith.constant 0 : i32
    %c0_i32_0 = arith.constant 0 : i32
    %c0_i32_1 = arith.constant 0 : i32
    return %c0_i32, %c0_i32_0 : i32, i32
  }
  func.func @transform_12(%arg0: i32) -> (i32, i32) {
    %c0_i32 = arith.constant 0 : i32
    %c0_i32_0 = arith.constant 0 : i32
    return %arg0, %c0_i32 : i32, i32
  }
  func.func @transform_13(%arg0: i32) -> (i32, i32) {
    %c0_i32 = arith.constant 0 : i32
    %c0_i32_0 = arith.constant 0 : i32
    return %arg0, %c0_i32 : i32, i32
  }
}

</mosaic_0001>

<llo_original>
// kernel: tpu_custom_call.1
$region0: #{tpu_custom_call.1}
  #allocation0 [shape = 'u32[]', space=smem, size = 0x4, offset = 0x4, fixed_abs, tag = 'smem constant byte address 0x4 - core index']
  #allocation1 [shape = 'u32[144,128]{1,0:T(1,128)}', space=vmem, size = 0x12000, scoped, tag = 'internal scratch']
  %s0 = inlined_call_operand.hbm [shape: bf16[16,1088], index: 0, kind: input, shape index: {}]
  %s1 = inlined_call_operand.hbm [shape: bf16[1088,128], index: 1, kind: input, shape index: {}]
  %s2 = inlined_call_operand.vmem [shape: f32[1,128], index: 2, kind: input, shape index: {}]
  %s3 = inlined_call_operand.hbm [shape: bf16[128,128], index: 3, kind: input, shape index: {}]
  %s4 = inlined_call_operand.vmem [shape: f32[1,128], index: 4, kind: input, shape index: {}]
  %s5 = inlined_call_operand.hbm [shape: bf16[128,384], index: 5, kind: input, shape index: {}]
  %s6 = inlined_call_operand.vmem [shape: f32[1,384], index: 6, kind: input, shape index: {}]
  %s7 = inlined_call_operand.hbm [shape: bf16[384,128], index: 7, kind: input, shape index: {}]
  %s8 = inlined_call_operand.vmem [shape: f32[1,128], index: 8, kind: input, shape index: {}]
  %s9 = inlined_call_operand.vmem [shape: f32[1,128], index: 9, kind: input, shape index: {}]
  %s10 = inlined_call_operand.hbm [shape: bf16[128,4096], index: 10, kind: input, shape index: {}]
  %s11 = inlined_call_operand.vmem [shape: f32[1,4096], index: 11, kind: input, shape index: {}]
  %s12 = inlined_call_operand.hbm [shape: f32[16,128], index: 12, kind: output, shape index: {0}]
  %s13 = inlined_call_operand.hbm [shape: bf16[16,4096], index: 13, kind: output, shape index: {1}]
  %14 = xla_tuple %s12, %s13
  %s15 = sld [smem:[#allocation0]]
  $region113: #{tpu_custom_call.1} parent=0
    _
  %s17 = ssub.s32 1, %s15
  %s18 = scalar_select 0, %s17, %s15
  $region1: #{tpu_custom_call.1} parent=0
    #allocation2 [shape = 'u8[36864]{0}', space=vmem, size = 0x9000, scoped, tag = 'input window, operand 0']
    #allocation3 [shape = 's32[2]{0}', space=sflag, size = 0x8, scoped, tag = 'scoped memory for tpu_custom_call.1']
    #allocation4 [shape = 's32[2]{0}', space=sflag, size = 0x8, scoped, tag = 'scoped memory for tpu_custom_call.1']
    #allocation5 [shape = 'u8[278528]{0}', space=vmem, size = 0x44000, scoped, tag = 'input window, operand 1, single buffered']
    #allocation6 [shape = 's32[1]{0}', space=sflag, size = 0x4, scoped, tag = 'scoped memory for tpu_custom_call.1']
    #allocation7 [shape = 'u8[32768]{0}', space=vmem, size = 0x8000, scoped, tag = 'input window, operand 3, single buffered']
    #allocation8 [shape = 'u8[98304]{0}', space=vmem, size = 0x18000, scoped, tag = 'input window, operand 5, single buffered']
    #allocation9 [shape = 's32[1]{0}', space=sflag, size = 0x4, scoped, tag = 'scoped memory for tpu_custom_call.1']
    #allocation10 [shape = 'u8[98304]{0}', space=vmem, size = 0x18000, scoped, tag = 'input window, operand 7, single buffered']
    #allocation11 [shape = 'u8[1048576]{0}', space=vmem, size = 0x100000, scoped, tag = 'input window, operand 10, single buffered']
    #allocation12 [shape = 's32[1]{0}', space=sflag, size = 0x4, scoped, tag = 'scoped memory for tpu_custom_call.1']
    #allocation13 [shape = 'u8[8192]{0}', space=vmem, size = 0x2000, scoped, tag = 'output window, operand 0']
    #allocation14 [shape = 'u8[131072]{0}', space=vmem, size = 0x20000, scoped, tag = 'output window, operand 1']
    #allocation15 [shape = 's32[2]{0}', space=sflag, size = 0x8, scoped, tag = 'scoped memory for tpu_custom_call.1']
    %19 = vsyncpa [#allocation3], 0
    %s20 = scalar_lea.sflag [#allocation3], 1
    %21 = vsyncpa %s20, 0
    %22 = vsyncpa [#allocation6], 0
    %23 = vsyncpa [#allocation9], 0
    %24 = vsyncpa [#allocation12], 0
    %25 = vsyncpa [#allocation4], 0
    %s26 = scalar_lea.sflag [#allocation4], 1
    %27 = vsyncpa %s26, 0
    %28 = vsyncpa [#allocation15], 0
    %s29 = scalar_lea.sflag [#allocation15], 1
    %30 = vsyncpa %s29, 0
    loop: start=0, step=1, limit=4
    $region2: #{tpu_custom_call.1} parent=1 // loop_pre_header
      _
    $region3: #{tpu_custom_call.1} parent=1 // loop_header
      %s32 = sphi 0, %s36
      %p33 = scmp.ge.s32.totalorder %s32, 4
      %s42 = sphi 0, %s44
      %s45 = sphi 0, %s42
      %s46 = sphi 0, %s45
      %s62 = sphi 0, %s46
      %s66 = sphi 0, %s66
      %s68 = sphi 0, %s66
      %s69 = sphi 0, %s68
      %s83 = sphi 0, %s69
      %s87 = sphi 0, %s87
      %s89 = sphi 0, %s87
      %s90 = sphi 0, %s89
      %s104 = sphi 0, %s90
      %s108 = sphi 0, %s108
      %s110 = sphi 0, %s108
      %s111 = sphi 0, %s110
      %s125 = sphi 0, %s111
      %s129 = sphi 0, %s129
      %s131 = sphi 0, %s129
      %s132 = sphi 0, %s131
      %s146 = sphi 0, %s132
      %s150 = sphi 0, %s150
      %s152 = sphi 0, %s150
      %s153 = sphi 0, %s152
      %s167 = sphi 0, %s153
      %s171 = sphi 0, %s171
      %s173 = sphi 0, %s171
      %s174 = sphi 0, %s173
      %s188 = sphi 0, %s174
      %s192 = sphi 0, %s192
      %s194 = sphi 0, %s192
      %s195 = sphi 0, %s194
      %s209 = sphi 0, %s195
      %s213 = sphi 0, %s213
      %s215 = sphi 0, %s213
      %s216 = sphi 0, %s215
      %s230 = sphi 0, %s216
      %s234 = sphi 0, %s234
      %s236 = sphi 0, %s234
      %s237 = sphi 0, %s236
      %s251 = sphi 0, %s237
      %s255 = sphi 0, %s255
      %s257 = sphi 0, %s255
      %s258 = sphi 0, %s257
      %s272 = sphi 0, %s258
      %s276 = sphi 0, %s276
      %s278 = sphi 0, %s276
      %s279 = sphi 0, %s278
      %s293 = sphi 0, %s279
      %s299 = sphi 0, %s301
      %s302 = sphi 0, %s299
      %s303 = sphi 0, %s302
      %s319 = sphi 0, %s303
      %s325 = sphi 0, %s327
      %s328 = sphi 0, %s325
      %s329 = sphi 0, %s328
      %s345 = sphi 0, %s329
    $region4: #{tpu_custom_call.1} parent=1 // loop_header_branch
      %35 = sbr.rel (%p33) target = $region8
    $region5: #{tpu_custom_call.1} parent=1 // loop_body
      %s37 = ssub.s32 %s32, 1
      %s38 = ssub.s32 %s32, 2
      %s39 = sadd.s32 %s32, 1
      %s40 = ssub.s32 %s32, %s39
      %p41 = scmp.eq.s32.totalorder %s40, 0
      %s43 = sadd.s32 %s42, 1
      %s44 = scalar_select %p41, %s42, %s43
      %p47 = pneg %p41
      %p48 = scmp.eq.s32.totalorder %s32, 1
      %p49 = por %p47, %p48
      %p50 = scmp.ne.s32.totalorder %s42, %s45
      %p51 = scmp.eq.s32.totalorder %s32, 0
      %p52 = por %p50, %p51
      %p53 = scmp.ne.s32.totalorder %s42, %s45
      %p54 = scmp.eq.s32.totalorder %s37, 1
      %p55 = por %p53, %p54
      %p56 = scmp.ne.s32.totalorder %s45, %s46
      %p57 = scmp.eq.s32.totalorder %s37, 0
      %p58 = por %p56, %p57
      %p59 = scmp.ne.s32.totalorder %s45, %s46
      %p60 = scmp.eq.s32.totalorder %s38, 1
      %p61 = por %p59, %p60
      %p63 = scmp.ne.s32.totalorder %s46, %s62
      %p64 = scmp.eq.s32.totalorder %s38, 0
      %p65 = por %p63, %p64
      %s67 = sadd.s32 %s66, 1
      %p70 = scmp.eq.s32.totalorder %s32, 1
      %p71 = scmp.ne.s32.totalorder %s66, %s68
      %p72 = scmp.eq.s32.totalorder %s32, 0
      %p73 = por %p71, %p72
      %p74 = scmp.ne.s32.totalorder %s66, %s68
      %p75 = scmp.eq.s32.totalorder %s37, 1
      %p76 = por %p74, %p75
      %p77 = scmp.ne.s32.totalorder %s68, %s69
      %p78 = scmp.eq.s32.totalorder %s37, 0
      %p79 = por %p77, %p78
      %p80 = scmp.ne.s32.totalorder %s68, %s69
      %p81 = scmp.eq.s32.totalorder %s38, 1
      %p82 = por %p80, %p81
      %p84 = scmp.ne.s32.totalorder %s69, %s83
      %p85 = scmp.eq.s32.totalorder %s38, 0
      %p86 = por %p84, %p85
      %s88 = sadd.s32 %s87, 1
      %p91 = scmp.eq.s32.totalorder %s32, 1
      %p92 = scmp.ne.s32.totalorder %s87, %s89
      %p93 = scmp.eq.s32.totalorder %s32, 0
      %p94 = por %p92, %p93
      %p95 = scmp.ne.s32.totalorder %s87, %s89
      %p96 = scmp.eq.s32.totalorder %s37, 1
      %p97 = por %p95, %p96
      %p98 = scmp.ne.s32.totalorder %s89, %s90
      %p99 = scmp.eq.s32.totalorder %s37, 0
      %p100 = por %p98, %p99
      %p101 = scmp.ne.s32.totalorder %s89, %s90
      %p102 = scmp.eq.s32.totalorder %s38, 1
      %p103 = por %p101, %p102
      %p105 = scmp.ne.s32.totalorder %s90, %s104
      %p106 = scmp.eq.s32.totalorder %s38, 0
      %p107 = por %p105, %p106
      %s109 = sadd.s32 %s108, 1
      %p112 = scmp.eq.s32.totalorder %s32, 1
      %p113 = scmp.ne.s32.totalorder %s108, %s110
      %p114 = scmp.eq.s32.totalorder %s32, 0
      %p115 = por %p113, %p114
      %p116 = scmp.ne.s32.totalorder %s108, %s110
      %p117 = scmp.eq.s32.totalorder %s37, 1
      %p118 = por %p116, %p117
      %p119 = scmp.ne.s32.totalorder %s110, %s111
      %p120 = scmp.eq.s32.totalorder %s37, 0
      %p121 = por %p119, %p120
      %p122 = scmp.ne.s32.totalorder %s110, %s111
      %p123 = scmp.eq.s32.totalorder %s38, 1
      %p124 = por %p122, %p123
      %p126 = scmp.ne.s32.totalorder %s111, %s125
      %p127 = scmp.eq.s32.totalorder %s38, 0
      %p128 = por %p126, %p127
      %s130 = sadd.s32 %s129, 1
      %p133 = scmp.eq.s32.totalorder %s32, 1
      %p134 = scmp.ne.s32.totalorder %s129, %s131
      %p135 = scmp.eq.s32.totalorder %s32, 0
      %p136 = por %p134, %p135
      %p137 = scmp.ne.s32.totalorder %s129, %s131
      %p138 = scmp.eq.s32.totalorder %s37, 1
      %p139 = por %p137, %p138
      %p140 = scmp.ne.s32.totalorder %s131, %s132
      %p141 = scmp.eq.s32.totalorder %s37, 0
      %p142 = por %p140, %p141
      %p143 = scmp.ne.s32.totalorder %s131, %s132
      %p144 = scmp.eq.s32.totalorder %s38, 1
      %p145 = por %p143, %p144
      %p147 = scmp.ne.s32.totalorder %s132, %s146
      %p148 = scmp.eq.s32.totalorder %s38, 0
      %p149 = por %p147, %p148
      %s151 = sadd.s32 %s150, 1
      %p154 = scmp.eq.s32.totalorder %s32, 1
      %p155 = scmp.ne.s32.totalorder %s150, %s152
      %p156 = scmp.eq.s32.totalorder %s32, 0
      %p157 = por %p155, %p156
      %p158 = scmp.ne.s32.totalorder %s150, %s152
      %p159 = scmp.eq.s32.totalorder %s37, 1
      %p160 = por %p158, %p159
      %p161 = scmp.ne.s32.totalorder %s152, %s153
      %p162 = scmp.eq.s32.totalorder %s37, 0
      %p163 = por %p161, %p162
      %p164 = scmp.ne.s32.totalorder %s152, %s153
      %p165 = scmp.eq.s32.totalorder %s38, 1
      %p166 = por %p164, %p165
      %p168 = scmp.ne.s32.totalorder %s153, %s167
      %p169 = scmp.eq.s32.totalorder %s38, 0
      %p170 = por %p168, %p169
      %s172 = sadd.s32 %s171, 1
      %p175 = scmp.eq.s32.totalorder %s32, 1
      %p176 = scmp.ne.s32.totalorder %s171, %s173
      %p177 = scmp.eq.s32.totalorder %s32, 0
      %p178 = por %p176, %p177
      %p179 = scmp.ne.s32.totalorder %s171, %s173
      %p180 = scmp.eq.s32.totalorder %s37, 1
      %p181 = por %p179, %p180
      %p182 = scmp.ne.s32.totalorder %s173, %s174
      %p183 = scmp.eq.s32.totalorder %s37, 0
      %p184 = por %p182, %p183
      %p185 = scmp.ne.s32.totalorder %s173, %s174
      %p186 = scmp.eq.s32.totalorder %s38, 1
      %p187 = por %p185, %p186
      %p189 = scmp.ne.s32.totalorder %s174, %s188
      %p190 = scmp.eq.s32.totalorder %s38, 0
      %p191 = por %p189, %p190
      %s193 = sadd.s32 %s192, 1
      %p196 = scmp.eq.s32.totalorder %s32, 1
      %p197 = scmp.ne.s32.totalorder %s192, %s194
      %p198 = scmp.eq.s32.totalorder %s32, 0
      %p199 = por %p197, %p198
      %p200 = scmp.ne.s32.totalorder %s192, %s194
      %p201 = scmp.eq.s32.totalorder %s37, 1
      %p202 = por %p200, %p201
      %p203 = scmp.ne.s32.totalorder %s194, %s195
      %p204 = scmp.eq.s32.totalorder %s37, 0
      %p205 = por %p203, %p204
      %p206 = scmp.ne.s32.totalorder %s194, %s195
      %p207 = scmp.eq.s32.totalorder %s38, 1
      %p208 = por %p206, %p207
      %p210 = scmp.ne.s32.totalorder %s195, %s209
      %p211 = scmp.eq.s32.totalorder %s38, 0
      %p212 = por %p210, %p211
      %s214 = sadd.s32 %s213, 1
      %p217 = scmp.eq.s32.totalorder %s32, 1
      %p218 = scmp.ne.s32.totalorder %s213, %s215
      %p219 = scmp.eq.s32.totalorder %s32, 0
      %p220 = por %p218, %p219
      %p221 = scmp.ne.s32.totalorder %s213, %s215
      %p222 = scmp.eq.s32.totalorder %s37, 1
      %p223 = por %p221, %p222
      %p224 = scmp.ne.s32.totalorder %s215, %s216
      %p225 = scmp.eq.s32.totalorder %s37, 0
      %p226 = por %p224, %p225
      %p227 = scmp.ne.s32.totalorder %s215, %s216
      %p228 = scmp.eq.s32.totalorder %s38, 1
      %p229 = por %p227, %p228
      %p231 = scmp.ne.s32.totalorder %s216, %s230
      %p232 = scmp.eq.s32.totalorder %s38, 0
      %p233 = por %p231, %p232
      %s235 = sadd.s32 %s234, 1
      %p238 = scmp.eq.s32.totalorder %s32, 1
      %p239 = scmp.ne.s32.totalorder %s234, %s236
      %p240 = scmp.eq.s32.totalorder %s32, 0
      %p241 = por %p239, %p240
      %p242 = scmp.ne.s32.totalorder %s234, %s236
      %p243 = scmp.eq.s32.totalorder %s37, 1
      %p244 = por %p242, %p243
      %p245 = scmp.ne.s32.totalorder %s236, %s237
      %p246 = scmp.eq.s32.totalorder %s37, 0
      %p247 = por %p245, %p246
      %p248 = scmp.ne.s32.totalorder %s236, %s237
      %p249 = scmp.eq.s32.totalorder %s38, 1
      %p250 = por %p248, %p249
      %p252 = scmp.ne.s32.totalorder %s237, %s251
      %p253 = scmp.eq.s32.totalorder %s38, 0
      %p254 = por %p252, %p253
      %s256 = sadd.s32 %s255, 1
      %p259 = scmp.eq.s32.totalorder %s32, 1
      %p260 = scmp.ne.s32.totalorder %s255, %s257
      %p261 = scmp.eq.s32.totalorder %s32, 0
      %p262 = por %p260, %p261
      %p263 = scmp.ne.s32.totalorder %s255, %s257
      %p264 = scmp.eq.s32.totalorder %s37, 1
      %p265 = por %p263, %p264
      %p266 = scmp.ne.s32.totalorder %s257, %s258
      %p267 = scmp.eq.s32.totalorder %s37, 0
      %p268 = por %p266, %p267
      %p269 = scmp.ne.s32.totalorder %s257, %s258
      %p270 = scmp.eq.s32.totalorder %s38, 1
      %p271 = por %p269, %p270
      %p273 = scmp.ne.s32.totalorder %s258, %s272
      %p274 = scmp.eq.s32.totalorder %s38, 0
      %p275 = por %p273, %p274
      %s277 = sadd.s32 %s276, 1
      %p280 = scmp.eq.s32.totalorder %s32, 1
      %p281 = scmp.ne.s32.totalorder %s276, %s278
      %p282 = scmp.eq.s32.totalorder %s32, 0
      %p283 = por %p281, %p282
      %p284 = scmp.ne.s32.totalorder %s276, %s278
      %p285 = scmp.eq.s32.totalorder %s37, 1
      %p286 = por %p284, %p285
      %p287 = scmp.ne.s32.totalorder %s278, %s279
      %p288 = scmp.eq.s32.totalorder %s37, 0
      %p289 = por %p287, %p288
      %p290 = scmp.ne.s32.totalorder %s278, %s279
      %p291 = scmp.eq.s32.totalorder %s38, 1
      %p292 = por %p290, %p291
      %p294 = scmp.ne.s32.totalorder %s279, %s293
      %p295 = scmp.eq.s32.totalorder %s38, 0
      %p296 = por %p294, %p295
      %s297 = ssub.s32 %s32, %s39
      %p298 = scmp.eq.s32.totalorder %s297, 0
      %s300 = sadd.s32 %s299, 1
      %s301 = scalar_select %p298, %s299, %s300
      %p304 = pneg %p298
      %p305 = scmp.eq.s32.totalorder %s32, 1
      %p306 = por %p304, %p305
      %p307 = scmp.ne.s32.totalorder %s299, %s302
      %p308 = scmp.eq.s32.totalorder %s32, 0
      %p309 = por %p307, %p308
      %p310 = scmp.ne.s32.totalorder %s299, %s302
      %p311 = scmp.eq.s32.totalorder %s37, 1
      %p312 = por %p310, %p311
      %p313 = scmp.ne.s32.totalorder %s302, %s303
      %p314 = scmp.eq.s32.totalorder %s37, 0
      %p315 = por %p313, %p314
      %p316 = scmp.ne.s32.totalorder %s302, %s303
      %p317 = scmp.eq.s32.totalorder %s38, 1
      %p318 = por %p316, %p317
      %p320 = scmp.ne.s32.totalorder %s303, %s319
      %p321 = scmp.eq.s32.totalorder %s38, 0
      %p322 = por %p320, %p321
      %s323 = ssub.s32 %s32, %s39
      %p324 = scmp.eq.s32.totalorder %s323, 0
      %s326 = sadd.s32 %s325, 1
      %s327 = scalar_select %p324, %s325, %s326
      %p330 = pneg %p324
      %p331 = scmp.eq.s32.totalorder %s32, 1
      %p332 = por %p330, %p331
      %p333 = scmp.ne.s32.totalorder %s325, %s328
      %p334 = scmp.eq.s32.totalorder %s32, 0
      %p335 = por %p333, %p334
      %p336 = scmp.ne.s32.totalorder %s325, %s328
      %p337 = scmp.eq.s32.totalorder %s37, 1
      %p338 = por %p336, %p337
      %p339 = scmp.ne.s32.totalorder %s328, %s329
      %p340 = scmp.eq.s32.totalorder %s37, 0
      %p341 = por %p339, %p340
      %p342 = scmp.ne.s32.totalorder %s328, %s329
      %p343 = scmp.eq.s32.totalorder %s38, 1
      %p344 = por %p342, %p343
      %p346 = scmp.ne.s32.totalorder %s329, %s345
      %p347 = scmp.eq.s32.totalorder %s38, 0
      %p348 = por %p346, %p347
      %p349 = scmp.le.s32.totalorder 1, %s32
      %p350 = scmp.lt.s32.totalorder %s32, 3
      %p351 = pnand %p349, %p350
      %p352 = pneg %p351
      // Predicated region
      $region9: #{tpu_custom_call.1} parent=5 // pred_check
        _
      $region10: #{tpu_custom_call.1} parent=5 // pred_check_branch
        %354 = sbr.rel (%p351) target = $region12
      $region11: #{tpu_custom_call.1} parent=5 // pred_region
        %s355 = ssub.s32 %s32, 1
        // Predicated region
        $region13: #{tpu_custom_call.1} parent=11 // pred_check
          %p356 = pneg %p79
        $region14: #{tpu_custom_call.1} parent=11 // pred_check_branch
          %358 = sbr.rel (%p356) target = $region16
        $region15: #{tpu_custom_call.1} parent=11 // pred_region
          %s360 = ssub.s32 8704, 8704
          %361 = vsyncadd [#allocation6], %s360
          %s362 = sshll.u32 [#allocation5], 4
          %s363 = int_to_ptr.vmem [resolvable:$true] %s362
          %368 = dma.hbm_to_vmem [thread:$0]  %s1, 8704, %s363, [#allocation6], 64, 64, 4
        $region16: #{tpu_custom_call.1} parent=11 // pred_fallthru
          _
        // Predicated region
        $region17: #{tpu_custom_call.1} parent=11 // pred_check
          %p369 = pneg %p100
        $region18: #{tpu_custom_call.1} parent=11 // pred_check_branch
          %371 = sbr.rel (%p369) target = $region20
        $region19: #{tpu_custom_call.1} parent=11 // pred_region
          _
        $region20: #{tpu_custom_call.1} parent=11 // pred_fallthru
          _
        // Predicated region
        $region21: #{tpu_custom_call.1} parent=11 // pred_check
          %p372 = pneg %p121
        $region22: #{tpu_custom_call.1} parent=11 // pred_check_branch
          %374 = sbr.rel (%p372) target = $region24
        $region23: #{tpu_custom_call.1} parent=11 // pred_region
          %s376 = ssub.s32 1024, 1024
          %377 = vsyncadd [#allocation6], %s376
          %s378 = sshll.u32 [#allocation7], 4
          %s379 = int_to_ptr.vmem [resolvable:$true] %s378
          %384 = dma.hbm_to_vmem [thread:$0]  %s3, 1024, %s379, [#allocation6], 64, 64, 4
        $region24: #{tpu_custom_call.1} parent=11 // pred_fallthru
          _
        // Predicated region
        $region25: #{tpu_custom_call.1} parent=11 // pred_check
          %p385 = pneg %p142
        $region26: #{tpu_custom_call.1} parent=11 // pred_check_branch
          %387 = sbr.rel (%p385) target = $region28
        $region27: #{tpu_custom_call.1} parent=11 // pred_region
          _
        $region28: #{tpu_custom_call.1} parent=11 // pred_fallthru
          _
        // Predicated region
        $region29: #{tpu_custom_call.1} parent=11 // pred_check
          %p388 = pneg %p163
        $region30: #{tpu_custom_call.1} parent=11 // pred_check_branch
          %390 = sbr.rel (%p388) target = $region32
        $region31: #{tpu_custom_call.1} parent=11 // pred_region
          %s392 = ssub.s32 3072, 3072
          %393 = vsyncadd [#allocation9], %s392
          %s394 = sshll.u32 [#allocation8], 4
          %s395 = int_to_ptr.vmem [resolvable:$true] %s394
          %400 = dma.hbm_to_vmem [thread:$0]  %s5, 3072, %s395, [#allocation9], 192, 192, 12
        $region32: #{tpu_custom_call.1} parent=11 // pred_fallthru
          _
        // Predicated region
        $region33: #{tpu_custom_call.1} parent=11 // pred_check
          %p401 = pneg %p184
        $region34: #{tpu_custom_call.1} parent=11 // pred_check_branch
          %403 = sbr.rel (%p401) target = $region36
        $region35: #{tpu_custom_call.1} parent=11 // pred_region
          _
        $region36: #{tpu_custom_call.1} parent=11 // pred_fallthru
          _
        // Predicated region
        $region37: #{tpu_custom_call.1} parent=11 // pred_check
          %p404 = pneg %p205
        $region38: #{tpu_custom_call.1} parent=11 // pred_check_branch
          %406 = sbr.rel (%p404) target = $region40
        $region39: #{tpu_custom_call.1} parent=11 // pred_region
          %s408 = ssub.s32 3072, 3072
          %409 = vsyncadd [#allocation9], %s408
          %s410 = sshll.u32 [#allocation10], 4
          %s411 = int_to_ptr.vmem [resolvable:$true] %s410
          %416 = dma.hbm_to_vmem [thread:$0]  %s7, 3072, %s411, [#allocation9], 64, 64, 4
        $region40: #{tpu_custom_call.1} parent=11 // pred_fallthru
          _
        // Predicated region
        $region41: #{tpu_custom_call.1} parent=11 // pred_check
          %p417 = pneg %p226
        $region42: #{tpu_custom_call.1} parent=11 // pred_check_branch
          %419 = sbr.rel (%p417) target = $region44
        $region43: #{tpu_custom_call.1} parent=11 // pred_region
          _
        $region44: #{tpu_custom_call.1} parent=11 // pred_fallthru
          _
        // Predicated region
        $region45: #{tpu_custom_call.1} parent=11 // pred_check
          %p420 = pneg %p247
        $region46: #{tpu_custom_call.1} parent=11 // pred_check_branch
          %422 = sbr.rel (%p420) target = $region48
        $region47: #{tpu_custom_call.1} parent=11 // pred_region
          _
        $region48: #{tpu_custom_call.1} parent=11 // pred_fallthru
          _
        // Predicated region
        $region49: #{tpu_custom_call.1} parent=11 // pred_check
          %p423 = pneg %p268
        $region50: #{tpu_custom_call.1} parent=11 // pred_check_branch
          %425 = sbr.rel (%p423) target = $region52
        $region51: #{tpu_custom_call.1} parent=11 // pred_region
          %s427 = ssub.s32 32768, 32768
          %428 = vsyncadd [#allocation12], %s427
          %s429 = sshll.u32 [#allocation11], 4
          %s430 = int_to_ptr.vmem [resolvable:$true] %s429
          %435 = dma.hbm_to_vmem [thread:$0]  %s10, 32768, %s430, [#allocation12], 2048, 2048, 128
        $region52: #{tpu_custom_call.1} parent=11 // pred_fallthru
          _
        // Predicated region
        $region53: #{tpu_custom_call.1} parent=11 // pred_check
          %p436 = pneg %p289
        $region54: #{tpu_custom_call.1} parent=11 // pred_check_branch
          %438 = sbr.rel (%p436) target = $region56
        $region55: #{tpu_custom_call.1} parent=11 // pred_region
          _
        $region56: #{tpu_custom_call.1} parent=11 // pred_fallthru
          _
      $region12: #{tpu_custom_call.1} parent=5 // pred_fallthru
        _
      %p439 = scmp.lt.s32.totalorder %s32, 2
      // Predicated region
      $region57: #{tpu_custom_call.1} parent=5 // pred_check
        %p440 = pneg %p439
      $region58: #{tpu_custom_call.1} parent=5 // pred_check_branch
        %442 = sbr.rel (%p440) target = $region60
      $region59: #{tpu_custom_call.1} parent=5 // pred_region
        // Predicated region
        $region61: #{tpu_custom_call.1} parent=59 // pred_check
          %p443 = pneg %p52
        $region62: #{tpu_custom_call.1} parent=59 // pred_check_branch
          %445 = sbr.rel (%p443) target = $region64
        $region63: #{tpu_custom_call.1} parent=59 // pred_region
          %s446 = sand.u32 %s42, 1
          %s447 = scalar_lea.sflag [#allocation3], %s446
          %s448 = sand.u32 %s42, 1
          %s449 = smul.addr %s448, 36
          %s450 = scalar_lea.vmem [#allocation2], %s449
          %s452 = ssub.s32 576, 576
          %453 = vsyncadd %s447, %s452
          %s454 = smul.addr %s32, 9
          %s455 = smul.addr %s454, 64
          %s456 = scalar_lea.hbm %s0, %s455
          %s458 = sshll.u32 %s450, 4
          %s459 = int_to_ptr.vmem [resolvable:$true] %s458
          %461 = dma.hbm_to_vmem [thread:$0]  %s456, 576, %s459, %s447
        $region64: #{tpu_custom_call.1} parent=59 // pred_fallthru
          _
      $region60: #{tpu_custom_call.1} parent=5 // pred_fallthru
        _
      %p462 = scmp.le.s32.totalorder 1, %s32
      %p463 = scmp.lt.s32.totalorder %s32, 3
      %p464 = pnand %p462, %p463
      %p465 = pneg %p464
      // Predicated region
      $region65: #{tpu_custom_call.1} parent=5 // pred_check
        _
      $region66: #{tpu_custom_call.1} parent=5 // pred_check_branch
        %467 = sbr.rel (%p464) target = $region68
      $region67: #{tpu_custom_call.1} parent=5 // pred_region
        %s468 = ssub.s32 %s32, 1
        %s469 = sand.u32 %s45, 1
        %s470 = scalar_lea.sflag [#allocation3], %s469
        %s471 = sand.u32 %s45, 1
        %s472 = smul.addr %s471, 36
        %s473 = scalar_lea.vmem [#allocation2], %s472
        // Predicated region
        $region69: #{tpu_custom_call.1} parent=67 // pred_check
          %p474 = pneg %p58
        $region70: #{tpu_custom_call.1} parent=67 // pred_check_branch
          %476 = sbr.rel (%p474) target = $region72
        $region71: #{tpu_custom_call.1} parent=67 // pred_region
          %477 = dma.done %s470, 576
        $region72: #{tpu_custom_call.1} parent=67 // pred_fallthru
          _
        // Predicated region
        $region73: #{tpu_custom_call.1} parent=67 // pred_check
          %p478 = pneg %p79
        $region74: #{tpu_custom_call.1} parent=67 // pred_check_branch
          %480 = sbr.rel (%p478) target = $region76
        $region75: #{tpu_custom_call.1} parent=67 // pred_region
          %481 = dma.done [#allocation6], 8704
        $region76: #{tpu_custom_call.1} parent=67 // pred_fallthru
          _
        // Predicated region
        $region77: #{tpu_custom_call.1} parent=67 // pred_check
          %p482 = pneg %p121
        $region78: #{tpu_custom_call.1} parent=67 // pred_check_branch
          %484 = sbr.rel (%p482) target = $region80
        $region79: #{tpu_custom_call.1} parent=67 // pred_region
          %485 = dma.done [#allocation6], 1024
        $region80: #{tpu_custom_call.1} parent=67 // pred_fallthru
          _
        // Predicated region
        $region81: #{tpu_custom_call.1} parent=67 // pred_check
          %p486 = pneg %p163
        $region82: #{tpu_custom_call.1} parent=67 // pred_check_branch
          %488 = sbr.rel (%p486) target = $region84
        $region83: #{tpu_custom_call.1} parent=67 // pred_region
          %489 = dma.done [#allocation9], 3072
        $region84: #{tpu_custom_call.1} parent=67 // pred_fallthru
          _
        // Predicated region
        $region85: #{tpu_custom_call.1} parent=67 // pred_check
          %p490 = pneg %p205
        $region86: #{tpu_custom_call.1} parent=67 // pred_check_branch
          %492 = sbr.rel (%p490) target = $region88
        $region87: #{tpu_custom_call.1} parent=67 // pred_region
          %493 = dma.done [#allocation9], 3072
        $region88: #{tpu_custom_call.1} parent=67 // pred_fallthru
          _
        // Predicated region
        $region89: #{tpu_custom_call.1} parent=67 // pred_check
          %p494 = pneg %p268
        $region90: #{tpu_custom_call.1} parent=67 // pred_check_branch
          %496 = sbr.rel (%p494) target = $region92
        $region91: #{tpu_custom_call.1} parent=67 // pred_region
          %497 = dma.done [#allocation12], 32768
        $region92: #{tpu_custom_call.1} parent=67 // pred_fallthru
          _
        %s498 = sand.u32 %s45, 1
        %s499 = scalar_lea.sflag [#allocation3], %s498
        %s500 = sand.u32 %s45, 1
        %s501 = smul.addr %s500, 36
        %s502 = scalar_lea.vmem [#allocation2], %s501
        %p503 = pneg %p58
        %p504 = pneg %p55
        %p505 = pneg %p79
        %p506 = pneg %p76
        %p507 = pneg %p100
        %p508 = pneg %p97
        %p509 = pneg %p121
        %p510 = pneg %p118
        %p511 = pneg %p142
        %p512 = pneg %p139
        %p513 = pneg %p163
        %p514 = pneg %p160
        %p515 = pneg %p184
        %p516 = pneg %p181
        %p517 = pneg %p205
        %p518 = pneg %p202
        %p519 = pneg %p226
        %p520 = pneg %p223
        %p521 = pneg %p247
        %p522 = pneg %p244
        %p523 = pneg %p268
        %p524 = pneg %p265
        %p525 = pneg %p289
        %p526 = pneg %p286
        %p527 = pneg %p315
        %p528 = pneg %p312
        %s529 = sand.u32 %s302, 1
        %s530 = scalar_lea.sflag [#allocation4], %s529
        %s531 = sand.u32 %s302, 1
        %s532 = smul.addr %s531, 8
        %s533 = scalar_lea.vmem [#allocation13], %s532
        %p534 = pneg %p341
        %p535 = pneg %p338
        %s536 = sand.u32 %s328, 1
        %s537 = scalar_lea.sflag [#allocation15], %s536
        %s538 = sand.u32 %s328, 1
        %s539 = smul.addr %s538, 128
        %s540 = scalar_lea.vmem [#allocation14], %s539
        %v542 = vld [vmem:[%s473] sm:$0xff]
        %v543 = vld [vmem:[%s473 + $0x8] sm:$0xff]
        %v544 = vld [vmem:[%s473 + $0x10] sm:$0xff]
        %v545 = vld [vmem:[%s473 + $0x18] sm:$0xff]
        %v546 = vld [vmem:[%s473 + $0x20] sm:$0xf]
        %v547 = vld [vmem:[#allocation5] sm:$0xf]
        %v548 = vld [vmem:[#allocation5 + $0x4] sm:$0xf]
        %v549 = vld [vmem:[#allocation5 + $0x8] sm:$0xf]
        %v550 = vld [vmem:[#allocation5 + $0xc] sm:$0xf]
        %v551 = vld [vmem:[#allocation5 + $0x10] sm:$0xf]
        %v552 = vld [vmem:[#allocation5 + $0x14] sm:$0xf]
        %v553 = vld [vmem:[#allocation5 + $0x18] sm:$0xf]
        %v554 = vld [vmem:[#allocation5 + $0x1c] sm:$0xf]
        %v555 = vld [vmem:[#allocation5 + $0x20] sm:$0xf]
        %v556 = vld [vmem:[#allocation5 + $0x24] sm:$0xf]
        %v557 = vld [vmem:[#allocation5 + $0x28] sm:$0xf]
        %v558 = vld [vmem:[#allocation5 + $0x2c] sm:$0xf]
        %v559 = vld [vmem:[#allocation5 + $0x30] sm:$0xf]
        %v560 = vld [vmem:[#allocation5 + $0x34] sm:$0xf]
        %v561 = vld [vmem:[#allocation5 + $0x38] sm:$0xf]
        %v562 = vld [vmem:[#allocation5 + $0x3c] sm:$0xf]
        %v563 = vld [vmem:[#allocation5 + $0x40] sm:$0xf]
        %v564 = vld [vmem:[#allocation5 + $0x44] sm:$0xf]
        %v565 = vld [vmem:[#allocation5 + $0x48] sm:$0xf]
        %v566 = vld [vmem:[#allocation5 + $0x4c] sm:$0xf]
        %v567 = vld [vmem:[#allocation5 + $0x50] sm:$0xf]
        %v568 = vld [vmem:[#allocation5 + $0x54] sm:$0xf]
        %v569 = vld [vmem:[#allocation5 + $0x58] sm:$0xf]
        %v570 = vld [vmem:[#allocation5 + $0x5c] sm:$0xf]
        %v571 = vld [vmem:[#allocation5 + $0x60] sm:$0xf]
        %v572 = vld [vmem:[#allocation5 + $0x64] sm:$0xf]
        %v573 = vld [vmem:[#allocation5 + $0x68] sm:$0xf]
        %v574 = vld [vmem:[#allocation5 + $0x6c] sm:$0xf]
        %v575 = vld [vmem:[#allocation5 + $0x70] sm:$0xf]
        %v576 = vld [vmem:[#allocation5 + $0x74] sm:$0xf]
        %v577 = vld [vmem:[#allocation5 + $0x78] sm:$0xf]
        %v578 = vld [vmem:[#allocation5 + $0x7c] sm:$0xf]
        %v579 = vld [vmem:[#allocation5 + $0x80] sm:$0xf]
        %v580 = vld [vmem:[#allocation5 + $0x84] sm:$0xf]
        %v581 = vld [vmem:[#allocation5 + $0x88] sm:$0xf]
        %v582 = vld [vmem:[#allocation5 + $0x8c] sm:$0xf]
        %v583 = vld [vmem:[#allocation5 + $0x90] sm:$0xf]
        %v584 = vld [vmem:[#allocation5 + $0x94] sm:$0xf]
        %v585 = vld [vmem:[#allocation5 + $0x98] sm:$0xf]
        %v586 = vld [vmem:[#allocation5 + $0x9c] sm:$0xf]
        %v587 = vld [vmem:[#allocation5 + $0xa0] sm:$0xf]
        %v588 = vld [vmem:[#allocation5 + $0xa4] sm:$0xf]
        %v589 = vld [vmem:[#allocation5 + $0xa8] sm:$0xf]
        %v590 = vld [vmem:[#allocation5 + $0xac] sm:$0xf]
        %v591 = vld [vmem:[#allocation5 + $0xb0] sm:$0xf]
        %v592 = vld [vmem:[#allocation5 + $0xb4] sm:$0xf]
        %v593 = vld [vmem:[#allocation5 + $0xb8] sm:$0xf]
        %v594 = vld [vmem:[#allocation5 + $0xbc] sm:$0xf]
        %v595 = vld [vmem:[#allocation5 + $0xc0] sm:$0xf]
        %v596 = vld [vmem:[#allocation5 + $0xc4] sm:$0xf]
        %v597 = vld [vmem:[#allocation5 + $0xc8] sm:$0xf]
        %v598 = vld [vmem:[#allocation5 + $0xcc] sm:$0xf]
        %v599 = vld [vmem:[#allocation5 + $0xd0] sm:$0xf]
        %v600 = vld [vmem:[#allocation5 + $0xd4] sm:$0xf]
        %v601 = vld [vmem:[#allocation5 + $0xd8] sm:$0xf]
        %v602 = vld [vmem:[#allocation5 + $0xdc] sm:$0xf]
        %v603 = vld [vmem:[#allocation5 + $0xe0] sm:$0xf]
        %v604 = vld [vmem:[#allocation5 + $0xe4] sm:$0xf]
        %v605 = vld [vmem:[#allocation5 + $0xe8] sm:$0xf]
        %v606 = vld [vmem:[#allocation5 + $0xec] sm:$0xf]
        %v607 = vld [vmem:[#allocation5 + $0xf0] sm:$0xf]
        %v608 = vld [vmem:[#allocation5 + $0xf4] sm:$0xf]
        %v609 = vld [vmem:[#allocation5 + $0xf8] sm:$0xf]
        %v610 = vld [vmem:[#allocation5 + $0xfc] sm:$0xf]
        %v611 = vld [vmem:[#allocation5 + $0x100] sm:$0xf]
        %v612 = vld [vmem:[#allocation5 + $0x104] sm:$0xf]
        %v613 = vld [vmem:[#allocation5 + $0x108] sm:$0xf]
        %v614 = vld [vmem:[#allocation5 + $0x10c] sm:$0xf]
        %v615 = vld [vmem:[#allocation5 + $0x110] sm:$0xf]
        %v616 = vld [vmem:[#allocation5 + $0x114] sm:$0xf]
        %v617 = vld [vmem:[#allocation5 + $0x118] sm:$0xf]
        %v618 = vld [vmem:[#allocation5 + $0x11c] sm:$0xf]
        %v619 = vld [vmem:[#allocation5 + $0x120] sm:$0xf]
        %v620 = vld [vmem:[#allocation5 + $0x124] sm:$0xf]
        %v621 = vld [vmem:[#allocation5 + $0x128] sm:$0xf]
        %v622 = vld [vmem:[#allocation5 + $0x12c] sm:$0xf]
        %v623 = vld [vmem:[#allocation5 + $0x130] sm:$0xf]
        %v624 = vld [vmem:[#allocation5 + $0x134] sm:$0xf]
        %v625 = vld [vmem:[#allocation5 + $0x138] sm:$0xf]
        %v626 = vld [vmem:[#allocation5 + $0x13c] sm:$0xf]
        %v627 = vld [vmem:[#allocation5 + $0x140] sm:$0xf]
        %v628 = vld [vmem:[#allocation5 + $0x144] sm:$0xf]
        %v629 = vld [vmem:[#allocation5 + $0x148] sm:$0xf]
        %v630 = vld [vmem:[#allocation5 + $0x14c] sm:$0xf]
        %v631 = vld [vmem:[#allocation5 + $0x150] sm:$0xf]
        %v632 = vld [vmem:[#allocation5 + $0x154] sm:$0xf]
        %v633 = vld [vmem:[#allocation5 + $0x158] sm:$0xf]
        %v634 = vld [vmem:[#allocation5 + $0x15c] sm:$0xf]
        %v635 = vld [vmem:[#allocation5 + $0x160] sm:$0xf]
        %v636 = vld [vmem:[#allocation5 + $0x164] sm:$0xf]
        %v637 = vld [vmem:[#allocation5 + $0x168] sm:$0xf]
        %v638 = vld [vmem:[#allocation5 + $0x16c] sm:$0xf]
        %v639 = vld [vmem:[#allocation5 + $0x170] sm:$0xf]
        %v640 = vld [vmem:[#allocation5 + $0x174] sm:$0xf]
        %v641 = vld [vmem:[#allocation5 + $0x178] sm:$0xf]
        %v642 = vld [vmem:[#allocation5 + $0x17c] sm:$0xf]
        %v643 = vld [vmem:[#allocation5 + $0x180] sm:$0xf]
        %v644 = vld [vmem:[#allocation5 + $0x184] sm:$0xf]
        %v645 = vld [vmem:[#allocation5 + $0x188] sm:$0xf]
        %v646 = vld [vmem:[#allocation5 + $0x18c] sm:$0xf]
        %v647 = vld [vmem:[#allocation5 + $0x190] sm:$0xf]
        %v648 = vld [vmem:[#allocation5 + $0x194] sm:$0xf]
        %v649 = vld [vmem:[#allocation5 + $0x198] sm:$0xf]
        %v650 = vld [vmem:[#allocation5 + $0x19c] sm:$0xf]
        %v651 = vld [vmem:[#allocation5 + $0x1a0] sm:$0xf]
        %v652 = vld [vmem:[#allocation5 + $0x1a4] sm:$0xf]
        %v653 = vld [vmem:[#allocation5 + $0x1a8] sm:$0xf]
        %v654 = vld [vmem:[#allocation5 + $0x1ac] sm:$0xf]
        %v655 = vld [vmem:[#allocation5 + $0x1b0] sm:$0xf]
        %v656 = vld [vmem:[#allocation5 + $0x1b4] sm:$0xf]
        %v657 = vld [vmem:[#allocation5 + $0x1b8] sm:$0xf]
        %v658 = vld [vmem:[#allocation5 + $0x1bc] sm:$0xf]
        %v659 = vld [vmem:[#allocation5 + $0x1c0] sm:$0xf]
        %v660 = vld [vmem:[#allocation5 + $0x1c4] sm:$0xf]
        %v661 = vld [vmem:[#allocation5 + $0x1c8] sm:$0xf]
        %v662 = vld [vmem:[#allocation5 + $0x1cc] sm:$0xf]
        %v663 = vld [vmem:[#allocation5 + $0x1d0] sm:$0xf]
        %v664 = vld [vmem:[#allocation5 + $0x1d4] sm:$0xf]
        %v665 = vld [vmem:[#allocation5 + $0x1d8] sm:$0xf]
        %v666 = vld [vmem:[#allocation5 + $0x1dc] sm:$0xf]
        %v667 = vld [vmem:[#allocation5 + $0x1e0] sm:$0xf]
        %v668 = vld [vmem:[#allocation5 + $0x1e4] sm:$0xf]
        %v669 = vld [vmem:[#allocation5 + $0x1e8] sm:$0xf]
        %v670 = vld [vmem:[#allocation5 + $0x1ec] sm:$0xf]
        %v671 = vld [vmem:[#allocation5 + $0x1f0] sm:$0xf]
        %v672 = vld [vmem:[#allocation5 + $0x1f4] sm:$0xf]
        %v673 = vld [vmem:[#allocation5 + $0x1f8] sm:$0xf]
        %v674 = vld [vmem:[#allocation5 + $0x1fc] sm:$0xf]
        %v675 = vld [vmem:[#allocation5 + $0x200] sm:$0xf]
        %v676 = vld [vmem:[#allocation5 + $0x204] sm:$0xf]
        %v677 = vld [vmem:[#allocation5 + $0x208] sm:$0xf]
        %v678 = vld [vmem:[#allocation5 + $0x20c] sm:$0xf]
        %v679 = vld [vmem:[#allocation5 + $0x210] sm:$0xf]
        %v680 = vld [vmem:[#allocation5 + $0x214] sm:$0xf]
        %v681 = vld [vmem:[#allocation5 + $0x218] sm:$0xf]
        %v682 = vld [vmem:[#allocation5 + $0x21c] sm:$0xf]
        %v683 = vld [vmem:[%s2] sm:$0x1]
        %v685 = vlaneseq
        %v686 = vshrl.u32 %v685, 7
        %v687 = vsub.s32 0, %v686
        %v688 = vrot.slane %v683, %v687
        %v695 = vunpack.c.l.b16 %v542
        %v696 = vunpack.c.h.b16 %v542
        %v697 = vunpack.c.l.b16 %v543
        %v698 = vunpack.c.h.b16 %v543
        %v699 = vunpack.c.l.b16 %v544
        %v700 = vunpack.c.h.b16 %v544
        %v701 = vunpack.c.l.b16 %v545
        %v702 = vunpack.c.h.b16 %v545
        %v703 = vunpack.c.l.b16 %v546
        %v704 = vpack.c.b16 %v695, %v695
        %v705 = vpack.c.b16 %v696, %v696
        %v706 = vpack.c.b16 %v697, %v697
        %v707 = vpack.c.b16 %v698, %v698
        %v708 = vpack.c.b16 %v699, %v699
        %v709 = vpack.c.b16 %v700, %v700
        %v710 = vpack.c.b16 %v701, %v701
        %v711 = vpack.c.b16 %v702, %v702
        %v712 = vpack.c.b16 %v703, %v703
        %v857 = vunpack.c.l.b16 %v547
        %v858 = vunpack.c.l.b16 %v548
        %v859 = vunpack.c.l.b16 %v549
        %v860 = vunpack.c.l.b16 %v550
        %v861 = vunpack.c.l.b16 %v551
        %v862 = vunpack.c.l.b16 %v552
        %v863 = vunpack.c.l.b16 %v553
        %v864 = vunpack.c.l.b16 %v554
        %v865 = vunpack.c.l.b16 %v555
        %v866 = vunpack.c.l.b16 %v556
        %v867 = vunpack.c.l.b16 %v557
        %v868 = vunpack.c.l.b16 %v558
        %v869 = vunpack.c.l.b16 %v559
        %v870 = vunpack.c.l.b16 %v560
        %v871 = vunpack.c.l.b16 %v561
        %v872 = vunpack.c.l.b16 %v562
        %v873 = vunpack.c.l.b16 %v563
        %v874 = vunpack.c.l.b16 %v564
        %v875 = vunpack.c.l.b16 %v565
        %v876 = vunpack.c.l.b16 %v566
        %v877 = vunpack.c.l.b16 %v567
        %v878 = vunpack.c.l.b16 %v568
        %v879 = vunpack.c.l.b16 %v569
        %v880 = vunpack.c.l.b16 %v570
        %v881 = vunpack.c.l.b16 %v571
        %v882 = vunpack.c.l.b16 %v572
        %v883 = vunpack.c.l.b16 %v573
        %v884 = vunpack.c.l.b16 %v574
        %v885 = vunpack.c.l.b16 %v575
        %v886 = vunpack.c.l.b16 %v576
        %v887 = vunpack.c.l.b16 %v577
        %v888 = vunpack.c.l.b16 %v578
        %v889 = vunpack.c.l.b16 %v579
        %v890 = vunpack.c.l.b16 %v580
        %v891 = vunpack.c.l.b16 %v581
        %v892 = vunpack.c.l.b16 %v582
        %v893 = vunpack.c.l.b16 %v583
        %v894 = vunpack.c.l.b16 %v584
        %v895 = vunpack.c.l.b16 %v585
        %v896 = vunpack.c.l.b16 %v586
        %v897 = vunpack.c.l.b16 %v587
        %v898 = vunpack.c.l.b16 %v588
        %v899 = vunpack.c.l.b16 %v589
        %v900 = vunpack.c.l.b16 %v590
        %v901 = vunpack.c.l.b16 %v591
        %v902 = vunpack.c.l.b16 %v592
        %v903 = vunpack.c.l.b16 %v593
        %v904 = vunpack.c.l.b16 %v594
        %v905 = vunpack.c.l.b16 %v595
        %v906 = vunpack.c.l.b16 %v596
        %v907 = vunpack.c.l.b16 %v597
        %v908 = vunpack.c.l.b16 %v598
        %v909 = vunpack.c.l.b16 %v599
        %v910 = vunpack.c.l.b16 %v600
        %v911 = vunpack.c.l.b16 %v601
        %v912 = vunpack.c.l.b16 %v602
        %v913 = vunpack.c.l.b16 %v603
        %v914 = vunpack.c.l.b16 %v604
        %v915 = vunpack.c.l.b16 %v605
        %v916 = vunpack.c.l.b16 %v606
        %v917 = vunpack.c.l.b16 %v607
        %v918 = vunpack.c.l.b16 %v608
        %v919 = vunpack.c.l.b16 %v609
        %v920 = vunpack.c.l.b16 %v610
        %v921 = vunpack.c.l.b16 %v611
        %v922 = vunpack.c.l.b16 %v612
        %v923 = vunpack.c.l.b16 %v613
        %v924 = vunpack.c.l.b16 %v614
        %v925 = vunpack.c.l.b16 %v615
        %v926 = vunpack.c.l.b16 %v616
        %v927 = vunpack.c.l.b16 %v617
        %v928 = vunpack.c.l.b16 %v618
        %v929 = vunpack.c.l.b16 %v619
        %v930 = vunpack.c.l.b16 %v620
        %v931 = vunpack.c.l.b16 %v621
        %v932 = vunpack.c.l.b16 %v622
        %v933 = vunpack.c.l.b16 %v623
        %v934 = vunpack.c.l.b16 %v624
        %v935 = vunpack.c.l.b16 %v625
        %v936 = vunpack.c.l.b16 %v626
        %v937 = vunpack.c.l.b16 %v627
        %v938 = vunpack.c.l.b16 %v628
        %v939 = vunpack.c.l.b16 %v629
        %v940 = vunpack.c.l.b16 %v630
        %v941 = vunpack.c.l.b16 %v631
        %v942 = vunpack.c.l.b16 %v632
        %v943 = vunpack.c.l.b16 %v633
        %v944 = vunpack.c.l.b16 %v634
        %v945 = vunpack.c.l.b16 %v635
        %v946 = vunpack.c.l.b16 %v636
        %v947 = vunpack.c.l.b16 %v637
        %v948 = vunpack.c.l.b16 %v638
        %v949 = vunpack.c.l.b16 %v639
        %v950 = vunpack.c.l.b16 %v640
        %v951 = vunpack.c.l.b16 %v641
        %v952 = vunpack.c.l.b16 %v642
        %v953 = vunpack.c.l.b16 %v643
        %v954 = vunpack.c.l.b16 %v644
        %v955 = vunpack.c.l.b16 %v645
        %v956 = vunpack.c.l.b16 %v646
        %v957 = vunpack.c.l.b16 %v647
        %v958 = vunpack.c.l.b16 %v648
        %v959 = vunpack.c.l.b16 %v649
        %v960 = vunpack.c.l.b16 %v650
        %v961 = vunpack.c.l.b16 %v651
        %v962 = vunpack.c.l.b16 %v652
        %v963 = vunpack.c.l.b16 %v653
        %v964 = vunpack.c.l.b16 %v654
        %v965 = vunpack.c.l.b16 %v655
        %v966 = vunpack.c.l.b16 %v656
        %v967 = vunpack.c.l.b16 %v657
        %v968 = vunpack.c.l.b16 %v658
        %v969 = vunpack.c.l.b16 %v659
        %v970 = vunpack.c.l.b16 %v660
        %v971 = vunpack.c.l.b16 %v661
        %v972 = vunpack.c.l.b16 %v662
        %v973 = vunpack.c.l.b16 %v663
        %v974 = vunpack.c.l.b16 %v664
        %v975 = vunpack.c.l.b16 %v665
        %v976 = vunpack.c.l.b16 %v666
        %v977 = vunpack.c.l.b16 %v667
        %v978 = vunpack.c.l.b16 %v668
        %v979 = vunpack.c.l.b16 %v669
        %v980 = vunpack.c.l.b16 %v670
        %v981 = vunpack.c.l.b16 %v671
        %v982 = vunpack.c.l.b16 %v672
        %v983 = vunpack.c.l.b16 %v673
        %v984 = vunpack.c.l.b16 %v674
        %v985 = vunpack.c.l.b16 %v675
        %v986 = vunpack.c.l.b16 %v676
        %v987 = vunpack.c.l.b16 %v677
        %v988 = vunpack.c.l.b16 %v678
        %v989 = vunpack.c.l.b16 %v679
        %v990 = vunpack.c.l.b16 %v680
        %v991 = vunpack.c.l.b16 %v681
        %v992 = vunpack.c.l.b16 %v682
        %v993 = vpack.c.b16 %v858, %v857
        %v994 = vpack.c.b16 %v860, %v859
        %v995 = vpack.c.b16 %v862, %v861
        %v996 = vpack.c.b16 %v864, %v863
        %v997 = vpack.c.b16 %v866, %v865
        %v998 = vpack.c.b16 %v868, %v867
        %v999 = vpack.c.b16 %v870, %v869
        %v1000 = vpack.c.b16 %v872, %v871
        %v1001 = vpack.c.b16 %v874, %v873
        %v1002 = vpack.c.b16 %v876, %v875
        %v1003 = vpack.c.b16 %v878, %v877
        %v1004 = vpack.c.b16 %v880, %v879
        %v1005 = vpack.c.b16 %v882, %v881
        %v1006 = vpack.c.b16 %v884, %v883
        %v1007 = vpack.c.b16 %v886, %v885
        %v1008 = vpack.c.b16 %v888, %v887
        %v1009 = vpack.c.b16 %v890, %v889
        %v1010 = vpack.c.b16 %v892, %v891
        %v1011 = vpack.c.b16 %v894, %v893
        %v1012 = vpack.c.b16 %v896, %v895
        %v1013 = vpack.c.b16 %v898, %v897
        %v1014 = vpack.c.b16 %v900, %v899
        %v1015 = vpack.c.b16 %v902, %v901
        %v1016 = vpack.c.b16 %v904, %v903
        %v1017 = vpack.c.b16 %v906, %v905
        %v1018 = vpack.c.b16 %v908, %v907
        %v1019 = vpack.c.b16 %v910, %v909
        %v1020 = vpack.c.b16 %v912, %v911
        %v1021 = vpack.c.b16 %v914, %v913
        %v1022 = vpack.c.b16 %v916, %v915
        %v1023 = vpack.c.b16 %v918, %v917
        %v1024 = vpack.c.b16 %v920, %v919
        %v1025 = vpack.c.b16 %v922, %v921
        %v1026 = vpack.c.b16 %v924, %v923
        %v1027 = vpack.c.b16 %v926, %v925
        %v1028 = vpack.c.b16 %v928, %v927
        %v1029 = vpack.c.b16 %v930, %v929
        %v1030 = vpack.c.b16 %v932, %v931
        %v1031 = vpack.c.b16 %v934, %v933
        %v1032 = vpack.c.b16 %v936, %v935
        %v1033 = vpack.c.b16 %v938, %v937
        %v1034 = vpack.c.b16 %v940, %v939
        %v1035 = vpack.c.b16 %v942, %v941
        %v1036 = vpack.c.b16 %v944, %v943
        %v1037 = vpack.c.b16 %v946, %v945
        %v1038 = vpack.c.b16 %v948, %v947
        %v1039 = vpack.c.b16 %v950, %v949
        %v1040 = vpack.c.b16 %v952, %v951
        %v1041 = vpack.c.b16 %v954, %v953
        %v1042 = vpack.c.b16 %v956, %v955
        %v1043 = vpack.c.b16 %v958, %v957
        %v1044 = vpack.c.b16 %v960, %v959
        %v1045 = vpack.c.b16 %v962, %v961
        %v1046 = vpack.c.b16 %v964, %v963
        %v1047 = vpack.c.b16 %v966, %v965
        %v1048 = vpack.c.b16 %v968, %v967
        %v1049 = vpack.c.b16 %v970, %v969
        %v1050 = vpack.c.b16 %v972, %v971
        %v1051 = vpack.c.b16 %v974, %v973
        %v1052 = vpack.c.b16 %v976, %v975
        %v1053 = vpack.c.b16 %v978, %v977
        %v1054 = vpack.c.b16 %v980, %v979
        %v1055 = vpack.c.b16 %v982, %v981
        %v1056 = vpack.c.b16 %v984, %v983
        %v1057 = vpack.c.b16 %v986, %v985
        %v1058 = vpack.c.b16 %v988, %v987
        %v1059 = vpack.c.b16 %v990, %v989
        %v1060 = vpack.c.b16 %v992, %v991
        %vm1129 = vcmask 523264
        %v1131 = vsel %vm1129, %v712, 0
        %1133 = vmatprep.subr.bf16.mxu0 0
        %1134 = vmatpush1.bf16.msra.mxu0 %v993
        %1135 = vmatprep.subr.bf16.mxu0 0
        %1136 = vmatpush1.bf16.msra.mxu0 %v994
        %1137 = vmatprep.subr.bf16.mxu0 0
        %1138 = vmatpush1.bf16.msra.mxu0 %v995
        %1139 = vmatprep.subr.bf16.mxu0 0
        %1140 = vmatpush1.bf16.msra.mxu0 %v996
        %1141 = vmatprep.subr.bf16.mxu0 0
        %1142 = vmatpush1.bf16.msra.mxu0 %v997
        %1143 = vmatprep.subr.bf16.mxu0 0
        %1144 = vmatpush1.bf16.msra.mxu0 %v998
        %1145 = vmatprep.subr.bf16.mxu0 0
        %1146 = vmatpush1.bf16.msra.mxu0 %v999
        %1147 = vmatprep.subr.bf16.mxu0 0
        %1148 = vmatpush1.bf16.msra.mxu0 %v1000
        %1149 = vmatprep.subr.bf16.mxu0 0
        %1150 = vmatpush1.bf16.msra.mxu0 %v1001
        %1151 = vmatprep.subr.bf16.mxu0 0
        %1152 = vmatpush1.bf16.msra.mxu0 %v1002
        %1153 = vmatprep.subr.bf16.mxu0 0
        %1154 = vmatpush1.bf16.msra.mxu0 %v1003
        %1155 = vmatprep.subr.bf16.mxu0 0
        %1156 = vmatpush1.bf16.msra.mxu0 %v1004
        %1157 = vmatprep.subr.bf16.mxu0 0
        %1158 = vmatpush1.bf16.msra.mxu0 %v1005
        %1159 = vmatprep.subr.bf16.mxu0 0
        %1160 = vmatpush1.bf16.msra.mxu0 %v1006
        %1161 = vmatprep.subr.bf16.mxu0 0
        %1162 = vmatpush1.bf16.msra.mxu0 %v1007
        %1163 = vmatprep.subr.bf16.mxu0 0
        %1164 = vmatpush1.bf16.msra.mxu0 %v1008
        %1165 = vmatprep.mubr.bf16.mxu0 %v705
        %1166 = vmatmul.mubr.bf16.gmra.mrb[0].mxu0 %v704
        %v1167 = vpop.f32.mrb[0].mxu0
        %v1168 = vadd.f32 %v688, %v1167
        %v1169 = vpop.f32.mrb[0].mxu0
        %v1170 = vpop.f32.mrb[0].mxu0
        %v1171 = vpop.f32.mrb[0].mxu0
        %1172 = vdwg.mxu0
        %1173 = vmatprep.subr.bf16.mxu0 0
        %1174 = vmatpush1.bf16.msra.mxu0 %v1009
        %1175 = vmatprep.subr.bf16.mxu0 0
        %1176 = vmatpush1.bf16.msra.mxu0 %v1010
        %1177 = vmatprep.subr.bf16.mxu0 0
        %1178 = vmatpush1.bf16.msra.mxu0 %v1011
        %1179 = vmatprep.subr.bf16.mxu0 0
        %1180 = vmatpush1.bf16.msra.mxu0 %v1012
        %1181 = vmatprep.subr.bf16.mxu0 0
        %1182 = vmatpush1.bf16.msra.mxu0 %v1013
        %1183 = vmatprep.subr.bf16.mxu0 0
        %1184 = vmatpush1.bf16.msra.mxu0 %v1014
        %1185 = vmatprep.subr.bf16.mxu0 0
        %1186 = vmatpush1.bf16.msra.mxu0 %v1015
        %1187 = vmatprep.subr.bf16.mxu0 0
        %1188 = vmatpush1.bf16.msra.mxu0 %v1016
        %1189 = vmatprep.subr.bf16.mxu0 0
        %1190 = vmatpush1.bf16.msra.mxu0 %v1017
        %1191 = vmatprep.subr.bf16.mxu0 0
        %1192 = vmatpush1.bf16.msra.mxu0 %v1018
        %1193 = vmatprep.subr.bf16.mxu0 0
        %1194 = vmatpush1.bf16.msra.mxu0 %v1019
        %1195 = vmatprep.subr.bf16.mxu0 0
        %1196 = vmatpush1.bf16.msra.mxu0 %v1020
        %1197 = vmatprep.subr.bf16.mxu0 0
        %1198 = vmatpush1.bf16.msra.mxu0 %v1021
        %1199 = vmatprep.subr.bf16.mxu0 0
        %1200 = vmatpush1.bf16.msra.mxu0 %v1022
        %1201 = vmatprep.subr.bf16.mxu0 0
        %1202 = vmatpush1.bf16.msra.mxu0 %v1023
        %1203 = vmatprep.subr.bf16.mxu0 0
        %1204 = vmatpush1.bf16.msra.mxu0 %v1024
        %1205 = vmatprep.mubr.bf16.mxu0 %v707
        %1206 = vmatmul.mubr.bf16.gmra.mrb[0].mxu0 %v706
        %v1207 = vpop.f32.mrb[0].mxu0
        %v1208 = vadd.f32 %v1168, %v1207
        %v1209 = vpop.f32.mrb[0].mxu0
        %v1210 = vpop.f32.mrb[0].mxu0
        %v1211 = vpop.f32.mrb[0].mxu0
        %1212 = vdwg.mxu0
        %1213 = vmatprep.subr.bf16.mxu0 0
        %1214 = vmatpush1.bf16.msra.mxu0 %v1025
        %1215 = vmatprep.subr.bf16.mxu0 0
        %1216 = vmatpush1.bf16.msra.mxu0 %v1026
        %1217 = vmatprep.subr.bf16.mxu0 0
        %1218 = vmatpush1.bf16.msra.mxu0 %v1027
        %1219 = vmatprep.subr.bf16.mxu0 0
        %1220 = vmatpush1.bf16.msra.mxu0 %v1028
        %1221 = vmatprep.subr.bf16.mxu0 0
        %1222 = vmatpush1.bf16.msra.mxu0 %v1029
        %1223 = vmatprep.subr.bf16.mxu0 0
        %1224 = vmatpush1.bf16.msra.mxu0 %v1030
        %1225 = vmatprep.subr.bf16.mxu0 0
        %1226 = vmatpush1.bf16.msra.mxu0 %v1031
        %1227 = vmatprep.subr.bf16.mxu0 0
        %1228 = vmatpush1.bf16.msra.mxu0 %v1032
        %1229 = vmatprep.subr.bf16.mxu0 0
        %1230 = vmatpush1.bf16.msra.mxu0 %v1033
        %1231 = vmatprep.subr.bf16.mxu0 0
        %1232 = vmatpush1.bf16.msra.mxu0 %v1034
        %1233 = vmatprep.subr.bf16.mxu0 0
        %1234 = vmatpush1.bf16.msra.mxu0 %v1035
        %1235 = vmatprep.subr.bf16.mxu0 0
        %1236 = vmatpush1.bf16.msra.mxu0 %v1036
        %1237 = vmatprep.subr.bf16.mxu0 0
        %1238 = vmatpush1.bf16.msra.mxu0 %v1037
        %1239 = vmatprep.subr.bf16.mxu0 0
        %1240 = vmatpush1.bf16.msra.mxu0 %v1038
        %1241 = vmatprep.subr.bf16.mxu0 0
        %1242 = vmatpush1.bf16.msra.mxu0 %v1039
        %1243 = vmatprep.subr.bf16.mxu0 0
        %1244 = vmatpush1.bf16.msra.mxu0 %v1040
        %1245 = vmatprep.mubr.bf16.mxu0 %v709
        %1246 = vmatmul.mubr.bf16.gmra.mrb[0].mxu0 %v708
        %v1247 = vpop.f32.mrb[0].mxu0
        %v1248 = vadd.f32 %v1208, %v1247
        %v1249 = vpop.f32.mrb[0].mxu0
        %v1250 = vpop.f32.mrb[0].mxu0
        %v1251 = vpop.f32.mrb[0].mxu0
        %1252 = vdwg.mxu0
        %1253 = vmatprep.subr.bf16.mxu0 0
        %1254 = vmatpush1.bf16.msra.mxu0 %v1041
        %1255 = vmatprep.subr.bf16.mxu0 0
        %1256 = vmatpush1.bf16.msra.mxu0 %v1042
        %1257 = vmatprep.subr.bf16.mxu0 0
        %1258 = vmatpush1.bf16.msra.mxu0 %v1043
        %1259 = vmatprep.subr.bf16.mxu0 0
        %1260 = vmatpush1.bf16.msra.mxu0 %v1044
        %1261 = vmatprep.subr.bf16.mxu0 0
        %1262 = vmatpush1.bf16.msra.mxu0 %v1045
        %1263 = vmatprep.subr.bf16.mxu0 0
        %1264 = vmatpush1.bf16.msra.mxu0 %v1046
        %1265 = vmatprep.subr.bf16.mxu0 0
        %1266 = vmatpush1.bf16.msra.mxu0 %v1047
        %1267 = vmatprep.subr.bf16.mxu0 0
        %1268 = vmatpush1.bf16.msra.mxu0 %v1048
        %1269 = vmatprep.subr.bf16.mxu0 0
        %1270 = vmatpush1.bf16.msra.mxu0 %v1049
        %1271 = vmatprep.subr.bf16.mxu0 0
        %1272 = vmatpush1.bf16.msra.mxu0 %v1050
        %1273 = vmatprep.subr.bf16.mxu0 0
        %1274 = vmatpush1.bf16.msra.mxu0 %v1051
        %1275 = vmatprep.subr.bf16.mxu0 0
        %1276 = vmatpush1.bf16.msra.mxu0 %v1052
        %1277 = vmatprep.subr.bf16.mxu0 0
        %1278 = vmatpush1.bf16.msra.mxu0 %v1053
        %1279 = vmatprep.subr.bf16.mxu0 0
        %1280 = vmatpush1.bf16.msra.mxu0 %v1054
        %1281 = vmatprep.subr.bf16.mxu0 0
        %1282 = vmatpush1.bf16.msra.mxu0 %v1055
        %1283 = vmatprep.subr.bf16.mxu0 0
        %1284 = vmatpush1.bf16.msra.mxu0 %v1056
        %1285 = vmatprep.mubr.bf16.mxu0 %v711
        %1286 = vmatmul.mubr.bf16.gmra.mrb[0].mxu0 %v710
        %v1287 = vpop.f32.mrb[0].mxu0
        %v1288 = vadd.f32 %v1248, %v1287
        %v1289 = vpop.f32.mrb[0].mxu0
        %v1290 = vpop.f32.mrb[0].mxu0
        %v1291 = vpop.f32.mrb[0].mxu0
        %1292 = vdwg.mxu0
        %1293 = vmatprep.subr.bf16.mxu0 0
        %1294 = vmatpush1.bf16.msra.mxu0 %v1057
        %1295 = vmatprep.subr.bf16.mxu0 0
        %1296 = vmatpush1.bf16.msra.mxu0 %v1058
        %1297 = vmatprep.subr.bf16.mxu0 0
        %1298 = vmatpush1.bf16.msra.mxu0 %v1059
        %1299 = vmatprep.subr.bf16.mxu0 0
        %1300 = vmatpush1.bf16.msra.mxu0 %v1060
        %1301 = vmatprep.subr.bf16.mxu0 0
        %1302 = vmatpush1.bf16.msra.mxu0 0
        %1303 = vmatprep.subr.bf16.mxu0 0
        %1304 = vmatpush1.bf16.msra.mxu0 0
        %1305 = vmatprep.subr.bf16.mxu0 0
        %1306 = vmatpush1.bf16.msra.mxu0 0
        %1307 = vmatprep.subr.bf16.mxu0 0
        %1308 = vmatpush1.bf16.msra.mxu0 0
        %1309 = vmatprep.subr.bf16.mxu0 0
        %1310 = vmatpush1.bf16.msra.mxu0 0
        %1311 = vmatprep.subr.bf16.mxu0 0
        %1312 = vmatpush1.bf16.msra.mxu0 0
        %1313 = vmatprep.subr.bf16.mxu0 0
        %1314 = vmatpush1.bf16.msra.mxu0 0
        %1315 = vmatprep.subr.bf16.mxu0 0
        %1316 = vmatpush1.bf16.msra.mxu0 0
        %1317 = vmatprep.subr.bf16.mxu0 0
        %1318 = vmatpush1.bf16.msra.mxu0 0
        %1319 = vmatprep.subr.bf16.mxu0 0
        %1320 = vmatpush1.bf16.msra.mxu0 0
        %1321 = vmatprep.subr.bf16.mxu0 0
        %1322 = vmatpush1.bf16.msra.mxu0 0
        %1323 = vmatprep.subr.bf16.mxu0 0
        %1324 = vmatpush1.bf16.msra.mxu0 0
        %1325 = vmatprep.mubr.bf16.mxu0 0
        %1326 = vmatmul.mubr.bf16.gmra.mrb[0].mxu0 %v1131
        %v1327 = vpop.f32.mrb[0].mxu0
        %v1328 = vadd.f32 %v1288, %v1327
        %v1329 = vpop.f32.mrb[0].mxu0
        %v1330 = vpop.f32.mrb[0].mxu0
        %v1331 = vpop.f32.mrb[0].mxu0
        %1332 = vdwg.mxu0
        %v1333 = vtanh.pop %v1328
        %v1334 = vld [vmem:[#allocation7] sm:$0xf]
        %v1335 = vld [vmem:[#allocation7 + $0x4] sm:$0xf]
        %v1336 = vld [vmem:[#allocation7 + $0x8] sm:$0xf]
        %v1337 = vld [vmem:[#allocation7 + $0xc] sm:$0xf]
        %v1338 = vld [vmem:[#allocation7 + $0x10] sm:$0xf]
        %v1339 = vld [vmem:[#allocation7 + $0x14] sm:$0xf]
        %v1340 = vld [vmem:[#allocation7 + $0x18] sm:$0xf]
        %v1341 = vld [vmem:[#allocation7 + $0x1c] sm:$0xf]
        %v1342 = vld [vmem:[#allocation7 + $0x20] sm:$0xf]
        %v1343 = vld [vmem:[#allocation7 + $0x24] sm:$0xf]
        %v1344 = vld [vmem:[#allocation7 + $0x28] sm:$0xf]
        %v1345 = vld [vmem:[#allocation7 + $0x2c] sm:$0xf]
        %v1346 = vld [vmem:[#allocation7 + $0x30] sm:$0xf]
        %v1347 = vld [vmem:[#allocation7 + $0x34] sm:$0xf]
        %v1348 = vld [vmem:[#allocation7 + $0x38] sm:$0xf]
        %v1349 = vld [vmem:[#allocation7 + $0x3c] sm:$0xf]
        %v1350 = vpack.c.bf16 %v1333, %v1333
        %v1351 = vld [vmem:[%s4] sm:$0x1]
        %v1353 = vlaneseq
        %v1354 = vshrl.u32 %v1353, 7
        %v1355 = vsub.s32 0, %v1354
        %v1356 = vrot.slane %v1351, %v1355
        %v1374 = vunpack.c.l.b16 %v1334
        %v1375 = vunpack.c.l.b16 %v1335
        %v1376 = vunpack.c.l.b16 %v1336
        %v1377 = vunpack.c.l.b16 %v1337
        %v1378 = vunpack.c.l.b16 %v1338
        %v1379 = vunpack.c.l.b16 %v1339
        %v1380 = vunpack.c.l.b16 %v1340
        %v1381 = vunpack.c.l.b16 %v1341
        %v1382 = vunpack.c.l.b16 %v1342
        %v1383 = vunpack.c.l.b16 %v1343
        %v1384 = vunpack.c.l.b16 %v1344
        %v1385 = vunpack.c.l.b16 %v1345
        %v1386 = vunpack.c.l.b16 %v1346
        %v1387 = vunpack.c.l.b16 %v1347
        %v1388 = vunpack.c.l.b16 %v1348
        %v1389 = vunpack.c.l.b16 %v1349
        %v1390 = vpack.c.b16 %v1375, %v1374
        %v1391 = vpack.c.b16 %v1377, %v1376
        %v1392 = vpack.c.b16 %v1379, %v1378
        %v1393 = vpack.c.b16 %v1381, %v1380
        %v1394 = vpack.c.b16 %v1383, %v1382
        %v1395 = vpack.c.b16 %v1385, %v1384
        %v1396 = vpack.c.b16 %v1387, %v1386
        %v1397 = vpack.c.b16 %v1389, %v1388
        %1406 = vmatprep.subr.bf16.mxu0 0
        %1407 = vmatpush1.bf16.msra.mxu0 %v1390
        %1408 = vmatprep.subr.bf16.mxu0 0
        %1409 = vmatpush1.bf16.msra.mxu0 %v1391
        %1410 = vmatprep.subr.bf16.mxu0 0
        %1411 = vmatpush1.bf16.msra.mxu0 %v1392
        %1412 = vmatprep.subr.bf16.mxu0 0
        %1413 = vmatpush1.bf16.msra.mxu0 %v1393
        %1414 = vmatprep.subr.bf16.mxu0 0
        %1415 = vmatpush1.bf16.msra.mxu0 %v1394
        %1416 = vmatprep.subr.bf16.mxu0 0
        %1417 = vmatpush1.bf16.msra.mxu0 %v1395
        %1418 = vmatprep.subr.bf16.mxu0 0
        %1419 = vmatpush1.bf16.msra.mxu0 %v1396
        %1420 = vmatprep.subr.bf16.mxu0 0
        %1421 = vmatpush1.bf16.msra.mxu0 %v1397
        %1422 = vmatprep.subr.bf16.mxu0 0
        %1423 = vmatpush1.bf16.msra.mxu0 0
        %1424 = vmatprep.subr.bf16.mxu0 0
        %1425 = vmatpush1.bf16.msra.mxu0 0
        %1426 = vmatprep.subr.bf16.mxu0 0
        %1427 = vmatpush1.bf16.msra.mxu0 0
        %1428 = vmatprep.subr.bf16.mxu0 0
        %1429 = vmatpush1.bf16.msra.mxu0 0
        %1430 = vmatprep.subr.bf16.mxu0 0
        %1431 = vmatpush1.bf16.msra.mxu0 0
        %1432 = vmatprep.subr.bf16.mxu0 0
        %1433 = vmatpush1.bf16.msra.mxu0 0
        %1434 = vmatprep.subr.bf16.mxu0 0
        %1435 = vmatpush1.bf16.msra.mxu0 0
        %1436 = vmatprep.subr.bf16.mxu0 0
        %1437 = vmatpush1.bf16.msra.mxu0 0
        %1438 = vmatprep.mubr.bf16.mxu0 0
        %1439 = vmatmul.mubr.bf16.gmra.mrb[0].mxu0 %v1350
        %v1440 = vpop.f32.mrb[0].mxu0
        %v1441 = vadd.f32 %v1356, %v1440
        %v1442 = vpop.f32.mrb[0].mxu0
        %v1443 = vpop.f32.mrb[0].mxu0
        %v1444 = vpop.f32.mrb[0].mxu0
        %1445 = vdwg.mxu0
        %v1446 = vtanh.pop %v1441
        %v1447 = vld [vmem:[#allocation8] sm:$0xff]
        %v1448 = vld [vmem:[#allocation8 + $0x8] sm:$0xf]
        %v1449 = vld [vmem:[#allocation8 + $0xc] sm:$0xff]
        %v1450 = vld [vmem:[#allocation8 + $0x14] sm:$0xf]
        %v1451 = vld [vmem:[#allocation8 + $0x18] sm:$0xff]
        %v1452 = vld [vmem:[#allocation8 + $0x20] sm:$0xf]
        %v1453 = vld [vmem:[#allocation8 + $0x24] sm:$0xff]
        %v1454 = vld [vmem:[#allocation8 + $0x2c] sm:$0xf]
        %v1455 = vld [vmem:[#allocation8 + $0x30] sm:$0xff]
        %v1456 = vld [vmem:[#allocation8 + $0x38] sm:$0xf]
        %v1457 = vld [vmem:[#allocation8 + $0x3c] sm:$0xff]
        %v1458 = vld [vmem:[#allocation8 + $0x44] sm:$0xf]
        %v1459 = vld [vmem:[#allocation8 + $0x48] sm:$0xff]
        %v1460 = vld [vmem:[#allocation8 + $0x50] sm:$0xf]
        %v1461 = vld [vmem:[#allocation8 + $0x54] sm:$0xff]
        %v1462 = vld [vmem:[#allocation8 + $0x5c] sm:$0xf]
        %v1463 = vld [vmem:[#allocation8 + $0x60] sm:$0xff]
        %v1464 = vld [vmem:[#allocation8 + $0x68] sm:$0xf]
        %v1465 = vld [vmem:[#allocation8 + $0x6c] sm:$0xff]
        %v1466 = vld [vmem:[#allocation8 + $0x74] sm:$0xf]
        %v1467 = vld [vmem:[#allocation8 + $0x78] sm:$0xff]
        %v1468 = vld [vmem:[#allocation8 + $0x80] sm:$0xf]
        %v1469 = vld [vmem:[#allocation8 + $0x84] sm:$0xff]
        %v1470 = vld [vmem:[#allocation8 + $0x8c] sm:$0xf]
        %v1471 = vld [vmem:[#allocation8 + $0x90] sm:$0xff]
        %v1472 = vld [vmem:[#allocation8 + $0x98] sm:$0xf]
        %v1473 = vld [vmem:[#allocation8 + $0x9c] sm:$0xff]
        %v1474 = vld [vmem:[#allocation8 + $0xa4] sm:$0xf]
        %v1475 = vld [vmem:[#allocation8 + $0xa8] sm:$0xff]
        %v1476 = vld [vmem:[#allocation8 + $0xb0] sm:$0xf]
        %v1477 = vld [vmem:[#allocation8 + $0xb4] sm:$0xff]
        %v1478 = vld [vmem:[#allocation8 + $0xbc] sm:$0xf]
        %v1479 = vpack.c.bf16 %v1446, %v1446
        %v1480 = vld [vmem:[%s6] sm:$0x7]
        %v1482 = vlaneseq
        %v1483 = vshrl.u32 %v1482, 7
        %v1484 = vsub.s32 0, %v1483
        %v1485 = vrot.slane %v1480, %v1484
        %v1486 = vlaneseq
        %v1487 = vshrl.u32 %v1486, 7
        %v1488 = vsub.s32 1, %v1487
        %v1489 = vrot.slane %v1480, %v1488
        %v1490 = vlaneseq
        %v1491 = vshrl.u32 %v1490, 7
        %v1492 = vsub.s32 2, %v1491
        %v1493 = vrot.slane %v1480, %v1492
        %v1529 = vunpack.c.l.b16 %v1447
        %v1530 = vunpack.c.h.b16 %v1447
        %v1531 = vunpack.c.l.b16 %v1448
        %v1532 = vunpack.c.l.b16 %v1449
        %v1533 = vunpack.c.h.b16 %v1449
        %v1534 = vunpack.c.l.b16 %v1450
        %v1535 = vunpack.c.l.b16 %v1451
        %v1536 = vunpack.c.h.b16 %v1451
        %v1537 = vunpack.c.l.b16 %v1452
        %v1538 = vunpack.c.l.b16 %v1453
        %v1539 = vunpack.c.h.b16 %v1453
        %v1540 = vunpack.c.l.b16 %v1454
        %v1541 = vunpack.c.l.b16 %v1455
        %v1542 = vunpack.c.h.b16 %v1455
        %v1543 = vunpack.c.l.b16 %v1456
        %v1544 = vunpack.c.l.b16 %v1457
        %v1545 = vunpack.c.h.b16 %v1457
        %v1546 = vunpack.c.l.b16 %v1458
        %v1547 = vunpack.c.l.b16 %v1459
        %v1548 = vunpack.c.h.b16 %v1459
        %v1549 = vunpack.c.l.b16 %v1460
        %v1550 = vunpack.c.l.b16 %v1461
        %v1551 = vunpack.c.h.b16 %v1461
        %v1552 = vunpack.c.l.b16 %v1462
        %v1553 = vunpack.c.l.b16 %v1463
        %v1554 = vunpack.c.h.b16 %v1463
        %v1555 = vunpack.c.l.b16 %v1464
        %v1556 = vunpack.c.l.b16 %v1465
        %v1557 = vunpack.c.h.b16 %v1465
        %v1558 = vunpack.c.l.b16 %v1466
        %v1559 = vunpack.c.l.b16 %v1467
        %v1560 = vunpack.c.h.b16 %v1467
        %v1561 = vunpack.c.l.b16 %v1468
        %v1562 = vunpack.c.l.b16 %v1469
        %v1563 = vunpack.c.h.b16 %v1469
        %v1564 = vunpack.c.l.b16 %v1470
        %v1565 = vunpack.c.l.b16 %v1471
        %v1566 = vunpack.c.h.b16 %v1471
        %v1567 = vunpack.c.l.b16 %v1472
        %v1568 = vunpack.c.l.b16 %v1473
        %v1569 = vunpack.c.h.b16 %v1473
        %v1570 = vunpack.c.l.b16 %v1474
        %v1571 = vunpack.c.l.b16 %v1475
        %v1572 = vunpack.c.h.b16 %v1475
        %v1573 = vunpack.c.l.b16 %v1476
        %v1574 = vunpack.c.l.b16 %v1477
        %v1575 = vunpack.c.h.b16 %v1477
        %v1576 = vunpack.c.l.b16 %v1478
        %v1577 = vpack.c.b16 %v1532, %v1529
        %v1578 = vpack.c.b16 %v1533, %v1530
        %v1579 = vpack.c.b16 %v1534, %v1531
        %v1580 = vpack.c.b16 %v1538, %v1535
        %v1581 = vpack.c.b16 %v1539, %v1536
        %v1582 = vpack.c.b16 %v1540, %v1537
        %v1583 = vpack.c.b16 %v1544, %v1541
        %v1584 = vpack.c.b16 %v1545, %v1542
        %v1585 = vpack.c.b16 %v1546, %v1543
        %v1586 = vpack.c.b16 %v1550, %v1547
        %v1587 = vpack.c.b16 %v1551, %v1548
        %v1588 = vpack.c.b16 %v1552, %v1549
        %v1589 = vpack.c.b16 %v1556, %v1553
        %v1590 = vpack.c.b16 %v1557, %v1554
        %v1591 = vpack.c.b16 %v1558, %v1555
        %v1592 = vpack.c.b16 %v1562, %v1559
        %v1593 = vpack.c.b16 %v1563, %v1560
        %v1594 = vpack.c.b16 %v1564, %v1561
        %v1595 = vpack.c.b16 %v1568, %v1565
        %v1596 = vpack.c.b16 %v1569, %v1566
        %v1597 = vpack.c.b16 %v1570, %v1567
        %v1598 = vpack.c.b16 %v1574, %v1571
        %v1599 = vpack.c.b16 %v1575, %v1572
        %v1600 = vpack.c.b16 %v1576, %v1573
        %1625 = vmatprep.subr.bf16.mxu0 %v1578
        %1626 = vmatpush1.bf16.msra.mxu0 %v1577
        %1627 = vmatprep.subr.bf16.mxu0 %v1581
        %1628 = vmatpush1.bf16.msra.mxu0 %v1580
        %1629 = vmatprep.subr.bf16.mxu0 %v1584
        %1630 = vmatpush1.bf16.msra.mxu0 %v1583
        %1631 = vmatprep.subr.bf16.mxu0 %v1587
        %1632 = vmatpush1.bf16.msra.mxu0 %v1586
        %1633 = vmatprep.subr.bf16.mxu0 %v1590
        %1634 = vmatpush1.bf16.msra.mxu0 %v1589
        %1635 = vmatprep.subr.bf16.mxu0 %v1593
        %1636 = vmatpush1.bf16.msra.mxu0 %v1592
        %1637 = vmatprep.subr.bf16.mxu0 %v1596
        %1638 = vmatpush1.bf16.msra.mxu0 %v1595
        %1639 = vmatprep.subr.bf16.mxu0 %v1599
        %1640 = vmatpush1.bf16.msra.mxu0 %v1598
        %1641 = vmatprep.subr.bf16.mxu0 0
        %1642 = vmatpush1.bf16.msra.mxu0 0
        %1643 = vmatprep.subr.bf16.mxu0 0
        %1644 = vmatpush1.bf16.msra.mxu0 0
        %1645 = vmatprep.subr.bf16.mxu0 0
        %1646 = vmatpush1.bf16.msra.mxu0 0
        %1647 = vmatprep.subr.bf16.mxu0 0
        %1648 = vmatpush1.bf16.msra.mxu0 0
        %1649 = vmatprep.subr.bf16.mxu0 0
        %1650 = vmatpush1.bf16.msra.mxu0 0
        %1651 = vmatprep.subr.bf16.mxu0 0
        %1652 = vmatpush1.bf16.msra.mxu0 0
        %1653 = vmatprep.subr.bf16.mxu0 0
        %1654 = vmatpush1.bf16.msra.mxu0 0
        %1655 = vmatprep.subr.bf16.mxu0 0
        %1656 = vmatpush1.bf16.msra.mxu0 0
        %1657 = vmatprep.mubr.bf16.mxu0 0
        %1658 = vmatmul.mubr.bf16.gmra.mrb[0].mxu0 %v1479
        %v1659 = vpop.f32.mrb[0].mxu0
        %v1660 = vadd.f32 %v1485, %v1659
        %v1661 = vpop.f32.mrb[0].mxu0
        %v1662 = vadd.f32 %v1489, %v1661
        %v1663 = vpop.f32.mrb[0].mxu0
        %v1664 = vpop.f32.mrb[0].mxu0
        %1665 = vdwg.mxu0
        %1666 = vmatprep.subr.bf16.mxu0 0
        %1667 = vmatpush1.bf16.msra.mxu0 %v1579
        %1668 = vmatprep.subr.bf16.mxu0 0
        %1669 = vmatpush1.bf16.msra.mxu0 %v1582
        %1670 = vmatprep.subr.bf16.mxu0 0
        %1671 = vmatpush1.bf16.msra.mxu0 %v1585
        %1672 = vmatprep.subr.bf16.mxu0 0
        %1673 = vmatpush1.bf16.msra.mxu0 %v1588
        %1674 = vmatprep.subr.bf16.mxu0 0
        %1675 = vmatpush1.bf16.msra.mxu0 %v1591
        %1676 = vmatprep.subr.bf16.mxu0 0
        %1677 = vmatpush1.bf16.msra.mxu0 %v1594
        %1678 = vmatprep.subr.bf16.mxu0 0
        %1679 = vmatpush1.bf16.msra.mxu0 %v1597
        %1680 = vmatprep.subr.bf16.mxu0 0
        %1681 = vmatpush1.bf16.msra.mxu0 %v1600
        %1682 = vmatprep.subr.bf16.mxu0 0
        %1683 = vmatpush1.bf16.msra.mxu0 0
        %1684 = vmatprep.subr.bf16.mxu0 0
        %1685 = vmatpush1.bf16.msra.mxu0 0
        %1686 = vmatprep.subr.bf16.mxu0 0
        %1687 = vmatpush1.bf16.msra.mxu0 0
        %1688 = vmatprep.subr.bf16.mxu0 0
        %1689 = vmatpush1.bf16.msra.mxu0 0
        %1690 = vmatprep.subr.bf16.mxu0 0
        %1691 = vmatpush1.bf16.msra.mxu0 0
        %1692 = vmatprep.subr.bf16.mxu0 0
        %1693 = vmatpush1.bf16.msra.mxu0 0
        %1694 = vmatprep.subr.bf16.mxu0 0
        %1695 = vmatpush1.bf16.msra.mxu0 0
        %1696 = vmatprep.subr.bf16.mxu0 0
        %1697 = vmatpush1.bf16.msra.mxu0 0
        %1698 = vmatprep.mubr.bf16.mxu0 0
        %1699 = vmatmul.mubr.bf16.gmra.mrb[0].mxu0 %v1479
        %v1700 = vpop.f32.mrb[0].mxu0
        %v1701 = vadd.f32 %v1493, %v1700
        %v1702 = vpop.f32.mrb[0].mxu0
        %v1703 = vpop.f32.mrb[0].mxu0
        %v1704 = vpop.f32.mrb[0].mxu0
        %1705 = vdwg.mxu0
        %v1706 = vtanh.pop %v1660
        %v1707 = vtanh.pop %v1662
        %v1708 = vtanh.pop %v1701
        %v1709 = vpack.c.bf16 %v1706, %v1706
        %v1710 = vpack.c.bf16 %v1707, %v1707
        %v1711 = vpack.c.bf16 %v1708, %v1708
        %v1712 = vld [vmem:[#allocation10] sm:$0xf]
        %v1713 = vld [vmem:[#allocation10 + $0x4] sm:$0xf]
        %v1714 = vld [vmem:[#allocation10 + $0x8] sm:$0xf]
        %v1715 = vld [vmem:[#allocation10 + $0xc] sm:$0xf]
        %v1716 = vld [vmem:[#allocation10 + $0x10] sm:$0xf]
        %v1717 = vld [vmem:[#allocation10 + $0x14] sm:$0xf]
        %v1718 = vld [vmem:[#allocation10 + $0x18] sm:$0xf]
        %v1719 = vld [vmem:[#allocation10 + $0x1c] sm:$0xf]
        %v1720 = vld [vmem:[#allocation10 + $0x20] sm:$0xf]
        %v1721 = vld [vmem:[#allocation10 + $0x24] sm:$0xf]
        %v1722 = vld [vmem:[#allocation10 + $0x28] sm:$0xf]
        %v1723 = vld [vmem:[#allocation10 + $0x2c] sm:$0xf]
        %v1724 = vld [vmem:[#allocation10 + $0x30] sm:$0xf]
        %v1725 = vld [vmem:[#allocation10 + $0x34] sm:$0xf]
        %v1726 = vld [vmem:[#allocation10 + $0x38] sm:$0xf]
        %v1727 = vld [vmem:[#allocation10 + $0x3c] sm:$0xf]
        %v1728 = vld [vmem:[#allocation10 + $0x40] sm:$0xf]
        %v1729 = vld [vmem:[#allocation10 + $0x44] sm:$0xf]
        %v1730 = vld [vmem:[#allocation10 + $0x48] sm:$0xf]
        %v1731 = vld [vmem:[#allocation10 + $0x4c] sm:$0xf]
        %v1732 = vld [vmem:[#allocation10 + $0x50] sm:$0xf]
        %v1733 = vld [vmem:[#allocation10 + $0x54] sm:$0xf]
        %v1734 = vld [vmem:[#allocation10 + $0x58] sm:$0xf]
        %v1735 = vld [vmem:[#allocation10 + $0x5c] sm:$0xf]
        %v1736 = vld [vmem:[#allocation10 + $0x60] sm:$0xf]
        %v1737 = vld [vmem:[#allocation10 + $0x64] sm:$0xf]
        %v1738 = vld [vmem:[#allocation10 + $0x68] sm:$0xf]
        %v1739 = vld [vmem:[#allocation10 + $0x6c] sm:$0xf]
        %v1740 = vld [vmem:[#allocation10 + $0x70] sm:$0xf]
        %v1741 = vld [vmem:[#allocation10 + $0x74] sm:$0xf]
        %v1742 = vld [vmem:[#allocation10 + $0x78] sm:$0xf]
        %v1743 = vld [vmem:[#allocation10 + $0x7c] sm:$0xf]
        %v1744 = vld [vmem:[#allocation10 + $0x80] sm:$0xf]
        %v1745 = vld [vmem:[#allocation10 + $0x84] sm:$0xf]
        %v1746 = vld [vmem:[#allocation10 + $0x88] sm:$0xf]
        %v1747 = vld [vmem:[#allocation10 + $0x8c] sm:$0xf]
        %v1748 = vld [vmem:[#allocation10 + $0x90] sm:$0xf]
        %v1749 = vld [vmem:[#allocation10 + $0x94] sm:$0xf]
        %v1750 = vld [vmem:[#allocation10 + $0x98] sm:$0xf]
        %v1751 = vld [vmem:[#allocation10 + $0x9c] sm:$0xf]
        %v1752 = vld [vmem:[#allocation10 + $0xa0] sm:$0xf]
        %v1753 = vld [vmem:[#allocation10 + $0xa4] sm:$0xf]
        %v1754 = vld [vmem:[#allocation10 + $0xa8] sm:$0xf]
        %v1755 = vld [vmem:[#allocation10 + $0xac] sm:$0xf]
        %v1756 = vld [vmem:[#allocation10 + $0xb0] sm:$0xf]
        %v1757 = vld [vmem:[#allocation10 + $0xb4] sm:$0xf]
        %v1758 = vld [vmem:[#allocation10 + $0xb8] sm:$0xf]
        %v1759 = vld [vmem:[#allocation10 + $0xbc] sm:$0xf]
        %v1760 = vld [vmem:[%s8] sm:$0x1]
        %v1762 = vlaneseq
        %v1763 = vshrl.u32 %v1762, 7
        %v1764 = vsub.s32 0, %v1763
        %v1765 = vrot.slane %v1760, %v1764
        %v1815 = vunpack.c.l.b16 %v1712
        %v1816 = vunpack.c.l.b16 %v1713
        %v1817 = vunpack.c.l.b16 %v1714
        %v1818 = vunpack.c.l.b16 %v1715
        %v1819 = vunpack.c.l.b16 %v1716
        %v1820 = vunpack.c.l.b16 %v1717
        %v1821 = vunpack.c.l.b16 %v1718
        %v1822 = vunpack.c.l.b16 %v1719
        %v1823 = vunpack.c.l.b16 %v1720
        %v1824 = vunpack.c.l.b16 %v1721
        %v1825 = vunpack.c.l.b16 %v1722
        %v1826 = vunpack.c.l.b16 %v1723
        %v1827 = vunpack.c.l.b16 %v1724
        %v1828 = vunpack.c.l.b16 %v1725
        %v1829 = vunpack.c.l.b16 %v1726
        %v1830 = vunpack.c.l.b16 %v1727
        %v1831 = vunpack.c.l.b16 %v1728
        %v1832 = vunpack.c.l.b16 %v1729
        %v1833 = vunpack.c.l.b16 %v1730
        %v1834 = vunpack.c.l.b16 %v1731
        %v1835 = vunpack.c.l.b16 %v1732
        %v1836 = vunpack.c.l.b16 %v1733
        %v1837 = vunpack.c.l.b16 %v1734
        %v1838 = vunpack.c.l.b16 %v1735
        %v1839 = vunpack.c.l.b16 %v1736
        %v1840 = vunpack.c.l.b16 %v1737
        %v1841 = vunpack.c.l.b16 %v1738
        %v1842 = vunpack.c.l.b16 %v1739
        %v1843 = vunpack.c.l.b16 %v1740
        %v1844 = vunpack.c.l.b16 %v1741
        %v1845 = vunpack.c.l.b16 %v1742
        %v1846 = vunpack.c.l.b16 %v1743
        %v1847 = vunpack.c.l.b16 %v1744
        %v1848 = vunpack.c.l.b16 %v1745
        %v1849 = vunpack.c.l.b16 %v1746
        %v1850 = vunpack.c.l.b16 %v1747
        %v1851 = vunpack.c.l.b16 %v1748
        %v1852 = vunpack.c.l.b16 %v1749
        %v1853 = vunpack.c.l.b16 %v1750
        %v1854 = vunpack.c.l.b16 %v1751
        %v1855 = vunpack.c.l.b16 %v1752
        %v1856 = vunpack.c.l.b16 %v1753
        %v1857 = vunpack.c.l.b16 %v1754
        %v1858 = vunpack.c.l.b16 %v1755
        %v1859 = vunpack.c.l.b16 %v1756
        %v1860 = vunpack.c.l.b16 %v1757
        %v1861 = vunpack.c.l.b16 %v1758
        %v1862 = vunpack.c.l.b16 %v1759
        %v1863 = vpack.c.b16 %v1816, %v1815
        %v1864 = vpack.c.b16 %v1818, %v1817
        %v1865 = vpack.c.b16 %v1820, %v1819
        %v1866 = vpack.c.b16 %v1822, %v1821
        %v1867 = vpack.c.b16 %v1824, %v1823
        %v1868 = vpack.c.b16 %v1826, %v1825
        %v1869 = vpack.c.b16 %v1828, %v1827
        %v1870 = vpack.c.b16 %v1830, %v1829
        %v1871 = vpack.c.b16 %v1832, %v1831
        %v1872 = vpack.c.b16 %v1834, %v1833
        %v1873 = vpack.c.b16 %v1836, %v1835
        %v1874 = vpack.c.b16 %v1838, %v1837
        %v1875 = vpack.c.b16 %v1840, %v1839
        %v1876 = vpack.c.b16 %v1842, %v1841
        %v1877 = vpack.c.b16 %v1844, %v1843
        %v1878 = vpack.c.b16 %v1846, %v1845
        %v1879 = vpack.c.b16 %v1848, %v1847
        %v1880 = vpack.c.b16 %v1850, %v1849
        %v1881 = vpack.c.b16 %v1852, %v1851
        %v1882 = vpack.c.b16 %v1854, %v1853
        %v1883 = vpack.c.b16 %v1856, %v1855
        %v1884 = vpack.c.b16 %v1858, %v1857
        %v1885 = vpack.c.b16 %v1860, %v1859
        %v1886 = vpack.c.b16 %v1862, %v1861
        %1911 = vmatprep.subr.bf16.mxu0 0
        %1912 = vmatpush1.bf16.msra.mxu0 %v1863
        %1913 = vmatprep.subr.bf16.mxu0 0
        %1914 = vmatpush1.bf16.msra.mxu0 %v1864
        %1915 = vmatprep.subr.bf16.mxu0 0
        %1916 = vmatpush1.bf16.msra.mxu0 %v1865
        %1917 = vmatprep.subr.bf16.mxu0 0
        %1918 = vmatpush1.bf16.msra.mxu0 %v1866
        %1919 = vmatprep.subr.bf16.mxu0 0
        %1920 = vmatpush1.bf16.msra.mxu0 %v1867
        %1921 = vmatprep.subr.bf16.mxu0 0
        %1922 = vmatpush1.bf16.msra.mxu0 %v1868
        %1923 = vmatprep.subr.bf16.mxu0 0
        %1924 = vmatpush1.bf16.msra.mxu0 %v1869
        %1925 = vmatprep.subr.bf16.mxu0 0
        %1926 = vmatpush1.bf16.msra.mxu0 %v1870
        %1927 = vmatprep.subr.bf16.mxu0 0
        %1928 = vmatpush1.bf16.msra.mxu0 %v1871
        %1929 = vmatprep.subr.bf16.mxu0 0
        %1930 = vmatpush1.bf16.msra.mxu0 %v1872
        %1931 = vmatprep.subr.bf16.mxu0 0
        %1932 = vmatpush1.bf16.msra.mxu0 %v1873
        %1933 = vmatprep.subr.bf16.mxu0 0
        %1934 = vmatpush1.bf16.msra.mxu0 %v1874
        %1935 = vmatprep.subr.bf16.mxu0 0
        %1936 = vmatpush1.bf16.msra.mxu0 %v1875
        %1937 = vmatprep.subr.bf16.mxu0 0
        %1938 = vmatpush1.bf16.msra.mxu0 %v1876
        %1939 = vmatprep.subr.bf16.mxu0 0
        %1940 = vmatpush1.bf16.msra.mxu0 %v1877
        %1941 = vmatprep.subr.bf16.mxu0 0
        %1942 = vmatpush1.bf16.msra.mxu0 %v1878
        %1943 = vmatprep.mubr.bf16.mxu0 %v1710
        %1944 = vmatmul.mubr.bf16.gmra.mrb[0].mxu0 %v1709
        %v1945 = vpop.f32.mrb[0].mxu0
        %v1946 = vadd.f32 %v1765, %v1945
        %v1947 = vpop.f32.mrb[0].mxu0
        %v1948 = vpop.f32.mrb[0].mxu0
        %v1949 = vpop.f32.mrb[0].mxu0
        %1950 = vdwg.mxu0
        %1951 = vmatprep.subr.bf16.mxu0 0
        %1952 = vmatpush1.bf16.msra.mxu0 %v1879
        %1953 = vmatprep.subr.bf16.mxu0 0
        %1954 = vmatpush1.bf16.msra.mxu0 %v1880
        %1955 = vmatprep.subr.bf16.mxu0 0
        %1956 = vmatpush1.bf16.msra.mxu0 %v1881
        %1957 = vmatprep.subr.bf16.mxu0 0
        %1958 = vmatpush1.bf16.msra.mxu0 %v1882
        %1959 = vmatprep.subr.bf16.mxu0 0
        %1960 = vmatpush1.bf16.msra.mxu0 %v1883
        %1961 = vmatprep.subr.bf16.mxu0 0
        %1962 = vmatpush1.bf16.msra.mxu0 %v1884
        %1963 = vmatprep.subr.bf16.mxu0 0
        %1964 = vmatpush1.bf16.msra.mxu0 %v1885
        %1965 = vmatprep.subr.bf16.mxu0 0
        %1966 = vmatpush1.bf16.msra.mxu0 %v1886
        %1967 = vmatprep.subr.bf16.mxu0 0
        %1968 = vmatpush1.bf16.msra.mxu0 0
        %1969 = vmatprep.subr.bf16.mxu0 0
        %1970 = vmatpush1.bf16.msra.mxu0 0
        %1971 = vmatprep.subr.bf16.mxu0 0
        %1972 = vmatpush1.bf16.msra.mxu0 0
        %1973 = vmatprep.subr.bf16.mxu0 0
        %1974 = vmatpush1.bf16.msra.mxu0 0
        %1975 = vmatprep.subr.bf16.mxu0 0
        %1976 = vmatpush1.bf16.msra.mxu0 0
        %1977 = vmatprep.subr.bf16.mxu0 0
        %1978 = vmatpush1.bf16.msra.mxu0 0
        %1979 = vmatprep.subr.bf16.mxu0 0
        %1980 = vmatpush1.bf16.msra.mxu0 0
        %1981 = vmatprep.subr.bf16.mxu0 0
        %1982 = vmatpush1.bf16.msra.mxu0 0
        %1983 = vmatprep.mubr.bf16.mxu0 0
        %1984 = vmatmul.mubr.bf16.gmra.mrb[0].mxu0 %v1711
        %v1985 = vpop.f32.mrb[0].mxu0
        %v1986 = vadd.f32 %v1946, %v1985
        %v1987 = vpop.f32.mrb[0].mxu0
        %v1988 = vpop.f32.mrb[0].mxu0
        %v1989 = vpop.f32.mrb[0].mxu0
        %1990 = vdwg.mxu0
        %v1991 = vsub.f32 0.0, %v1986
        %v1992 = vmul.f32 %v1991, 1.442695
        %v1993 = vpow.pop %v1992
        %v1994 = vadd.f32 %v1993, 1.0
        %v1995 = vrcp.pop %v1994
        %v1996 = vmul.f32 1.0, %v1995
        %v1997 = vld [vmem:[%s9] sm:$0x1]
        %v1999 = vlaneseq
        %v2000 = vshrl.u32 %v1999, 7
        %v2001 = vsub.s32 0, %v2000
        %v2002 = vrot.slane %v1997, %v2001
        %v2004 = vmul.f32 %v2002, %v1996
        %v2005 = vsub.f32 1.0, %v1997
        %v2007 = vlaneseq
        %v2008 = vshrl.u32 %v2007, 7
        %v2009 = vsub.s32 0, %v2008
        %v2010 = vrot.slane %v2005, %v2009
        %v2012 = vmul.f32 %v2010, %v1986
        %v2013 = vadd.f32 %v2004, %v2012
        %2014 = vst [vmem:[%s533] sm:$0xff] %v2013
        %v2015 = vld [vmem:[#allocation11] sm:$0xff]
        %v2016 = vld [vmem:[#allocation11 + $0x8] sm:$0xff]
        %v2017 = vld [vmem:[#allocation11 + $0x10] sm:$0xff]
        %v2018 = vld [vmem:[#allocation11 + $0x18] sm:$0xff]
        %v2019 = vld [vmem:[#allocation11 + $0x20] sm:$0xff]
        %v2020 = vld [vmem:[#allocation11 + $0x28] sm:$0xff]
        %v2021 = vld [vmem:[#allocation11 + $0x30] sm:$0xff]
        %v2022 = vld [vmem:[#allocation11 + $0x38] sm:$0xff]
        %v2023 = vld [vmem:[#allocation11 + $0x40] sm:$0xff]
        %v2024 = vld [vmem:[#allocation11 + $0x48] sm:$0xff]
        %v2025 = vld [vmem:[#allocation11 + $0x50] sm:$0xff]
        %v2026 = vld [vmem:[#allocation11 + $0x58] sm:$0xff]
        %v2027 = vld [vmem:[#allocation11 + $0x60] sm:$0xff]
        %v2028 = vld [vmem:[#allocation11 + $0x68] sm:$0xff]
        %v2029 = vld [vmem:[#allocation11 + $0x70] sm:$0xff]
        %v2030 = vld [vmem:[#allocation11 + $0x78] sm:$0xff]
        %v2031 = vld [vmem:[#allocation11 + $0x80] sm:$0xff]
        %v2032 = vld [vmem:[#allocation11 + $0x88] sm:$0xff]
        %v2033 = vld [vmem:[#allocation11 + $0x90] sm:$0xff]
        %v2034 = vld [vmem:[#allocation11 + $0x98] sm:$0xff]
        %v2035 = vld [vmem:[#allocation11 + $0xa0] sm:$0xff]
        %v2036 = vld [vmem:[#allocation11 + $0xa8] sm:$0xff]
        %v2037 = vld [vmem:[#allocation11 + $0xb0] sm:$0xff]
        %v2038 = vld [vmem:[#allocation11 + $0xb8] sm:$0xff]
        %v2039 = vld [vmem:[#allocation11 + $0xc0] sm:$0xff]
        %v2040 = vld [vmem:[#allocation11 + $0xc8] sm:$0xff]
        %v2041 = vld [vmem:[#allocation11 + $0xd0] sm:$0xff]
        %v2042 = vld [vmem:[#allocation11 + $0xd8] sm:$0xff]
        %v2043 = vld [vmem:[#allocation11 + $0xe0] sm:$0xff]
        %v2044 = vld [vmem:[#allocation11 + $0xe8] sm:$0xff]
        %v2045 = vld [vmem:[#allocation11 + $0xf0] sm:$0xff]
        %v2046 = vld [vmem:[#allocation11 + $0xf8] sm:$0xff]
        %v2047 = vld [vmem:[#allocation11 + $0x100] sm:$0xff]
        %v2048 = vld [vmem:[#allocation11 + $0x108] sm:$0xff]
        %v2049 = vld [vmem:[#allocation11 + $0x110] sm:$0xff]
        %v2050 = vld [vmem:[#allocation11 + $0x118] sm:$0xff]
        %v2051 = vld [vmem:[#allocation11 + $0x120] sm:$0xff]
        %v2052 = vld [vmem:[#allocation11 + $0x128] sm:$0xff]
        %v2053 = vld [vmem:[#allocation11 + $0x130] sm:$0xff]
        %v2054 = vld [vmem:[#allocation11 + $0x138] sm:$0xff]
        %v2055 = vld [vmem:[#allocation11 + $0x140] sm:$0xff]
        %v2056 = vld [vmem:[#allocation11 + $0x148] sm:$0xff]
        %v2057 = vld [vmem:[#allocation11 + $0x150] sm:$0xff]
        %v2058 = vld [vmem:[#allocation11 + $0x158] sm:$0xff]
        %v2059 = vld [vmem:[#allocation11 + $0x160] sm:$0xff]
        %v2060 = vld [vmem:[#allocation11 + $0x168] sm:$0xff]
        %v2061 = vld [vmem:[#allocation11 + $0x170] sm:$0xff]
        %v2062 = vld [vmem:[#allocation11 + $0x178] sm:$0xff]
        %v2063 = vld [vmem:[#allocation11 + $0x180] sm:$0xff]
        %v2064 = vld [vmem:[#allocation11 + $0x188] sm:$0xff]
        %v2065 = vld [vmem:[#allocation11 + $0x190] sm:$0xff]
        %v2066 = vld [vmem:[#allocation11 + $0x198] sm:$0xff]
        %v2067 = vld [vmem:[#allocation11 + $0x1a0] sm:$0xff]
        %v2068 = vld [vmem:[#allocation11 + $0x1a8] sm:$0xff]
        %v2069 = vld [vmem:[#allocation11 + $0x1b0] sm:$0xff]
        %v2070 = vld [vmem:[#allocation11 + $0x1b8] sm:$0xff]
        %v2071 = vld [vmem:[#allocation11 + $0x1c0] sm:$0xff]
        %v2072 = vld [vmem:[#allocation11 + $0x1c8] sm:$0xff]
        %v2073 = vld [vmem:[#allocation11 + $0x1d0] sm:$0xff]
        %v2074 = vld [vmem:[#allocation11 + $0x1d8] sm:$0xff]
        %v2075 = vld [vmem:[#allocation11 + $0x1e0] sm:$0xff]
        %v2076 = vld [vmem:[#allocation11 + $0x1e8] sm:$0xff]
        %v2077 = vld [vmem:[#allocation11 + $0x1f0] sm:$0xff]
        %v2078 = vld [vmem:[#allocation11 + $0x1f8] sm:$0xff]
        %v2079 = vld [vmem:[#allocation11 + $0x200] sm:$0xff]
        %v2080 = vld [vmem:[#allocation11 + $0x208] sm:$0xff]
        %v2081 = vld [vmem:[#allocation11 + $0x210] sm:$0xff]
        %v2082 = vld [vmem:[#allocation11 + $0x218] sm:$0xff]
        %v2083 = vld [vmem:[#allocation11 + $0x220] sm:$0xff]
        %v2084 = vld [vmem:[#allocation11 + $0x228] sm:$0xff]
        %v2085 = vld [vmem:[#allocation11 + $0x230] sm:$0xff]
        %v2086 = vld [vmem:[#allocation11 + $0x238] sm:$0xff]
        %v2087 = vld [vmem:[#allocation11 + $0x240] sm:$0xff]
        %v2088 = vld [vmem:[#allocation11 + $0x248] sm:$0xff]
        %v2089 = vld [vmem:[#allocation11 + $0x250] sm:$0xff]
        %v2090 = vld [vmem:[#allocation11 + $0x258] sm:$0xff]
        %v2091 = vld [vmem:[#allocation11 + $0x260] sm:$0xff]
        %v2092 = vld [vmem:[#allocation11 + $0x268] sm:$0xff]
        %v2093 = vld [vmem:[#allocation11 + $0x270] sm:$0xff]
        %v2094 = vld [vmem:[#allocation11 + $0x278] sm:$0xff]
        %v2095 = vld [vmem:[#allocation11 + $0x280] sm:$0xff]
        %v2096 = vld [vmem:[#allocation11 + $0x288] sm:$0xff]
        %v2097 = vld [vmem:[#allocation11 + $0x290] sm:$0xff]
        %v2098 = vld [vmem:[#allocation11 + $0x298] sm:$0xff]
        %v2099 = vld [vmem:[#allocation11 + $0x2a0] sm:$0xff]
        %v2100 = vld [vmem:[#allocation11 + $0x2a8] sm:$0xff]
        %v2101 = vld [vmem:[#allocation11 + $0x2b0] sm:$0xff]
        %v2102 = vld [vmem:[#allocation11 + $0x2b8] sm:$0xff]
        %v2103 = vld [vmem:[#allocation11 + $0x2c0] sm:$0xff]
        %v2104 = vld [vmem:[#allocation11 + $0x2c8] sm:$0xff]
        %v2105 = vld [vmem:[#allocation11 + $0x2d0] sm:$0xff]
        %v2106 = vld [vmem:[#allocation11 + $0x2d8] sm:$0xff]
        %v2107 = vld [vmem:[#allocation11 + $0x2e0] sm:$0xff]
        %v2108 = vld [vmem:[#allocation11 + $0x2e8] sm:$0xff]
        %v2109 = vld [vmem:[#allocation11 + $0x2f0] sm:$0xff]
        %v2110 = vld [vmem:[#allocation11 + $0x2f8] sm:$0xff]
        %v2111 = vld [vmem:[#allocation11 + $0x300] sm:$0xff]
        %v2112 = vld [vmem:[#allocation11 + $0x308] sm:$0xff]
        %v2113 = vld [vmem:[#allocation11 + $0x310] sm:$0xff]
        %v2114 = vld [vmem:[#allocation11 + $0x318] sm:$0xff]
        %v2115 = vld [vmem:[#allocation11 + $0x320] sm:$0xff]
        %v2116 = vld [vmem:[#allocation11 + $0x328] sm:$0xff]
        %v2117 = vld [vmem:[#allocation11 + $0x330] sm:$0xff]
        %v2118 = vld [vmem:[#allocation11 + $0x338] sm:$0xff]
        %v2119 = vld [vmem:[#allocation11 + $0x340] sm:$0xff]
        %v2120 = vld [vmem:[#allocation11 + $0x348] sm:$0xff]
        %v2121 = vld [vmem:[#allocation11 + $0x350] sm:$0xff]
        %v2122 = vld [vmem:[#allocation11 + $0x358] sm:$0xff]
        %v2123 = vld [vmem:[#allocation11 + $0x360] sm:$0xff]
        %v2124 = vld [vmem:[#allocation11 + $0x368] sm:$0xff]
        %v2125 = vld [vmem:[#allocation11 + $0x370] sm:$0xff]
        %v2126 = vld [vmem:[#allocation11 + $0x378] sm:$0xff]
        %v2127 = vld [vmem:[#allocation11 + $0x380] sm:$0xff]
        %v2128 = vld [vmem:[#allocation11 + $0x388] sm:$0xff]
        %v2129 = vld [vmem:[#allocation11 + $0x390] sm:$0xff]
        %v2130 = vld [vmem:[#allocation11 + $0x398] sm:$0xff]
        %v2131 = vld [vmem:[#allocation11 + $0x3a0] sm:$0xff]
        %v2132 = vld [vmem:[#allocation11 + $0x3a8] sm:$0xff]
        %v2133 = vld [vmem:[#allocation11 + $0x3b0] sm:$0xff]
        %v2134 = vld [vmem:[#allocation11 + $0x3b8] sm:$0xff]
        %v2135 = vld [vmem:[#allocation11 + $0x3c0] sm:$0xff]
        %v2136 = vld [vmem:[#allocation11 + $0x3c8] sm:$0xff]
        %v2137 = vld [vmem:[#allocation11 + $0x3d0] sm:$0xff]
        %v2138 = vld [vmem:[#allocation11 + $0x3d8] sm:$0xff]
        %v2139 = vld [vmem:[#allocation11 + $0x3e0] sm:$0xff]
        %v2140 = vld [vmem:[#allocation11 + $0x3e8] sm:$0xff]
        %v2141 = vld [vmem:[#allocation11 + $0x3f0] sm:$0xff]
        %v2142 = vld [vmem:[#allocation11 + $0x3f8] sm:$0xff]
        %v2143 = vld [vmem:[#allocation11 + $0x400] sm:$0xff]
        %v2144 = vld [vmem:[#allocation11 + $0x408] sm:$0xff]
        %v2145 = vld [vmem:[#allocation11 + $0x410] sm:$0xff]
        %v2146 = vld [vmem:[#allocation11 + $0x418] sm:$0xff]
        %v2147 = vld [vmem:[#allocation11 + $0x420] sm:$0xff]
        %v2148 = vld [vmem:[#allocation11 + $0x428] sm:$0xff]
        %v2149 = vld [vmem:[#allocation11 + $0x430] sm:$0xff]
        %v2150 = vld [vmem:[#allocation11 + $0x438] sm:$0xff]
        %v2151 = vld [vmem:[#allocation11 + $0x440] sm:$0xff]
        %v2152 = vld [vmem:[#allocation11 + $0x448] sm:$0xff]
        %v2153 = vld [vmem:[#allocation11 + $0x450] sm:$0xff]
        %v2154 = vld [vmem:[#allocation11 + $0x458] sm:$0xff]
        %v2155 = vld [vmem:[#allocation11 + $0x460] sm:$0xff]
        %v2156 = vld [vmem:[#allocation11 + $0x468] sm:$0xff]
        %v2157 = vld [vmem:[#allocation11 + $0x470] sm:$0xff]
        %v2158 = vld [vmem:[#allocation11 + $0x478] sm:$0xff]
        %v2159 = vld [vmem:[#allocation11 + $0x480] sm:$0xff]
        %v2160 = vld [vmem:[#allocation11 + $0x488] sm:$0xff]
        %v2161 = vld [vmem:[#allocation11 + $0x490] sm:$0xff]
        %v2162 = vld [vmem:[#allocation11 + $0x498] sm:$0xff]
        %v2163 = vld [vmem:[#allocation11 + $0x4a0] sm:$0xff]
        %v2164 = vld [vmem:[#allocation11 + $0x4a8] sm:$0xff]
        %v2165 = vld [vmem:[#allocation11 + $0x4b0] sm:$0xff]
        %v2166 = vld [vmem:[#allocation11 + $0x4b8] sm:$0xff]
        %v2167 = vld [vmem:[#allocation11 + $0x4c0] sm:$0xff]
        %v2168 = vld [vmem:[#allocation11 + $0x4c8] sm:$0xff]
        %v2169 = vld [vmem:[#allocation11 + $0x4d0] sm:$0xff]
        %v2170 = vld [vmem:[#allocation11 + $0x4d8] sm:$0xff]
        %v2171 = vld [vmem:[#allocation11 + $0x4e0] sm:$0xff]
        %v2172 = vld [vmem:[#allocation11 + $0x4e8] sm:$0xff]
        %v2173 = vld [vmem:[#allocation11 + $0x4f0] sm:$0xff]
        %v2174 = vld [vmem:[#allocation11 + $0x4f8] sm:$0xff]
        %v2175 = vld [vmem:[#allocation11 + $0x500] sm:$0xff]
        %v2176 = vld [vmem:[#allocation11 + $0x508] sm:$0xff]
        %v2177 = vld [vmem:[#allocation11 + $0x510] sm:$0xff]
        %v2178 = vld [vmem:[#allocation11 + $0x518] sm:$0xff]
        %v2179 = vld [vmem:[#allocation11 + $0x520] sm:$0xff]
        %v2180 = vld [vmem:[#allocation11 + $0x528] sm:$0xff]
        %v2181 = vld [vmem:[#allocation11 + $0x530] sm:$0xff]
        %v2182 = vld [vmem:[#allocation11 + $0x538] sm:$0xff]
        %v2183 = vld [vmem:[#allocation11 + $0x540] sm:$0xff]
        %v2184 = vld [vmem:[#allocation11 + $0x548] sm:$0xff]
        %v2185 = vld [vmem:[#allocation11 + $0x550] sm:$0xff]
        %v2186 = vld [vmem:[#allocation11 + $0x558] sm:$0xff]
        %v2187 = vld [vmem:[#allocation11 + $0x560] sm:$0xff]
        %v2188 = vld [vmem:[#allocation11 + $0x568] sm:$0xff]
        %v2189 = vld [vmem:[#allocation11 + $0x570] sm:$0xff]
        %v2190 = vld [vmem:[#allocation11 + $0x578] sm:$0xff]
        %v2191 = vld [vmem:[#allocation11 + $0x580] sm:$0xff]
        %v2192 = vld [vmem:[#allocation11 + $0x588] sm:$0xff]
        %v2193 = vld [vmem:[#allocation11 + $0x590] sm:$0xff]
        %v2194 = vld [vmem:[#allocation11 + $0x598] sm:$0xff]
        %v2195 = vld [vmem:[#allocation11 + $0x5a0] sm:$0xff]
        %v2196 = vld [vmem:[#allocation11 + $0x5a8] sm:$0xff]
        %v2197 = vld [vmem:[#allocation11 + $0x5b0] sm:$0xff]
        %v2198 = vld [vmem:[#allocation11 + $0x5b8] sm:$0xff]
        %v2199 = vld [vmem:[#allocation11 + $0x5c0] sm:$0xff]
        %v2200 = vld [vmem:[#allocation11 + $0x5c8] sm:$0xff]
        %v2201 = vld [vmem:[#allocation11 + $0x5d0] sm:$0xff]
        %v2202 = vld [vmem:[#allocation11 + $0x5d8] sm:$0xff]
        %v2203 = vld [vmem:[#allocation11 + $0x5e0] sm:$0xff]
        %v2204 = vld [vmem:[#allocation11 + $0x5e8] sm:$0xff]
        %v2205 = vld [vmem:[#allocation11 + $0x5f0] sm:$0xff]
        %v2206 = vld [vmem:[#allocation11 + $0x5f8] sm:$0xff]
        %v2207 = vld [vmem:[#allocation11 + $0x600] sm:$0xff]
        %v2208 = vld [vmem:[#allocation11 + $0x608] sm:$0xff]
        %v2209 = vld [vmem:[#allocation11 + $0x610] sm:$0xff]
        %v2210 = vld [vmem:[#allocation11 + $0x618] sm:$0xff]
        %v2211 = vld [vmem:[#allocation11 + $0x620] sm:$0xff]
        %v2212 = vld [vmem:[#allocation11 + $0x628] sm:$0xff]
        %v2213 = vld [vmem:[#allocation11 + $0x630] sm:$0xff]
        %v2214 = vld [vmem:[#allocation11 + $0x638] sm:$0xff]
        %v2215 = vld [vmem:[#allocation11 + $0x640] sm:$0xff]
        %v2216 = vld [vmem:[#allocation11 + $0x648] sm:$0xff]
        %v2217 = vld [vmem:[#allocation11 + $0x650] sm:$0xff]
        %v2218 = vld [vmem:[#allocation11 + $0x658] sm:$0xff]
        %v2219 = vld [vmem:[#allocation11 + $0x660] sm:$0xff]
        %v2220 = vld [vmem:[#allocation11 + $0x668] sm:$0xff]
        %v2221 = vld [vmem:[#allocation11 + $0x670] sm:$0xff]
        %v2222 = vld [vmem:[#allocation11 + $0x678] sm:$0xff]
        %v2223 = vld [vmem:[#allocation11 + $0x680] sm:$0xff]
        %v2224 = vld [vmem:[#allocation11 + $0x688] sm:$0xff]
        %v2225 = vld [vmem:[#allocation11 + $0x690] sm:$0xff]
        %v2226 = vld [vmem:[#allocation11 + $0x698] sm:$0xff]
        %v2227 = vld [vmem:[#allocation11 + $0x6a0] sm:$0xff]
        %v2228 = vld [vmem:[#allocation11 + $0x6a8] sm:$0xff]
        %v2229 = vld [vmem:[#allocation11 + $0x6b0] sm:$0xff]
        %v2230 = vld [vmem:[#allocation11 + $0x6b8] sm:$0xff]
        %v2231 = vld [vmem:[#allocation11 + $0x6c0] sm:$0xff]
        %v2232 = vld [vmem:[#allocation11 + $0x6c8] sm:$0xff]
        %v2233 = vld [vmem:[#allocation11 + $0x6d0] sm:$0xff]
        %v2234 = vld [vmem:[#allocation11 + $0x6d8] sm:$0xff]
        %v2235 = vld [vmem:[#allocation11 + $0x6e0] sm:$0xff]
        %v2236 = vld [vmem:[#allocation11 + $0x6e8] sm:$0xff]
        %v2237 = vld [vmem:[#allocation11 + $0x6f0] sm:$0xff]
        %v2238 = vld [vmem:[#allocation11 + $0x6f8] sm:$0xff]
        %v2239 = vld [vmem:[#allocation11 + $0x700] sm:$0xff]
        %v2240 = vld [vmem:[#allocation11 + $0x708] sm:$0xff]
        %v2241 = vld [vmem:[#allocation11 + $0x710] sm:$0xff]
        %v2242 = vld [vmem:[#allocation11 + $0x718] sm:$0xff]
        %v2243 = vld [vmem:[#allocation11 + $0x720] sm:$0xff]
        %v2244 = vld [vmem:[#allocation11 + $0x728] sm:$0xff]
        %v2245 = vld [vmem:[#allocation11 + $0x730] sm:$0xff]
        %v2246 = vld [vmem:[#allocation11 + $0x738] sm:$0xff]
        %v2247 = vld [vmem:[#allocation11 + $0x740] sm:$0xff]
        %v2248 = vld [vmem:[#allocation11 + $0x748] sm:$0xff]
        %v2249 = vld [vmem:[#allocation11 + $0x750] sm:$0xff]
        %v2250 = vld [vmem:[#allocation11 + $0x758] sm:$0xff]
        %v2251 = vld [vmem:[#allocation11 + $0x760] sm:$0xff]
        %v2252 = vld [vmem:[#allocation11 + $0x768] sm:$0xff]
        %v2253 = vld [vmem:[#allocation11 + $0x770] sm:$0xff]
        %v2254 = vld [vmem:[#allocation11 + $0x778] sm:$0xff]
        %v2255 = vld [vmem:[#allocation11 + $0x780] sm:$0xff]
        %v2256 = vld [vmem:[#allocation11 + $0x788] sm:$0xff]
        %v2257 = vld [vmem:[#allocation11 + $0x790] sm:$0xff]
        %v2258 = vld [vmem:[#allocation11 + $0x798] sm:$0xff]
        %v2259 = vld [vmem:[#allocation11 + $0x7a0] sm:$0xff]
        %v2260 = vld [vmem:[#allocation11 + $0x7a8] sm:$0xff]
        %v2261 = vld [vmem:[#allocation11 + $0x7b0] sm:$0xff]
        %v2262 = vld [vmem:[#allocation11 + $0x7b8] sm:$0xff]
        %v2263 = vld [vmem:[#allocation11 + $0x7c0] sm:$0xff]
        %v2264 = vld [vmem:[#allocation11 + $0x7c8] sm:$0xff]
        %v2265 = vld [vmem:[#allocation11 + $0x7d0] sm:$0xff]
        %v2266 = vld [vmem:[#allocation11 + $0x7d8] sm:$0xff]
        %v2267 = vld [vmem:[#allocation11 + $0x7e0] sm:$0xff]
        %v2268 = vld [vmem:[#allocation11 + $0x7e8] sm:$0xff]
        %v2269 = vld [vmem:[#allocation11 + $0x7f0] sm:$0xff]
        %v2270 = vld [vmem:[#allocation11 + $0x7f8] sm:$0xff]
        %v2271 = vld [vmem:[%s11] sm:$0xff]
        %v2272 = vld [vmem:[%s11 + $0x8] sm:$0xff]
        %v2273 = vld [vmem:[%s11 + $0x10] sm:$0xff]
        %v2274 = vld [vmem:[%s11 + $0x18] sm:$0xff]
        %v2279 = vlaneseq
        %v2280 = vshrl.u32 %v2279, 7
        %v2281 = vsub.s32 0, %v2280
        %v2282 = vrot.slane %v2271, %v2281
        %v2283 = vlaneseq
        %v2284 = vshrl.u32 %v2283, 7
        %v2285 = vsub.s32 1, %v2284
        %v2286 = vrot.slane %v2271, %v2285
        %v2287 = vlaneseq
        %v2288 = vshrl.u32 %v2287, 7
        %v2289 = vsub.s32 2, %v2288
        %v2290 = vrot.slane %v2271, %v2289
        %v2291 = vlaneseq
        %v2292 = vshrl.u32 %v2291, 7
        %v2293 = vsub.s32 3, %v2292
        %v2294 = vrot.slane %v2271, %v2293
        %v2295 = vlaneseq
        %v2296 = vshrl.u32 %v2295, 7
        %v2297 = vsub.s32 4, %v2296
        %v2298 = vrot.slane %v2271, %v2297
        %v2299 = vlaneseq
        %v2300 = vshrl.u32 %v2299, 7
        %v2301 = vsub.s32 5, %v2300
        %v2302 = vrot.slane %v2271, %v2301
        %v2303 = vlaneseq
        %v2304 = vshrl.u32 %v2303, 7
        %v2305 = vsub.s32 6, %v2304
        %v2306 = vrot.slane %v2271, %v2305
        %v2307 = vlaneseq
        %v2308 = vshrl.u32 %v2307, 7
        %v2309 = vsub.s32 7, %v2308
        %v2310 = vrot.slane %v2271, %v2309
        %v2311 = vlaneseq
        %v2312 = vshrl.u32 %v2311, 7
        %v2313 = vsub.s32 0, %v2312
        %v2314 = vrot.slane %v2272, %v2313
        %v2315 = vlaneseq
        %v2316 = vshrl.u32 %v2315, 7
        %v2317 = vsub.s32 1, %v2316
        %v2318 = vrot.slane %v2272, %v2317
        %v2319 = vlaneseq
        %v2320 = vshrl.u32 %v2319, 7
        %v2321 = vsub.s32 2, %v2320
        %v2322 = vrot.slane %v2272, %v2321
        %v2323 = vlaneseq
        %v2324 = vshrl.u32 %v2323, 7
        %v2325 = vsub.s32 3, %v2324
        %v2326 = vrot.slane %v2272, %v2325
        %v2327 = vlaneseq
        %v2328 = vshrl.u32 %v2327, 7
        %v2329 = vsub.s32 4, %v2328
        %v2330 = vrot.slane %v2272, %v2329
        %v2331 = vlaneseq
        %v2332 = vshrl.u32 %v2331, 7
        %v2333 = vsub.s32 5, %v2332
        %v2334 = vrot.slane %v2272, %v2333
        %v2335 = vlaneseq
        %v2336 = vshrl.u32 %v2335, 7
        %v2337 = vsub.s32 6, %v2336
        %v2338 = vrot.slane %v2272, %v2337
        %v2339 = vlaneseq
        %v2340 = vshrl.u32 %v2339, 7
        %v2341 = vsub.s32 7, %v2340
        %v2342 = vrot.slane %v2272, %v2341
        %v2343 = vlaneseq
        %v2344 = vshrl.u32 %v2343, 7
        %v2345 = vsub.s32 0, %v2344
        %v2346 = vrot.slane %v2273, %v2345
        %v2347 = vlaneseq
        %v2348 = vshrl.u32 %v2347, 7
        %v2349 = vsub.s32 1, %v2348
        %v2350 = vrot.slane %v2273, %v2349
        %v2351 = vlaneseq
        %v2352 = vshrl.u32 %v2351, 7
        %v2353 = vsub.s32 2, %v2352
        %v2354 = vrot.slane %v2273, %v2353
        %v2355 = vlaneseq
        %v2356 = vshrl.u32 %v2355, 7
        %v2357 = vsub.s32 3, %v2356
        %v2358 = vrot.slane %v2273, %v2357
        %v2359 = vlaneseq
        %v2360 = vshrl.u32 %v2359, 7
        %v2361 = vsub.s32 4, %v2360
        %v2362 = vrot.slane %v2273, %v2361
        %v2363 = vlaneseq
        %v2364 = vshrl.u32 %v2363, 7
        %v2365 = vsub.s32 5, %v2364
        %v2366 = vrot.slane %v2273, %v2365
        %v2367 = vlaneseq
        %v2368 = vshrl.u32 %v2367, 7
        %v2369 = vsub.s32 6, %v2368
        %v2370 = vrot.slane %v2273, %v2369
        %v2371 = vlaneseq
        %v2372 = vshrl.u32 %v2371, 7
        %v2373 = vsub.s32 7, %v2372
        %v2374 = vrot.slane %v2273, %v2373
        %v2375 = vlaneseq
        %v2376 = vshrl.u32 %v2375, 7
        %v2377 = vsub.s32 0, %v2376
        %v2378 = vrot.slane %v2274, %v2377
        %v2379 = vlaneseq
        %v2380 = vshrl.u32 %v2379, 7
        %v2381 = vsub.s32 1, %v2380
        %v2382 = vrot.slane %v2274, %v2381
        %v2383 = vlaneseq
        %v2384 = vshrl.u32 %v2383, 7
        %v2385 = vsub.s32 2, %v2384
        %v2386 = vrot.slane %v2274, %v2385
        %v2387 = vlaneseq
        %v2388 = vshrl.u32 %v2387, 7
        %v2389 = vsub.s32 3, %v2388
        %v2390 = vrot.slane %v2274, %v2389
        %v2391 = vlaneseq
        %v2392 = vshrl.u32 %v2391, 7
        %v2393 = vsub.s32 4, %v2392
        %v2394 = vrot.slane %v2274, %v2393
        %v2395 = vlaneseq
        %v2396 = vshrl.u32 %v2395, 7
        %v2397 = vsub.s32 5, %v2396
        %v2398 = vrot.slane %v2274, %v2397
        %v2399 = vlaneseq
        %v2400 = vshrl.u32 %v2399, 7
        %v2401 = vsub.s32 6, %v2400
        %v2402 = vrot.slane %v2274, %v2401
        %v2403 = vlaneseq
        %v2404 = vshrl.u32 %v2403, 7
        %v2405 = vsub.s32 7, %v2404
        %v2406 = vrot.slane %v2274, %v2405
        %v2695 = vunpack.c.l.b16 %v2015
        %v2696 = vunpack.c.h.b16 %v2015
        %v2697 = vunpack.c.l.b16 %v2016
        %v2698 = vunpack.c.h.b16 %v2016
        %v2699 = vunpack.c.l.b16 %v2017
        %v2700 = vunpack.c.h.b16 %v2017
        %v2701 = vunpack.c.l.b16 %v2018
        %v2702 = vunpack.c.h.b16 %v2018
        %v2703 = vunpack.c.l.b16 %v2019
        %v2704 = vunpack.c.h.b16 %v2019
        %v2705 = vunpack.c.l.b16 %v2020
        %v2706 = vunpack.c.h.b16 %v2020
        %v2707 = vunpack.c.l.b16 %v2021
        %v2708 = vunpack.c.h.b16 %v2021
        %v2709 = vunpack.c.l.b16 %v2022
        %v2710 = vunpack.c.h.b16 %v2022
        %v2711 = vunpack.c.l.b16 %v2023
        %v2712 = vunpack.c.h.b16 %v2023
        %v2713 = vunpack.c.l.b16 %v2024
        %v2714 = vunpack.c.h.b16 %v2024
        %v2715 = vunpack.c.l.b16 %v2025
        %v2716 = vunpack.c.h.b16 %v2025
        %v2717 = vunpack.c.l.b16 %v2026
        %v2718 = vunpack.c.h.b16 %v2026
        %v2719 = vunpack.c.l.b16 %v2027
        %v2720 = vunpack.c.h.b16 %v2027
        %v2721 = vunpack.c.l.b16 %v2028
        %v2722 = vunpack.c.h.b16 %v2028
        %v2723 = vunpack.c.l.b16 %v2029
        %v2724 = vunpack.c.h.b16 %v2029
        %v2725 = vunpack.c.l.b16 %v2030
        %v2726 = vunpack.c.h.b16 %v2030
        %v2727 = vunpack.c.l.b16 %v2031
        %v2728 = vunpack.c.h.b16 %v2031
        %v2729 = vunpack.c.l.b16 %v2032
        %v2730 = vunpack.c.h.b16 %v2032
        %v2731 = vunpack.c.l.b16 %v2033
        %v2732 = vunpack.c.h.b16 %v2033
        %v2733 = vunpack.c.l.b16 %v2034
        %v2734 = vunpack.c.h.b16 %v2034
        %v2735 = vunpack.c.l.b16 %v2035
        %v2736 = vunpack.c.h.b16 %v2035
        %v2737 = vunpack.c.l.b16 %v2036
        %v2738 = vunpack.c.h.b16 %v2036
        %v2739 = vunpack.c.l.b16 %v2037
        %v2740 = vunpack.c.h.b16 %v2037
        %v2741 = vunpack.c.l.b16 %v2038
        %v2742 = vunpack.c.h.b16 %v2038
        %v2743 = vunpack.c.l.b16 %v2039
        %v2744 = vunpack.c.h.b16 %v2039
        %v2745 = vunpack.c.l.b16 %v2040
        %v2746 = vunpack.c.h.b16 %v2040
        %v2747 = vunpack.c.l.b16 %v2041
        %v2748 = vunpack.c.h.b16 %v2041
        %v2749 = vunpack.c.l.b16 %v2042
        %v2750 = vunpack.c.h.b16 %v2042
        %v2751 = vunpack.c.l.b16 %v2043
        %v2752 = vunpack.c.h.b16 %v2043
        %v2753 = vunpack.c.l.b16 %v2044
        %v2754 = vunpack.c.h.b16 %v2044
        %v2755 = vunpack.c.l.b16 %v2045
        %v2756 = vunpack.c.h.b16 %v2045
        %v2757 = vunpack.c.l.b16 %v2046
        %v2758 = vunpack.c.h.b16 %v2046
        %v2759 = vunpack.c.l.b16 %v2047
        %v2760 = vunpack.c.h.b16 %v2047
        %v2761 = vunpack.c.l.b16 %v2048
        %v2762 = vunpack.c.h.b16 %v2048
        %v2763 = vunpack.c.l.b16 %v2049
        %v2764 = vunpack.c.h.b16 %v2049
        %v2765 = vunpack.c.l.b16 %v2050
        %v2766 = vunpack.c.h.b16 %v2050
        %v2767 = vunpack.c.l.b16 %v2051
        %v2768 = vunpack.c.h.b16 %v2051
        %v2769 = vunpack.c.l.b16 %v2052
        %v2770 = vunpack.c.h.b16 %v2052
        %v2771 = vunpack.c.l.b16 %v2053
        %v2772 = vunpack.c.h.b16 %v2053
        %v2773 = vunpack.c.l.b16 %v2054
        %v2774 = vunpack.c.h.b16 %v2054
        %v2775 = vunpack.c.l.b16 %v2055
        %v2776 = vunpack.c.h.b16 %v2055
        %v2777 = vunpack.c.l.b16 %v2056
        %v2778 = vunpack.c.h.b16 %v2056
        %v2779 = vunpack.c.l.b16 %v2057
        %v2780 = vunpack.c.h.b16 %v2057
        %v2781 = vunpack.c.l.b16 %v2058
        %v2782 = vunpack.c.h.b16 %v2058
        %v2783 = vunpack.c.l.b16 %v2059
        %v2784 = vunpack.c.h.b16 %v2059
        %v2785 = vunpack.c.l.b16 %v2060
        %v2786 = vunpack.c.h.b16 %v2060
        %v2787 = vunpack.c.l.b16 %v2061
        %v2788 = vunpack.c.h.b16 %v2061
        %v2789 = vunpack.c.l.b16 %v2062
        %v2790 = vunpack.c.h.b16 %v2062
        %v2791 = vunpack.c.l.b16 %v2063
        %v2792 = vunpack.c.h.b16 %v2063
        %v2793 = vunpack.c.l.b16 %v2064
        %v2794 = vunpack.c.h.b16 %v2064
        %v2795 = vunpack.c.l.b16 %v2065
        %v2796 = vunpack.c.h.b16 %v2065
        %v2797 = vunpack.c.l.b16 %v2066
        %v2798 = vunpack.c.h.b16 %v2066
        %v2799 = vunpack.c.l.b16 %v2067
        %v2800 = vunpack.c.h.b16 %v2067
        %v2801 = vunpack.c.l.b16 %v2068
        %v2802 = vunpack.c.h.b16 %v2068
        %v2803 = vunpack.c.l.b16 %v2069
        %v2804 = vunpack.c.h.b16 %v2069
        %v2805 = vunpack.c.l.b16 %v2070
        %v2806 = vunpack.c.h.b16 %v2070
        %v2807 = vunpack.c.l.b16 %v2071
        %v2808 = vunpack.c.h.b16 %v2071
        %v2809 = vunpack.c.l.b16 %v2072
        %v2810 = vunpack.c.h.b16 %v2072
        %v2811 = vunpack.c.l.b16 %v2073
        %v2812 = vunpack.c.h.b16 %v2073
        %v2813 = vunpack.c.l.b16 %v2074
        %v2814 = vunpack.c.h.b16 %v2074
        %v2815 = vunpack.c.l.b16 %v2075
        %v2816 = vunpack.c.h.b16 %v2075
        %v2817 = vunpack.c.l.b16 %v2076
        %v2818 = vunpack.c.h.b16 %v2076
        %v2819 = vunpack.c.l.b16 %v2077
        %v2820 = vunpack.c.h.b16 %v2077
        %v2821 = vunpack.c.l.b16 %v2078
        %v2822 = vunpack.c.h.b16 %v2078
        %v2823 = vunpack.c.l.b16 %v2079
        %v2824 = vunpack.c.h.b16 %v2079
        %v2825 = vunpack.c.l.b16 %v2080
        %v2826 = vunpack.c.h.b16 %v2080
        %v2827 = vunpack.c.l.b16 %v2081
        %v2828 = vunpack.c.h.b16 %v2081
        %v2829 = vunpack.c.l.b16 %v2082
        %v2830 = vunpack.c.h.b16 %v2082
        %v2831 = vunpack.c.l.b16 %v2083
        %v2832 = vunpack.c.h.b16 %v2083
        %v2833 = vunpack.c.l.b16 %v2084
        %v2834 = vunpack.c.h.b16 %v2084
        %v2835 = vunpack.c.l.b16 %v2085
        %v2836 = vunpack.c.h.b16 %v2085
        %v2837 = vunpack.c.l.b16 %v2086
        %v2838 = vunpack.c.h.b16 %v2086
        %v2839 = vunpack.c.l.b16 %v2087
        %v2840 = vunpack.c.h.b16 %v2087
        %v2841 = vunpack.c.l.b16 %v2088
        %v2842 = vunpack.c.h.b16 %v2088
        %v2843 = vunpack.c.l.b16 %v2089
        %v2844 = vunpack.c.h.b16 %v2089
        %v2845 = vunpack.c.l.b16 %v2090
        %v2846 = vunpack.c.h.b16 %v2090
        %v2847 = vunpack.c.l.b16 %v2091
        %v2848 = vunpack.c.h.b16 %v2091
        %v2849 = vunpack.c.l.b16 %v2092
        %v2850 = vunpack.c.h.b16 %v2092
        %v2851 = vunpack.c.l.b16 %v2093
        %v2852 = vunpack.c.h.b16 %v2093
        %v2853 = vunpack.c.l.b16 %v2094
        %v2854 = vunpack.c.h.b16 %v2094
        %v2855 = vunpack.c.l.b16 %v2095
        %v2856 = vunpack.c.h.b16 %v2095
        %v2857 = vunpack.c.l.b16 %v2096
        %v2858 = vunpack.c.h.b16 %v2096
        %v2859 = vunpack.c.l.b16 %v2097
        %v2860 = vunpack.c.h.b16 %v2097
        %v2861 = vunpack.c.l.b16 %v2098
        %v2862 = vunpack.c.h.b16 %v2098
        %v2863 = vunpack.c.l.b16 %v2099
        %v2864 = vunpack.c.h.b16 %v2099
        %v2865 = vunpack.c.l.b16 %v2100
        %v2866 = vunpack.c.h.b16 %v2100
        %v2867 = vunpack.c.l.b16 %v2101
        %v2868 = vunpack.c.h.b16 %v2101
        %v2869 = vunpack.c.l.b16 %v2102
        %v2870 = vunpack.c.h.b16 %v2102
        %v2871 = vunpack.c.l.b16 %v2103
        %v2872 = vunpack.c.h.b16 %v2103
        %v2873 = vunpack.c.l.b16 %v2104
        %v2874 = vunpack.c.h.b16 %v2104
        %v2875 = vunpack.c.l.b16 %v2105
        %v2876 = vunpack.c.h.b16 %v2105
        %v2877 = vunpack.c.l.b16 %v2106
        %v2878 = vunpack.c.h.b16 %v2106
        %v2879 = vunpack.c.l.b16 %v2107
        %v2880 = vunpack.c.h.b16 %v2107
        %v2881 = vunpack.c.l.b16 %v2108
        %v2882 = vunpack.c.h.b16 %v2108
        %v2883 = vunpack.c.l.b16 %v2109
        %v2884 = vunpack.c.h.b16 %v2109
        %v2885 = vunpack.c.l.b16 %v2110
        %v2886 = vunpack.c.h.b16 %v2110
        %v2887 = vunpack.c.l.b16 %v2111
        %v2888 = vunpack.c.h.b16 %v2111
        %v2889 = vunpack.c.l.b16 %v2112
        %v2890 = vunpack.c.h.b16 %v2112
        %v2891 = vunpack.c.l.b16 %v2113
        %v2892 = vunpack.c.h.b16 %v2113
        %v2893 = vunpack.c.l.b16 %v2114
        %v2894 = vunpack.c.h.b16 %v2114
        %v2895 = vunpack.c.l.b16 %v2115
        %v2896 = vunpack.c.h.b16 %v2115
        %v2897 = vunpack.c.l.b16 %v2116
        %v2898 = vunpack.c.h.b16 %v2116
        %v2899 = vunpack.c.l.b16 %v2117
        %v2900 = vunpack.c.h.b16 %v2117
        %v2901 = vunpack.c.l.b16 %v2118
        %v2902 = vunpack.c.h.b16 %v2118
        %v2903 = vunpack.c.l.b16 %v2119
        %v2904 = vunpack.c.h.b16 %v2119
        %v2905 = vunpack.c.l.b16 %v2120
        %v2906 = vunpack.c.h.b16 %v2120
        %v2907 = vunpack.c.l.b16 %v2121
        %v2908 = vunpack.c.h.b16 %v2121
        %v2909 = vunpack.c.l.b16 %v2122
        %v2910 = vunpack.c.h.b16 %v2122
        %v2911 = vunpack.c.l.b16 %v2123
        %v2912 = vunpack.c.h.b16 %v2123
        %v2913 = vunpack.c.l.b16 %v2124
        %v2914 = vunpack.c.h.b16 %v2124
        %v2915 = vunpack.c.l.b16 %v2125
        %v2916 = vunpack.c.h.b16 %v2125
        %v2917 = vunpack.c.l.b16 %v2126
        %v2918 = vunpack.c.h.b16 %v2126
        %v2919 = vunpack.c.l.b16 %v2127
        %v2920 = vunpack.c.h.b16 %v2127
        %v2921 = vunpack.c.l.b16 %v2128
        %v2922 = vunpack.c.h.b16 %v2128
        %v2923 = vunpack.c.l.b16 %v2129
        %v2924 = vunpack.c.h.b16 %v2129
        %v2925 = vunpack.c.l.b16 %v2130
        %v2926 = vunpack.c.h.b16 %v2130
        %v2927 = vunpack.c.l.b16 %v2131
        %v2928 = vunpack.c.h.b16 %v2131
        %v2929 = vunpack.c.l.b16 %v2132
        %v2930 = vunpack.c.h.b16 %v2132
        %v2931 = vunpack.c.l.b16 %v2133
        %v2932 = vunpack.c.h.b16 %v2133
        %v2933 = vunpack.c.l.b16 %v2134
        %v2934 = vunpack.c.h.b16 %v2134
        %v2935 = vunpack.c.l.b16 %v2135
        %v2936 = vunpack.c.h.b16 %v2135
        %v2937 = vunpack.c.l.b16 %v2136
        %v2938 = vunpack.c.h.b16 %v2136
        %v2939 = vunpack.c.l.b16 %v2137
        %v2940 = vunpack.c.h.b16 %v2137
        %v2941 = vunpack.c.l.b16 %v2138
        %v2942 = vunpack.c.h.b16 %v2138
        %v2943 = vunpack.c.l.b16 %v2139
        %v2944 = vunpack.c.h.b16 %v2139
        %v2945 = vunpack.c.l.b16 %v2140
        %v2946 = vunpack.c.h.b16 %v2140
        %v2947 = vunpack.c.l.b16 %v2141
        %v2948 = vunpack.c.h.b16 %v2141
        %v2949 = vunpack.c.l.b16 %v2142
        %v2950 = vunpack.c.h.b16 %v2142
        %v2951 = vunpack.c.l.b16 %v2143
        %v2952 = vunpack.c.h.b16 %v2143
        %v2953 = vunpack.c.l.b16 %v2144
        %v2954 = vunpack.c.h.b16 %v2144
        %v2955 = vunpack.c.l.b16 %v2145
        %v2956 = vunpack.c.h.b16 %v2145
        %v2957 = vunpack.c.l.b16 %v2146
        %v2958 = vunpack.c.h.b16 %v2146
        %v2959 = vunpack.c.l.b16 %v2147
        %v2960 = vunpack.c.h.b16 %v2147
        %v2961 = vunpack.c.l.b16 %v2148
        %v2962 = vunpack.c.h.b16 %v2148
        %v2963 = vunpack.c.l.b16 %v2149
        %v2964 = vunpack.c.h.b16 %v2149
        %v2965 = vunpack.c.l.b16 %v2150
        %v2966 = vunpack.c.h.b16 %v2150
        %v2967 = vunpack.c.l.b16 %v2151
        %v2968 = vunpack.c.h.b16 %v2151
        %v2969 = vunpack.c.l.b16 %v2152
        %v2970 = vunpack.c.h.b16 %v2152
        %v2971 = vunpack.c.l.b16 %v2153
        %v2972 = vunpack.c.h.b16 %v2153
        %v2973 = vunpack.c.l.b16 %v2154
        %v2974 = vunpack.c.h.b16 %v2154
        %v2975 = vunpack.c.l.b16 %v2155
        %v2976 = vunpack.c.h.b16 %v2155
        %v2977 = vunpack.c.l.b16 %v2156
        %v2978 = vunpack.c.h.b16 %v2156
        %v2979 = vunpack.c.l.b16 %v2157
        %v2980 = vunpack.c.h.b16 %v2157
        %v2981 = vunpack.c.l.b16 %v2158
        %v2982 = vunpack.c.h.b16 %v2158
        %v2983 = vunpack.c.l.b16 %v2159
        %v2984 = vunpack.c.h.b16 %v2159
        %v2985 = vunpack.c.l.b16 %v2160
        %v2986 = vunpack.c.h.b16 %v2160
        %v2987 = vunpack.c.l.b16 %v2161
        %v2988 = vunpack.c.h.b16 %v2161
        %v2989 = vunpack.c.l.b16 %v2162
        %v2990 = vunpack.c.h.b16 %v2162
        %v2991 = vunpack.c.l.b16 %v2163
        %v2992 = vunpack.c.h.b16 %v2163
        %v2993 = vunpack.c.l.b16 %v2164
        %v2994 = vunpack.c.h.b16 %v2164
        %v2995 = vunpack.c.l.b16 %v2165
        %v2996 = vunpack.c.h.b16 %v2165
        %v2997 = vunpack.c.l.b16 %v2166
        %v2998 = vunpack.c.h.b16 %v2166
        %v2999 = vunpack.c.l.b16 %v2167
        %v3000 = vunpack.c.h.b16 %v2167
        %v3001 = vunpack.c.l.b16 %v2168
        %v3002 = vunpack.c.h.b16 %v2168
        %v3003 = vunpack.c.l.b16 %v2169
        %v3004 = vunpack.c.h.b16 %v2169
        %v3005 = vunpack.c.l.b16 %v2170
        %v3006 = vunpack.c.h.b16 %v2170
        %v3007 = vunpack.c.l.b16 %v2171
        %v3008 = vunpack.c.h.b16 %v2171
        %v3009 = vunpack.c.l.b16 %v2172
        %v3010 = vunpack.c.h.b16 %v2172
        %v3011 = vunpack.c.l.b16 %v2173
        %v3012 = vunpack.c.h.b16 %v2173
        %v3013 = vunpack.c.l.b16 %v2174
        %v3014 = vunpack.c.h.b16 %v2174
        %v3015 = vunpack.c.l.b16 %v2175
        %v3016 = vunpack.c.h.b16 %v2175
        %v3017 = vunpack.c.l.b16 %v2176
        %v3018 = vunpack.c.h.b16 %v2176
        %v3019 = vunpack.c.l.b16 %v2177
        %v3020 = vunpack.c.h.b16 %v2177
        %v3021 = vunpack.c.l.b16 %v2178
        %v3022 = vunpack.c.h.b16 %v2178
        %v3023 = vunpack.c.l.b16 %v2179
        %v3024 = vunpack.c.h.b16 %v2179
        %v3025 = vunpack.c.l.b16 %v2180
        %v3026 = vunpack.c.h.b16 %v2180
        %v3027 = vunpack.c.l.b16 %v2181
        %v3028 = vunpack.c.h.b16 %v2181
        %v3029 = vunpack.c.l.b16 %v2182
        %v3030 = vunpack.c.h.b16 %v2182
        %v3031 = vunpack.c.l.b16 %v2183
        %v3032 = vunpack.c.h.b16 %v2183
        %v3033 = vunpack.c.l.b16 %v2184
        %v3034 = vunpack.c.h.b16 %v2184
        %v3035 = vunpack.c.l.b16 %v2185
        %v3036 = vunpack.c.h.b16 %v2185
        %v3037 = vunpack.c.l.b16 %v2186
        %v3038 = vunpack.c.h.b16 %v2186
        %v3039 = vunpack.c.l.b16 %v2187
        %v3040 = vunpack.c.h.b16 %v2187
        %v3041 = vunpack.c.l.b16 %v2188
        %v3042 = vunpack.c.h.b16 %v2188
        %v3043 = vunpack.c.l.b16 %v2189
        %v3044 = vunpack.c.h.b16 %v2189
        %v3045 = vunpack.c.l.b16 %v2190
        %v3046 = vunpack.c.h.b16 %v2190
        %v3047 = vunpack.c.l.b16 %v2191
        %v3048 = vunpack.c.h.b16 %v2191
        %v3049 = vunpack.c.l.b16 %v2192
        %v3050 = vunpack.c.h.b16 %v2192
        %v3051 = vunpack.c.l.b16 %v2193
        %v3052 = vunpack.c.h.b16 %v2193
        %v3053 = vunpack.c.l.b16 %v2194
        %v3054 = vunpack.c.h.b16 %v2194
        %v3055 = vunpack.c.l.b16 %v2195
        %v3056 = vunpack.c.h.b16 %v2195
        %v3057 = vunpack.c.l.b16 %v2196
        %v3058 = vunpack.c.h.b16 %v2196
        %v3059 = vunpack.c.l.b16 %v2197
        %v3060 = vunpack.c.h.b16 %v2197
        %v3061 = vunpack.c.l.b16 %v2198
        %v3062 = vunpack.c.h.b16 %v2198
        %v3063 = vunpack.c.l.b16 %v2199
        %v3064 = vunpack.c.h.b16 %v2199
        %v3065 = vunpack.c.l.b16 %v2200
        %v3066 = vunpack.c.h.b16 %v2200
        %v3067 = vunpack.c.l.b16 %v2201
        %v3068 = vunpack.c.h.b16 %v2201
        %v3069 = vunpack.c.l.b16 %v2202
        %v3070 = vunpack.c.h.b16 %v2202
        %v3071 = vunpack.c.l.b16 %v2203
        %v3072 = vunpack.c.h.b16 %v2203
        %v3073 = vunpack.c.l.b16 %v2204
        %v3074 = vunpack.c.h.b16 %v2204
        %v3075 = vunpack.c.l.b16 %v2205
        %v3076 = vunpack.c.h.b16 %v2205
        %v3077 = vunpack.c.l.b16 %v2206
        %v3078 = vunpack.c.h.b16 %v2206
        %v3079 = vunpack.c.l.b16 %v2207
        %v3080 = vunpack.c.h.b16 %v2207
        %v3081 = vunpack.c.l.b16 %v2208
        %v3082 = vunpack.c.h.b16 %v2208
        %v3083 = vunpack.c.l.b16 %v2209
        %v3084 = vunpack.c.h.b16 %v2209
        %v3085 = vunpack.c.l.b16 %v2210
        %v3086 = vunpack.c.h.b16 %v2210
        %v3087 = vunpack.c.l.b16 %v2211
        %v3088 = vunpack.c.h.b16 %v2211
        %v3089 = vunpack.c.l.b16 %v2212
        %v3090 = vunpack.c.h.b16 %v2212
        %v3091 = vunpack.c.l.b16 %v2213
        %v3092 = vunpack.c.h.b16 %v2213
        %v3093 = vunpack.c.l.b16 %v2214
        %v3094 = vunpack.c.h.b16 %v2214
        %v3095 = vunpack.c.l.b16 %v2215
        %v3096 = vunpack.c.h.b16 %v2215
        %v3097 = vunpack.c.l.b16 %v2216
        %v3098 = vunpack.c.h.b16 %v2216
        %v3099 = vunpack.c.l.b16 %v2217
        %v3100 = vunpack.c.h.b16 %v2217
        %v3101 = vunpack.c.l.b16 %v2218
        %v3102 = vunpack.c.h.b16 %v2218
        %v3103 = vunpack.c.l.b16 %v2219
        %v3104 = vunpack.c.h.b16 %v2219
        %v3105 = vunpack.c.l.b16 %v2220
        %v3106 = vunpack.c.h.b16 %v2220
        %v3107 = vunpack.c.l.b16 %v2221
        %v3108 = vunpack.c.h.b16 %v2221
        %v3109 = vunpack.c.l.b16 %v2222
        %v3110 = vunpack.c.h.b16 %v2222
        %v3111 = vunpack.c.l.b16 %v2223
        %v3112 = vunpack.c.h.b16 %v2223
        %v3113 = vunpack.c.l.b16 %v2224
        %v3114 = vunpack.c.h.b16 %v2224
        %v3115 = vunpack.c.l.b16 %v2225
        %v3116 = vunpack.c.h.b16 %v2225
        %v3117 = vunpack.c.l.b16 %v2226
        %v3118 = vunpack.c.h.b16 %v2226
        %v3119 = vunpack.c.l.b16 %v2227
        %v3120 = vunpack.c.h.b16 %v2227
        %v3121 = vunpack.c.l.b16 %v2228
        %v3122 = vunpack.c.h.b16 %v2228
        %v3123 = vunpack.c.l.b16 %v2229
        %v3124 = vunpack.c.h.b16 %v2229
        %v3125 = vunpack.c.l.b16 %v2230
        %v3126 = vunpack.c.h.b16 %v2230
        %v3127 = vunpack.c.l.b16 %v2231
        %v3128 = vunpack.c.h.b16 %v2231
        %v3129 = vunpack.c.l.b16 %v2232
        %v3130 = vunpack.c.h.b16 %v2232
        %v3131 = vunpack.c.l.b16 %v2233
        %v3132 = vunpack.c.h.b16 %v2233
        %v3133 = vunpack.c.l.b16 %v2234
        %v3134 = vunpack.c.h.b16 %v2234
        %v3135 = vunpack.c.l.b16 %v2235
        %v3136 = vunpack.c.h.b16 %v2235
        %v3137 = vunpack.c.l.b16 %v2236
        %v3138 = vunpack.c.h.b16 %v2236
        %v3139 = vunpack.c.l.b16 %v2237
        %v3140 = vunpack.c.h.b16 %v2237
        %v3141 = vunpack.c.l.b16 %v2238
        %v3142 = vunpack.c.h.b16 %v2238
        %v3143 = vunpack.c.l.b16 %v2239
        %v3144 = vunpack.c.h.b16 %v2239
        %v3145 = vunpack.c.l.b16 %v2240
        %v3146 = vunpack.c.h.b16 %v2240
        %v3147 = vunpack.c.l.b16 %v2241
        %v3148 = vunpack.c.h.b16 %v2241
        %v3149 = vunpack.c.l.b16 %v2242
        %v3150 = vunpack.c.h.b16 %v2242
        %v3151 = vunpack.c.l.b16 %v2243
        %v3152 = vunpack.c.h.b16 %v2243
        %v3153 = vunpack.c.l.b16 %v2244
        %v3154 = vunpack.c.h.b16 %v2244
        %v3155 = vunpack.c.l.b16 %v2245
        %v3156 = vunpack.c.h.b16 %v2245
        %v3157 = vunpack.c.l.b16 %v2246
        %v3158 = vunpack.c.h.b16 %v2246
        %v3159 = vunpack.c.l.b16 %v2247
        %v3160 = vunpack.c.h.b16 %v2247
        %v3161 = vunpack.c.l.b16 %v2248
        %v3162 = vunpack.c.h.b16 %v2248
        %v3163 = vunpack.c.l.b16 %v2249
        %v3164 = vunpack.c.h.b16 %v2249
        %v3165 = vunpack.c.l.b16 %v2250
        %v3166 = vunpack.c.h.b16 %v2250
        %v3167 = vunpack.c.l.b16 %v2251
        %v3168 = vunpack.c.h.b16 %v2251
        %v3169 = vunpack.c.l.b16 %v2252
        %v3170 = vunpack.c.h.b16 %v2252
        %v3171 = vunpack.c.l.b16 %v2253
        %v3172 = vunpack.c.h.b16 %v2253
        %v3173 = vunpack.c.l.b16 %v2254
        %v3174 = vunpack.c.h.b16 %v2254
        %v3175 = vunpack.c.l.b16 %v2255
        %v3176 = vunpack.c.h.b16 %v2255
        %v3177 = vunpack.c.l.b16 %v2256
        %v3178 = vunpack.c.h.b16 %v2256
        %v3179 = vunpack.c.l.b16 %v2257
        %v3180 = vunpack.c.h.b16 %v2257
        %v3181 = vunpack.c.l.b16 %v2258
        %v3182 = vunpack.c.h.b16 %v2258
        %v3183 = vunpack.c.l.b16 %v2259
        %v3184 = vunpack.c.h.b16 %v2259
        %v3185 = vunpack.c.l.b16 %v2260
        %v3186 = vunpack.c.h.b16 %v2260
        %v3187 = vunpack.c.l.b16 %v2261
        %v3188 = vunpack.c.h.b16 %v2261
        %v3189 = vunpack.c.l.b16 %v2262
        %v3190 = vunpack.c.h.b16 %v2262
        %v3191 = vunpack.c.l.b16 %v2263
        %v3192 = vunpack.c.h.b16 %v2263
        %v3193 = vunpack.c.l.b16 %v2264
        %v3194 = vunpack.c.h.b16 %v2264
        %v3195 = vunpack.c.l.b16 %v2265
        %v3196 = vunpack.c.h.b16 %v2265
        %v3197 = vunpack.c.l.b16 %v2266
        %v3198 = vunpack.c.h.b16 %v2266
        %v3199 = vunpack.c.l.b16 %v2267
        %v3200 = vunpack.c.h.b16 %v2267
        %v3201 = vunpack.c.l.b16 %v2268
        %v3202 = vunpack.c.h.b16 %v2268
        %v3203 = vunpack.c.l.b16 %v2269
        %v3204 = vunpack.c.h.b16 %v2269
        %v3205 = vunpack.c.l.b16 %v2270
        %v3206 = vunpack.c.h.b16 %v2270
        %v3207 = vpack.c.b16 %v2727, %v2695
        %v3208 = vpack.c.b16 %v2728, %v2696
        %v3209 = vpack.c.b16 %v2729, %v2697
        %v3210 = vpack.c.b16 %v2730, %v2698
        %v3211 = vpack.c.b16 %v2731, %v2699
        %v3212 = vpack.c.b16 %v2732, %v2700
        %v3213 = vpack.c.b16 %v2733, %v2701
        %v3214 = vpack.c.b16 %v2734, %v2702
        %v3215 = vpack.c.b16 %v2735, %v2703
        %v3216 = vpack.c.b16 %v2736, %v2704
        %v3217 = vpack.c.b16 %v2737, %v2705
        %v3218 = vpack.c.b16 %v2738, %v2706
        %v3219 = vpack.c.b16 %v2739, %v2707
        %v3220 = vpack.c.b16 %v2740, %v2708
        %v3221 = vpack.c.b16 %v2741, %v2709
        %v3222 = vpack.c.b16 %v2742, %v2710
        %v3223 = vpack.c.b16 %v2743, %v2711
        %v3224 = vpack.c.b16 %v2744, %v2712
        %v3225 = vpack.c.b16 %v2745, %v2713
        %v3226 = vpack.c.b16 %v2746, %v2714
        %v3227 = vpack.c.b16 %v2747, %v2715
        %v3228 = vpack.c.b16 %v2748, %v2716
        %v3229 = vpack.c.b16 %v2749, %v2717
        %v3230 = vpack.c.b16 %v2750, %v2718
        %v3231 = vpack.c.b16 %v2751, %v2719
        %v3232 = vpack.c.b16 %v2752, %v2720
        %v3233 = vpack.c.b16 %v2753, %v2721
        %v3234 = vpack.c.b16 %v2754, %v2722
        %v3235 = vpack.c.b16 %v2755, %v2723
        %v3236 = vpack.c.b16 %v2756, %v2724
        %v3237 = vpack.c.b16 %v2757, %v2725
        %v3238 = vpack.c.b16 %v2758, %v2726
        %v3239 = vpack.c.b16 %v2791, %v2759
        %v3240 = vpack.c.b16 %v2792, %v2760
        %v3241 = vpack.c.b16 %v2793, %v2761
        %v3242 = vpack.c.b16 %v2794, %v2762
        %v3243 = vpack.c.b16 %v2795, %v2763
        %v3244 = vpack.c.b16 %v2796, %v2764
        %v3245 = vpack.c.b16 %v2797, %v2765
        %v3246 = vpack.c.b16 %v2798, %v2766
        %v3247 = vpack.c.b16 %v2799, %v2767
        %v3248 = vpack.c.b16 %v2800, %v2768
        %v3249 = vpack.c.b16 %v2801, %v2769
        %v3250 = vpack.c.b16 %v2802, %v2770
        %v3251 = vpack.c.b16 %v2803, %v2771
        %v3252 = vpack.c.b16 %v2804, %v2772
        %v3253 = vpack.c.b16 %v2805, %v2773
        %v3254 = vpack.c.b16 %v2806, %v2774
        %v3255 = vpack.c.b16 %v2807, %v2775
        %v3256 = vpack.c.b16 %v2808, %v2776
        %v3257 = vpack.c.b16 %v2809, %v2777
        %v3258 = vpack.c.b16 %v2810, %v2778
        %v3259 = vpack.c.b16 %v2811, %v2779
        %v3260 = vpack.c.b16 %v2812, %v2780
        %v3261 = vpack.c.b16 %v2813, %v2781
        %v3262 = vpack.c.b16 %v2814, %v2782
        %v3263 = vpack.c.b16 %v2815, %v2783
        %v3264 = vpack.c.b16 %v2816, %v2784
        %v3265 = vpack.c.b16 %v2817, %v2785
        %v3266 = vpack.c.b16 %v2818, %v2786
        %v3267 = vpack.c.b16 %v2819, %v2787
        %v3268 = vpack.c.b16 %v2820, %v2788
        %v3269 = vpack.c.b16 %v2821, %v2789
        %v3270 = vpack.c.b16 %v2822, %v2790
        %v3271 = vpack.c.b16 %v2855, %v2823
        %v3272 = vpack.c.b16 %v2856, %v2824
        %v3273 = vpack.c.b16 %v2857, %v2825
        %v3274 = vpack.c.b16 %v2858, %v2826
        %v3275 = vpack.c.b16 %v2859, %v2827
        %v3276 = vpack.c.b16 %v2860, %v2828
        %v3277 = vpack.c.b16 %v2861, %v2829
        %v3278 = vpack.c.b16 %v2862, %v2830
        %v3279 = vpack.c.b16 %v2863, %v2831
        %v3280 = vpack.c.b16 %v2864, %v2832
        %v3281 = vpack.c.b16 %v2865, %v2833
        %v3282 = vpack.c.b16 %v2866, %v2834
        %v3283 = vpack.c.b16 %v2867, %v2835
        %v3284 = vpack.c.b16 %v2868, %v2836
        %v3285 = vpack.c.b16 %v2869, %v2837
        %v3286 = vpack.c.b16 %v2870, %v2838
        %v3287 = vpack.c.b16 %v2871, %v2839
        %v3288 = vpack.c.b16 %v2872, %v2840
        %v3289 = vpack.c.b16 %v2873, %v2841
        %v3290 = vpack.c.b16 %v2874, %v2842
        %v3291 = vpack.c.b16 %v2875, %v2843
        %v3292 = vpack.c.b16 %v2876, %v2844
        %v3293 = vpack.c.b16 %v2877, %v2845
        %v3294 = vpack.c.b16 %v2878, %v2846
        %v3295 = vpack.c.b16 %v2879, %v2847
        %v3296 = vpack.c.b16 %v2880, %v2848
        %v3297 = vpack.c.b16 %v2881, %v2849
        %v3298 = vpack.c.b16 %v2882, %v2850
        %v3299 = vpack.c.b16 %v2883, %v2851
        %v3300 = vpack.c.b16 %v2884, %v2852
        %v3301 = vpack.c.b16 %v2885, %v2853
        %v3302 = vpack.c.b16 %v2886, %v2854
        %v3303 = vpack.c.b16 %v2919, %v2887
        %v3304 = vpack.c.b16 %v2920, %v2888
        %v3305 = vpack.c.b16 %v2921, %v2889
        %v3306 = vpack.c.b16 %v2922, %v2890
        %v3307 = vpack.c.b16 %v2923, %v2891
        %v3308 = vpack.c.b16 %v2924, %v2892
        %v3309 = vpack.c.b16 %v2925, %v2893
        %v3310 = vpack.c.b16 %v2926, %v2894
        %v3311 = vpack.c.b16 %v2927, %v2895
        %v3312 = vpack.c.b16 %v2928, %v2896
        %v3313 = vpack.c.b16 %v2929, %v2897
        %v3314 = vpack.c.b16 %v2930, %v2898
        %v3315 = vpack.c.b16 %v2931, %v2899
        %v3316 = vpack.c.b16 %v2932, %v2900
        %v3317 = vpack.c.b16 %v2933, %v2901
        %v3318 = vpack.c.b16 %v2934, %v2902
        %v3319 = vpack.c.b16 %v2935, %v2903
        %v3320 = vpack.c.b16 %v2936, %v2904
        %v3321 = vpack.c.b16 %v2937, %v2905
        %v3322 = vpack.c.b16 %v2938, %v2906
        %v3323 = vpack.c.b16 %v2939, %v2907
        %v3324 = vpack.c.b16 %v2940, %v2908
        %v3325 = vpack.c.b16 %v2941, %v2909
        %v3326 = vpack.c.b16 %v2942, %v2910
        %v3327 = vpack.c.b16 %v2943, %v2911
        %v3328 = vpack.c.b16 %v2944, %v2912
        %v3329 = vpack.c.b16 %v2945, %v2913
        %v3330 = vpack.c.b16 %v2946, %v2914
        %v3331 = vpack.c.b16 %v2947, %v2915
        %v3332 = vpack.c.b16 %v2948, %v2916
        %v3333 = vpack.c.b16 %v2949, %v2917
        %v3334 = vpack.c.b16 %v2950, %v2918
        %v3335 = vpack.c.b16 %v2983, %v2951
        %v3336 = vpack.c.b16 %v2984, %v2952
        %v3337 = vpack.c.b16 %v2985, %v2953
        %v3338 = vpack.c.b16 %v2986, %v2954
        %v3339 = vpack.c.b16 %v2987, %v2955
        %v3340 = vpack.c.b16 %v2988, %v2956
        %v3341 = vpack.c.b16 %v2989, %v2957
        %v3342 = vpack.c.b16 %v2990, %v2958
        %v3343 = vpack.c.b16 %v2991, %v2959
        %v3344 = vpack.c.b16 %v2992, %v2960
        %v3345 = vpack.c.b16 %v2993, %v2961
        %v3346 = vpack.c.b16 %v2994, %v2962
        %v3347 = vpack.c.b16 %v2995, %v2963
        %v3348 = vpack.c.b16 %v2996, %v2964
        %v3349 = vpack.c.b16 %v2997, %v2965
        %v3350 = vpack.c.b16 %v2998, %v2966
        %v3351 = vpack.c.b16 %v2999, %v2967
        %v3352 = vpack.c.b16 %v3000, %v2968
        %v3353 = vpack.c.b16 %v3001, %v2969
        %v3354 = vpack.c.b16 %v3002, %v2970
        %v3355 = vpack.c.b16 %v3003, %v2971
        %v3356 = vpack.c.b16 %v3004, %v2972
        %v3357 = vpack.c.b16 %v3005, %v2973
        %v3358 = vpack.c.b16 %v3006, %v2974
        %v3359 = vpack.c.b16 %v3007, %v2975
        %v3360 = vpack.c.b16 %v3008, %v2976
        %v3361 = vpack.c.b16 %v3009, %v2977
        %v3362 = vpack.c.b16 %v3010, %v2978
        %v3363 = vpack.c.b16 %v3011, %v2979
        %v3364 = vpack.c.b16 %v3012, %v2980
        %v3365 = vpack.c.b16 %v3013, %v2981
        %v3366 = vpack.c.b16 %v3014, %v2982
        %v3367 = vpack.c.b16 %v3047, %v3015
        %v3368 = vpack.c.b16 %v3048, %v3016
        %v3369 = vpack.c.b16 %v3049, %v3017
        %v3370 = vpack.c.b16 %v3050, %v3018
        %v3371 = vpack.c.b16 %v3051, %v3019
        %v3372 = vpack.c.b16 %v3052, %v3020
        %v3373 = vpack.c.b16 %v3053, %v3021
        %v3374 = vpack.c.b16 %v3054, %v3022
        %v3375 = vpack.c.b16 %v3055, %v3023
        %v3376 = vpack.c.b16 %v3056, %v3024
        %v3377 = vpack.c.b16 %v3057, %v3025
        %v3378 = vpack.c.b16 %v3058, %v3026
        %v3379 = vpack.c.b16 %v3059, %v3027
        %v3380 = vpack.c.b16 %v3060, %v3028
        %v3381 = vpack.c.b16 %v3061, %v3029
        %v3382 = vpack.c.b16 %v3062, %v3030
        %v3383 = vpack.c.b16 %v3063, %v3031
        %v3384 = vpack.c.b16 %v3064, %v3032
        %v3385 = vpack.c.b16 %v3065, %v3033
        %v3386 = vpack.c.b16 %v3066, %v3034
        %v3387 = vpack.c.b16 %v3067, %v3035
        %v3388 = vpack.c.b16 %v3068, %v3036
        %v3389 = vpack.c.b16 %v3069, %v3037
        %v3390 = vpack.c.b16 %v3070, %v3038
        %v3391 = vpack.c.b16 %v3071, %v3039
        %v3392 = vpack.c.b16 %v3072, %v3040
        %v3393 = vpack.c.b16 %v3073, %v3041
        %v3394 = vpack.c.b16 %v3074, %v3042
        %v3395 = vpack.c.b16 %v3075, %v3043
        %v3396 = vpack.c.b16 %v3076, %v3044
        %v3397 = vpack.c.b16 %v3077, %v3045
        %v3398 = vpack.c.b16 %v3078, %v3046
        %v3399 = vpack.c.b16 %v3111, %v3079
        %v3400 = vpack.c.b16 %v3112, %v3080
        %v3401 = vpack.c.b16 %v3113, %v3081
        %v3402 = vpack.c.b16 %v3114, %v3082
        %v3403 = vpack.c.b16 %v3115, %v3083
        %v3404 = vpack.c.b16 %v3116, %v3084
        %v3405 = vpack.c.b16 %v3117, %v3085
        %v3406 = vpack.c.b16 %v3118, %v3086
        %v3407 = vpack.c.b16 %v3119, %v3087
        %v3408 = vpack.c.b16 %v3120, %v3088
        %v3409 = vpack.c.b16 %v3121, %v3089
        %v3410 = vpack.c.b16 %v3122, %v3090
        %v3411 = vpack.c.b16 %v3123, %v3091
        %v3412 = vpack.c.b16 %v3124, %v3092
        %v3413 = vpack.c.b16 %v3125, %v3093
        %v3414 = vpack.c.b16 %v3126, %v3094
        %v3415 = vpack.c.b16 %v3127, %v3095
        %v3416 = vpack.c.b16 %v3128, %v3096
        %v3417 = vpack.c.b16 %v3129, %v3097
        %v3418 = vpack.c.b16 %v3130, %v3098
        %v3419 = vpack.c.b16 %v3131, %v3099
        %v3420 = vpack.c.b16 %v3132, %v3100
        %v3421 = vpack.c.b16 %v3133, %v3101
        %v3422 = vpack.c.b16 %v3134, %v3102
        %v3423 = vpack.c.b16 %v3135, %v3103
        %v3424 = vpack.c.b16 %v3136, %v3104
        %v3425 = vpack.c.b16 %v3137, %v3105
        %v3426 = vpack.c.b16 %v3138, %v3106
        %v3427 = vpack.c.b16 %v3139, %v3107
        %v3428 = vpack.c.b16 %v3140, %v3108
        %v3429 = vpack.c.b16 %v3141, %v3109
        %v3430 = vpack.c.b16 %v3142, %v3110
        %v3431 = vpack.c.b16 %v3175, %v3143
        %v3432 = vpack.c.b16 %v3176, %v3144
        %v3433 = vpack.c.b16 %v3177, %v3145
        %v3434 = vpack.c.b16 %v3178, %v3146
        %v3435 = vpack.c.b16 %v3179, %v3147
        %v3436 = vpack.c.b16 %v3180, %v3148
        %v3437 = vpack.c.b16 %v3181, %v3149
        %v3438 = vpack.c.b16 %v3182, %v3150
        %v3439 = vpack.c.b16 %v3183, %v3151
        %v3440 = vpack.c.b16 %v3184, %v3152
        %v3441 = vpack.c.b16 %v3185, %v3153
        %v3442 = vpack.c.b16 %v3186, %v3154
        %v3443 = vpack.c.b16 %v3187, %v3155
        %v3444 = vpack.c.b16 %v3188, %v3156
        %v3445 = vpack.c.b16 %v3189, %v3157
        %v3446 = vpack.c.b16 %v3190, %v3158
        %v3447 = vpack.c.b16 %v3191, %v3159
        %v3448 = vpack.c.b16 %v3192, %v3160
        %v3449 = vpack.c.b16 %v3193, %v3161
        %v3450 = vpack.c.b16 %v3194, %v3162
        %v3451 = vpack.c.b16 %v3195, %v3163
        %v3452 = vpack.c.b16 %v3196, %v3164
        %v3453 = vpack.c.b16 %v3197, %v3165
        %v3454 = vpack.c.b16 %v3198, %v3166
        %v3455 = vpack.c.b16 %v3199, %v3167
        %v3456 = vpack.c.b16 %v3200, %v3168
        %v3457 = vpack.c.b16 %v3201, %v3169
        %v3458 = vpack.c.b16 %v3202, %v3170
        %v3459 = vpack.c.b16 %v3203, %v3171
        %v3460 = vpack.c.b16 %v3204, %v3172
        %v3461 = vpack.c.b16 %v3205, %v3173
        %v3462 = vpack.c.b16 %v3206, %v3174
        %3719 = vmatprep.subr.bf16.mxu0 %v3208
        %3720 = vmatpush1.bf16.msra.mxu0 %v3207
        %3721 = vmatprep.subr.bf16.mxu0 %v3240
        %3722 = vmatpush1.bf16.msra.mxu0 %v3239
        %3723 = vmatprep.subr.bf16.mxu0 %v3272
        %3724 = vmatpush1.bf16.msra.mxu0 %v3271
        %3725 = vmatprep.subr.bf16.mxu0 %v3304
        %3726 = vmatpush1.bf16.msra.mxu0 %v3303
        %3727 = vmatprep.subr.bf16.mxu0 %v3336
        %3728 = vmatpush1.bf16.msra.mxu0 %v3335
        %3729 = vmatprep.subr.bf16.mxu0 %v3368
        %3730 = vmatpush1.bf16.msra.mxu0 %v3367
        %3731 = vmatprep.subr.bf16.mxu0 %v3400
        %3732 = vmatpush1.bf16.msra.mxu0 %v3399
        %3733 = vmatprep.subr.bf16.mxu0 %v3432
        %3734 = vmatpush1.bf16.msra.mxu0 %v3431
        %3735 = vmatprep.subr.bf16.mxu0 0
        %3736 = vmatpush1.bf16.msra.mxu0 0
        %3737 = vmatprep.subr.bf16.mxu0 0
        %3738 = vmatpush1.bf16.msra.mxu0 0
        %3739 = vmatprep.subr.bf16.mxu0 0
        %3740 = vmatpush1.bf16.msra.mxu0 0
        %3741 = vmatprep.subr.bf16.mxu0 0
        %3742 = vmatpush1.bf16.msra.mxu0 0
        %3743 = vmatprep.subr.bf16.mxu0 0
        %3744 = vmatpush1.bf16.msra.mxu0 0
        %3745 = vmatprep.subr.bf16.mxu0 0
        %3746 = vmatpush1.bf16.msra.mxu0 0
        %3747 = vmatprep.subr.bf16.mxu0 0
        %3748 = vmatpush1.bf16.msra.mxu0 0
        %3749 = vmatprep.subr.bf16.mxu0 0
        %3750 = vmatpush1.bf16.msra.mxu0 0
        %3751 = vmatprep.mubr.bf16.mxu0 0
        %3752 = vmatmul.mubr.bf16.gmra.mrb[0].mxu0 %v1710
        %v3753 = vpop.f32.mrb[0].mxu0
        %v3754 = vadd.f32 %v2282, %v3753
        %v3755 = vpop.f32.mrb[0].mxu0
        %v3756 = vadd.f32 %v2286, %v3755
        %v3757 = vpop.f32.mrb[0].mxu0
        %v3758 = vpop.f32.mrb[0].mxu0
        %3759 = vdwg.mxu0
        %3760 = vmatprep.subr.bf16.mxu0 %v3210
        %3761 = vmatpush1.bf16.msra.mxu0 %v3209
        %3762 = vmatprep.subr.bf16.mxu0 %v3242
        %3763 = vmatpush1.bf16.msra.mxu0 %v3241
        %3764 = vmatprep.subr.bf16.mxu0 %v3274
        %3765 = vmatpush1.bf16.msra.mxu0 %v3273
        %3766 = vmatprep.subr.bf16.mxu0 %v3306
        %3767 = vmatpush1.bf16.msra.mxu0 %v3305
        %3768 = vmatprep.subr.bf16.mxu0 %v3338
        %3769 = vmatpush1.bf16.msra.mxu0 %v3337
        %3770 = vmatprep.subr.bf16.mxu0 %v3370
        %3771 = vmatpush1.bf16.msra.mxu0 %v3369
        %3772 = vmatprep.subr.bf16.mxu0 %v3402
        %3773 = vmatpush1.bf16.msra.mxu0 %v3401
        %3774 = vmatprep.subr.bf16.mxu0 %v3434
        %3775 = vmatpush1.bf16.msra.mxu0 %v3433
        %3776 = vmatprep.subr.bf16.mxu0 0
        %3777 = vmatpush1.bf16.msra.mxu0 0
        %3778 = vmatprep.subr.bf16.mxu0 0
        %3779 = vmatpush1.bf16.msra.mxu0 0
        %3780 = vmatprep.subr.bf16.mxu0 0
        %3781 = vmatpush1.bf16.msra.mxu0 0
        %3782 = vmatprep.subr.bf16.mxu0 0
        %3783 = vmatpush1.bf16.msra.mxu0 0
        %3784 = vmatprep.subr.bf16.mxu0 0
        %3785 = vmatpush1.bf16.msra.mxu0 0
        %3786 = vmatprep.subr.bf16.mxu0 0
        %3787 = vmatpush1.bf16.msra.mxu0 0
        %3788 = vmatprep.subr.bf16.mxu0 0
        %3789 = vmatpush1.bf16.msra.mxu0 0
        %3790 = vmatprep.subr.bf16.mxu0 0
        %3791 = vmatpush1.bf16.msra.mxu0 0
        %3792 = vmatprep.mubr.bf16.mxu0 0
        %3793 = vmatmul.mubr.bf16.gmra.mrb[0].mxu0 %v1710
        %v3794 = vpop.f32.mrb[0].mxu0
        %v3795 = vadd.f32 %v2290, %v3794
        %v3796 = vpop.f32.mrb[0].mxu0
        %v3797 = vadd.f32 %v2294, %v3796
        %v3798 = vpop.f32.mrb[0].mxu0
        %v3799 = vpop.f32.mrb[0].mxu0
        %3800 = vdwg.mxu0
        %3801 = vmatprep.subr.bf16.mxu0 %v3212
        %3802 = vmatpush1.bf16.msra.mxu0 %v3211
        %3803 = vmatprep.subr.bf16.mxu0 %v3244
        %3804 = vmatpush1.bf16.msra.mxu0 %v3243
        %3805 = vmatprep.subr.bf16.mxu0 %v3276
        %3806 = vmatpush1.bf16.msra.mxu0 %v3275
        %3807 = vmatprep.subr.bf16.mxu0 %v3308
        %3808 = vmatpush1.bf16.msra.mxu0 %v3307
        %3809 = vmatprep.subr.bf16.mxu0 %v3340
        %3810 = vmatpush1.bf16.msra.mxu0 %v3339
        %3811 = vmatprep.subr.bf16.mxu0 %v3372
        %3812 = vmatpush1.bf16.msra.mxu0 %v3371
        %3813 = vmatprep.subr.bf16.mxu0 %v3404
        %3814 = vmatpush1.bf16.msra.mxu0 %v3403
        %3815 = vmatprep.subr.bf16.mxu0 %v3436
        %3816 = vmatpush1.bf16.msra.mxu0 %v3435
        %3817 = vmatprep.subr.bf16.mxu0 0
        %3818 = vmatpush1.bf16.msra.mxu0 0
        %3819 = vmatprep.subr.bf16.mxu0 0
        %3820 = vmatpush1.bf16.msra.mxu0 0
        %3821 = vmatprep.subr.bf16.mxu0 0
        %3822 = vmatpush1.bf16.msra.mxu0 0
        %3823 = vmatprep.subr.bf16.mxu0 0
        %3824 = vmatpush1.bf16.msra.mxu0 0
        %3825 = vmatprep.subr.bf16.mxu0 0
        %3826 = vmatpush1.bf16.msra.mxu0 0
        %3827 = vmatprep.subr.bf16.mxu0 0
        %3828 = vmatpush1.bf16.msra.mxu0 0
        %3829 = vmatprep.subr.bf16.mxu0 0
        %3830 = vmatpush1.bf16.msra.mxu0 0
        %3831 = vmatprep.subr.bf16.mxu0 0
        %3832 = vmatpush1.bf16.msra.mxu0 0
        %3833 = vmatprep.mubr.bf16.mxu0 0
        %3834 = vmatmul.mubr.bf16.gmra.mrb[0].mxu0 %v1710
        %v3835 = vpop.f32.mrb[0].mxu0
        %v3836 = vadd.f32 %v2298, %v3835
        %v3837 = vpop.f32.mrb[0].mxu0
        %v3838 = vadd.f32 %v2302, %v3837
        %v3839 = vpop.f32.mrb[0].mxu0
        %v3840 = vpop.f32.mrb[0].mxu0
        %3841 = vdwg.mxu0
        %3842 = vmatprep.subr.bf16.mxu0 %v3214
        %3843 = vmatpush1.bf16.msra.mxu0 %v3213
        %3844 = vmatprep.subr.bf16.mxu0 %v3246
        %3845 = vmatpush1.bf16.msra.mxu0 %v3245
        %3846 = vmatprep.subr.bf16.mxu0 %v3278
        %3847 = vmatpush1.bf16.msra.mxu0 %v3277
        %3848 = vmatprep.subr.bf16.mxu0 %v3310
        %3849 = vmatpush1.bf16.msra.mxu0 %v3309
        %3850 = vmatprep.subr.bf16.mxu0 %v3342
        %3851 = vmatpush1.bf16.msra.mxu0 %v3341
        %3852 = vmatprep.subr.bf16.mxu0 %v3374
        %3853 = vmatpush1.bf16.msra.mxu0 %v3373
        %3854 = vmatprep.subr.bf16.mxu0 %v3406
        %3855 = vmatpush1.bf16.msra.mxu0 %v3405
        %3856 = vmatprep.subr.bf16.mxu0 %v3438
        %3857 = vmatpush1.bf16.msra.mxu0 %v3437
        %3858 = vmatprep.subr.bf16.mxu0 0
        %3859 = vmatpush1.bf16.msra.mxu0 0
        %3860 = vmatprep.subr.bf16.mxu0 0
        %3861 = vmatpush1.bf16.msra.mxu0 0
        %3862 = vmatprep.subr.bf16.mxu0 0
        %3863 = vmatpush1.bf16.msra.mxu0 0
        %3864 = vmatprep.subr.bf16.mxu0 0
        %3865 = vmatpush1.bf16.msra.mxu0 0
        %3866 = vmatprep.subr.bf16.mxu0 0
        %3867 = vmatpush1.bf16.msra.mxu0 0
        %3868 = vmatprep.subr.bf16.mxu0 0
        %3869 = vmatpush1.bf16.msra.mxu0 0
        %3870 = vmatprep.subr.bf16.mxu0 0
        %3871 = vmatpush1.bf16.msra.mxu0 0
        %3872 = vmatprep.subr.bf16.mxu0 0
        %3873 = vmatpush1.bf16.msra.mxu0 0
        %3874 = vmatprep.mubr.bf16.mxu0 0
        %3875 = vmatmul.mubr.bf16.gmra.mrb[0].mxu0 %v1710
        %v3876 = vpop.f32.mrb[0].mxu0
        %v3877 = vadd.f32 %v2306, %v3876
        %v3878 = vpop.f32.mrb[0].mxu0
        %v3879 = vadd.f32 %v2310, %v3878
        %v3880 = vpop.f32.mrb[0].mxu0
        %v3881 = vpop.f32.mrb[0].mxu0
        %3882 = vdwg.mxu0
        %3883 = vmatprep.subr.bf16.mxu0 %v3216
        %3884 = vmatpush1.bf16.msra.mxu0 %v3215
        %3885 = vmatprep.subr.bf16.mxu0 %v3248
        %3886 = vmatpush1.bf16.msra.mxu0 %v3247
        %3887 = vmatprep.subr.bf16.mxu0 %v3280
        %3888 = vmatpush1.bf16.msra.mxu0 %v3279
        %3889 = vmatprep.subr.bf16.mxu0 %v3312
        %3890 = vmatpush1.bf16.msra.mxu0 %v3311
        %3891 = vmatprep.subr.bf16.mxu0 %v3344
        %3892 = vmatpush1.bf16.msra.mxu0 %v3343
        %3893 = vmatprep.subr.bf16.mxu0 %v3376
        %3894 = vmatpush1.bf16.msra.mxu0 %v3375
        %3895 = vmatprep.subr.bf16.mxu0 %v3408
        %3896 = vmatpush1.bf16.msra.mxu0 %v3407
        %3897 = vmatprep.subr.bf16.mxu0 %v3440
        %3898 = vmatpush1.bf16.msra.mxu0 %v3439
        %3899 = vmatprep.subr.bf16.mxu0 0
        %3900 = vmatpush1.bf16.msra.mxu0 0
        %3901 = vmatprep.subr.bf16.mxu0 0
        %3902 = vmatpush1.bf16.msra.mxu0 0
        %3903 = vmatprep.subr.bf16.mxu0 0
        %3904 = vmatpush1.bf16.msra.mxu0 0
        %3905 = vmatprep.subr.bf16.mxu0 0
        %3906 = vmatpush1.bf16.msra.mxu0 0
        %3907 = vmatprep.subr.bf16.mxu0 0
        %3908 = vmatpush1.bf16.msra.mxu0 0
        %3909 = vmatprep.subr.bf16.mxu0 0
        %3910 = vmatpush1.bf16.msra.mxu0 0
        %3911 = vmatprep.subr.bf16.mxu0 0
        %3912 = vmatpush1.bf16.msra.mxu0 0
        %3913 = vmatprep.subr.bf16.mxu0 0
        %3914 = vmatpush1.bf16.msra.mxu0 0
        %3915 = vmatprep.mubr.bf16.mxu0 0
        %3916 = vmatmul.mubr.bf16.gmra.mrb[0].mxu0 %v1710
        %v3917 = vpop.f32.mrb[0].mxu0
        %v3918 = vadd.f32 %v2314, %v3917
        %v3919 = vpop.f32.mrb[0].mxu0
        %v3920 = vadd.f32 %v2318, %v3919
        %v3921 = vpop.f32.mrb[0].mxu0
        %v3922 = vpop.f32.mrb[0].mxu0
        %3923 = vdwg.mxu0
        %3924 = vmatprep.subr.bf16.mxu0 %v3218
        %3925 = vmatpush1.bf16.msra.mxu0 %v3217
        %3926 = vmatprep.subr.bf16.mxu0 %v3250
        %3927 = vmatpush1.bf16.msra.mxu0 %v3249
        %3928 = vmatprep.subr.bf16.mxu0 %v3282
        %3929 = vmatpush1.bf16.msra.mxu0 %v3281
        %3930 = vmatprep.subr.bf16.mxu0 %v3314
        %3931 = vmatpush1.bf16.msra.mxu0 %v3313
        %3932 = vmatprep.subr.bf16.mxu0 %v3346
        %3933 = vmatpush1.bf16.msra.mxu0 %v3345
        %3934 = vmatprep.subr.bf16.mxu0 %v3378
        %3935 = vmatpush1.bf16.msra.mxu0 %v3377
        %3936 = vmatprep.subr.bf16.mxu0 %v3410
        %3937 = vmatpush1.bf16.msra.mxu0 %v3409
        %3938 = vmatprep.subr.bf16.mxu0 %v3442
        %3939 = vmatpush1.bf16.msra.mxu0 %v3441
        %3940 = vmatprep.subr.bf16.mxu0 0
        %3941 = vmatpush1.bf16.msra.mxu0 0
        %3942 = vmatprep.subr.bf16.mxu0 0
        %3943 = vmatpush1.bf16.msra.mxu0 0
        %3944 = vmatprep.subr.bf16.mxu0 0
        %3945 = vmatpush1.bf16.msra.mxu0 0
        %3946 = vmatprep.subr.bf16.mxu0 0
        %3947 = vmatpush1.bf16.msra.mxu0 0
        %3948 = vmatprep.subr.bf16.mxu0 0
        %3949 = vmatpush1.bf16.msra.mxu0 0
        %3950 = vmatprep.subr.bf16.mxu0 0
        %3951 = vmatpush1.bf16.msra.mxu0 0
        %3952 = vmatprep.subr.bf16.mxu0 0
        %3953 = vmatpush1.bf16.msra.mxu0 0
        %3954 = vmatprep.subr.bf16.mxu0 0
        %3955 = vmatpush1.bf16.msra.mxu0 0
        %3956 = vmatprep.mubr.bf16.mxu0 0
        %3957 = vmatmul.mubr.bf16.gmra.mrb[0].mxu0 %v1710
        %v3958 = vpop.f32.mrb[0].mxu0
        %v3959 = vadd.f32 %v2322, %v3958
        %v3960 = vpop.f32.mrb[0].mxu0
        %v3961 = vadd.f32 %v2326, %v3960
        %v3962 = vpop.f32.mrb[0].mxu0
        %v3963 = vpop.f32.mrb[0].mxu0
        %3964 = vdwg.mxu0
        %3965 = vmatprep.subr.bf16.mxu0 %v3220
        %3966 = vmatpush1.bf16.msra.mxu0 %v3219
        %3967 = vmatprep.subr.bf16.mxu0 %v3252
        %3968 = vmatpush1.bf16.msra.mxu0 %v3251
        %3969 = vmatprep.subr.bf16.mxu0 %v3284
        %3970 = vmatpush1.bf16.msra.mxu0 %v3283
        %3971 = vmatprep.subr.bf16.mxu0 %v3316
        %3972 = vmatpush1.bf16.msra.mxu0 %v3315
        %3973 = vmatprep.subr.bf16.mxu0 %v3348
        %3974 = vmatpush1.bf16.msra.mxu0 %v3347
        %3975 = vmatprep.subr.bf16.mxu0 %v3380
        %3976 = vmatpush1.bf16.msra.mxu0 %v3379
        %3977 = vmatprep.subr.bf16.mxu0 %v3412
        %3978 = vmatpush1.bf16.msra.mxu0 %v3411
        %3979 = vmatprep.subr.bf16.mxu0 %v3444
        %3980 = vmatpush1.bf16.msra.mxu0 %v3443
        %3981 = vmatprep.subr.bf16.mxu0 0
        %3982 = vmatpush1.bf16.msra.mxu0 0
        %3983 = vmatprep.subr.bf16.mxu0 0
        %3984 = vmatpush1.bf16.msra.mxu0 0
        %3985 = vmatprep.subr.bf16.mxu0 0
        %3986 = vmatpush1.bf16.msra.mxu0 0
        %3987 = vmatprep.subr.bf16.mxu0 0
        %3988 = vmatpush1.bf16.msra.mxu0 0
        %3989 = vmatprep.subr.bf16.mxu0 0
        %3990 = vmatpush1.bf16.msra.mxu0 0
        %3991 = vmatprep.subr.bf16.mxu0 0
        %3992 = vmatpush1.bf16.msra.mxu0 0
        %3993 = vmatprep.subr.bf16.mxu0 0
        %3994 = vmatpush1.bf16.msra.mxu0 0
        %3995 = vmatprep.subr.bf16.mxu0 0
        %3996 = vmatpush1.bf16.msra.mxu0 0
        %3997 = vmatprep.mubr.bf16.mxu0 0
        %3998 = vmatmul.mubr.bf16.gmra.mrb[0].mxu0 %v1710
        %v3999 = vpop.f32.mrb[0].mxu0
        %v4000 = vadd.f32 %v2330, %v3999
        %v4001 = vpop.f32.mrb[0].mxu0
        %v4002 = vadd.f32 %v2334, %v4001
        %v4003 = vpop.f32.mrb[0].mxu0
        %v4004 = vpop.f32.mrb[0].mxu0
        %4005 = vdwg.mxu0
        %4006 = vmatprep.subr.bf16.mxu0 %v3222
        %4007 = vmatpush1.bf16.msra.mxu0 %v3221
        %4008 = vmatprep.subr.bf16.mxu0 %v3254
        %4009 = vmatpush1.bf16.msra.mxu0 %v3253
        %4010 = vmatprep.subr.bf16.mxu0 %v3286
        %4011 = vmatpush1.bf16.msra.mxu0 %v3285
        %4012 = vmatprep.subr.bf16.mxu0 %v3318
        %4013 = vmatpush1.bf16.msra.mxu0 %v3317
        %4014 = vmatprep.subr.bf16.mxu0 %v3350
        %4015 = vmatpush1.bf16.msra.mxu0 %v3349
        %4016 = vmatprep.subr.bf16.mxu0 %v3382
        %4017 = vmatpush1.bf16.msra.mxu0 %v3381
        %4018 = vmatprep.subr.bf16.mxu0 %v3414
        %4019 = vmatpush1.bf16.msra.mxu0 %v3413
        %4020 = vmatprep.subr.bf16.mxu0 %v3446
        %4021 = vmatpush1.bf16.msra.mxu0 %v3445
        %4022 = vmatprep.subr.bf16.mxu0 0
        %4023 = vmatpush1.bf16.msra.mxu0 0
        %4024 = vmatprep.subr.bf16.mxu0 0
        %4025 = vmatpush1.bf16.msra.mxu0 0
        %4026 = vmatprep.subr.bf16.mxu0 0
        %4027 = vmatpush1.bf16.msra.mxu0 0
        %4028 = vmatprep.subr.bf16.mxu0 0
        %4029 = vmatpush1.bf16.msra.mxu0 0
        %4030 = vmatprep.subr.bf16.mxu0 0
        %4031 = vmatpush1.bf16.msra.mxu0 0
        %4032 = vmatprep.subr.bf16.mxu0 0
        %4033 = vmatpush1.bf16.msra.mxu0 0
        %4034 = vmatprep.subr.bf16.mxu0 0
        %4035 = vmatpush1.bf16.msra.mxu0 0
        %4036 = vmatprep.subr.bf16.mxu0 0
        %4037 = vmatpush1.bf16.msra.mxu0 0
        %4038 = vmatprep.mubr.bf16.mxu0 0
        %4039 = vmatmul.mubr.bf16.gmra.mrb[0].mxu0 %v1710
        %v4040 = vpop.f32.mrb[0].mxu0
        %v4041 = vadd.f32 %v2338, %v4040
        %v4042 = vpop.f32.mrb[0].mxu0
        %v4043 = vadd.f32 %v2342, %v4042
        %v4044 = vpop.f32.mrb[0].mxu0
        %v4045 = vpop.f32.mrb[0].mxu0
        %4046 = vdwg.mxu0
        %4047 = vmatprep.subr.bf16.mxu0 %v3224
        %4048 = vmatpush1.bf16.msra.mxu0 %v3223
        %4049 = vmatprep.subr.bf16.mxu0 %v3256
        %4050 = vmatpush1.bf16.msra.mxu0 %v3255
        %4051 = vmatprep.subr.bf16.mxu0 %v3288
        %4052 = vmatpush1.bf16.msra.mxu0 %v3287
        %4053 = vmatprep.subr.bf16.mxu0 %v3320
        %4054 = vmatpush1.bf16.msra.mxu0 %v3319
        %4055 = vmatprep.subr.bf16.mxu0 %v3352
        %4056 = vmatpush1.bf16.msra.mxu0 %v3351
        %4057 = vmatprep.subr.bf16.mxu0 %v3384
        %4058 = vmatpush1.bf16.msra.mxu0 %v3383
        %4059 = vmatprep.subr.bf16.mxu0 %v3416
        %4060 = vmatpush1.bf16.msra.mxu0 %v3415
        %4061 = vmatprep.subr.bf16.mxu0 %v3448
        %4062 = vmatpush1.bf16.msra.mxu0 %v3447
        %4063 = vmatprep.subr.bf16.mxu0 0
        %4064 = vmatpush1.bf16.msra.mxu0 0
        %4065 = vmatprep.subr.bf16.mxu0 0
        %4066 = vmatpush1.bf16.msra.mxu0 0
        %4067 = vmatprep.subr.bf16.mxu0 0
        %4068 = vmatpush1.bf16.msra.mxu0 0
        %4069 = vmatprep.subr.bf16.mxu0 0
        %4070 = vmatpush1.bf16.msra.mxu0 0
        %4071 = vmatprep.subr.bf16.mxu0 0
        %4072 = vmatpush1.bf16.msra.mxu0 0
        %4073 = vmatprep.subr.bf16.mxu0 0
        %4074 = vmatpush1.bf16.msra.mxu0 0
        %4075 = vmatprep.subr.bf16.mxu0 0
        %4076 = vmatpush1.bf16.msra.mxu0 0
        %4077 = vmatprep.subr.bf16.mxu0 0
        %4078 = vmatpush1.bf16.msra.mxu0 0
        %4079 = vmatprep.mubr.bf16.mxu0 0
        %4080 = vmatmul.mubr.bf16.gmra.mrb[0].mxu0 %v1710
        %v4081 = vpop.f32.mrb[0].mxu0
        %v4082 = vadd.f32 %v2346, %v4081
        %v4083 = vpop.f32.mrb[0].mxu0
        %v4084 = vadd.f32 %v2350, %v4083
        %v4085 = vpop.f32.mrb[0].mxu0
        %v4086 = vpop.f32.mrb[0].mxu0
        %4087 = vdwg.mxu0
        %4088 = vmatprep.subr.bf16.mxu0 %v3226
        %4089 = vmatpush1.bf16.msra.mxu0 %v3225
        %4090 = vmatprep.subr.bf16.mxu0 %v3258
        %4091 = vmatpush1.bf16.msra.mxu0 %v3257
        %4092 = vmatprep.subr.bf16.mxu0 %v3290
        %4093 = vmatpush1.bf16.msra.mxu0 %v3289
        %4094 = vmatprep.subr.bf16.mxu0 %v3322
        %4095 = vmatpush1.bf16.msra.mxu0 %v3321
        %4096 = vmatprep.subr.bf16.mxu0 %v3354
        %4097 = vmatpush1.bf16.msra.mxu0 %v3353
        %4098 = vmatprep.subr.bf16.mxu0 %v3386
        %4099 = vmatpush1.bf16.msra.mxu0 %v3385
        %4100 = vmatprep.subr.bf16.mxu0 %v3418
        %4101 = vmatpush1.bf16.msra.mxu0 %v3417
        %4102 = vmatprep.subr.bf16.mxu0 %v3450
        %4103 = vmatpush1.bf16.msra.mxu0 %v3449
        %4104 = vmatprep.subr.bf16.mxu0 0
        %4105 = vmatpush1.bf16.msra.mxu0 0
        %4106 = vmatprep.subr.bf16.mxu0 0
        %4107 = vmatpush1.bf16.msra.mxu0 0
        %4108 = vmatprep.subr.bf16.mxu0 0
        %4109 = vmatpush1.bf16.msra.mxu0 0
        %4110 = vmatprep.subr.bf16.mxu0 0
        %4111 = vmatpush1.bf16.msra.mxu0 0
        %4112 = vmatprep.subr.bf16.mxu0 0
        %4113 = vmatpush1.bf16.msra.mxu0 0
        %4114 = vmatprep.subr.bf16.mxu0 0
        %4115 = vmatpush1.bf16.msra.mxu0 0
        %4116 = vmatprep.subr.bf16.mxu0 0
        %4117 = vmatpush1.bf16.msra.mxu0 0
        %4118 = vmatprep.subr.bf16.mxu0 0
        %4119 = vmatpush1.bf16.msra.mxu0 0
        %4120 = vmatprep.mubr.bf16.mxu0 0
        %4121 = vmatmul.mubr.bf16.gmra.mrb[0].mxu0 %v1710
        %v4122 = vpop.f32.mrb[0].mxu0
        %v4123 = vadd.f32 %v2354, %v4122
        %v4124 = vpop.f32.mrb[0].mxu0
        %v4125 = vadd.f32 %v2358, %v4124
        %v4126 = vpop.f32.mrb[0].mxu0
        %v4127 = vpop.f32.mrb[0].mxu0
        %4128 = vdwg.mxu0
        %4129 = vmatprep.subr.bf16.mxu0 %v3228
        %4130 = vmatpush1.bf16.msra.mxu0 %v3227
        %4131 = vmatprep.subr.bf16.mxu0 %v3260
        %4132 = vmatpush1.bf16.msra.mxu0 %v3259
        %4133 = vmatprep.subr.bf16.mxu0 %v3292
        %4134 = vmatpush1.bf16.msra.mxu0 %v3291
        %4135 = vmatprep.subr.bf16.mxu0 %v3324
        %4136 = vmatpush1.bf16.msra.mxu0 %v3323
        %4137 = vmatprep.subr.bf16.mxu0 %v3356
        %4138 = vmatpush1.bf16.msra.mxu0 %v3355
        %4139 = vmatprep.subr.bf16.mxu0 %v3388
        %4140 = vmatpush1.bf16.msra.mxu0 %v3387
        %4141 = vmatprep.subr.bf16.mxu0 %v3420
        %4142 = vmatpush1.bf16.msra.mxu0 %v3419
        %4143 = vmatprep.subr.bf16.mxu0 %v3452
        %4144 = vmatpush1.bf16.msra.mxu0 %v3451
        %4145 = vmatprep.subr.bf16.mxu0 0
        %4146 = vmatpush1.bf16.msra.mxu0 0
        %4147 = vmatprep.subr.bf16.mxu0 0
        %4148 = vmatpush1.bf16.msra.mxu0 0
        %4149 = vmatprep.subr.bf16.mxu0 0
        %4150 = vmatpush1.bf16.msra.mxu0 0
        %4151 = vmatprep.subr.bf16.mxu0 0
        %4152 = vmatpush1.bf16.msra.mxu0 0
        %4153 = vmatprep.subr.bf16.mxu0 0
        %4154 = vmatpush1.bf16.msra.mxu0 0
        %4155 = vmatprep.subr.bf16.mxu0 0
        %4156 = vmatpush1.bf16.msra.mxu0 0
        %4157 = vmatprep.subr.bf16.mxu0 0
        %4158 = vmatpush1.bf16.msra.mxu0 0
        %4159 = vmatprep.subr.bf16.mxu0 0
        %4160 = vmatpush1.bf16.msra.mxu0 0
        %4161 = vmatprep.mubr.bf16.mxu0 0
        %4162 = vmatmul.mubr.bf16.gmra.mrb[0].mxu0 %v1710
        %v4163 = vpop.f32.mrb[0].mxu0
        %v4164 = vadd.f32 %v2362, %v4163
        %v4165 = vpop.f32.mrb[0].mxu0
        %v4166 = vadd.f32 %v2366, %v4165
        %v4167 = vpop.f32.mrb[0].mxu0
        %v4168 = vpop.f32.mrb[0].mxu0
        %4169 = vdwg.mxu0
        %4170 = vmatprep.subr.bf16.mxu0 %v3230
        %4171 = vmatpush1.bf16.msra.mxu0 %v3229
        %4172 = vmatprep.subr.bf16.mxu0 %v3262
        %4173 = vmatpush1.bf16.msra.mxu0 %v3261
        %4174 = vmatprep.subr.bf16.mxu0 %v3294
        %4175 = vmatpush1.bf16.msra.mxu0 %v3293
        %4176 = vmatprep.subr.bf16.mxu0 %v3326
        %4177 = vmatpush1.bf16.msra.mxu0 %v3325
        %4178 = vmatprep.subr.bf16.mxu0 %v3358
        %4179 = vmatpush1.bf16.msra.mxu0 %v3357
        %4180 = vmatprep.subr.bf16.mxu0 %v3390
        %4181 = vmatpush1.bf16.msra.mxu0 %v3389
        %4182 = vmatprep.subr.bf16.mxu0 %v3422
        %4183 = vmatpush1.bf16.msra.mxu0 %v3421
        %4184 = vmatprep.subr.bf16.mxu0 %v3454
        %4185 = vmatpush1.bf16.msra.mxu0 %v3453
        %4186 = vmatprep.subr.bf16.mxu0 0
        %4187 = vmatpush1.bf16.msra.mxu0 0
        %4188 = vmatprep.subr.bf16.mxu0 0
        %4189 = vmatpush1.bf16.msra.mxu0 0
        %4190 = vmatprep.subr.bf16.mxu0 0
        %4191 = vmatpush1.bf16.msra.mxu0 0
        %4192 = vmatprep.subr.bf16.mxu0 0
        %4193 = vmatpush1.bf16.msra.mxu0 0
        %4194 = vmatprep.subr.bf16.mxu0 0
        %4195 = vmatpush1.bf16.msra.mxu0 0
        %4196 = vmatprep.subr.bf16.mxu0 0
        %4197 = vmatpush1.bf16.msra.mxu0 0
        %4198 = vmatprep.subr.bf16.mxu0 0
        %4199 = vmatpush1.bf16.msra.mxu0 0
        %4200 = vmatprep.subr.bf16.mxu0 0
        %4201 = vmatpush1.bf16.msra.mxu0 0
        %4202 = vmatprep.mubr.bf16.mxu0 0
        %4203 = vmatmul.mubr.bf16.gmra.mrb[0].mxu0 %v1710
        %v4204 = vpop.f32.mrb[0].mxu0
        %v4205 = vadd.f32 %v2370, %v4204
        %v4206 = vpop.f32.mrb[0].mxu0
        %v4207 = vadd.f32 %v2374, %v4206
        %v4208 = vpop.f32.mrb[0].mxu0
        %v4209 = vpop.f32.mrb[0].mxu0
        %4210 = vdwg.mxu0
        %4211 = vmatprep.subr.bf16.mxu0 %v3232
        %4212 = vmatpush1.bf16.msra.mxu0 %v3231
        %4213 = vmatprep.subr.bf16.mxu0 %v3264
        %4214 = vmatpush1.bf16.msra.mxu0 %v3263
        %4215 = vmatprep.subr.bf16.mxu0 %v3296
        %4216 = vmatpush1.bf16.msra.mxu0 %v3295
        %4217 = vmatprep.subr.bf16.mxu0 %v3328
        %4218 = vmatpush1.bf16.msra.mxu0 %v3327
        %4219 = vmatprep.subr.bf16.mxu0 %v3360
        %4220 = vmatpush1.bf16.msra.mxu0 %v3359
        %4221 = vmatprep.subr.bf16.mxu0 %v3392
        %4222 = vmatpush1.bf16.msra.mxu0 %v3391
        %4223 = vmatprep.subr.bf16.mxu0 %v3424
        %4224 = vmatpush1.bf16.msra.mxu0 %v3423
        %4225 = vmatprep.subr.bf16.mxu0 %v3456
        %4226 = vmatpush1.bf16.msra.mxu0 %v3455
        %4227 = vmatprep.subr.bf16.mxu0 0
        %4228 = vmatpush1.bf16.msra.mxu0 0
        %4229 = vmatprep.subr.bf16.mxu0 0
        %4230 = vmatpush1.bf16.msra.mxu0 0
        %4231 = vmatprep.subr.bf16.mxu0 0
        %4232 = vmatpush1.bf16.msra.mxu0 0
        %4233 = vmatprep.subr.bf16.mxu0 0
        %4234 = vmatpush1.bf16.msra.mxu0 0
        %4235 = vmatprep.subr.bf16.mxu0 0
        %4236 = vmatpush1.bf16.msra.mxu0 0
        %4237 = vmatprep.subr.bf16.mxu0 0
        %4238 = vmatpush1.bf16.msra.mxu0 0
        %4239 = vmatprep.subr.bf16.mxu0 0
        %4240 = vmatpush1.bf16.msra.mxu0 0
        %4241 = vmatprep.subr.bf16.mxu0 0
        %4242 = vmatpush1.bf16.msra.mxu0 0
        %4243 = vmatprep.mubr.bf16.mxu0 0
        %4244 = vmatmul.mubr.bf16.gmra.mrb[0].mxu0 %v1710
        %v4245 = vpop.f32.mrb[0].mxu0
        %v4246 = vadd.f32 %v2378, %v4245
        %v4247 = vpop.f32.mrb[0].mxu0
        %v4248 = vadd.f32 %v2382, %v4247
        %v4249 = vpop.f32.mrb[0].mxu0
        %v4250 = vpop.f32.mrb[0].mxu0
        %4251 = vdwg.mxu0
        %4252 = vmatprep.subr.bf16.mxu0 %v3234
        %4253 = vmatpush1.bf16.msra.mxu0 %v3233
        %4254 = vmatprep.subr.bf16.mxu0 %v3266
        %4255 = vmatpush1.bf16.msra.mxu0 %v3265
        %4256 = vmatprep.subr.bf16.mxu0 %v3298
        %4257 = vmatpush1.bf16.msra.mxu0 %v3297
        %4258 = vmatprep.subr.bf16.mxu0 %v3330
        %4259 = vmatpush1.bf16.msra.mxu0 %v3329
        %4260 = vmatprep.subr.bf16.mxu0 %v3362
        %4261 = vmatpush1.bf16.msra.mxu0 %v3361
        %4262 = vmatprep.subr.bf16.mxu0 %v3394
        %4263 = vmatpush1.bf16.msra.mxu0 %v3393
        %4264 = vmatprep.subr.bf16.mxu0 %v3426
        %4265 = vmatpush1.bf16.msra.mxu0 %v3425
        %4266 = vmatprep.subr.bf16.mxu0 %v3458
        %4267 = vmatpush1.bf16.msra.mxu0 %v3457
        %4268 = vmatprep.subr.bf16.mxu0 0
        %4269 = vmatpush1.bf16.msra.mxu0 0
        %4270 = vmatprep.subr.bf16.mxu0 0
        %4271 = vmatpush1.bf16.msra.mxu0 0
        %4272 = vmatprep.subr.bf16.mxu0 0
        %4273 = vmatpush1.bf16.msra.mxu0 0
        %4274 = vmatprep.subr.bf16.mxu0 0
        %4275 = vmatpush1.bf16.msra.mxu0 0
        %4276 = vmatprep.subr.bf16.mxu0 0
        %4277 = vmatpush1.bf16.msra.mxu0 0
        %4278 = vmatprep.subr.bf16.mxu0 0
        %4279 = vmatpush1.bf16.msra.mxu0 0
        %4280 = vmatprep.subr.bf16.mxu0 0
        %4281 = vmatpush1.bf16.msra.mxu0 0
        %4282 = vmatprep.subr.bf16.mxu0 0
        %4283 = vmatpush1.bf16.msra.mxu0 0
        %4284 = vmatprep.mubr.bf16.mxu0 0
        %4285 = vmatmul.mubr.bf16.gmra.mrb[0].mxu0 %v1710
        %v4286 = vpop.f32.mrb[0].mxu0
        %v4287 = vadd.f32 %v2386, %v4286
        %v4288 = vpop.f32.mrb[0].mxu0
        %v4289 = vadd.f32 %v2390, %v4288
        %v4290 = vpop.f32.mrb[0].mxu0
        %v4291 = vpop.f32.mrb[0].mxu0
        %4292 = vdwg.mxu0
        %4293 = vmatprep.subr.bf16.mxu0 %v3236
        %4294 = vmatpush1.bf16.msra.mxu0 %v3235
        %4295 = vmatprep.subr.bf16.mxu0 %v3268
        %4296 = vmatpush1.bf16.msra.mxu0 %v3267
        %4297 = vmatprep.subr.bf16.mxu0 %v3300
        %4298 = vmatpush1.bf16.msra.mxu0 %v3299
        %4299 = vmatprep.subr.bf16.mxu0 %v3332
        %4300 = vmatpush1.bf16.msra.mxu0 %v3331
        %4301 = vmatprep.subr.bf16.mxu0 %v3364
        %4302 = vmatpush1.bf16.msra.mxu0 %v3363
        %4303 = vmatprep.subr.bf16.mxu0 %v3396
        %4304 = vmatpush1.bf16.msra.mxu0 %v3395
        %4305 = vmatprep.subr.bf16.mxu0 %v3428
        %4306 = vmatpush1.bf16.msra.mxu0 %v3427
        %4307 = vmatprep.subr.bf16.mxu0 %v3460
        %4308 = vmatpush1.bf16.msra.mxu0 %v3459
        %4309 = vmatprep.subr.bf16.mxu0 0
        %4310 = vmatpush1.bf16.msra.mxu0 0
        %4311 = vmatprep.subr.bf16.mxu0 0
        %4312 = vmatpush1.bf16.msra.mxu0 0
        %4313 = vmatprep.subr.bf16.mxu0 0
        %4314 = vmatpush1.bf16.msra.mxu0 0
        %4315 = vmatprep.subr.bf16.mxu0 0
        %4316 = vmatpush1.bf16.msra.mxu0 0
        %4317 = vmatprep.subr.bf16.mxu0 0
        %4318 = vmatpush1.bf16.msra.mxu0 0
        %4319 = vmatprep.subr.bf16.mxu0 0
        %4320 = vmatpush1.bf16.msra.mxu0 0
        %4321 = vmatprep.subr.bf16.mxu0 0
        %4322 = vmatpush1.bf16.msra.mxu0 0
        %4323 = vmatprep.subr.bf16.mxu0 0
        %4324 = vmatpush1.bf16.msra.mxu0 0
        %4325 = vmatprep.mubr.bf16.mxu0 0
        %4326 = vmatmul.mubr.bf16.gmra.mrb[0].mxu0 %v1710
        %v4327 = vpop.f32.mrb[0].mxu0
        %v4328 = vadd.f32 %v2394, %v4327
        %v4329 = vpop.f32.mrb[0].mxu0
        %v4330 = vadd.f32 %v2398, %v4329
        %v4331 = vpop.f32.mrb[0].mxu0
        %v4332 = vpop.f32.mrb[0].mxu0
        %4333 = vdwg.mxu0
        %4334 = vmatprep.subr.bf16.mxu0 %v3238
        %4335 = vmatpush1.bf16.msra.mxu0 %v3237
        %4336 = vmatprep.subr.bf16.mxu0 %v3270
        %4337 = vmatpush1.bf16.msra.mxu0 %v3269
        %4338 = vmatprep.subr.bf16.mxu0 %v3302
        %4339 = vmatpush1.bf16.msra.mxu0 %v3301
        %4340 = vmatprep.subr.bf16.mxu0 %v3334
        %4341 = vmatpush1.bf16.msra.mxu0 %v3333
        %4342 = vmatprep.subr.bf16.mxu0 %v3366
        %4343 = vmatpush1.bf16.msra.mxu0 %v3365
        %4344 = vmatprep.subr.bf16.mxu0 %v3398
        %4345 = vmatpush1.bf16.msra.mxu0 %v3397
        %4346 = vmatprep.subr.bf16.mxu0 %v3430
        %4347 = vmatpush1.bf16.msra.mxu0 %v3429
        %4348 = vmatprep.subr.bf16.mxu0 %v3462
        %4349 = vmatpush1.bf16.msra.mxu0 %v3461
        %4350 = vmatprep.subr.bf16.mxu0 0
        %4351 = vmatpush1.bf16.msra.mxu0 0
        %4352 = vmatprep.subr.bf16.mxu0 0
        %4353 = vmatpush1.bf16.msra.mxu0 0
        %4354 = vmatprep.subr.bf16.mxu0 0
        %4355 = vmatpush1.bf16.msra.mxu0 0
        %4356 = vmatprep.subr.bf16.mxu0 0
        %4357 = vmatpush1.bf16.msra.mxu0 0
        %4358 = vmatprep.subr.bf16.mxu0 0
        %4359 = vmatpush1.bf16.msra.mxu0 0
        %4360 = vmatprep.subr.bf16.mxu0 0
        %4361 = vmatpush1.bf16.msra.mxu0 0
        %4362 = vmatprep.subr.bf16.mxu0 0
        %4363 = vmatpush1.bf16.msra.mxu0 0
        %4364 = vmatprep.subr.bf16.mxu0 0
        %4365 = vmatpush1.bf16.msra.mxu0 0
        %4366 = vmatprep.mubr.bf16.mxu0 0
        %4367 = vmatmul.mubr.bf16.gmra.mrb[0].mxu0 %v1710
        %v4368 = vpop.f32.mrb[0].mxu0
        %v4369 = vadd.f32 %v2402, %v4368
        %v4370 = vpop.f32.mrb[0].mxu0
        %v4371 = vadd.f32 %v2406, %v4370
        %v4372 = vpop.f32.mrb[0].mxu0
        %v4373 = vpop.f32.mrb[0].mxu0
        %4374 = vdwg.mxu0
        %v4375 = vmax.f32 %v3754, %v3836
        %v4376 = vmax.f32 %v3756, %v3838
        %v4377 = vmax.f32 %v3795, %v3877
        %v4378 = vmax.f32 %v3797, %v3879
        %v4379 = vmax.f32 %v4375, %v3918
        %v4380 = vmax.f32 %v4376, %v3920
        %v4381 = vmax.f32 %v4377, %v3959
        %v4382 = vmax.f32 %v4378, %v3961
        %v4383 = vmax.f32 %v4379, %v4000
        %v4384 = vmax.f32 %v4380, %v4002
        %v4385 = vmax.f32 %v4381, %v4041
        %v4386 = vmax.f32 %v4382, %v4043
        %v4387 = vmax.f32 %v4383, %v4082
        %v4388 = vmax.f32 %v4384, %v4084
        %v4389 = vmax.f32 %v4385, %v4123
        %v4390 = vmax.f32 %v4386, %v4125
        %v4391 = vmax.f32 %v4387, %v4164
        %v4392 = vmax.f32 %v4388, %v4166
        %v4393 = vmax.f32 %v4389, %v4205
        %v4394 = vmax.f32 %v4390, %v4207
        %v4395 = vmax.f32 %v4391, %v4246
        %v4396 = vmax.f32 %v4392, %v4248
        %v4397 = vmax.f32 %v4393, %v4287
        %v4398 = vmax.f32 %v4394, %v4289
        %v4399 = vmax.f32 %v4395, %v4328
        %v4400 = vmax.f32 %v4396, %v4330
        %v4401 = vmax.f32 %v4397, %v4369
        %v4402 = vmax.f32 %v4398, %v4371
        %v4403 = vmax.f32 %v4399, %v4400
        %v4404 = vmax.f32 %v4401, %v4402
        %v4405 = vmax.f32 %v4403, %v4404
        %4406 = vmax.xlane.f32.xlu0 %v4405
        %v4407 = vpop.xlane.xlu0 %4406
        %v4408 = vsub.f32 %v3754, %v4407
        %v4409 = vsub.f32 %v3756, %v4407
        %v4410 = vsub.f32 %v3795, %v4407
        %v4411 = vsub.f32 %v3797, %v4407
        %v4412 = vsub.f32 %v3836, %v4407
        %v4413 = vsub.f32 %v3838, %v4407
        %v4414 = vsub.f32 %v3877, %v4407
        %v4415 = vsub.f32 %v3879, %v4407
        %v4416 = vsub.f32 %v3918, %v4407
        %v4417 = vsub.f32 %v3920, %v4407
        %v4418 = vsub.f32 %v3959, %v4407
        %v4419 = vsub.f32 %v3961, %v4407
        %v4420 = vsub.f32 %v4000, %v4407
        %v4421 = vsub.f32 %v4002, %v4407
        %v4422 = vsub.f32 %v4041, %v4407
        %v4423 = vsub.f32 %v4043, %v4407
        %v4424 = vsub.f32 %v4082, %v4407
        %v4425 = vsub.f32 %v4084, %v4407
        %v4426 = vsub.f32 %v4123, %v4407
        %v4427 = vsub.f32 %v4125, %v4407
        %v4428 = vsub.f32 %v4164, %v4407
        %v4429 = vsub.f32 %v4166, %v4407
        %v4430 = vsub.f32 %v4205, %v4407
        %v4431 = vsub.f32 %v4207, %v4407
        %v4432 = vsub.f32 %v4246, %v4407
        %v4433 = vsub.f32 %v4248, %v4407
        %v4434 = vsub.f32 %v4287, %v4407
        %v4435 = vsub.f32 %v4289, %v4407
        %v4436 = vsub.f32 %v4328, %v4407
        %v4437 = vsub.f32 %v4330, %v4407
        %v4438 = vsub.f32 %v4369, %v4407
        %v4439 = vsub.f32 %v4371, %v4407
        %v4440 = vmul.f32 %v4408, 1.442695
        %v4441 = vpow.pop %v4440
        %v4442 = vmul.f32 %v4409, 1.442695
        %v4443 = vpow.pop %v4442
        %v4444 = vmul.f32 %v4410, 1.442695
        %v4445 = vpow.pop %v4444
        %v4446 = vmul.f32 %v4411, 1.442695
        %v4447 = vpow.pop %v4446
        %v4448 = vmul.f32 %v4412, 1.442695
        %v4449 = vpow.pop %v4448
        %v4450 = vmul.f32 %v4413, 1.442695
        %v4451 = vpow.pop %v4450
        %v4452 = vmul.f32 %v4414, 1.442695
        %v4453 = vpow.pop %v4452
        %v4454 = vmul.f32 %v4415, 1.442695
        %v4455 = vpow.pop %v4454
        %v4456 = vmul.f32 %v4416, 1.442695
        %v4457 = vpow.pop %v4456
        %v4458 = vmul.f32 %v4417, 1.442695
        %v4459 = vpow.pop %v4458
        %v4460 = vmul.f32 %v4418, 1.442695
        %v4461 = vpow.pop %v4460
        %v4462 = vmul.f32 %v4419, 1.442695
        %v4463 = vpow.pop %v4462
        %v4464 = vmul.f32 %v4420, 1.442695
        %v4465 = vpow.pop %v4464
        %v4466 = vmul.f32 %v4421, 1.442695
        %v4467 = vpow.pop %v4466
        %v4468 = vmul.f32 %v4422, 1.442695
        %v4469 = vpow.pop %v4468
        %v4470 = vmul.f32 %v4423, 1.442695
        %v4471 = vpow.pop %v4470
        %v4472 = vmul.f32 %v4424, 1.442695
        %v4473 = vpow.pop %v4472
        %v4474 = vmul.f32 %v4425, 1.442695
        %v4475 = vpow.pop %v4474
        %v4476 = vmul.f32 %v4426, 1.442695
        %v4477 = vpow.pop %v4476
        %v4478 = vmul.f32 %v4427, 1.442695
        %v4479 = vpow.pop %v4478
        %v4480 = vmul.f32 %v4428, 1.442695
        %v4481 = vpow.pop %v4480
        %v4482 = vmul.f32 %v4429, 1.442695
        %v4483 = vpow.pop %v4482
        %v4484 = vmul.f32 %v4430, 1.442695
        %v4485 = vpow.pop %v4484
        %v4486 = vmul.f32 %v4431, 1.442695
        %v4487 = vpow.pop %v4486
        %v4488 = vmul.f32 %v4432, 1.442695
        %v4489 = vpow.pop %v4488
        %v4490 = vmul.f32 %v4433, 1.442695
        %v4491 = vpow.pop %v4490
        %v4492 = vmul.f32 %v4434, 1.442695
        %v4493 = vpow.pop %v4492
        %v4494 = vmul.f32 %v4435, 1.442695
        %v4495 = vpow.pop %v4494
        %v4496 = vmul.f32 %v4436, 1.442695
        %v4497 = vpow.pop %v4496
        %v4498 = vmul.f32 %v4437, 1.442695
        %v4499 = vpow.pop %v4498
        %v4500 = vmul.f32 %v4438, 1.442695
        %v4501 = vpow.pop %v4500
        %v4502 = vmul.f32 %v4439, 1.442695
        %v4503 = vpow.pop %v4502
        %v4504 = vpack.c.bf16 %v4441, %v4441
        %v4505 = vpack.c.bf16 %v4443, %v4443
        %v4506 = vpack.c.bf16 %v4445, %v4445
        %v4507 = vpack.c.bf16 %v4447, %v4447
        %v4508 = vpack.c.bf16 %v4449, %v4449
        %v4509 = vpack.c.bf16 %v4451, %v4451
        %v4510 = vpack.c.bf16 %v4453, %v4453
        %v4511 = vpack.c.bf16 %v4455, %v4455
        %v4512 = vpack.c.bf16 %v4457, %v4457
        %v4513 = vpack.c.bf16 %v4459, %v4459
        %v4514 = vpack.c.bf16 %v4461, %v4461
        %v4515 = vpack.c.bf16 %v4463, %v4463
        %v4516 = vpack.c.bf16 %v4465, %v4465
        %v4517 = vpack.c.bf16 %v4467, %v4467
        %v4518 = vpack.c.bf16 %v4469, %v4469
        %v4519 = vpack.c.bf16 %v4471, %v4471
        %v4520 = vpack.c.bf16 %v4473, %v4473
        %v4521 = vpack.c.bf16 %v4475, %v4475
        %v4522 = vpack.c.bf16 %v4477, %v4477
        %v4523 = vpack.c.bf16 %v4479, %v4479
        %v4524 = vpack.c.bf16 %v4481, %v4481
        %v4525 = vpack.c.bf16 %v4483, %v4483
        %v4526 = vpack.c.bf16 %v4485, %v4485
        %v4527 = vpack.c.bf16 %v4487, %v4487
        %v4528 = vpack.c.bf16 %v4489, %v4489
        %v4529 = vpack.c.bf16 %v4491, %v4491
        %v4530 = vpack.c.bf16 %v4493, %v4493
        %v4531 = vpack.c.bf16 %v4495, %v4495
        %v4532 = vpack.c.bf16 %v4497, %v4497
        %v4533 = vpack.c.bf16 %v4499, %v4499
        %v4534 = vpack.c.bf16 %v4501, %v4501
        %v4535 = vpack.c.bf16 %v4503, %v4503
        %v4568 = vunpack.c.l.b16 %v4504
        %v4569 = vunpack.c.l.b16 %v4505
        %v4570 = vunpack.c.l.b16 %v4506
        %v4571 = vunpack.c.l.b16 %v4507
        %v4572 = vunpack.c.l.b16 %v4508
        %v4573 = vunpack.c.l.b16 %v4509
        %v4574 = vunpack.c.l.b16 %v4510
        %v4575 = vunpack.c.l.b16 %v4511
        %v4576 = vunpack.c.l.b16 %v4512
        %v4577 = vunpack.c.l.b16 %v4513
        %v4578 = vunpack.c.l.b16 %v4514
        %v4579 = vunpack.c.l.b16 %v4515
        %v4580 = vunpack.c.l.b16 %v4516
        %v4581 = vunpack.c.l.b16 %v4517
        %v4582 = vunpack.c.l.b16 %v4518
        %v4583 = vunpack.c.l.b16 %v4519
        %v4584 = vunpack.c.l.b16 %v4520
        %v4585 = vunpack.c.l.b16 %v4521
        %v4586 = vunpack.c.l.b16 %v4522
        %v4587 = vunpack.c.l.b16 %v4523
        %v4588 = vunpack.c.l.b16 %v4524
        %v4589 = vunpack.c.l.b16 %v4525
        %v4590 = vunpack.c.l.b16 %v4526
        %v4591 = vunpack.c.l.b16 %v4527
        %v4592 = vunpack.c.l.b16 %v4528
        %v4593 = vunpack.c.l.b16 %v4529
        %v4594 = vunpack.c.l.b16 %v4530
        %v4595 = vunpack.c.l.b16 %v4531
        %v4596 = vunpack.c.l.b16 %v4532
        %v4597 = vunpack.c.l.b16 %v4533
        %v4598 = vunpack.c.l.b16 %v4534
        %v4599 = vunpack.c.l.b16 %v4535
        %v4600 = vpack.c.b16 %v4569, %v4568
        %v4601 = vpack.c.b16 %v4571, %v4570
        %v4602 = vpack.c.b16 %v4573, %v4572
        %v4603 = vpack.c.b16 %v4575, %v4574
        %v4604 = vpack.c.b16 %v4577, %v4576
        %v4605 = vpack.c.b16 %v4579, %v4578
        %v4606 = vpack.c.b16 %v4581, %v4580
        %v4607 = vpack.c.b16 %v4583, %v4582
        %v4608 = vpack.c.b16 %v4585, %v4584
        %v4609 = vpack.c.b16 %v4587, %v4586
        %v4610 = vpack.c.b16 %v4589, %v4588
        %v4611 = vpack.c.b16 %v4591, %v4590
        %v4612 = vpack.c.b16 %v4593, %v4592
        %v4613 = vpack.c.b16 %v4595, %v4594
        %v4614 = vpack.c.b16 %v4597, %v4596
        %v4615 = vpack.c.b16 %v4599, %v4598
        %4632 = vst [vmem:[%s540] sm:$0xff] %v4600
        %4633 = vst [vmem:[%s540 + $0x8] sm:$0xff] %v4601
        %4634 = vst [vmem:[%s540 + $0x10] sm:$0xff] %v4602
        %4635 = vst [vmem:[%s540 + $0x18] sm:$0xff] %v4603
        %4636 = vst [vmem:[%s540 + $0x20] sm:$0xff] %v4604
        %4637 = vst [vmem:[%s540 + $0x28] sm:$0xff] %v4605
        %4638 = vst [vmem:[%s540 + $0x30] sm:$0xff] %v4606
        %4639 = vst [vmem:[%s540 + $0x38] sm:$0xff] %v4607
        %4640 = vst [vmem:[%s540 + $0x40] sm:$0xff] %v4608
        %4641 = vst [vmem:[%s540 + $0x48] sm:$0xff] %v4609
        %4642 = vst [vmem:[%s540 + $0x50] sm:$0xff] %v4610
        %4643 = vst [vmem:[%s540 + $0x58] sm:$0xff] %v4611
        %4644 = vst [vmem:[%s540 + $0x60] sm:$0xff] %v4612
        %4645 = vst [vmem:[%s540 + $0x68] sm:$0xff] %v4613
        %4646 = vst [vmem:[%s540 + $0x70] sm:$0xff] %v4614
        %4647 = vst [vmem:[%s540 + $0x78] sm:$0xff] %v4615
        %v4648 = vld [vmem:[%s540] sm:$0xff]
        %v4649 = vld [vmem:[%s540 + $0x8] sm:$0xff]
        %v4650 = vld [vmem:[%s540 + $0x10] sm:$0xff]
        %v4651 = vld [vmem:[%s540 + $0x18] sm:$0xff]
        %v4652 = vld [vmem:[%s540 + $0x20] sm:$0xff]
        %v4653 = vld [vmem:[%s540 + $0x28] sm:$0xff]
        %v4654 = vld [vmem:[%s540 + $0x30] sm:$0xff]
        %v4655 = vld [vmem:[%s540 + $0x38] sm:$0xff]
        %v4656 = vld [vmem:[%s540 + $0x40] sm:$0xff]
        %v4657 = vld [vmem:[%s540 + $0x48] sm:$0xff]
        %v4658 = vld [vmem:[%s540 + $0x50] sm:$0xff]
        %v4659 = vld [vmem:[%s540 + $0x58] sm:$0xff]
        %v4660 = vld [vmem:[%s540 + $0x60] sm:$0xff]
        %v4661 = vld [vmem:[%s540 + $0x68] sm:$0xff]
        %v4662 = vld [vmem:[%s540 + $0x70] sm:$0xff]
        %v4663 = vld [vmem:[%s540 + $0x78] sm:$0xff]
        %v4664 = vunpack.c.l.bf16 %v4648
        %v4665 = vunpack.c.h.bf16 %v4648
        %v4666 = vunpack.c.l.bf16 %v4649
        %v4667 = vunpack.c.h.bf16 %v4649
        %v4668 = vunpack.c.l.bf16 %v4650
        %v4669 = vunpack.c.h.bf16 %v4650
        %v4670 = vunpack.c.l.bf16 %v4651
        %v4671 = vunpack.c.h.bf16 %v4651
        %v4672 = vunpack.c.l.bf16 %v4652
        %v4673 = vunpack.c.h.bf16 %v4652
        %v4674 = vunpack.c.l.bf16 %v4653
        %v4675 = vunpack.c.h.bf16 %v4653
        %v4676 = vunpack.c.l.bf16 %v4654
        %v4677 = vunpack.c.h.bf16 %v4654
        %v4678 = vunpack.c.l.bf16 %v4655
        %v4679 = vunpack.c.h.bf16 %v4655
        %v4680 = vunpack.c.l.bf16 %v4656
        %v4681 = vunpack.c.h.bf16 %v4656
        %v4682 = vunpack.c.l.bf16 %v4657
        %v4683 = vunpack.c.h.bf16 %v4657
        %v4684 = vunpack.c.l.bf16 %v4658
        %v4685 = vunpack.c.h.bf16 %v4658
        %v4686 = vunpack.c.l.bf16 %v4659
        %v4687 = vunpack.c.h.bf16 %v4659
        %v4688 = vunpack.c.l.bf16 %v4660
        %v4689 = vunpack.c.h.bf16 %v4660
        %v4690 = vunpack.c.l.bf16 %v4661
        %v4691 = vunpack.c.h.bf16 %v4661
        %v4692 = vunpack.c.l.bf16 %v4662
        %v4693 = vunpack.c.h.bf16 %v4662
        %v4694 = vunpack.c.l.bf16 %v4663
        %v4695 = vunpack.c.h.bf16 %v4663
        %v4696 = vadd.f32 %v4664, %v4665
        %v4697 = vadd.f32 %v4696, %v4666
        %v4698 = vadd.f32 %v4697, %v4667
        %v4699 = vadd.f32 %v4698, %v4668
        %v4700 = vadd.f32 %v4699, %v4669
        %v4701 = vadd.f32 %v4700, %v4670
        %v4702 = vadd.f32 %v4701, %v4671
        %v4703 = vadd.f32 %v4702, %v4672
        %v4704 = vadd.f32 %v4703, %v4673
        %v4705 = vadd.f32 %v4704, %v4674
        %v4706 = vadd.f32 %v4705, %v4675
        %v4707 = vadd.f32 %v4706, %v4676
        %v4708 = vadd.f32 %v4707, %v4677
        %v4709 = vadd.f32 %v4708, %v4678
        %v4710 = vadd.f32 %v4709, %v4679
        %v4711 = vadd.f32 %v4710, %v4680
        %v4712 = vadd.f32 %v4711, %v4681
        %v4713 = vadd.f32 %v4712, %v4682
        %v4714 = vadd.f32 %v4713, %v4683
        %v4715 = vadd.f32 %v4714, %v4684
        %v4716 = vadd.f32 %v4715, %v4685
        %v4717 = vadd.f32 %v4716, %v4686
        %v4718 = vadd.f32 %v4717, %v4687
        %v4719 = vadd.f32 %v4718, %v4688
        %v4720 = vadd.f32 %v4719, %v4689
        %v4721 = vadd.f32 %v4720, %v4690
        %v4722 = vadd.f32 %v4721, %v4691
        %v4723 = vadd.f32 %v4722, %v4692
        %v4724 = vadd.f32 %v4723, %v4693
        %v4725 = vadd.f32 %v4724, %v4694
        %v4726 = vadd.f32 %v4725, %v4695
        %4727 = vadd.xlane.f32.xlu0 %v4726
        %v4728 = vpop.xlane.xlu0 %4727
        %v4729 = vrcp.pop %v4728
        %v4730 = vmul.f32 %v4664, %v4729
        %v4731 = vmul.f32 %v4665, %v4729
        %v4732 = vmul.f32 %v4666, %v4729
        %v4733 = vmul.f32 %v4667, %v4729
        %v4734 = vmul.f32 %v4668, %v4729
        %v4735 = vmul.f32 %v4669, %v4729
        %v4736 = vmul.f32 %v4670, %v4729
        %v4737 = vmul.f32 %v4671, %v4729
        %v4738 = vmul.f32 %v4672, %v4729
        %v4739 = vmul.f32 %v4673, %v4729
        %v4740 = vmul.f32 %v4674, %v4729
        %v4741 = vmul.f32 %v4675, %v4729
        %v4742 = vmul.f32 %v4676, %v4729
        %v4743 = vmul.f32 %v4677, %v4729
        %v4744 = vmul.f32 %v4678, %v4729
        %v4745 = vmul.f32 %v4679, %v4729
        %v4746 = vmul.f32 %v4680, %v4729
        %v4747 = vmul.f32 %v4681, %v4729
        %v4748 = vmul.f32 %v4682, %v4729
        %v4749 = vmul.f32 %v4683, %v4729
        %v4750 = vmul.f32 %v4684, %v4729
        %v4751 = vmul.f32 %v4685, %v4729
        %v4752 = vmul.f32 %v4686, %v4729
        %v4753 = vmul.f32 %v4687, %v4729
        %v4754 = vmul.f32 %v4688, %v4729
        %v4755 = vmul.f32 %v4689, %v4729
        %v4756 = vmul.f32 %v4690, %v4729
        %v4757 = vmul.f32 %v4691, %v4729
        %v4758 = vmul.f32 %v4692, %v4729
        %v4759 = vmul.f32 %v4693, %v4729
        %v4760 = vmul.f32 %v4694, %v4729
        %v4761 = vmul.f32 %v4695, %v4729
        %v4762 = vpack.c.bf16 %v4730, %v4730
        %v4763 = vpack.c.bf16 %v4731, %v4731
        %v4764 = vpack.c.bf16 %v4732, %v4732
        %v4765 = vpack.c.bf16 %v4733, %v4733
        %v4766 = vpack.c.bf16 %v4734, %v4734
        %v4767 = vpack.c.bf16 %v4735, %v4735
        %v4768 = vpack.c.bf16 %v4736, %v4736
        %v4769 = vpack.c.bf16 %v4737, %v4737
        %v4770 = vpack.c.bf16 %v4738, %v4738
        %v4771 = vpack.c.bf16 %v4739, %v4739
        %v4772 = vpack.c.bf16 %v4740, %v4740
        %v4773 = vpack.c.bf16 %v4741, %v4741
        %v4774 = vpack.c.bf16 %v4742, %v4742
        %v4775 = vpack.c.bf16 %v4743, %v4743
        %v4776 = vpack.c.bf16 %v4744, %v4744
        %v4777 = vpack.c.bf16 %v4745, %v4745
        %v4778 = vpack.c.bf16 %v4746, %v4746
        %v4779 = vpack.c.bf16 %v4747, %v4747
        %v4780 = vpack.c.bf16 %v4748, %v4748
        %v4781 = vpack.c.bf16 %v4749, %v4749
        %v4782 = vpack.c.bf16 %v4750, %v4750
        %v4783 = vpack.c.bf16 %v4751, %v4751
        %v4784 = vpack.c.bf16 %v4752, %v4752
        %v4785 = vpack.c.bf16 %v4753, %v4753
        %v4786 = vpack.c.bf16 %v4754, %v4754
        %v4787 = vpack.c.bf16 %v4755, %v4755
        %v4788 = vpack.c.bf16 %v4756, %v4756
        %v4789 = vpack.c.bf16 %v4757, %v4757
        %v4790 = vpack.c.bf16 %v4758, %v4758
        %v4791 = vpack.c.bf16 %v4759, %v4759
        %v4792 = vpack.c.bf16 %v4760, %v4760
        %v4793 = vpack.c.bf16 %v4761, %v4761
        %v4826 = vunpack.c.l.b16 %v4762
        %v4827 = vunpack.c.l.b16 %v4763
        %v4828 = vunpack.c.l.b16 %v4764
        %v4829 = vunpack.c.l.b16 %v4765
        %v4830 = vunpack.c.l.b16 %v4766
        %v4831 = vunpack.c.l.b16 %v4767
        %v4832 = vunpack.c.l.b16 %v4768
        %v4833 = vunpack.c.l.b16 %v4769
        %v4834 = vunpack.c.l.b16 %v4770
        %v4835 = vunpack.c.l.b16 %v4771
        %v4836 = vunpack.c.l.b16 %v4772
        %v4837 = vunpack.c.l.b16 %v4773
        %v4838 = vunpack.c.l.b16 %v4774
        %v4839 = vunpack.c.l.b16 %v4775
        %v4840 = vunpack.c.l.b16 %v4776
        %v4841 = vunpack.c.l.b16 %v4777
        %v4842 = vunpack.c.l.b16 %v4778
        %v4843 = vunpack.c.l.b16 %v4779
        %v4844 = vunpack.c.l.b16 %v4780
        %v4845 = vunpack.c.l.b16 %v4781
        %v4846 = vunpack.c.l.b16 %v4782
        %v4847 = vunpack.c.l.b16 %v4783
        %v4848 = vunpack.c.l.b16 %v4784
        %v4849 = vunpack.c.l.b16 %v4785
        %v4850 = vunpack.c.l.b16 %v4786
        %v4851 = vunpack.c.l.b16 %v4787
        %v4852 = vunpack.c.l.b16 %v4788
        %v4853 = vunpack.c.l.b16 %v4789
        %v4854 = vunpack.c.l.b16 %v4790
        %v4855 = vunpack.c.l.b16 %v4791
        %v4856 = vunpack.c.l.b16 %v4792
        %v4857 = vunpack.c.l.b16 %v4793
        %v4858 = vpack.c.b16 %v4827, %v4826
        %v4859 = vpack.c.b16 %v4829, %v4828
        %v4860 = vpack.c.b16 %v4831, %v4830
        %v4861 = vpack.c.b16 %v4833, %v4832
        %v4862 = vpack.c.b16 %v4835, %v4834
        %v4863 = vpack.c.b16 %v4837, %v4836
        %v4864 = vpack.c.b16 %v4839, %v4838
        %v4865 = vpack.c.b16 %v4841, %v4840
        %v4866 = vpack.c.b16 %v4843, %v4842
        %v4867 = vpack.c.b16 %v4845, %v4844
        %v4868 = vpack.c.b16 %v4847, %v4846
        %v4869 = vpack.c.b16 %v4849, %v4848
        %v4870 = vpack.c.b16 %v4851, %v4850
        %v4871 = vpack.c.b16 %v4853, %v4852
        %v4872 = vpack.c.b16 %v4855, %v4854
        %v4873 = vpack.c.b16 %v4857, %v4856
        %4890 = vst [vmem:[%s540] sm:$0xff] %v4858
        %4891 = vst [vmem:[%s540 + $0x8] sm:$0xff] %v4859
        %4892 = vst [vmem:[%s540 + $0x10] sm:$0xff] %v4860
        %4893 = vst [vmem:[%s540 + $0x18] sm:$0xff] %v4861
        %4894 = vst [vmem:[%s540 + $0x20] sm:$0xff] %v4862
        %4895 = vst [vmem:[%s540 + $0x28] sm:$0xff] %v4863
        %4896 = vst [vmem:[%s540 + $0x30] sm:$0xff] %v4864
        %4897 = vst [vmem:[%s540 + $0x38] sm:$0xff] %v4865
        %4898 = vst [vmem:[%s540 + $0x40] sm:$0xff] %v4866
        %4899 = vst [vmem:[%s540 + $0x48] sm:$0xff] %v4867
        %4900 = vst [vmem:[%s540 + $0x50] sm:$0xff] %v4868
        %4901 = vst [vmem:[%s540 + $0x58] sm:$0xff] %v4869
        %4902 = vst [vmem:[%s540 + $0x60] sm:$0xff] %v4870
        %4903 = vst [vmem:[%s540 + $0x68] sm:$0xff] %v4871
        %4904 = vst [vmem:[%s540 + $0x70] sm:$0xff] %v4872
        %4905 = vst [vmem:[%s540 + $0x78] sm:$0xff] %v4873
        %s4906 = sand.u32 %s302, 1
        %s4907 = scalar_lea.sflag [#allocation4], %s4906
        %s4908 = sand.u32 %s302, 1
        %s4909 = smul.addr %s4908, 8
        %s4910 = scalar_lea.vmem [#allocation13], %s4909
        %s4911 = sand.u32 %s328, 1
        %s4912 = scalar_lea.sflag [#allocation15], %s4911
        %s4913 = sand.u32 %s328, 1
        %s4914 = smul.addr %s4913, 128
        %s4915 = scalar_lea.vmem [#allocation14], %s4914
        // Predicated region
        $region93: #{tpu_custom_call.1} parent=67 // pred_check
          %p4916 = pneg %p312
        $region94: #{tpu_custom_call.1} parent=67 // pred_check_branch
          %4918 = sbr.rel (%p4916) target = $region96
        $region95: #{tpu_custom_call.1} parent=67 // pred_region
          %s4920 = ssub.s32 128, 128
          %4921 = vsyncadd %s4907, %s4920
          %s4922 = smul.addr %s37, 128
          %s4923 = scalar_lea.hbm %s12, %s4922
          %s4925 = sshll.u32 %s4910, 4
          %s4926 = int_to_ptr.vmem [resolvable:$true] %s4925
          %4928 = dma.vmem_to_hbm [thread:$0]  %s4926, 128, %s4923, %s4907
        $region96: #{tpu_custom_call.1} parent=67 // pred_fallthru
          _
        // Predicated region
        $region97: #{tpu_custom_call.1} parent=67 // pred_check
          %p4929 = pneg %p338
        $region98: #{tpu_custom_call.1} parent=67 // pred_check_branch
          %4931 = sbr.rel (%p4929) target = $region100
        $region99: #{tpu_custom_call.1} parent=67 // pred_region
          %s4933 = ssub.s32 2048, 2048
          %4934 = vsyncadd %s4912, %s4933
          %s4935 = smul.addr %s37, 32
          %s4936 = smul.addr %s4935, 64
          %s4937 = scalar_lea.hbm %s13, %s4936
          %s4939 = sshll.u32 %s4915, 4
          %s4940 = int_to_ptr.vmem [resolvable:$true] %s4939
          %4942 = dma.vmem_to_hbm [thread:$0]  %s4940, 2048, %s4937, %s4912
        $region100: #{tpu_custom_call.1} parent=67 // pred_fallthru
          _
      $region68: #{tpu_custom_call.1} parent=5 // pred_fallthru
        _
      %p4943 = scmp.le.s32.totalorder 2, %s32
      // Predicated region
      $region101: #{tpu_custom_call.1} parent=5 // pred_check
        %p4944 = pneg %p4943
      $region102: #{tpu_custom_call.1} parent=5 // pred_check_branch
        %4946 = sbr.rel (%p4944) target = $region104
      $region103: #{tpu_custom_call.1} parent=5 // pred_region
        %s4947 = ssub.s32 %s32, 2
        // Predicated region
        $region105: #{tpu_custom_call.1} parent=103 // pred_check
          %p4948 = pneg %p318
        $region106: #{tpu_custom_call.1} parent=103 // pred_check_branch
          %4950 = sbr.rel (%p4948) target = $region108
        $region107: #{tpu_custom_call.1} parent=103 // pred_region
          %s4951 = sand.u32 %s303, 1
          %s4952 = scalar_lea.sflag [#allocation4], %s4951
          %s4953 = sand.u32 %s303, 1
          %s4954 = smul.addr %s4953, 8
          %s4955 = scalar_lea.vmem [#allocation13], %s4954
          %4956 = dma.done %s4952, 128
        $region108: #{tpu_custom_call.1} parent=103 // pred_fallthru
          _
        // Predicated region
        $region109: #{tpu_custom_call.1} parent=103 // pred_check
          %p4957 = pneg %p344
        $region110: #{tpu_custom_call.1} parent=103 // pred_check_branch
          %4959 = sbr.rel (%p4957) target = $region112
        $region111: #{tpu_custom_call.1} parent=103 // pred_region
          %s4960 = sand.u32 %s329, 1
          %s4961 = scalar_lea.sflag [#allocation15], %s4960
          %s4962 = sand.u32 %s329, 1
          %s4963 = smul.addr %s4962, 128
          %s4964 = scalar_lea.vmem [#allocation14], %s4963
          %4965 = dma.done %s4961, 2048
        $region112: #{tpu_custom_call.1} parent=103 // pred_fallthru
          _
      $region104: #{tpu_custom_call.1} parent=5 // pred_fallthru
        _
    $region6: #{tpu_custom_call.1} parent=1 // loop_footer
      %s36 = sadd.s32 1, %s32
    $region7: #{tpu_custom_call.1} parent=1 // loop_footer_branch
      %31 = sbr.rel target = $region3
    $region8: #{tpu_custom_call.1} parent=1 // loop_exit
      _
    %4966 = vsyncpa [#allocation3], 1
    %s4967 = scalar_lea.sflag [#allocation3], 1
    %4968 = vsyncpa %s4967, 1
    %4969 = vsyncpa [#allocation6], 1
    %4970 = vsyncpa [#allocation9], 1
    %4971 = vsyncpa [#allocation12], 1
    %4972 = vsyncpa [#allocation4], 1
    %s4973 = scalar_lea.sflag [#allocation4], 1
    %4974 = vsyncpa %s4973, 1
    %4975 = vsyncpa [#allocation15], 1
    %s4976 = scalar_lea.sflag [#allocation15], 1
    %4977 = vsyncpa %s4976, 1

// kernel: tpu_custom_call.1
$region0: #{tpu_custom_call.1}
  #allocation0 [shape = 'u32[]', space=smem, size = 0x4, offset = 0x4, fixed_abs, tag = 'smem constant byte address 0x4 - core index']
  #allocation1 [shape = 'u32[144,128]{1,0:T(1,128)}', space=vmem, size = 0x12000, scoped, tag = 'internal scratch']
  %s0 = inlined_call_operand.hbm [shape: bf16[16,1088], index: 0, kind: input, shape index: {}]
  %s1 = inlined_call_operand.hbm [shape: bf16[1088,128], index: 1, kind: input, shape index: {}]
  %s2 = inlined_call_operand.vmem [shape: f32[1,128], index: 2, kind: input, shape index: {}]
  %s3 = inlined_call_operand.hbm [shape: bf16[128,128], index: 3, kind: input, shape index: {}]
  %s4 = inlined_call_operand.vmem [shape: f32[1,128], index: 4, kind: input, shape index: {}]
  %s5 = inlined_call_operand.hbm [shape: bf16[128,384], index: 5, kind: input, shape index: {}]
  %s6 = inlined_call_operand.vmem [shape: f32[1,384], index: 6, kind: input, shape index: {}]
  %s7 = inlined_call_operand.hbm [shape: bf16[384,128], index: 7, kind: input, shape index: {}]
  %s8 = inlined_call_operand.vmem [shape: f32[1,128], index: 8, kind: input, shape index: {}]
  %s9 = inlined_call_operand.vmem [shape: f32[1,128], index: 9, kind: input, shape index: {}]
  %s10 = inlined_call_operand.hbm [shape: bf16[128,4096], index: 10, kind: input, shape index: {}]
  %s11 = inlined_call_operand.vmem [shape: f32[1,4096], index: 11, kind: input, shape index: {}]
  %s12 = inlined_call_operand.hbm [shape: f32[16,128], index: 12, kind: output, shape index: {0}]
  %s13 = inlined_call_operand.hbm [shape: bf16[16,4096], index: 13, kind: output, shape index: {1}]
  %14 = xla_tuple %s12, %s13
  %s15 = sld [smem:[#allocation0]]
  $region113: #{tpu_custom_call.1} parent=0
    _
  %s17 = ssub.s32 1, %s15
  %s18 = scalar_select 0, %s17, %s15
  $region1: #{tpu_custom_call.1} parent=0
    #allocation2 [shape = 'u8[36864]{0}', space=vmem, size = 0x9000, scoped, tag = 'input window, operand 0']
    #allocation3 [shape = 's32[2]{0}', space=sflag, size = 0x8, scoped, tag = 'scoped memory for tpu_custom_call.1']
    #allocation4 [shape = 's32[2]{0}', space=sflag, size = 0x8, scoped, tag = 'scoped memory for tpu_custom_call.1']
    #allocation5 [shape = 'u8[278528]{0}', space=vmem, size = 0x44000, scoped, tag = 'input window, operand 1, single buffered']
    #allocation6 [shape = 's32[1]{0}', space=sflag, size = 0x4, scoped, tag = 'scoped memory for tpu_custom_call.1']
    #allocation7 [shape = 'u8[32768]{0}', space=vmem, size = 0x8000, scoped, tag = 'input window, operand 3, single buffered']
    #allocation8 [shape = 'u8[98304]{0}', space=vmem, size = 0x18000, scoped, tag = 'input window, operand 5, single buffered']
    #allocation9 [shape = 's32[1]{0}', space=sflag, size = 0x4, scoped, tag = 'scoped memory for tpu_custom_call.1']
    #allocation10 [shape = 'u8[98304]{0}', space=vmem, size = 0x18000, scoped, tag = 'input window, operand 7, single buffered']
    #allocation11 [shape = 'u8[1048576]{0}', space=vmem, size = 0x100000, scoped, tag = 'input window, operand 10, single buffered']
    #allocation12 [shape = 's32[1]{0}', space=sflag, size = 0x4, scoped, tag = 'scoped memory for tpu_custom_call.1']
    #allocation13 [shape = 'u8[8192]{0}', space=vmem, size = 0x2000, scoped, tag = 'output window, operand 0']
    #allocation14 [shape = 'u8[131072]{0}', space=vmem, size = 0x20000, scoped, tag = 'output window, operand 1']
    #allocation15 [shape = 's32[2]{0}', space=sflag, size = 0x8, scoped, tag = 'scoped memory for tpu_custom_call.1']
    %19 = vsyncpa [#allocation3], 0
    %s20 = scalar_lea.sflag [#allocation3], 1
    %21 = vsyncpa %s20, 0
    %22 = vsyncpa [#allocation6], 0
    %23 = vsyncpa [#allocation9], 0
    %24 = vsyncpa [#allocation12], 0
    %25 = vsyncpa [#allocation4], 0
    %s26 = scalar_lea.sflag [#allocation4], 1
    %27 = vsyncpa %s26, 0
    %28 = vsyncpa [#allocation15], 0
    %s29 = scalar_lea.sflag [#allocation15], 1
    %30 = vsyncpa %s29, 0
    loop: start=0, step=1, limit=4
    $region2: #{tpu_custom_call.1} parent=1 // loop_pre_header
      _
    $region3: #{tpu_custom_call.1} parent=1 // loop_header
      %s32 = sphi 0, %s36
      %p33 = scmp.ge.s32.totalorder %s32, 4
      %s42 = sphi 0, %s44
      %s45 = sphi 0, %s42
      %s46 = sphi 0, %s45
      %s62 = sphi 0, %s46
      %s66 = sphi 0, %s66
      %s68 = sphi 0, %s66
      %s69 = sphi 0, %s68
      %s83 = sphi 0, %s69
      %s87 = sphi 0, %s87
      %s89 = sphi 0, %s87
      %s90 = sphi 0, %s89
      %s104 = sphi 0, %s90
      %s108 = sphi 0, %s108
      %s110 = sphi 0, %s108
      %s111 = sphi 0, %s110
      %s125 = sphi 0, %s111
      %s129 = sphi 0, %s129
      %s131 = sphi 0, %s129
      %s132 = sphi 0, %s131
      %s146 = sphi 0, %s132
      %s150 = sphi 0, %s150
      %s152 = sphi 0, %s150
      %s153 = sphi 0, %s152
      %s167 = sphi 0, %s153
      %s171 = sphi 0, %s171
      %s173 = sphi 0, %s171
      %s174 = sphi 0, %s173
      %s188 = sphi 0, %s174
      %s192 = sphi 0, %s192
      %s194 = sphi 0, %s192
      %s195 = sphi 0, %s194
      %s209 = sphi 0, %s195
      %s213 = sphi 0, %s213
      %s215 = sphi 0, %s213
      %s216 = sphi 0, %s215
      %s230 = sphi 0, %s216
      %s234 = sphi 0, %s234
      %s236 = sphi 0, %s234
      %s237 = sphi 0, %s236
      %s251 = sphi 0, %s237
      %s255 = sphi 0, %s255
      %s257 = sphi 0, %s255
      %s258 = sphi 0, %s257
      %s272 = sphi 0, %s258
      %s276 = sphi 0, %s276
      %s278 = sphi 0, %s276
      %s279 = sphi 0, %s278
      %s293 = sphi 0, %s279
      %s299 = sphi 0, %s301
      %s302 = sphi 0, %s299
      %s303 = sphi 0, %s302
      %s319 = sphi 0, %s303
      %s325 = sphi 0, %s327
      %s328 = sphi 0, %s325
      %s329 = sphi 0, %s328
      %s345 = sphi 0, %s329
    $region4: #{tpu_custom_call.1} parent=1 // loop_header_branch
      %35 = sbr.rel (%p33) target = $region8
    $region5: #{tpu_custom_call.1} parent=1 // loop_body
      %s37 = ssub.s32 %s32, 1
      %s38 = ssub.s32 %s32, 2
      %s39 = sadd.s32 %s32, 1
      %s40 = ssub.s32 %s32, %s39
      %p41 = scmp.eq.s32.totalorder %s40, 0
      %s43 = sadd.s32 %s42, 1
      %s44 = scalar_select %p41, %s42, %s43
      %p47 = pneg %p41
      %p48 = scmp.eq.s32.totalorder %s32, 1
      %p49 = por %p47, %p48
      %p50 = scmp.ne.s32.totalorder %s42, %s45
      %p51 = scmp.eq.s32.totalorder %s32, 0
      %p52 = por %p50, %p51
      %p53 = scmp.ne.s32.totalorder %s42, %s45
      %p54 = scmp.eq.s32.totalorder %s37, 1
      %p55 = por %p53, %p54
      %p56 = scmp.ne.s32.totalorder %s45, %s46
      %p57 = scmp.eq.s32.totalorder %s37, 0
      %p58 = por %p56, %p57
      %p59 = scmp.ne.s32.totalorder %s45, %s46
      %p60 = scmp.eq.s32.totalorder %s38, 1
      %p61 = por %p59, %p60
      %p63 = scmp.ne.s32.totalorder %s46, %s62
      %p64 = scmp.eq.s32.totalorder %s38, 0
      %p65 = por %p63, %p64
      %s67 = sadd.s32 %s66, 1
      %p70 = scmp.eq.s32.totalorder %s32, 1
      %p71 = scmp.ne.s32.totalorder %s66, %s68
      %p72 = scmp.eq.s32.totalorder %s32, 0
      %p73 = por %p71, %p72
      %p74 = scmp.ne.s32.totalorder %s66, %s68
      %p75 = scmp.eq.s32.totalorder %s37, 1
      %p76 = por %p74, %p75
      %p77 = scmp.ne.s32.totalorder %s68, %s69
      %p78 = scmp.eq.s32.totalorder %s37, 0
      %p79 = por %p77, %p78
      %p80 = scmp.ne.s32.totalorder %s68, %s69
      %p81 = scmp.eq.s32.totalorder %s38, 1
      %p82 = por %p80, %p81
      %p84 = scmp.ne.s32.totalorder %s69, %s83
      %p85 = scmp.eq.s32.totalorder %s38, 0
      %p86 = por %p84, %p85
      %s88 = sadd.s32 %s87, 1
      %p91 = scmp.eq.s32.totalorder %s32, 1
      %p92 = scmp.ne.s32.totalorder %s87, %s89
      %p93 = scmp.eq.s32.totalorder %s32, 0
      %p94 = por %p92, %p93
      %p95 = scmp.ne.s32.totalorder %s87, %s89
      %p96 = scmp.eq.s32.totalorder %s37, 1
      %p97 = por %p95, %p96
      %p98 = scmp.ne.s32.totalorder %s89, %s90
      %p99 = scmp.eq.s32.totalorder %s37, 0
      %p100 = por %p98, %p99
      %p101 = scmp.ne.s32.totalorder %s89, %s90
      %p102 = scmp.eq.s32.totalorder %s38, 1
      %p103 = por %p101, %p102
      %p105 = scmp.ne.s32.totalorder %s90, %s104
      %p106 = scmp.eq.s32.totalorder %s38, 0
      %p107 = por %p105, %p106
      %s109 = sadd.s32 %s108, 1
      %p112 = scmp.eq.s32.totalorder %s32, 1
      %p113 = scmp.ne.s32.totalorder %s108, %s110
      %p114 = scmp.eq.s32.totalorder %s32, 0
      %p115 = por %p113, %p114
      %p116 = scmp.ne.s32.totalorder %s108, %s110
      %p117 = scmp.eq.s32.totalorder %s37, 1
      %p118 = por %p116, %p117
      %p119 = scmp.ne.s32.totalorder %s110, %s111
      %p120 = scmp.eq.s32.totalorder %s37, 0
      %p121 = por %p119, %p120
      %p122 = scmp.ne.s32.totalorder %s110, %s111
      %p123 = scmp.eq.s32.totalorder %s38, 1
      %p124 = por %p122, %p123
      %p126 = scmp.ne.s32.totalorder %s111, %s125
      %p127 = scmp.eq.s32.totalorder %s38, 0
      %p128 = por %p126, %p127
      %s130 = sadd.s32 %s129, 1
      %p133 = scmp.eq.s32.totalorder %s32, 1
      %p134 = scmp.ne.s32.totalorder %s129, %s131
      %p135 = scmp.eq.s32.totalorder %s32, 0
      %p136 = por %p134, %p135
      %p137 = scmp.ne.s32.totalorder %s129, %s131
      %p138 = scmp.eq.s32.totalorder %s37, 1
      %p139 = por %p137, %p138
      %p140 = scmp.ne.s32.totalorder %s131, %s132
      %p141 = scmp.eq.s32.totalorder %s37, 0
      %p142 = por %p140, %p141
      %p143 = scmp.ne.s32.totalorder %s131, %s132
      %p144 = scmp.eq.s32.totalorder %s38, 1
      %p145 = por %p143, %p144
      %p147 = scmp.ne.s32.totalorder %s132, %s146
      %p148 = scmp.eq.s32.totalorder %s38, 0
      %p149 = por %p147, %p148
      %s151 = sadd.s32 %s150, 1
      %p154 = scmp.eq.s32.totalorder %s32, 1
      %p155 = scmp.ne.s32.totalorder %s150, %s152
      %p156 = scmp.eq.s32.totalorder %s32, 0
      %p157 = por %p155, %p156
      %p158 = scmp.ne.s32.totalorder %s150, %s152
      %p159 = scmp.eq.s32.totalorder %s37, 1
      %p160 = por %p158, %p159
      %p161 = scmp.ne.s32.totalorder %s152, %s153
      %p162 = scmp.eq.s32.totalorder %s37, 0
      %p163 = por %p161, %p162
      %p164 = scmp.ne.s32.totalorder %s152, %s153
      %p165 = scmp.eq.s32.totalorder %s38, 1
      %p166 = por %p164, %p165
      %p168 = scmp.ne.s32.totalorder %s153, %s167
      %p169 = scmp.eq.s32.totalorder %s38, 0
      %p170 = por %p168, %p169
      %s172 = sadd.s32 %s171, 1
      %p175 = scmp.eq.s32.totalorder %s32, 1
      %p176 = scmp.ne.s32.totalorder %s171, %s173
      %p177 = scmp.eq.s32.totalorder %s32, 0
      %p178 = por %p176, %p177
      %p179 = scmp.ne.s32.totalorder %s171, %s173
      %p180 = scmp.eq.s32.totalorder %s37, 1
      %p181 = por %p179, %p180
      %p182 = scmp.ne.s32.totalorder %s173, %s174
      %p183 = scmp.eq.s32.totalorder %s37, 0
      %p184 = por %p182, %p183
      %p185 = scmp.ne.s32.totalorder %s173, %s174
      %p186 = scmp.eq.s32.totalorder %s38, 1
      %p187 = por %p185, %p186
      %p189 = scmp.ne.s32.totalorder %s174, %s188
      %p190 = scmp.eq.s32.totalorder %s38, 0
      %p191 = por %p189, %p190
      %s193 = sadd.s32 %s192, 1
      %p196 = scmp.eq.s32.totalorder %s32, 1
      %p197 = scmp.ne.s32.totalorder %s192, %s194
      %p198 = scmp.eq.s32.totalorder %s32, 0
      %p199 = por %p197, %p198
      %p200 = scmp.ne.s32.totalorder %s192, %s194
      %p201 = scmp.eq.s32.totalorder %s37, 1
      %p202 = por %p200, %p201
      %p203 = scmp.ne.s32.totalorder %s194, %s195
      %p204 = scmp.eq.s32.totalorder %s37, 0
      %p205 = por %p203, %p204
      %p206 = scmp.ne.s32.totalorder %s194, %s195
      %p207 = scmp.eq.s32.totalorder %s38, 1
      %p208 = por %p206, %p207
      %p210 = scmp.ne.s32.totalorder %s195, %s209
      %p211 = scmp.eq.s32.totalorder %s38, 0
      %p212 = por %p210, %p211
      %s214 = sadd.s32 %s213, 1
      %p217 = scmp.eq.s32.totalorder %s32, 1
      %p218 = scmp.ne.s32.totalorder %s213, %s215
      %p219 = scmp.eq.s32.totalorder %s32, 0
      %p220 = por %p218, %p219
      %p221 = scmp.ne.s32.totalorder %s213, %s215
      %p222 = scmp.eq.s32.totalorder %s37, 1
      %p223 = por %p221, %p222
      %p224 = scmp.ne.s32.totalorder %s215, %s216
      %p225 = scmp.eq.s32.totalorder %s37, 0
      %p226 = por %p224, %p225
      %p227 = scmp.ne.s32.totalorder %s215, %s216
      %p228 = scmp.eq.s32.totalorder %s38, 1
      %p229 = por %p227, %p228
      %p231 = scmp.ne.s32.totalorder %s216, %s230
      %p232 = scmp.eq.s32.totalorder %s38, 0
      %p233 = por %p231, %p232
      %s235 = sadd.s32 %s234, 1
      %p238 = scmp.eq.s32.totalorder %s32, 1
      %p239 = scmp.ne.s32.totalorder %s234, %s236
      %p240 = scmp.eq.s32.totalorder %s32, 0
      %p241 = por %p239, %p240
      %p242 = scmp.ne.s32.totalorder %s234, %s236
      %p243 = scmp.eq.s32.totalorder %s37, 1
      %p244 = por %p242, %p243
      %p245 = scmp.ne.s32.totalorder %s236, %s237
      %p246 = scmp.eq.s32.totalorder %s37, 0
      %p247 = por %p245, %p246
      %p248 = scmp.ne.s32.totalorder %s236, %s237
      %p249 = scmp.eq.s32.totalorder %s38, 1
      %p250 = por %p248, %p249
      %p252 = scmp.ne.s32.totalorder %s237, %s251
      %p253 = scmp.eq.s32.totalorder %s38, 0
      %p254 = por %p252, %p253
      %s256 = sadd.s32 %s255, 1
      %p259 = scmp.eq.s32.totalorder %s32, 1
      %p260 = scmp.ne.s32.totalorder %s255, %s257
      %p261 = scmp.eq.s32.totalorder %s32, 0
      %p262 = por %p260, %p261
      %p263 = scmp.ne.s32.totalorder %s255, %s257
      %p264 = scmp.eq.s32.totalorder %s37, 1
      %p265 = por %p263, %p264
      %p266 = scmp.ne.s32.totalorder %s257, %s258
      %p267 = scmp.eq.s32.totalorder %s37, 0
      %p268 = por %p266, %p267
      %p269 = scmp.ne.s32.totalorder %s257, %s258
      %p270 = scmp.eq.s32.totalorder %s38, 1
      %p271 = por %p269, %p270
      %p273 = scmp.ne.s32.totalorder %s258, %s272
      %p274 = scmp.eq.s32.totalorder %s38, 0
      %p275 = por %p273, %p274
      %s277 = sadd.s32 %s276, 1
      %p280 = scmp.eq.s32.totalorder %s32, 1
      %p281 = scmp.ne.s32.totalorder %s276, %s278
      %p282 = scmp.eq.s32.totalorder %s32, 0
      %p283 = por %p281, %p282
      %p284 = scmp.ne.s32.totalorder %s276, %s278
      %p285 = scmp.eq.s32.totalorder %s37, 1
      %p286 = por %p284, %p285
      %p287 = scmp.ne.s32.totalorder %s278, %s279
      %p288 = scmp.eq.s32.totalorder %s37, 0
      %p289 = por %p287, %p288
      %p290 = scmp.ne.s32.totalorder %s278, %s279
      %p291 = scmp.eq.s32.totalorder %s38, 1
      %p292 = por %p290, %p291
      %p294 = scmp.ne.s32.totalorder %s279, %s293
      %p295 = scmp.eq.s32.totalorder %s38, 0
      %p296 = por %p294, %p295
      %s297 = ssub.s32 %s32, %s39
      %p298 = scmp.eq.s32.totalorder %s297, 0
      %s300 = sadd.s32 %s299, 1
      %s301 = scalar_select %p298, %s299, %s300
      %p304 = pneg %p298
      %p305 = scmp.eq.s32.totalorder %s32, 1
      %p306 = por %p304, %p305
      %p307 = scmp.ne.s32.totalorder %s299, %s302
      %p308 = scmp.eq.s32.totalorder %s32, 0
      %p309 = por %p307, %p308
      %p310 = scmp.ne.s32.totalorder %s299, %s302
      %p311 = scmp.eq.s32.totalorder %s37, 1
      %p312 = por %p310, %p311
      %p313 = scmp.ne.s32.totalorder %s302, %s303
      %p314 = scmp.eq.s32.totalorder %s37, 0
      %p315 = por %p313, %p314
      %p316 = scmp.ne.s32.totalorder %s302, %s303
      %p317 = scmp.eq.s32.totalorder %s38, 1
      %p318 = por %p316, %p317
      %p320 = scmp.ne.s32.totalorder %s303, %s319
      %p321 = scmp.eq.s32.totalorder %s38, 0
      %p322 = por %p320, %p321
      %s323 = ssub.s32 %s32, %s39
      %p324 = scmp.eq.s32.totalorder %s323, 0
      %s326 = sadd.s32 %s325, 1
      %s327 = scalar_select %p324, %s325, %s326
      %p330 = pneg %p324
      %p331 = scmp.eq.s32.totalorder %s32, 1
      %p332 = por %p330, %p331
      %p333 = scmp.ne.s32.totalorder %s325, %s328
      %p334 = scmp.eq.s32.totalorder %s32, 0
      %p335 = por %p333, %p334
      %p336 = scmp.ne.s32.totalorder %s325, %s328
      %p337 = scmp.eq.s32.totalorder %s37, 1
      %p338 = por %p336, %p337
      %p339 = scmp.ne.s32.totalorder %s328, %s329
      %p340 = scmp.eq.s32.totalorder %s37, 0
      %p341 = por %p339, %p340
      %p342 = scmp.ne.s32.totalorder %s328, %s329
      %p343 = scmp.eq.s32.totalorder %s38, 1
      %p344 = por %p342, %p343
      %p346 = scmp.ne.s32.totalorder %s329, %s345
      %p347 = scmp.eq.s32.totalorder %s38, 0
      %p348 = por %p346, %p347
      %p349 = scmp.le.s32.totalorder 1, %s32
      %p350 = scmp.lt.s32.totalorder %s32, 3
      %p351 = pnand %p349, %p350
      %p352 = pneg %p351
      // Predicated region
      $region9: #{tpu_custom_call.1} parent=5 // pred_check
        _
      $region10: #{tpu_custom_call.1} parent=5 // pred_check_branch
        %354 = sbr.rel (%p351) target = $region12
      $region11: #{tpu_custom_call.1} parent=5 // pred_region
        %s355 = ssub.s32 %s32, 1
        // Predicated region
        $region13: #{tpu_custom_call.1} parent=11 // pred_check
          %p356 = pneg %p79
        $region14: #{tpu_custom_call.1} parent=11 // pred_check_branch
          %358 = sbr.rel (%p356) target = $region16
        $region15: #{tpu_custom_call.1} parent=11 // pred_region
          %s360 = ssub.s32 8704, 8704
          %361 = vsyncadd [#allocation6], %s360
          %s362 = sshll.u32 [#allocation5], 4
          %s363 = int_to_ptr.vmem [resolvable:$true] %s362
          %368 = dma.hbm_to_vmem [thread:$0]  %s1, 8704, %s363, [#allocation6], 64, 64, 4
        $region16: #{tpu_custom_call.1} parent=11 // pred_fallthru
          _
        // Predicated region
        $region17: #{tpu_custom_call.1} parent=11 // pred_check
          %p369 = pneg %p100
        $region18: #{tpu_custom_call.1} parent=11 // pred_check_branch
          %371 = sbr.rel (%p369) target = $region20
        $region19: #{tpu_custom_call.1} parent=11 // pred_region
          _
        $region20: #{tpu_custom_call.1} parent=11 // pred_fallthru
          _
        // Predicated region
        $region21: #{tpu_custom_call.1} parent=11 // pred_check
          %p372 = pneg %p121
        $region22: #{tpu_custom_call.1} parent=11 // pred_check_branch
          %374 = sbr.rel (%p372) target = $region24
        $region23: #{tpu_custom_call.1} parent=11 // pred_region
          %s376 = ssub.s32 1024, 1024
          %377 = vsyncadd [#allocation6], %s376
          %s378 = sshll.u32 [#allocation7], 4
          %s379 = int_to_ptr.vmem [resolvable:$true] %s378
          %384 = dma.hbm_to_vmem [thread:$0]  %s3, 1024, %s379, [#allocation6], 64, 64, 4
        $region24: #{tpu_custom_call.1} parent=11 // pred_fallthru
          _
        // Predicated region
        $region25: #{tpu_custom_call.1} parent=11 // pred_check
          %p385 = pneg %p142
        $region26: #{tpu_custom_call.1} parent=11 // pred_check_branch
          %387 = sbr.rel (%p385) target = $region28
        $region27: #{tpu_custom_call.1} parent=11 // pred_region
          _
        $region28: #{tpu_custom_call.1} parent=11 // pred_fallthru
          _
        // Predicated region
        $region29: #{tpu_custom_call.1} parent=11 // pred_check
          %p388 = pneg %p163
        $region30: #{tpu_custom_call.1} parent=11 // pred_check_branch
          %390 = sbr.rel (%p388) target = $region32
        $region31: #{tpu_custom_call.1} parent=11 // pred_region
          %s392 = ssub.s32 3072, 3072
          %393 = vsyncadd [#allocation9], %s392
          %s394 = sshll.u32 [#allocation8], 4
          %s395 = int_to_ptr.vmem [resolvable:$true] %s394
          %400 = dma.hbm_to_vmem [thread:$0]  %s5, 3072, %s395, [#allocation9], 192, 192, 12
        $region32: #{tpu_custom_call.1} parent=11 // pred_fallthru
          _
        // Predicated region
        $region33: #{tpu_custom_call.1} parent=11 // pred_check
          %p401 = pneg %p184
        $region34: #{tpu_custom_call.1} parent=11 // pred_check_branch
          %403 = sbr.rel (%p401) target = $region36
        $region35: #{tpu_custom_call.1} parent=11 // pred_region
          _
        $region36: #{tpu_custom_call.1} parent=11 // pred_fallthru
          _
        // Predicated region
        $region37: #{tpu_custom_call.1} parent=11 // pred_check
          %p404 = pneg %p205
        $region38: #{tpu_custom_call.1} parent=11 // pred_check_branch
          %406 = sbr.rel (%p404) target = $region40
        $region39: #{tpu_custom_call.1} parent=11 // pred_region
          %s408 = ssub.s32 3072, 3072
          %409 = vsyncadd [#allocation9], %s408
          %s410 = sshll.u32 [#allocation10], 4
          %s411 = int_to_ptr.vmem [resolvable:$true] %s410
          %416 = dma.hbm_to_vmem [thread:$0]  %s7, 3072, %s411, [#allocation9], 64, 64, 4
        $region40: #{tpu_custom_call.1} parent=11 // pred_fallthru
          _
        // Predicated region
        $region41: #{tpu_custom_call.1} parent=11 // pred_check
          %p417 = pneg %p226
        $region42: #{tpu_custom_call.1} parent=11 // pred_check_branch
          %419 = sbr.rel (%p417) target = $region44
        $region43: #{tpu_custom_call.1} parent=11 // pred_region
          _
        $region44: #{tpu_custom_call.1} parent=11 // pred_fallthru
          _
        // Predicated region
        $region45: #{tpu_custom_call.1} parent=11 // pred_check
          %p420 = pneg %p247
        $region46: #{tpu_custom_call.1} parent=11 // pred_check_branch
          %422 = sbr.rel (%p420) target = $region48
        $region47: #{tpu_custom_call.1} parent=11 // pred_region
          _
        $region48: #{tpu_custom_call.1} parent=11 // pred_fallthru
          _
        // Predicated region
        $region49: #{tpu_custom_call.1} parent=11 // pred_check
          %p423 = pneg %p268
        $region50: #{tpu_custom_call.1} parent=11 // pred_check_branch
          %425 = sbr.rel (%p423) target = $region52
        $region51: #{tpu_custom_call.1} parent=11 // pred_region
          %s427 = ssub.s32 32768, 32768
          %428 = vsyncadd [#allocation12], %s427
          %s429 = sshll.u32 [#allocation11], 4
          %s430 = int_to_ptr.vmem [resolvable:$true] %s429
          %435 = dma.hbm_to_vmem [thread:$0]  %s10, 32768, %s430, [#allocation12], 2048, 2048, 128
        $region52: #{tpu_custom_call.1} parent=11 // pred_fallthru
          _
        // Predicated region
        $region53: #{tpu_custom_call.1} parent=11 // pred_check
          %p436 = pneg %p289
        $region54: #{tpu_custom_call.1} parent=11 // pred_check_branch
          %438 = sbr.rel (%p436) target = $region56
        $region55: #{tpu_custom_call.1} parent=11 // pred_region
          _
        $region56: #{tpu_custom_call.1} parent=11 // pred_fallthru
          _
      $region12: #{tpu_custom_call.1} parent=5 // pred_fallthru
        _
      %p439 = scmp.lt.s32.totalorder %s32, 2
      // Predicated region
      $region57: #{tpu_custom_call.1} parent=5 // pred_check
        %p440 = pneg %p439
      $region58: #{tpu_custom_call.1} parent=5 // pred_check_branch
        %442 = sbr.rel (%p440) target = $region60
      $region59: #{tpu_custom_call.1} parent=5 // pred_region
        // Predicated region
        $region61: #{tpu_custom_call.1} parent=59 // pred_check
          %p443 = pneg %p52
        $region62: #{tpu_custom_call.1} parent=59 // pred_check_branch
          %445 = sbr.rel (%p443) target = $region64
        $region63: #{tpu_custom_call.1} parent=59 // pred_region
          %s446 = sand.u32 %s42, 1
          %s447 = scalar_lea.sflag [#allocation3], %s446
          %s448 = sand.u32 %s42, 1
          %s449 = smul.addr %s448, 36
          %s450 = scalar_lea.vmem [#allocation2], %s449
          %s452 = ssub.s32 576, 576
          %453 = vsyncadd %s447, %s452
          %s454 = smul.addr %s32, 9
          %s455 = smul.addr %s454, 64
          %s456 = scalar_lea.hbm %s0, %s455
          %s458 = sshll.u32 %s450, 4
          %s459 = int_to_ptr.vmem [resolvable:$true] %s458
          %461 = dma.hbm_to_vmem [thread:$0]  %s456, 576, %s459, %s447
        $region64: #{tpu_custom_call.1} parent=59 // pred_fallthru
          _
      $region60: #{tpu_custom_call.1} parent=5 // pred_fallthru
        _
      %p462 = scmp.le.s32.totalorder 1, %s32
      %p463 = scmp.lt.s32.totalorder %s32, 3
      %p464 = pnand %p462, %p463
      %p465 = pneg %p464
      // Predicated region
      $region65: #{tpu_custom_call.1} parent=5 // pred_check
        _
      $region66: #{tpu_custom_call.1} parent=5 // pred_check_branch
        %467 = sbr.rel (%p464) target = $region68
      $region67: #{tpu_custom_call.1} parent=5 // pred_region
        %s468 = ssub.s32 %s32, 1
        %s469 = sand.u32 %s45, 1
        %s470 = scalar_lea.sflag [#allocation3], %s469
        %s471 = sand.u32 %s45, 1
        %s472 = smul.addr %s471, 36
        %s473 = scalar_lea.vmem [#allocation2], %s472
        // Predicated region
        $region69: #{tpu_custom_call.1} parent=67 // pred_check
          %p474 = pneg %p58
        $region70: #{tpu_custom_call.1} parent=67 // pred_check_branch
          %476 = sbr.rel (%p474) target = $region72
        $region71: #{tpu_custom_call.1} parent=67 // pred_region
          %477 = dma.done %s470, 576
        $region72: #{tpu_custom_call.1} parent=67 // pred_fallthru
          _
        // Predicated region
        $region73: #{tpu_custom_call.1} parent=67 // pred_check
          %p478 = pneg %p79
        $region74: #{tpu_custom_call.1} parent=67 // pred_check_branch
          %480 = sbr.rel (%p478) target = $region76
        $region75: #{tpu_custom_call.1} parent=67 // pred_region
          %481 = dma.done [#allocation6], 8704
        $region76: #{tpu_custom_call.1} parent=67 // pred_fallthru
          _
        // Predicated region
        $region77: #{tpu_custom_call.1} parent=67 // pred_check
          %p482 = pneg %p121
        $region78: #{tpu_custom_call.1} parent=67 // pred_check_branch
          %484 = sbr.rel (%p482) target = $region80
        $region79: #{tpu_custom_call.1} parent=67 // pred_region
          %485 = dma.done [#allocation6], 1024
        $region80: #{tpu_custom_call.1} parent=67 // pred_fallthru
          _
        // Predicated region
        $region81: #{tpu_custom_call.1} parent=67 // pred_check
          %p486 = pneg %p163
        $region82: #{tpu_custom_call.1} parent=67 // pred_check_branch
          %488 = sbr.rel (%p486) target = $region84
        $region83: #{tpu_custom_call.1} parent=67 // pred_region
          %489 = dma.done [#allocation9], 3072
        $region84: #{tpu_custom_call.1} parent=67 // pred_fallthru
          _
        // Predicated region
        $region85: #{tpu_custom_call.1} parent=67 // pred_check
          %p490 = pneg %p205
        $region86: #{tpu_custom_call.1} parent=67 // pred_check_branch
          %492 = sbr.rel (%p490) target = $region88
        $region87: #{tpu_custom_call.1} parent=67 // pred_region
          %493 = dma.done [#allocation9], 3072
        $region88: #{tpu_custom_call.1} parent=67 // pred_fallthru
          _
        // Predicated region
        $region89: #{tpu_custom_call.1} parent=67 // pred_check
          %p494 = pneg %p268
        $region90: #{tpu_custom_call.1} parent=67 // pred_check_branch
          %496 = sbr.rel (%p494) target = $region92
        $region91: #{tpu_custom_call.1} parent=67 // pred_region
          %497 = dma.done [#allocation12], 32768
        $region92: #{tpu_custom_call.1} parent=67 // pred_fallthru
          _
        %s498 = sand.u32 %s45, 1
        %s499 = scalar_lea.sflag [#allocation3], %s498
        %s500 = sand.u32 %s45, 1
        %s501 = smul.addr %s500, 36
        %s502 = scalar_lea.vmem [#allocation2], %s501
        %p503 = pneg %p58
        %p504 = pneg %p55
        %p505 = pneg %p79
        %p506 = pneg %p76
        %p507 = pneg %p100
        %p508 = pneg %p97
        %p509 = pneg %p121
        %p510 = pneg %p118
        %p511 = pneg %p142
        %p512 = pneg %p139
        %p513 = pneg %p163
        %p514 = pneg %p160
        %p515 = pneg %p184
        %p516 = pneg %p181
        %p517 = pneg %p205
        %p518 = pneg %p202
        %p519 = pneg %p226
        %p520 = pneg %p223
        %p521 = pneg %p247
        %p522 = pneg %p244
        %p523 = pneg %p268
        %p524 = pneg %p265
        %p525 = pneg %p289
        %p526 = pneg %p286
        %p527 = pneg %p315
        %p528 = pneg %p312
        %s529 = sand.u32 %s302, 1
        %s530 = scalar_lea.sflag [#allocation4], %s529
        %s531 = sand.u32 %s302, 1
        %s532 = smul.addr %s531, 8
        %s533 = scalar_lea.vmem [#allocation13], %s532
        %p534 = pneg %p341
        %p535 = pneg %p338
        %s536 = sand.u32 %s328, 1
        %s537 = scalar_lea.sflag [#allocation15], %s536
        %s538 = sand.u32 %s328, 1
        %s539 = smul.addr %s538, 128
        %s540 = scalar_lea.vmem [#allocation14], %s539
        %v542 = vld [vmem:[%s473] sm:$0xff]
        %v543 = vld [vmem:[%s473 + $0x8] sm:$0xff]
        %v544 = vld [vmem:[%s473 + $0x10] sm:$0xff]
        %v545 = vld [vmem:[%s473 + $0x18] sm:$0xff]
        %v546 = vld [vmem:[%s473 + $0x20] sm:$0xf]
        %v547 = vld [vmem:[#allocation5] sm:$0xf]
        %v548 = vld [vmem:[#allocation5 + $0x4] sm:$0xf]
        %v549 = vld [vmem:[#allocation5 + $0x8] sm:$0xf]
        %v550 = vld [vmem:[#allocation5 + $0xc] sm:$0xf]
        %v551 = vld [vmem:[#allocation5 + $0x10] sm:$0xf]
        %v552 = vld [vmem:[#allocation5 + $0x14] sm:$0xf]
        %v553 = vld [vmem:[#allocation5 + $0x18] sm:$0xf]
        %v554 = vld [vmem:[#allocation5 + $0x1c] sm:$0xf]
        %v555 = vld [vmem:[#allocation5 + $0x20] sm:$0xf]
        %v556 = vld [vmem:[#allocation5 + $0x24] sm:$0xf]
        %v557 = vld [vmem:[#allocation5 + $0x28] sm:$0xf]
        %v558 = vld [vmem:[#allocation5 + $0x2c] sm:$0xf]
        %v559 = vld [vmem:[#allocation5 + $0x30] sm:$0xf]
        %v560 = vld [vmem:[#allocation5 + $0x34] sm:$0xf]
        %v561 = vld [vmem:[#allocation5 + $0x38] sm:$0xf]
        %v562 = vld [vmem:[#allocation5 + $0x3c] sm:$0xf]
        %v563 = vld [vmem:[#allocation5 + $0x40] sm:$0xf]
        %v564 = vld [vmem:[#allocation5 + $0x44] sm:$0xf]
        %v565 = vld [vmem:[#allocation5 + $0x48] sm:$0xf]
        %v566 = vld [vmem:[#allocation5 + $0x4c] sm:$0xf]
        %v567 = vld [vmem:[#allocation5 + $0x50] sm:$0xf]
        %v568 = vld [vmem:[#allocation5 + $0x54] sm:$0xf]
        %v569 = vld [vmem:[#allocation5 + $0x58] sm:$0xf]
        %v570 = vld [vmem:[#allocation5 + $0x5c] sm:$0xf]
        %v571 = vld [vmem:[#allocation5 + $0x60] sm:$0xf]
        %v572 = vld [vmem:[#allocation5 + $0x64] sm:$0xf]
        %v573 = vld [vmem:[#allocation5 + $0x68] sm:$0xf]
        %v574 = vld [vmem:[#allocation5 + $0x6c] sm:$0xf]
        %v575 = vld [vmem:[#allocation5 + $0x70] sm:$0xf]
        %v576 = vld [vmem:[#allocation5 + $0x74] sm:$0xf]
        %v577 = vld [vmem:[#allocation5 + $0x78] sm:$0xf]
        %v578 = vld [vmem:[#allocation5 + $0x7c] sm:$0xf]
        %v579 = vld [vmem:[#allocation5 + $0x80] sm:$0xf]
        %v580 = vld [vmem:[#allocation5 + $0x84] sm:$0xf]
        %v581 = vld [vmem:[#allocation5 + $0x88] sm:$0xf]
        %v582 = vld [vmem:[#allocation5 + $0x8c] sm:$0xf]
        %v583 = vld [vmem:[#allocation5 + $0x90] sm:$0xf]
        %v584 = vld [vmem:[#allocation5 + $0x94] sm:$0xf]
        %v585 = vld [vmem:[#allocation5 + $0x98] sm:$0xf]
        %v586 = vld [vmem:[#allocation5 + $0x9c] sm:$0xf]
        %v587 = vld [vmem:[#allocation5 + $0xa0] sm:$0xf]
        %v588 = vld [vmem:[#allocation5 + $0xa4] sm:$0xf]
        %v589 = vld [vmem:[#allocation5 + $0xa8] sm:$0xf]
        %v590 = vld [vmem:[#allocation5 + $0xac] sm:$0xf]
        %v591 = vld [vmem:[#allocation5 + $0xb0] sm:$0xf]
        %v592 = vld [vmem:[#allocation5 + $0xb4] sm:$0xf]
        %v593 = vld [vmem:[#allocation5 + $0xb8] sm:$0xf]
        %v594 = vld [vmem:[#allocation5 + $0xbc] sm:$0xf]
        %v595 = vld [vmem:[#allocation5 + $0xc0] sm:$0xf]
        %v596 = vld [vmem:[#allocation5 + $0xc4] sm:$0xf]
        %v597 = vld [vmem:[#allocation5 + $0xc8] sm:$0xf]
        %v598 = vld [vmem:[#allocation5 + $0xcc] sm:$0xf]
        %v599 = vld [vmem:[#allocation5 + $0xd0] sm:$0xf]
        %v600 = vld [vmem:[#allocation5 + $0xd4] sm:$0xf]
        %v601 = vld [vmem:[#allocation5 + $0xd8] sm:$0xf]
        %v602 = vld [vmem:[#allocation5 + $0xdc] sm:$0xf]
        %v603 = vld [vmem:[#allocation5 + $0xe0] sm:$0xf]
        %v604 = vld [vmem:[#allocation5 + $0xe4] sm:$0xf]
        %v605 = vld [vmem:[#allocation5 + $0xe8] sm:$0xf]
        %v606 = vld [vmem:[#allocation5 + $0xec] sm:$0xf]
        %v607 = vld [vmem:[#allocation5 + $0xf0] sm:$0xf]
        %v608 = vld [vmem:[#allocation5 + $0xf4] sm:$0xf]
        %v609 = vld [vmem:[#allocation5 + $0xf8] sm:$0xf]
        %v610 = vld [vmem:[#allocation5 + $0xfc] sm:$0xf]
        %v611 = vld [vmem:[#allocation5 + $0x100] sm:$0xf]
        %v612 = vld [vmem:[#allocation5 + $0x104] sm:$0xf]
        %v613 = vld [vmem:[#allocation5 + $0x108] sm:$0xf]
        %v614 = vld [vmem:[#allocation5 + $0x10c] sm:$0xf]
        %v615 = vld [vmem:[#allocation5 + $0x110] sm:$0xf]
        %v616 = vld [vmem:[#allocation5 + $0x114] sm:$0xf]
        %v617 = vld [vmem:[#allocation5 + $0x118] sm:$0xf]
        %v618 = vld [vmem:[#allocation5 + $0x11c] sm:$0xf]
        %v619 = vld [vmem:[#allocation5 + $0x120] sm:$0xf]
        %v620 = vld [vmem:[#allocation5 + $0x124] sm:$0xf]
        %v621 = vld [vmem:[#allocation5 + $0x128] sm:$0xf]
        %v622 = vld [vmem:[#allocation5 + $0x12c] sm:$0xf]
        %v623 = vld [vmem:[#allocation5 + $0x130] sm:$0xf]
        %v624 = vld [vmem:[#allocation5 + $0x134] sm:$0xf]
        %v625 = vld [vmem:[#allocation5 + $0x138] sm:$0xf]
        %v626 = vld [vmem:[#allocation5 + $0x13c] sm:$0xf]
        %v627 = vld [vmem:[#allocation5 + $0x140] sm:$0xf]
        %v628 = vld [vmem:[#allocation5 + $0x144] sm:$0xf]
        %v629 = vld [vmem:[#allocation5 + $0x148] sm:$0xf]
        %v630 = vld [vmem:[#allocation5 + $0x14c] sm:$0xf]
        %v631 = vld [vmem:[#allocation5 + $0x150] sm:$0xf]
        %v632 = vld [vmem:[#allocation5 + $0x154] sm:$0xf]
        %v633 = vld [vmem:[#allocation5 + $0x158] sm:$0xf]
        %v634 = vld [vmem:[#allocation5 + $0x15c] sm:$0xf]
        %v635 = vld [vmem:[#allocation5 + $0x160] sm:$0xf]
        %v636 = vld [vmem:[#allocation5 + $0x164] sm:$0xf]
        %v637 = vld [vmem:[#allocation5 + $0x168] sm:$0xf]
        %v638 = vld [vmem:[#allocation5 + $0x16c] sm:$0xf]
        %v639 = vld [vmem:[#allocation5 + $0x170] sm:$0xf]
        %v640 = vld [vmem:[#allocation5 + $0x174] sm:$0xf]
        %v641 = vld [vmem:[#allocation5 + $0x178] sm:$0xf]
        %v642 = vld [vmem:[#allocation5 + $0x17c] sm:$0xf]
        %v643 = vld [vmem:[#allocation5 + $0x180] sm:$0xf]
        %v644 = vld [vmem:[#allocation5 + $0x184] sm:$0xf]
        %v645 = vld [vmem:[#allocation5 + $0x188] sm:$0xf]
        %v646 = vld [vmem:[#allocation5 + $0x18c] sm:$0xf]
        %v647 = vld [vmem:[#allocation5 + $0x190] sm:$0xf]
        %v648 = vld [vmem:[#allocation5 + $0x194] sm:$0xf]
        %v649 = vld [vmem:[#allocation5 + $0x198] sm:$0xf]
        %v650 = vld [vmem:[#allocation5 + $0x19c] sm:$0xf]
        %v651 = vld [vmem:[#allocation5 + $0x1a0] sm:$0xf]
        %v652 = vld [vmem:[#allocation5 + $0x1a4] sm:$0xf]
        %v653 = vld [vmem:[#allocation5 + $0x1a8] sm:$0xf]
        %v654 = vld [vmem:[#allocation5 + $0x1ac] sm:$0xf]
        %v655 = vld [vmem:[#allocation5 + $0x1b0] sm:$0xf]
        %v656 = vld [vmem:[#allocation5 + $0x1b4] sm:$0xf]
        %v657 = vld [vmem:[#allocation5 + $0x1b8] sm:$0xf]
        %v658 = vld [vmem:[#allocation5 + $0x1bc] sm:$0xf]
        %v659 = vld [vmem:[#allocation5 + $0x1c0] sm:$0xf]
        %v660 = vld [vmem:[#allocation5 + $0x1c4] sm:$0xf]
        %v661 = vld [vmem:[#allocation5 + $0x1c8] sm:$0xf]
        %v662 = vld [vmem:[#allocation5 + $0x1cc] sm:$0xf]
        %v663 = vld [vmem:[#allocation5 + $0x1d0] sm:$0xf]
        %v664 = vld [vmem:[#allocation5 + $0x1d4] sm:$0xf]
        %v665 = vld [vmem:[#allocation5 + $0x1d8] sm:$0xf]
        %v666 = vld [vmem:[#allocation5 + $0x1dc] sm:$0xf]
        %v667 = vld [vmem:[#allocation5 + $0x1e0] sm:$0xf]
        %v668 = vld [vmem:[#allocation5 + $0x1e4] sm:$0xf]
        %v669 = vld [vmem:[#allocation5 + $0x1e8] sm:$0xf]
        %v670 = vld [vmem:[#allocation5 + $0x1ec] sm:$0xf]
        %v671 = vld [vmem:[#allocation5 + $0x1f0] sm:$0xf]
        %v672 = vld [vmem:[#allocation5 + $0x1f4] sm:$0xf]
        %v673 = vld [vmem:[#allocation5 + $0x1f8] sm:$0xf]
        %v674 = vld [vmem:[#allocation5 + $0x1fc] sm:$0xf]
        %v675 = vld [vmem:[#allocation5 + $0x200] sm:$0xf]
        %v676 = vld [vmem:[#allocation5 + $0x204] sm:$0xf]
        %v677 = vld [vmem:[#allocation5 + $0x208] sm:$0xf]
        %v678 = vld [vmem:[#allocation5 + $0x20c] sm:$0xf]
        %v679 = vld [vmem:[#allocation5 + $0x210] sm:$0xf]
        %v680 = vld [vmem:[#allocation5 + $0x214] sm:$0xf]
        %v681 = vld [vmem:[#allocation5 + $0x218] sm:$0xf]
        %v682 = vld [vmem:[#allocation5 + $0x21c] sm:$0xf]
        %v683 = vld [vmem:[%s2] sm:$0x1]
        %v685 = vlaneseq
        %v686 = vshrl.u32 %v685, 7
        %v687 = vsub.s32 0, %v686
        %v688 = vrot.slane %v683, %v687
        %v695 = vunpack.c.l.b16 %v542
        %v696 = vunpack.c.h.b16 %v542
        %v697 = vunpack.c.l.b16 %v543
        %v698 = vunpack.c.h.b16 %v543
        %v699 = vunpack.c.l.b16 %v544
        %v700 = vunpack.c.h.b16 %v544
        %v701 = vunpack.c.l.b16 %v545
        %v702 = vunpack.c.h.b16 %v545
        %v703 = vunpack.c.l.b16 %v546
        %v704 = vpack.c.b16 %v695, %v695
        %v705 = vpack.c.b16 %v696, %v696
        %v706 = vpack.c.b16 %v697, %v697
        %v707 = vpack.c.b16 %v698, %v698
        %v708 = vpack.c.b16 %v699, %v699
        %v709 = vpack.c.b16 %v700, %v700
        %v710 = vpack.c.b16 %v701, %v701
        %v711 = vpack.c.b16 %v702, %v702
        %v712 = vpack.c.b16 %v703, %v703
        %v857 = vunpack.c.l.b16 %v547
        %v858 = vunpack.c.l.b16 %v548
        %v859 = vunpack.c.l.b16 %v549
        %v860 = vunpack.c.l.b16 %v550
        %v861 = vunpack.c.l.b16 %v551
        %v862 = vunpack.c.l.b16 %v552
        %v863 = vunpack.c.l.b16 %v553
        %v864 = vunpack.c.l.b16 %v554
        %v865 = vunpack.c.l.b16 %v555
        %v866 = vunpack.c.l.b16 %v556
        %v867 = vunpack.c.l.b16 %v557
        %v868 = vunpack.c.l.b16 %v558
        %v869 = vunpack.c.l.b16 %v559
        %v870 = vunpack.c.l.b16 %v560
        %v871 = vunpack.c.l.b16 %v561
        %v872 = vunpack.c.l.b16 %v562
        %v873 = vunpack.c.l.b16 %v563
        %v874 = vunpack.c.l.b16 %v564
        %v875 = vunpack.c.l.b16 %v565
        %v876 = vunpack.c.l.b16 %v566
        %v877 = vunpack.c.l.b16 %v567
        %v878 = vunpack.c.l.b16 %v568
        %v879 = vunpack.c.l.b16 %v569
        %v880 = vunpack.c.l.b16 %v570
        %v881 = vunpack.c.l.b16 %v571
        %v882 = vunpack.c.l.b16 %v572
        %v883 = vunpack.c.l.b16 %v573
        %v884 = vunpack.c.l.b16 %v574
        %v885 = vunpack.c.l.b16 %v575
        %v886 = vunpack.c.l.b16 %v576
        %v887 = vunpack.c.l.b16 %v577
        %v888 = vunpack.c.l.b16 %v578
        %v889 = vunpack.c.l.b16 %v579
        %v890 = vunpack.c.l.b16 %v580
        %v891 = vunpack.c.l.b16 %v581
        %v892 = vunpack.c.l.b16 %v582
        %v893 = vunpack.c.l.b16 %v583
        %v894 = vunpack.c.l.b16 %v584
        %v895 = vunpack.c.l.b16 %v585
        %v896 = vunpack.c.l.b16 %v586
        %v897 = vunpack.c.l.b16 %v587
        %v898 = vunpack.c.l.b16 %v588
        %v899 = vunpack.c.l.b16 %v589
        %v900 = vunpack.c.l.b16 %v590
        %v901 = vunpack.c.l.b16 %v591
        %v902 = vunpack.c.l.b16 %v592
        %v903 = vunpack.c.l.b16 %v593
        %v904 = vunpack.c.l.b16 %v594
        %v905 = vunpack.c.l.b16 %v595
        %v906 = vunpack.c.l.b16 %v596
        %v907 = vunpack.c.l.b16 %v597
        %v908 = vunpack.c.l.b16 %v598
        %v909 = vunpack.c.l.b16 %v599
        %v910 = vunpack.c.l.b16 %v600
        %v911 = vunpack.c.l.b16 %v601
        %v912 = vunpack.c.l.b16 %v602
        %v913 = vunpack.c.l.b16 %v603
        %v914 = vunpack.c.l.b16 %v604
        %v915 = vunpack.c.l.b16 %v605
        %v916 = vunpack.c.l.b16 %v606
        %v917 = vunpack.c.l.b16 %v607
        %v918 = vunpack.c.l.b16 %v608
        %v919 = vunpack.c.l.b16 %v609
        %v920 = vunpack.c.l.b16 %v610
        %v921 = vunpack.c.l.b16 %v611
        %v922 = vunpack.c.l.b16 %v612
        %v923 = vunpack.c.l.b16 %v613
        %v924 = vunpack.c.l.b16 %v614
        %v925 = vunpack.c.l.b16 %v615
        %v926 = vunpack.c.l.b16 %v616
        %v927 = vunpack.c.l.b16 %v617
        %v928 = vunpack.c.l.b16 %v618
        %v929 = vunpack.c.l.b16 %v619
        %v930 = vunpack.c.l.b16 %v620
        %v931 = vunpack.c.l.b16 %v621
        %v932 = vunpack.c.l.b16 %v622
        %v933 = vunpack.c.l.b16 %v623
        %v934 = vunpack.c.l.b16 %v624
        %v935 = vunpack.c.l.b16 %v625
        %v936 = vunpack.c.l.b16 %v626
        %v937 = vunpack.c.l.b16 %v627
        %v938 = vunpack.c.l.b16 %v628
        %v939 = vunpack.c.l.b16 %v629
        %v940 = vunpack.c.l.b16 %v630
        %v941 = vunpack.c.l.b16 %v631
        %v942 = vunpack.c.l.b16 %v632
        %v943 = vunpack.c.l.b16 %v633
        %v944 = vunpack.c.l.b16 %v634
        %v945 = vunpack.c.l.b16 %v635
        %v946 = vunpack.c.l.b16 %v636
        %v947 = vunpack.c.l.b16 %v637
        %v948 = vunpack.c.l.b16 %v638
        %v949 = vunpack.c.l.b16 %v639
        %v950 = vunpack.c.l.b16 %v640
        %v951 = vunpack.c.l.b16 %v641
        %v952 = vunpack.c.l.b16 %v642
        %v953 = vunpack.c.l.b16 %v643
        %v954 = vunpack.c.l.b16 %v644
        %v955 = vunpack.c.l.b16 %v645
        %v956 = vunpack.c.l.b16 %v646
        %v957 = vunpack.c.l.b16 %v647
        %v958 = vunpack.c.l.b16 %v648
        %v959 = vunpack.c.l.b16 %v649
        %v960 = vunpack.c.l.b16 %v650
        %v961 = vunpack.c.l.b16 %v651
        %v962 = vunpack.c.l.b16 %v652
        %v963 = vunpack.c.l.b16 %v653
        %v964 = vunpack.c.l.b16 %v654
        %v965 = vunpack.c.l.b16 %v655
        %v966 = vunpack.c.l.b16 %v656
        %v967 = vunpack.c.l.b16 %v657
        %v968 = vunpack.c.l.b16 %v658
        %v969 = vunpack.c.l.b16 %v659
        %v970 = vunpack.c.l.b16 %v660
        %v971 = vunpack.c.l.b16 %v661
        %v972 = vunpack.c.l.b16 %v662
        %v973 = vunpack.c.l.b16 %v663
        %v974 = vunpack.c.l.b16 %v664
        %v975 = vunpack.c.l.b16 %v665
        %v976 = vunpack.c.l.b16 %v666
        %v977 = vunpack.c.l.b16 %v667
        %v978 = vunpack.c.l.b16 %v668
        %v979 = vunpack.c.l.b16 %v669
        %v980 = vunpack.c.l.b16 %v670
        %v981 = vunpack.c.l.b16 %v671
        %v982 = vunpack.c.l.b16 %v672
        %v983 = vunpack.c.l.b16 %v673
        %v984 = vunpack.c.l.b16 %v674
        %v985 = vunpack.c.l.b16 %v675
        %v986 = vunpack.c.l.b16 %v676
        %v987 = vunpack.c.l.b16 %v677
        %v988 = vunpack.c.l.b16 %v678
        %v989 = vunpack.c.l.b16 %v679
        %v990 = vunpack.c.l.b16 %v680
        %v991 = vunpack.c.l.b16 %v681
        %v992 = vunpack.c.l.b16 %v682
        %v993 = vpack.c.b16 %v858, %v857
        %v994 = vpack.c.b16 %v860, %v859
        %v995 = vpack.c.b16 %v862, %v861
        %v996 = vpack.c.b16 %v864, %v863
        %v997 = vpack.c.b16 %v866, %v865
        %v998 = vpack.c.b16 %v868, %v867
        %v999 = vpack.c.b16 %v870, %v869
        %v1000 = vpack.c.b16 %v872, %v871
        %v1001 = vpack.c.b16 %v874, %v873
        %v1002 = vpack.c.b16 %v876, %v875
        %v1003 = vpack.c.b16 %v878, %v877
        %v1004 = vpack.c.b16 %v880, %v879
        %v1005 = vpack.c.b16 %v882, %v881
        %v1006 = vpack.c.b16 %v884, %v883
        %v1007 = vpack.c.b16 %v886, %v885
        %v1008 = vpack.c.b16 %v888, %v887
        %v1009 = vpack.c.b16 %v890, %v889
        %v1010 = vpack.c.b16 %v892, %v891
        %v1011 = vpack.c.b16 %v894, %v893
        %v1012 = vpack.c.b16 %v896, %v895
        %v1013 = vpack.c.b16 %v898, %v897
        %v1014 = vpack.c.b16 %v900, %v899
        %v1015 = vpack.c.b16 %v902, %v901
        %v1016 = vpack.c.b16 %v904, %v903
        %v1017 = vpack.c.b16 %v906, %v905
        %v1018 = vpack.c.b16 %v908, %v907
        %v1019 = vpack.c.b16 %v910, %v909
        %v1020 = vpack.c.b16 %v912, %v911
        %v1021 = vpack.c.b16 %v914, %v913
        %v1022 = vpack.c.b16 %v916, %v915
        %v1023 = vpack.c.b16 %v918, %v917
        %v1024 = vpack.c.b16 %v920, %v919
        %v1025 = vpack.c.b16 %v922, %v921
        %v1026 = vpack.c.b16 %v924, %v923
        %v1027 = vpack.c.b16 %v926, %v925
        %v1028 = vpack.c.b16 %v928, %v927
        %v1029 = vpack.c.b16 %v930, %v929
        %v1030 = vpack.c.b16 %v932, %v931
        %v1031 = vpack.c.b16 %v934, %v933
        %v1032 = vpack.c.b16 %v936, %v935
        %v1033 = vpack.c.b16 %v938, %v937
        %v1034 = vpack.c.b16 %v940, %v939
        %v1035 = vpack.c.b16 %v942, %v941
        %v1036 = vpack.c.b16 %v944, %v943
        %v1037 = vpack.c.b16 %v946, %v945
        %v1038 = vpack.c.b16 %v948, %v947
        %v1039 = vpack.c.b16 %v950, %v949
        %v1040 = vpack.c.b16 %v952, %v951
        %v1041 = vpack.c.b16 %v954, %v953
        %v1042 = vpack.c.b16 %v956, %v955
        %v1043 = vpack.c.b16 %v958, %v957
        %v1044 = vpack.c.b16 %v960, %v959
        %v1045 = vpack.c.b16 %v962, %v961
        %v1046 = vpack.c.b16 %v964, %v963
        %v1047 = vpack.c.b16 %v966, %v965
        %v1048 = vpack.c.b16 %v968, %v967
        %v1049 = vpack.c.b16 %v970, %v969
        %v1050 = vpack.c.b16 %v972, %v971
        %v1051 = vpack.c.b16 %v974, %v973
        %v1052 = vpack.c.b16 %v976, %v975
        %v1053 = vpack.c.b16 %v978, %v977
        %v1054 = vpack.c.b16 %v980, %v979
        %v1055 = vpack.c.b16 %v982, %v981
        %v1056 = vpack.c.b16 %v984, %v983
        %v1057 = vpack.c.b16 %v986, %v985
        %v1058 = vpack.c.b16 %v988, %v987
        %v1059 = vpack.c.b16 %v990, %v989
        %v1060 = vpack.c.b16 %v992, %v991
        %vm1129 = vcmask 523264
        %v1131 = vsel %vm1129, %v712, 0
        %1133 = vmatprep.subr.bf16.mxu0 0
        %1134 = vmatpush1.bf16.msra.mxu0 %v993
        %1135 = vmatprep.subr.bf16.mxu0 0
        %1136 = vmatpush1.bf16.msra.mxu0 %v994
        %1137 = vmatprep.subr.bf16.mxu0 0
        %1138 = vmatpush1.bf16.msra.mxu0 %v995
        %1139 = vmatprep.subr.bf16.mxu0 0
        %1140 = vmatpush1.bf16.msra.mxu0 %v996
        %1141 = vmatprep.subr.bf16.mxu0 0
        %1142 = vmatpush1.bf16.msra.mxu0 %v997
        %1143 = vmatprep.subr.bf16.mxu0 0
        %1144 = vmatpush1.bf16.msra.mxu0 %v998
        %1145 = vmatprep.subr.bf16.mxu0 0
        %1146 = vmatpush1.bf16.msra.mxu0 %v999
        %1147 = vmatprep.subr.bf16.mxu0 0
        %1148 = vmatpush1.bf16.msra.mxu0 %v1000
        %1149 = vmatprep.subr.bf16.mxu0 0
        %1150 = vmatpush1.bf16.msra.mxu0 %v1001
        %1151 = vmatprep.subr.bf16.mxu0 0
        %1152 = vmatpush1.bf16.msra.mxu0 %v1002
        %1153 = vmatprep.subr.bf16.mxu0 0
        %1154 = vmatpush1.bf16.msra.mxu0 %v1003
        %1155 = vmatprep.subr.bf16.mxu0 0
        %1156 = vmatpush1.bf16.msra.mxu0 %v1004
        %1157 = vmatprep.subr.bf16.mxu0 0
        %1158 = vmatpush1.bf16.msra.mxu0 %v1005
        %1159 = vmatprep.subr.bf16.mxu0 0
        %1160 = vmatpush1.bf16.msra.mxu0 %v1006
        %1161 = vmatprep.subr.bf16.mxu0 0
        %1162 = vmatpush1.bf16.msra.mxu0 %v1007
        %1163 = vmatprep.subr.bf16.mxu0 0
        %1164 = vmatpush1.bf16.msra.mxu0 %v1008
        %1165 = vmatprep.mubr.bf16.mxu0 %v705
        %1166 = vmatmul.mubr.bf16.gmra.mrb[0].mxu0 %v704
        %v1167 = vpop.f32.mrb[0].mxu0
        %v1168 = vadd.f32 %v688, %v1167
        %v1169 = vpop.f32.mrb[0].mxu0
        %v1170 = vpop.f32.mrb[0].mxu0
        %v1171 = vpop.f32.mrb[0].mxu0
        %1172 = vdwg.mxu0
        %1173 = vmatprep.subr.bf16.mxu0 0
        %1174 = vmatpush1.bf16.msra.mxu0 %v1009
        %1175 = vmatprep.subr.bf16.mxu0 0
        %1176 = vmatpush1.bf16.msra.mxu0 %v1010
        %1177 = vmatprep.subr.bf16.mxu0 0
        %1178 = vmatpush1.bf16.msra.mxu0 %v1011
        %1179 = vmatprep.subr.bf16.mxu0 0
        %1180 = vmatpush1.bf16.msra.mxu0 %v1012
        %1181 = vmatprep.subr.bf16.mxu0 0
        %1182 = vmatpush1.bf16.msra.mxu0 %v1013
        %1183 = vmatprep.subr.bf16.mxu0 0
        %1184 = vmatpush1.bf16.msra.mxu0 %v1014
        %1185 = vmatprep.subr.bf16.mxu0 0
        %1186 = vmatpush1.bf16.msra.mxu0 %v1015
        %1187 = vmatprep.subr.bf16.mxu0 0
        %1188 = vmatpush1.bf16.msra.mxu0 %v1016
        %1189 = vmatprep.subr.bf16.mxu0 0
        %1190 = vmatpush1.bf16.msra.mxu0 %v1017
        %1191 = vmatprep.subr.bf16.mxu0 0
        %1192 = vmatpush1.bf16.msra.mxu0 %v1018
        %1193 = vmatprep.subr.bf16.mxu0 0
        %1194 = vmatpush1.bf16.msra.mxu0 %v1019
        %1195 = vmatprep.subr.bf16.mxu0 0
        %1196 = vmatpush1.bf16.msra.mxu0 %v1020
        %1197 = vmatprep.subr.bf16.mxu0 0
        %1198 = vmatpush1.bf16.msra.mxu0 %v1021
        %1199 = vmatprep.subr.bf16.mxu0 0
        %1200 = vmatpush1.bf16.msra.mxu0 %v1022
        %1201 = vmatprep.subr.bf16.mxu0 0
        %1202 = vmatpush1.bf16.msra.mxu0 %v1023
        %1203 = vmatprep.subr.bf16.mxu0 0
        %1204 = vmatpush1.bf16.msra.mxu0 %v1024
        %1205 = vmatprep.mubr.bf16.mxu0 %v707
        %1206 = vmatmul.mubr.bf16.gmra.mrb[0].mxu0 %v706
        %v1207 = vpop.f32.mrb[0].mxu0
        %v1208 = vadd.f32 %v1168, %v1207
        %v1209 = vpop.f32.mrb[0].mxu0
        %v1210 = vpop.f32.mrb[0].mxu0
        %v1211 = vpop.f32.mrb[0].mxu0
        %1212 = vdwg.mxu0
        %1213 = vmatprep.subr.bf16.mxu0 0
        %1214 = vmatpush1.bf16.msra.mxu0 %v1025
        %1215 = vmatprep.subr.bf16.mxu0 0
        %1216 = vmatpush1.bf16.msra.mxu0 %v1026
        %1217 = vmatprep.subr.bf16.mxu0 0
        %1218 = vmatpush1.bf16.msra.mxu0 %v1027
        %1219 = vmatprep.subr.bf16.mxu0 0
        %1220 = vmatpush1.bf16.msra.mxu0 %v1028
        %1221 = vmatprep.subr.bf16.mxu0 0
        %1222 = vmatpush1.bf16.msra.mxu0 %v1029
        %1223 = vmatprep.subr.bf16.mxu0 0
        %1224 = vmatpush1.bf16.msra.mxu0 %v1030
        %1225 = vmatprep.subr.bf16.mxu0 0
        %1226 = vmatpush1.bf16.msra.mxu0 %v1031
        %1227 = vmatprep.subr.bf16.mxu0 0
        %1228 = vmatpush1.bf16.msra.mxu0 %v1032
        %1229 = vmatprep.subr.bf16.mxu0 0
        %1230 = vmatpush1.bf16.msra.mxu0 %v1033
        %1231 = vmatprep.subr.bf16.mxu0 0
        %1232 = vmatpush1.bf16.msra.mxu0 %v1034
        %1233 = vmatprep.subr.bf16.mxu0 0
        %1234 = vmatpush1.bf16.msra.mxu0 %v1035
        %1235 = vmatprep.subr.bf16.mxu0 0
        %1236 = vmatpush1.bf16.msra.mxu0 %v1036
        %1237 = vmatprep.subr.bf16.mxu0 0
        %1238 = vmatpush1.bf16.msra.mxu0 %v1037
        %1239 = vmatprep.subr.bf16.mxu0 0
        %1240 = vmatpush1.bf16.msra.mxu0 %v1038
        %1241 = vmatprep.subr.bf16.mxu0 0
        %1242 = vmatpush1.bf16.msra.mxu0 %v1039
        %1243 = vmatprep.subr.bf16.mxu0 0
        %1244 = vmatpush1.bf16.msra.mxu0 %v1040
        %1245 = vmatprep.mubr.bf16.mxu0 %v709
        %1246 = vmatmul.mubr.bf16.gmra.mrb[0].mxu0 %v708
        %v1247 = vpop.f32.mrb[0].mxu0
        %v1248 = vadd.f32 %v1208, %v1247
        %v1249 = vpop.f32.mrb[0].mxu0
        %v1250 = vpop.f32.mrb[0].mxu0
        %v1251 = vpop.f32.mrb[0].mxu0
        %1252 = vdwg.mxu0
        %1253 = vmatprep.subr.bf16.mxu0 0
        %1254 = vmatpush1.bf16.msra.mxu0 %v1041
        %1255 = vmatprep.subr.bf16.mxu0 0
        %1256 = vmatpush1.bf16.msra.mxu0 %v1042
        %1257 = vmatprep.subr.bf16.mxu0 0
        %1258 = vmatpush1.bf16.msra.mxu0 %v1043
        %1259 = vmatprep.subr.bf16.mxu0 0
        %1260 = vmatpush1.bf16.msra.mxu0 %v1044
        %1261 = vmatprep.subr.bf16.mxu0 0
        %1262 = vmatpush1.bf16.msra.mxu0 %v1045
        %1263 = vmatprep.subr.bf16.mxu0 0
        %1264 = vmatpush1.bf16.msra.mxu0 %v1046
        %1265 = vmatprep.subr.bf16.mxu0 0
        %1266 = vmatpush1.bf16.msra.mxu0 %v1047
        %1267 = vmatprep.subr.bf16.mxu0 0
        %1268 = vmatpush1.bf16.msra.mxu0 %v1048
        %1269 = vmatprep.subr.bf16.mxu0 0
        %1270 = vmatpush1.bf16.msra.mxu0 %v1049
        %1271 = vmatprep.subr.bf16.mxu0 0
        %1272 = vmatpush1.bf16.msra.mxu0 %v1050
        %1273 = vmatprep.subr.bf16.mxu0 0
        %1274 = vmatpush1.bf16.msra.mxu0 %v1051
        %1275 = vmatprep.subr.bf16.mxu0 0
        %1276 = vmatpush1.bf16.msra.mxu0 %v1052
        %1277 = vmatprep.subr.bf16.mxu0 0
        %1278 = vmatpush1.bf16.msra.mxu0 %v1053
        %1279 = vmatprep.subr.bf16.mxu0 0
        %1280 = vmatpush1.bf16.msra.mxu0 %v1054
        %1281 = vmatprep.subr.bf16.mxu0 0
        %1282 = vmatpush1.bf16.msra.mxu0 %v1055
        %1283 = vmatprep.subr.bf16.mxu0 0
        %1284 = vmatpush1.bf16.msra.mxu0 %v1056
        %1285 = vmatprep.mubr.bf16.mxu0 %v711
        %1286 = vmatmul.mubr.bf16.gmra.mrb[0].mxu0 %v710
        %v1287 = vpop.f32.mrb[0].mxu0
        %v1288 = vadd.f32 %v1248, %v1287
        %v1289 = vpop.f32.mrb[0].mxu0
        %v1290 = vpop.f32.mrb[0].mxu0
        %v1291 = vpop.f32.mrb[0].mxu0
        %1292 = vdwg.mxu0
        %1293 = vmatprep.subr.bf16.mxu0 0
        %1294 = vmatpush1.bf16.msra.mxu0 %v1057
        %1295 = vmatprep.subr.bf16.mxu0 0
        %1296 = vmatpush1.bf16.msra.mxu0 %v1058
        %1297 = vmatprep.subr.bf16.mxu0 0
        %1298 = vmatpush1.bf16.msra.mxu0 %v1059
        %1299 = vmatprep.subr.bf16.mxu0 0
        %1300 = vmatpush1.bf16.msra.mxu0 %v1060
        %1301 = vmatprep.subr.bf16.mxu0 0
        %1302 = vmatpush1.bf16.msra.mxu0 0
        %1303 = vmatprep.subr.bf16.mxu0 0
        %1304 = vmatpush1.bf16.msra.mxu0 0
        %1305 = vmatprep.subr.bf16.mxu0 0
        %1306 = vmatpush1.bf16.msra.mxu0 0
        %1307 = vmatprep.subr.bf16.mxu0 0
        %1308 = vmatpush1.bf16.msra.mxu0 0
        %1309 = vmatprep.subr.bf16.mxu0 0
        %1310 = vmatpush1.bf16.msra.mxu0 0
        %1311 = vmatprep.subr.bf16.mxu0 0
        %1312 = vmatpush1.bf16.msra.mxu0 0
        %1313 = vmatprep.subr.bf16.mxu0 0
        %1314 = vmatpush1.bf16.msra.mxu0 0
        %1315 = vmatprep.subr.bf16.mxu0 0
        %1316 = vmatpush1.bf16.msra.mxu0 0
        %1317 = vmatprep.subr.bf16.mxu0 0
        %1318 = vmatpush1.bf16.msra.mxu0 0
        %1319 = vmatprep.subr.bf16.mxu0 0
        %1320 = vmatpush1.bf16.msra.mxu0 0
        %1321 = vmatprep.subr.bf16.mxu0 0
        %1322 = vmatpush1.bf16.msra.mxu0 0
        %1323 = vmatprep.subr.bf16.mxu0 0
        %1324 = vmatpush1.bf16.msra.mxu0 0
        %1325 = vmatprep.mubr.bf16.mxu0 0
        %1326 = vmatmul.mubr.bf16.gmra.mrb[0].mxu0 %v1131
        %v1327 = vpop.f32.mrb[0].mxu0
        %v1328 = vadd.f32 %v1288, %v1327
        %v1329 = vpop.f32.mrb[0].mxu0
        %v1330 = vpop.f32.mrb[0].mxu0
        %v1331 = vpop.f32.mrb[0].mxu0
        %1332 = vdwg.mxu0
        %v1333 = vtanh.pop %v1328
        %v1334 = vld [vmem:[#allocation7] sm:$0xf]
        %v1335 = vld [vmem:[#allocation7 + $0x4] sm:$0xf]
        %v1336 = vld [vmem:[#allocation7 + $0x8] sm:$0xf]
        %v1337 = vld [vmem:[#allocation7 + $0xc] sm:$0xf]
        %v1338 = vld [vmem:[#allocation7 + $0x10] sm:$0xf]
        %v1339 = vld [vmem:[#allocation7 + $0x14] sm:$0xf]
        %v1340 = vld [vmem:[#allocation7 + $0x18] sm:$0xf]
        %v1341 = vld [vmem:[#allocation7 + $0x1c] sm:$0xf]
        %v1342 = vld [vmem:[#allocation7 + $0x20] sm:$0xf]
        %v1343 = vld [vmem:[#allocation7 + $0x24] sm:$0xf]
        %v1344 = vld [vmem:[#allocation7 + $0x28] sm:$0xf]
        %v1345 = vld [vmem:[#allocation7 + $0x2c] sm:$0xf]
        %v1346 = vld [vmem:[#allocation7 + $0x30] sm:$0xf]
        %v1347 = vld [vmem:[#allocation7 + $0x34] sm:$0xf]
        %v1348 = vld [vmem:[#allocation7 + $0x38] sm:$0xf]
        %v1349 = vld [vmem:[#allocation7 + $0x3c] sm:$0xf]
        %v1350 = vpack.c.bf16 %v1333, %v1333
        %v1351 = vld [vmem:[%s4] sm:$0x1]
        %v1353 = vlaneseq
        %v1354 = vshrl.u32 %v1353, 7
        %v1355 = vsub.s32 0, %v1354
        %v1356 = vrot.slane %v1351, %v1355
        %v1374 = vunpack.c.l.b16 %v1334
        %v1375 = vunpack.c.l.b16 %v1335
        %v1376 = vunpack.c.l.b16 %v1336
        %v1377 = vunpack.c.l.b16 %v1337
        %v1378 = vunpack.c.l.b16 %v1338
        %v1379 = vunpack.c.l.b16 %v1339
        %v1380 = vunpack.c.l.b16 %v1340
        %v1381 = vunpack.c.l.b16 %v1341
        %v1382 = vunpack.c.l.b16 %v1342
        %v1383 = vunpack.c.l.b16 %v1343
        %v1384 = vunpack.c.l.b16 %v1344
        %v1385 = vunpack.c.l.b16 %v1345
        %v1386 = vunpack.c.l.b16 %v1346
        %v1387 = vunpack.c.l.b16 %v1347
        %v1388 = vunpack.c.l.b16 %v1348
        %v1389 = vunpack.c.l.b16 %v1349
        %v1390 = vpack.c.b16 %v1375, %v1374
        %v1391 = vpack.c.b16 %v1377, %v1376
        %v1392 = vpack.c.b16 %v1379, %v1378
        %v1393 = vpack.c.b16 %v1381, %v1380
        %v1394 = vpack.c.b16 %v1383, %v1382
        %v1395 = vpack.c.b16 %v1385, %v1384
        %v1396 = vpack.c.b16 %v1387, %v1386
        %v1397 = vpack.c.b16 %v1389, %v1388
        %1406 = vmatprep.subr.bf16.mxu0 0
        %1407 = vmatpush1.bf16.msra.mxu0 %v1390
        %1408 = vmatprep.subr.bf16.mxu0 0
        %1409 = vmatpush1.bf16.msra.mxu0 %v1391
        %1410 = vmatprep.subr.bf16.mxu0 0
        %1411 = vmatpush1.bf16.msra.mxu0 %v1392
        %1412 = vmatprep.subr.bf16.mxu0 0
        %1413 = vmatpush1.bf16.msra.mxu0 %v1393
        %1414 = vmatprep.subr.bf16.mxu0 0
        %1415 = vmatpush1.bf16.msra.mxu0 %v1394
        %1416 = vmatprep.subr.bf16.mxu0 0
        %1417 = vmatpush1.bf16.msra.mxu0 %v1395
        %1418 = vmatprep.subr.bf16.mxu0 0
        %1419 = vmatpush1.bf16.msra.mxu0 %v1396
        %1420 = vmatprep.subr.bf16.mxu0 0
        %1421 = vmatpush1.bf16.msra.mxu0 %v1397
        %1422 = vmatprep.subr.bf16.mxu0 0
        %1423 = vmatpush1.bf16.msra.mxu0 0
        %1424 = vmatprep.subr.bf16.mxu0 0
        %1425 = vmatpush1.bf16.msra.mxu0 0
        %1426 = vmatprep.subr.bf16.mxu0 0
        %1427 = vmatpush1.bf16.msra.mxu0 0
        %1428 = vmatprep.subr.bf16.mxu0 0
        %1429 = vmatpush1.bf16.msra.mxu0 0
        %1430 = vmatprep.subr.bf16.mxu0 0
        %1431 = vmatpush1.bf16.msra.mxu0 0
        %1432 = vmatprep.subr.bf16.mxu0 0
        %1433 = vmatpush1.bf16.msra.mxu0 0
        %1434 = vmatprep.subr.bf16.mxu0 0
        %1435 = vmatpush1.bf16.msra.mxu0 0
        %1436 = vmatprep.subr.bf16.mxu0 0
        %1437 = vmatpush1.bf16.msra.mxu0 0
        %1438 = vmatprep.mubr.bf16.mxu0 0
        %1439 = vmatmul.mubr.bf16.gmra.mrb[0].mxu0 %v1350
        %v1440 = vpop.f32.mrb[0].mxu0
        %v1441 = vadd.f32 %v1356, %v1440
        %v1442 = vpop.f32.mrb[0].mxu0
        %v1443 = vpop.f32.mrb[0].mxu0
        %v1444 = vpop.f32.mrb[0].mxu0
        %1445 = vdwg.mxu0
        %v1446 = vtanh.pop %v1441
        %v1447 = vld [vmem:[#allocation8] sm:$0xff]
        %v1448 = vld [vmem:[#allocation8 + $0x8] sm:$0xf]
        %v1449 = vld [vmem:[#allocation8 + $0xc] sm:$0xff]
        %v1450 = vld [vmem:[#allocation8 + $0x14] sm:$0xf]
        %v1451 = vld [vmem:[#allocation8 + $0x18] sm:$0xff]
        %v1452 = vld [vmem:[#allocation8 + $0x20] sm:$0xf]
        %v1453 = vld [vmem:[#allocation8 + $0x24] sm:$0xff]
        %v1454 = vld [vmem:[#allocation8 + $0x2c] sm:$0xf]
        %v1455 = vld [vmem:[#allocation8 + $0x30] sm:$0xff]
        %v1456 = vld [vmem:[#allocation8 + $0x38] sm:$0xf]
        %v1457 = vld [vmem:[#allocation8 + $0x3c] sm:$0xff]
        %v1458 = vld [vmem:[#allocation8 + $0x44] sm:$0xf]
        %v1459 = vld [vmem:[#allocation8 + $0x48] sm:$0xff]
        %v1460 = vld [vmem:[#allocation8 + $0x50] sm:$0xf]
        %v1461 = vld [vmem:[#allocation8 + $0x54] sm:$0xff]
        %v1462 = vld [vmem:[#allocation8 + $0x5c] sm:$0xf]
        %v1463 = vld [vmem:[#allocation8 + $0x60] sm:$0xff]
        %v1464 = vld [vmem:[#allocation8 + $0x68] sm:$0xf]
        %v1465 = vld [vmem:[#allocation8 + $0x6c] sm:$0xff]
        %v1466 = vld [vmem:[#allocation8 + $0x74] sm:$0xf]
        %v1467 = vld [vmem:[#allocation8 + $0x78] sm:$0xff]
        %v1468 = vld [vmem:[#allocation8 + $0x80] sm:$0xf]
        %v1469 = vld [vmem:[#allocation8 + $0x84] sm:$0xff]
        %v1470 = vld [vmem:[#allocation8 + $0x8c] sm:$0xf]
        %v1471 = vld [vmem:[#allocation8 + $0x90] sm:$0xff]
        %v1472 = vld [vmem:[#allocation8 + $0x98] sm:$0xf]
        %v1473 = vld [vmem:[#allocation8 + $0x9c] sm:$0xff]
        %v1474 = vld [vmem:[#allocation8 + $0xa4] sm:$0xf]
        %v1475 = vld [vmem:[#allocation8 + $0xa8] sm:$0xff]
        %v1476 = vld [vmem:[#allocation8 + $0xb0] sm:$0xf]
        %v1477 = vld [vmem:[#allocation8 + $0xb4] sm:$0xff]
        %v1478 = vld [vmem:[#allocation8 + $0xbc] sm:$0xf]
        %v1479 = vpack.c.bf16 %v1446, %v1446
        %v1480 = vld [vmem:[%s6] sm:$0x7]
        %v1482 = vlaneseq
        %v1483 = vshrl.u32 %v1482, 7
        %v1484 = vsub.s32 0, %v1483
        %v1485 = vrot.slane %v1480, %v1484
        %v1486 = vlaneseq
        %v1487 = vshrl.u32 %v1486, 7
        %v1488 = vsub.s32 1, %v1487
        %v1489 = vrot.slane %v1480, %v1488
        %v1490 = vlaneseq
        %v1491 = vshrl.u32 %v1490, 7
        %v1492 = vsub.s32 2, %v1491
        %v1493 = vrot.slane %v1480, %v1492
        %v1529 = vunpack.c.l.b16 %v1447
        %v1530 = vunpack.c.h.b16 %v1447
        %v1531 = vunpack.c.l.b16 %v1448
        %v1532 = vunpack.c.l.b16 %v1449
        %v1533 = vunpack.c.h.b16 %v1449
        %v1534 = vunpack.c.l.b16 %v1450
        %v1535 = vunpack.c.l.b16 %v1451
        %v1536 = vunpack.c.h.b16 %v1451
        %v1537 = vunpack.c.l.b16 %v1452
        %v1538 = vunpack.c.l.b16 %v1453
        %v1539 = vunpack.c.h.b16 %v1453
        %v1540 = vunpack.c.l.b16 %v1454
        %v1541 = vunpack.c.l.b16 %v1455
        %v1542 = vunpack.c.h.b16 %v1455
        %v1543 = vunpack.c.l.b16 %v1456
        %v1544 = vunpack.c.l.b16 %v1457
        %v1545 = vunpack.c.h.b16 %v1457
        %v1546 = vunpack.c.l.b16 %v1458
        %v1547 = vunpack.c.l.b16 %v1459
        %v1548 = vunpack.c.h.b16 %v1459
        %v1549 = vunpack.c.l.b16 %v1460
        %v1550 = vunpack.c.l.b16 %v1461
        %v1551 = vunpack.c.h.b16 %v1461
        %v1552 = vunpack.c.l.b16 %v1462
        %v1553 = vunpack.c.l.b16 %v1463
        %v1554 = vunpack.c.h.b16 %v1463
        %v1555 = vunpack.c.l.b16 %v1464
        %v1556 = vunpack.c.l.b16 %v1465
        %v1557 = vunpack.c.h.b16 %v1465
        %v1558 = vunpack.c.l.b16 %v1466
        %v1559 = vunpack.c.l.b16 %v1467
        %v1560 = vunpack.c.h.b16 %v1467
        %v1561 = vunpack.c.l.b16 %v1468
        %v1562 = vunpack.c.l.b16 %v1469
        %v1563 = vunpack.c.h.b16 %v1469
        %v1564 = vunpack.c.l.b16 %v1470
        %v1565 = vunpack.c.l.b16 %v1471
        %v1566 = vunpack.c.h.b16 %v1471
        %v1567 = vunpack.c.l.b16 %v1472
        %v1568 = vunpack.c.l.b16 %v1473
        %v1569 = vunpack.c.h.b16 %v1473
        %v1570 = vunpack.c.l.b16 %v1474
        %v1571 = vunpack.c.l.b16 %v1475
        %v1572 = vunpack.c.h.b16 %v1475
        %v1573 = vunpack.c.l.b16 %v1476
        %v1574 = vunpack.c.l.b16 %v1477
        %v1575 = vunpack.c.h.b16 %v1477
        %v1576 = vunpack.c.l.b16 %v1478
        %v1577 = vpack.c.b16 %v1532, %v1529
        %v1578 = vpack.c.b16 %v1533, %v1530
        %v1579 = vpack.c.b16 %v1534, %v1531
        %v1580 = vpack.c.b16 %v1538, %v1535
        %v1581 = vpack.c.b16 %v1539, %v1536
        %v1582 = vpack.c.b16 %v1540, %v1537
        %v1583 = vpack.c.b16 %v1544, %v1541
        %v1584 = vpack.c.b16 %v1545, %v1542
        %v1585 = vpack.c.b16 %v1546, %v1543
        %v1586 = vpack.c.b16 %v1550, %v1547
        %v1587 = vpack.c.b16 %v1551, %v1548
        %v1588 = vpack.c.b16 %v1552, %v1549
        %v1589 = vpack.c.b16 %v1556, %v1553
        %v1590 = vpack.c.b16 %v1557, %v1554
        %v1591 = vpack.c.b16 %v1558, %v1555
        %v1592 = vpack.c.b16 %v1562, %v1559
        %v1593 = vpack.c.b16 %v1563, %v1560
        %v1594 = vpack.c.b16 %v1564, %v1561
        %v1595 = vpack.c.b16 %v1568, %v1565
        %v1596 = vpack.c.b16 %v1569, %v1566
        %v1597 = vpack.c.b16 %v1570, %v1567
        %v1598 = vpack.c.b16 %v1574, %v1571
        %v1599 = vpack.c.b16 %v1575, %v1572
        %v1600 = vpack.c.b16 %v1576, %v1573
        %1625 = vmatprep.subr.bf16.mxu0 %v1578
        %1626 = vmatpush1.bf16.msra.mxu0 %v1577
        %1627 = vmatprep.subr.bf16.mxu0 %v1581
        %1628 = vmatpush1.bf16.msra.mxu0 %v1580
        %1629 = vmatprep.subr.bf16.mxu0 %v1584
        %1630 = vmatpush1.bf16.msra.mxu0 %v1583
        %1631 = vmatprep.subr.bf16.mxu0 %v1587
        %1632 = vmatpush1.bf16.msra.mxu0 %v1586
        %1633 = vmatprep.subr.bf16.mxu0 %v1590
        %1634 = vmatpush1.bf16.msra.mxu0 %v1589
        %1635 = vmatprep.subr.bf16.mxu0 %v1593
        %1636 = vmatpush1.bf16.msra.mxu0 %v1592
        %1637 = vmatprep.subr.bf16.mxu0 %v1596
        %1638 = vmatpush1.bf16.msra.mxu0 %v1595
        %1639 = vmatprep.subr.bf16.mxu0 %v1599
        %1640 = vmatpush1.bf16.msra.mxu0 %v1598
        %1641 = vmatprep.subr.bf16.mxu0 0
        %1642 = vmatpush1.bf16.msra.mxu0 0
        %1643 = vmatprep.subr.bf16.mxu0 0
        %1644 = vmatpush1.bf16.msra.mxu0 0
        %1645 = vmatprep.subr.bf16.mxu0 0
        %1646 = vmatpush1.bf16.msra.mxu0 0
        %1647 = vmatprep.subr.bf16.mxu0 0
        %1648 = vmatpush1.bf16.msra.mxu0 0
        %1649 = vmatprep.subr.bf16.mxu0 0
        %1650 = vmatpush1.bf16.msra.mxu0 0
        %1651 = vmatprep.subr.bf16.mxu0 0
        %1652 = vmatpush1.bf16.msra.mxu0 0
        %1653 = vmatprep.subr.bf16.mxu0 0
        %1654 = vmatpush1.bf16.msra.mxu0 0
        %1655 = vmatprep.subr.bf16.mxu0 0
        %1656 = vmatpush1.bf16.msra.mxu0 0
        %1657 = vmatprep.mubr.bf16.mxu0 0
        %1658 = vmatmul.mubr.bf16.gmra.mrb[0].mxu0 %v1479
        %v1659 = vpop.f32.mrb[0].mxu0
        %v1660 = vadd.f32 %v1485, %v1659
        %v1661 = vpop.f32.mrb[0].mxu0
        %v1662 = vadd.f32 %v1489, %v1661
        %v1663 = vpop.f32.mrb[0].mxu0
        %v1664 = vpop.f32.mrb[0].mxu0
        %1665 = vdwg.mxu0
        %1666 = vmatprep.subr.bf16.mxu0 0
        %1667 = vmatpush1.bf16.msra.mxu0 %v1579
        %1668 = vmatprep.subr.bf16.mxu0 0
        %1669 = vmatpush1.bf16.msra.mxu0 %v1582
        %1670 = vmatprep.subr.bf16.mxu0 0
        %1671 = vmatpush1.bf16.msra.mxu0 %v1585
        %1672 = vmatprep.subr.bf16.mxu0 0
        %1673 = vmatpush1.bf16.msra.mxu0 %v1588
        %1674 = vmatprep.subr.bf16.mxu0 0
        %1675 = vmatpush1.bf16.msra.mxu0 %v1591
        %1676 = vmatprep.subr.bf16.mxu0 0
        %1677 = vmatpush1.bf16.msra.mxu0 %v1594
        %1678 = vmatprep.subr.bf16.mxu0 0
        %1679 = vmatpush1.bf16.msra.mxu0 %v1597
        %1680 = vmatprep.subr.bf16.mxu0 0
        %1681 = vmatpush1.bf16.msra.mxu0 %v1600
        %1682 = vmatprep.subr.bf16.mxu0 0
        %1683 = vmatpush1.bf16.msra.mxu0 0
        %1684 = vmatprep.subr.bf16.mxu0 0
        %1685 = vmatpush1.bf16.msra.mxu0 0
        %1686 = vmatprep.subr.bf16.mxu0 0
        %1687 = vmatpush1.bf16.msra.mxu0 0
        %1688 = vmatprep.subr.bf16.mxu0 0
        %1689 = vmatpush1.bf16.msra.mxu0 0
        %1690 = vmatprep.subr.bf16.mxu0 0
        %1691 = vmatpush1.bf16.msra.mxu0 0
        %1692 = vmatprep.subr.bf16.mxu0 0
        %1693 = vmatpush1.bf16.msra.mxu0 0
        %1694 = vmatprep.subr.bf16.mxu0 0
        %1695 = vmatpush1.bf16.msra.mxu0 0
        %1696 = vmatprep.subr.bf16.mxu0 0
        %1697 = vmatpush1.bf16.msra.mxu0 0
        %1698 = vmatprep.mubr.bf16.mxu0 0
        %1699 = vmatmul.mubr.bf16.gmra.mrb[0].mxu0 %v1479
        %v1700 = vpop.f32.mrb[0].mxu0
        %v1701 = vadd.f32 %v1493, %v1700
        %v1702 = vpop.f32.mrb[0].mxu0
        %v1703 = vpop.f32.mrb[0].mxu0
        %v1704 = vpop.f32.mrb[0].mxu0
        %1705 = vdwg.mxu0
        %v1706 = vtanh.pop %v1660
        %v1707 = vtanh.pop %v1662
        %v1708 = vtanh.pop %v1701
        %v1709 = vpack.c.bf16 %v1706, %v1706
        %v1710 = vpack.c.bf16 %v1707, %v1707
        %v1711 = vpack.c.bf16 %v1708, %v1708
        %v1712 = vld [vmem:[#allocation10] sm:$0xf]
        %v1713 = vld [vmem:[#allocation10 + $0x4] sm:$0xf]
        %v1714 = vld [vmem:[#allocation10 + $0x8] sm:$0xf]
        %v1715 = vld [vmem:[#allocation10 + $0xc] sm:$0xf]
        %v1716 = vld [vmem:[#allocation10 + $0x10] sm:$0xf]
        %v1717 = vld [vmem:[#allocation10 + $0x14] sm:$0xf]
        %v1718 = vld [vmem:[#allocation10 + $0x18] sm:$0xf]
        %v1719 = vld [vmem:[#allocation10 + $0x1c] sm:$0xf]
        %v1720 = vld [vmem:[#allocation10 + $0x20] sm:$0xf]
        %v1721 = vld [vmem:[#allocation10 + $0x24] sm:$0xf]
        %v1722 = vld [vmem:[#allocation10 + $0x28] sm:$0xf]
        %v1723 = vld [vmem:[#allocation10 + $0x2c] sm:$0xf]
        %v1724 = vld [vmem:[#allocation10 + $0x30] sm:$0xf]
        %v1725 = vld [vmem:[#allocation10 + $0x34] sm:$0xf]
        %v1726 = vld [vmem:[#allocation10 + $0x38] sm:$0xf]
        %v1727 = vld [vmem:[#allocation10 + $0x3c] sm:$0xf]
        %v1728 = vld [vmem:[#allocation10 + $0x40] sm:$0xf]
        %v1729 = vld [vmem:[#allocation10 + $0x44] sm:$0xf]
        %v1730 = vld [vmem:[#allocation10 + $0x48] sm:$0xf]
        %v1731 = vld [vmem:[#allocation10 + $0x4c] sm:$0xf]
        %v1732 = vld [vmem:[#allocation10 + $0x50] sm:$0xf]
        %v1733 = vld [vmem:[#allocation10 + $0x54] sm:$0xf]
        %v1734 = vld [vmem:[#allocation10 + $0x58] sm:$0xf]
        %v1735 = vld [vmem:[#allocation10 + $0x5c] sm:$0xf]
        %v1736 = vld [vmem:[#allocation10 + $0x60] sm:$0xf]
        %v1737 = vld [vmem:[#allocation10 + $0x64] sm:$0xf]
        %v1738 = vld [vmem:[#allocation10 + $0x68] sm:$0xf]
        %v1739 = vld [vmem:[#allocation10 + $0x6c] sm:$0xf]
        %v1740 = vld [vmem:[#allocation10 + $0x70] sm:$0xf]
        %v1741 = vld [vmem:[#allocation10 + $0x74] sm:$0xf]
        %v1742 = vld [vmem:[#allocation10 + $0x78] sm:$0xf]
        %v1743 = vld [vmem:[#allocation10 + $0x7c] sm:$0xf]
        %v1744 = vld [vmem:[#allocation10 + $0x80] sm:$0xf]
        %v1745 = vld [vmem:[#allocation10 + $0x84] sm:$0xf]
        %v1746 = vld [vmem:[#allocation10 + $0x88] sm:$0xf]
        %v1747 = vld [vmem:[#allocation10 + $0x8c] sm:$0xf]
        %v1748 = vld [vmem:[#allocation10 + $0x90] sm:$0xf]
        %v1749 = vld [vmem:[#allocation10 + $0x94] sm:$0xf]
        %v1750 = vld [vmem:[#allocation10 + $0x98] sm:$0xf]
        %v1751 = vld [vmem:[#allocation10 + $0x9c] sm:$0xf]
        %v1752 = vld [vmem:[#allocation10 + $0xa0] sm:$0xf]
        %v1753 = vld [vmem:[#allocation10 + $0xa4] sm:$0xf]
        %v1754 = vld [vmem:[#allocation10 + $0xa8] sm:$0xf]
        %v1755 = vld [vmem:[#allocation10 + $0xac] sm:$0xf]
        %v1756 = vld [vmem:[#allocation10 + $0xb0] sm:$0xf]
        %v1757 = vld [vmem:[#allocation10 + $0xb4] sm:$0xf]
        %v1758 = vld [vmem:[#allocation10 + $0xb8] sm:$0xf]
        %v1759 = vld [vmem:[#allocation10 + $0xbc] sm:$0xf]
        %v1760 = vld [vmem:[%s8] sm:$0x1]
        %v1762 = vlaneseq
        %v1763 = vshrl.u32 %v1762, 7
        %v1764 = vsub.s32 0, %v1763
        %v1765 = vrot.slane %v1760, %v1764
        %v1815 = vunpack.c.l.b16 %v1712
        %v1816 = vunpack.c.l.b16 %v1713
        %v1817 = vunpack.c.l.b16 %v1714
        %v1818 = vunpack.c.l.b16 %v1715
        %v1819 = vunpack.c.l.b16 %v1716
        %v1820 = vunpack.c.l.b16 %v1717
        %v1821 = vunpack.c.l.b16 %v1718
        %v1822 = vunpack.c.l.b16 %v1719
        %v1823 = vunpack.c.l.b16 %v1720
        %v1824 = vunpack.c.l.b16 %v1721
        %v1825 = vunpack.c.l.b16 %v1722
        %v1826 = vunpack.c.l.b16 %v1723
        %v1827 = vunpack.c.l.b16 %v1724
        %v1828 = vunpack.c.l.b16 %v1725
        %v1829 = vunpack.c.l.b16 %v1726
        %v1830 = vunpack.c.l.b16 %v1727
        %v1831 = vunpack.c.l.b16 %v1728
        %v1832 = vunpack.c.l.b16 %v1729
        %v1833 = vunpack.c.l.b16 %v1730
        %v1834 = vunpack.c.l.b16 %v1731
        %v1835 = vunpack.c.l.b16 %v1732
        %v1836 = vunpack.c.l.b16 %v1733
        %v1837 = vunpack.c.l.b16 %v1734
        %v1838 = vunpack.c.l.b16 %v1735
        %v1839 = vunpack.c.l.b16 %v1736
        %v1840 = vunpack.c.l.b16 %v1737
        %v1841 = vunpack.c.l.b16 %v1738
        %v1842 = vunpack.c.l.b16 %v1739
        %v1843 = vunpack.c.l.b16 %v1740
        %v1844 = vunpack.c.l.b16 %v1741
        %v1845 = vunpack.c.l.b16 %v1742
        %v1846 = vunpack.c.l.b16 %v1743
        %v1847 = vunpack.c.l.b16 %v1744
        %v1848 = vunpack.c.l.b16 %v1745
        %v1849 = vunpack.c.l.b16 %v1746
        %v1850 = vunpack.c.l.b16 %v1747
        %v1851 = vunpack.c.l.b16 %v1748
        %v1852 = vunpack.c.l.b16 %v1749
        %v1853 = vunpack.c.l.b16 %v1750
        %v1854 = vunpack.c.l.b16 %v1751
        %v1855 = vunpack.c.l.b16 %v1752
        %v1856 = vunpack.c.l.b16 %v1753
        %v1857 = vunpack.c.l.b16 %v1754
        %v1858 = vunpack.c.l.b16 %v1755
        %v1859 = vunpack.c.l.b16 %v1756
        %v1860 = vunpack.c.l.b16 %v1757
        %v1861 = vunpack.c.l.b16 %v1758
        %v1862 = vunpack.c.l.b16 %v1759
        %v1863 = vpack.c.b16 %v1816, %v1815
        %v1864 = vpack.c.b16 %v1818, %v1817
        %v1865 = vpack.c.b16 %v1820, %v1819
        %v1866 = vpack.c.b16 %v1822, %v1821
        %v1867 = vpack.c.b16 %v1824, %v1823
        %v1868 = vpack.c.b16 %v1826, %v1825
        %v1869 = vpack.c.b16 %v1828, %v1827
        %v1870 = vpack.c.b16 %v1830, %v1829
        %v1871 = vpack.c.b16 %v1832, %v1831
        %v1872 = vpack.c.b16 %v1834, %v1833
        %v1873 = vpack.c.b16 %v1836, %v1835
        %v1874 = vpack.c.b16 %v1838, %v1837
        %v1875 = vpack.c.b16 %v1840, %v1839
        %v1876 = vpack.c.b16 %v1842, %v1841
        %v1877 = vpack.c.b16 %v1844, %v1843
        %v1878 = vpack.c.b16 %v1846, %v1845
        %v1879 = vpack.c.b16 %v1848, %v1847
        %v1880 = vpack.c.b16 %v1850, %v1849
        %v1881 = vpack.c.b16 %v1852, %v1851
        %v1882 = vpack.c.b16 %v1854, %v1853
        %v1883 = vpack.c.b16 %v1856, %v1855
        %v1884 = vpack.c.b16 %v1858, %v1857
        %v1885 = vpack.c.b16 %v1860, %v1859
        %v1886 = vpack.c.b16 %v1862, %v1861
        %1911 = vmatprep.subr.bf16.mxu0 0
        %1912 = vmatpush1.bf16.msra.mxu0 %v1863
        %1913 = vmatprep.subr.bf16.mxu0 0
        %1914 = vmatpush1.bf16.msra.mxu0 %v1864
        %1915 = vmatprep.subr.bf16.mxu0 0
        %1916 = vmatpush1.bf16.msra.mxu0 %v1865
        %1917 = vmatprep.subr.bf16.mxu0 0
        %1918 = vmatpush1.bf16.msra.mxu0 %v1866
        %1919 = vmatprep.subr.bf16.mxu0 0
        %1920 = vmatpush1.bf16.msra.mxu0 %v1867
        %1921 = vmatprep.subr.bf16.mxu0 0
        %1922 = vmatpush1.bf16.msra.mxu0 %v1868
        %1923 = vmatprep.subr.bf16.mxu0 0
        %1924 = vmatpush1.bf16.msra.mxu0 %v1869
        %1925 = vmatprep.subr.bf16.mxu0 0
        %1926 = vmatpush1.bf16.msra.mxu0 %v1870
        %1927 = vmatprep.subr.bf16.mxu0 0
        %1928 = vmatpush1.bf16.msra.mxu0 %v1871
        %1929 = vmatprep.subr.bf16.mxu0 0
        %1930 = vmatpush1.bf16.msra.mxu0 %v1872
        %1931 = vmatprep.subr.bf16.mxu0 0
        %1932 = vmatpush1.bf16.msra.mxu0 %v1873
        %1933 = vmatprep.subr.bf16.mxu0 0
        %1934 = vmatpush1.bf16.msra.mxu0 %v1874
        %1935 = vmatprep.subr.bf16.mxu0 0
        %1936 = vmatpush1.bf16.msra.mxu0 %v1875
        %1937 = vmatprep.subr.bf16.mxu0 0
        %1938 = vmatpush1.bf16.msra.mxu0 %v1876
        %1939 = vmatprep.subr.bf16.mxu0 0
        %1940 = vmatpush1.bf16.msra.mxu0 %v1877
        %1941 = vmatprep.subr.bf16.mxu0 0
        %1942 = vmatpush1.bf16.msra.mxu0 %v1878
        %1943 = vmatprep.mubr.bf16.mxu0 %v1710
        %1944 = vmatmul.mubr.bf16.gmra.mrb[0].mxu0 %v1709
        %v1945 = vpop.f32.mrb[0].mxu0
        %v1946 = vadd.f32 %v1765, %v1945
        %v1947 = vpop.f32.mrb[0].mxu0
        %v1948 = vpop.f32.mrb[0].mxu0
        %v1949 = vpop.f32.mrb[0].mxu0
        %1950 = vdwg.mxu0
        %1951 = vmatprep.subr.bf16.mxu0 0
        %1952 = vmatpush1.bf16.msra.mxu0 %v1879
        %1953 = vmatprep.subr.bf16.mxu0 0
        %1954 = vmatpush1.bf16.msra.mxu0 %v1880
        %1955 = vmatprep.subr.bf16.mxu0 0
        %1956 = vmatpush1.bf16.msra.mxu0 %v1881
        %1957 = vmatprep.subr.bf16.mxu0 0
        %1958 = vmatpush1.bf16.msra.mxu0 %v1882
        %1959 = vmatprep.subr.bf16.mxu0 0
        %1960 = vmatpush1.bf16.msra.mxu0 %v1883
        %1961 = vmatprep.subr.bf16.mxu0 0
        %1962 = vmatpush1.bf16.msra.mxu0 %v1884
        %1963 = vmatprep.subr.bf16.mxu0 0
        %1964 = vmatpush1.bf16.msra.mxu0 %v1885
        %1965 = vmatprep.subr.bf16.mxu0 0
        %1966 = vmatpush1.bf16.msra.mxu0 %v1886
        %1967 = vmatprep.subr.bf16.mxu0 0
        %1968 = vmatpush1.bf16.msra.mxu0 0
        %1969 = vmatprep.subr.bf16.mxu0 0
        %1970 = vmatpush1.bf16.msra.mxu0 0
        %1971 = vmatprep.subr.bf16.mxu0 0
        %1972 = vmatpush1.bf16.msra.mxu0 0
        %1973 = vmatprep.subr.bf16.mxu0 0
        %1974 = vmatpush1.bf16.msra.mxu0 0
        %1975 = vmatprep.subr.bf16.mxu0 0
        %1976 = vmatpush1.bf16.msra.mxu0 0
        %1977 = vmatprep.subr.bf16.mxu0 0
        %1978 = vmatpush1.bf16.msra.mxu0 0
        %1979 = vmatprep.subr.bf16.mxu0 0
        %1980 = vmatpush1.bf16.msra.mxu0 0
        %1981 = vmatprep.subr.bf16.mxu0 0
        %1982 = vmatpush1.bf16.msra.mxu0 0
        %1983 = vmatprep.mubr.bf16.mxu0 0
        %1984 = vmatmul.mubr.bf16.gmra.mrb[0].mxu0 %v1711
        %v1985 = vpop.f32.mrb[0].mxu0
        %v1986 = vadd.f32 %v1946, %v1985
        %v1987 = vpop.f32.mrb[0].mxu0
        %v1988 = vpop.f32.mrb[0].mxu0
        %v1989 = vpop.f32.mrb[0].mxu0
        %1990 = vdwg.mxu0
        %v1991 = vsub.f32 0.0, %v1986
        %v1992 = vmul.f32 %v1991, 1.442695
        %v1993 = vpow.pop %v1992
        %v1994 = vadd.f32 %v1993, 1.0
        %v1995 = vrcp.pop %v1994
        %v1996 = vmul.f32 1.0, %v1995
        %v1997 = vld [vmem:[%s9] sm:$0x1]
        %v1999 = vlaneseq
        %v2000 = vshrl.u32 %v1999, 7
        %v2001 = vsub.s32 0, %v2000
        %v2002 = vrot.slane %v1997, %v2001
        %v2004 = vmul.f32 %v2002, %v1996
        %v2005 = vsub.f32 1.0, %v1997
        %v2007 = vlaneseq
        %v2008 = vshrl.u32 %v2007, 7
        %v2009 = vsub.s32 0, %v2008
        %v2010 = vrot.slane %v2005, %v2009
        %v2012 = vmul.f32 %v2010, %v1986
        %v2013 = vadd.f32 %v2004, %v2012
        %2014 = vst [vmem:[%s533] sm:$0xff] %v2013
        %v2015 = vld [vmem:[#allocation11] sm:$0xff]
        %v2016 = vld [vmem:[#allocation11 + $0x8] sm:$0xff]
        %v2017 = vld [vmem:[#allocation11 + $0x10] sm:$0xff]
        %v2018 = vld [vmem:[#allocation11 + $0x18] sm:$0xff]
        %v2019 = vld [vmem:[#allocation11 + $0x20] sm:$0xff]
        %v2020 = vld [vmem:[#allocation11 + $0x28] sm:$0xff]
        %v2021 = vld [vmem:[#allocation11 + $0x30] sm:$0xff]
        %v2022 = vld [vmem:[#allocation11 + $0x38] sm:$0xff]
        %v2023 = vld [vmem:[#allocation11 + $0x40] sm:$0xff]
        %v2024 = vld [vmem:[#allocation11 + $0x48] sm:$0xff]
        %v2025 = vld [vmem:[#allocation11 + $0x50] sm:$0xff]
        %v2026 = vld [vmem:[#allocation11 + $0x58] sm:$0xff]
        %v2027 = vld [vmem:[#allocation11 + $0x60] sm:$0xff]
        %v2028 = vld [vmem:[#allocation11 + $0x68] sm:$0xff]
        %v2029 = vld [vmem:[#allocation11 + $0x70] sm:$0xff]
        %v2030 = vld [vmem:[#allocation11 + $0x78] sm:$0xff]
        %v2031 = vld [vmem:[#allocation11 + $0x80] sm:$0xff]
        %v2032 = vld [vmem:[#allocation11 + $0x88] sm:$0xff]
        %v2033 = vld [vmem:[#allocation11 + $0x90] sm:$0xff]
        %v2034 = vld [vmem:[#allocation11 + $0x98] sm:$0xff]
        %v2035 = vld [vmem:[#allocation11 + $0xa0] sm:$0xff]
        %v2036 = vld [vmem:[#allocation11 + $0xa8] sm:$0xff]
        %v2037 = vld [vmem:[#allocation11 + $0xb0] sm:$0xff]
        %v2038 = vld [vmem:[#allocation11 + $0xb8] sm:$0xff]
        %v2039 = vld [vmem:[#allocation11 + $0xc0] sm:$0xff]
        %v2040 = vld [vmem:[#allocation11 + $0xc8] sm:$0xff]
        %v2041 = vld [vmem:[#allocation11 + $0xd0] sm:$0xff]
        %v2042 = vld [vmem:[#allocation11 + $0xd8] sm:$0xff]
        %v2043 = vld [vmem:[#allocation11 + $0xe0] sm:$0xff]
        %v2044 = vld [vmem:[#allocation11 + $0xe8] sm:$0xff]
        %v2045 = vld [vmem:[#allocation11 + $0xf0] sm:$0xff]
        %v2046 = vld [vmem:[#allocation11 + $0xf8] sm:$0xff]
        %v2047 = vld [vmem:[#allocation11 + $0x100] sm:$0xff]
        %v2048 = vld [vmem:[#allocation11 + $0x108] sm:$0xff]
        %v2049 = vld [vmem:[#allocation11 + $0x110] sm:$0xff]
        %v2050 = vld [vmem:[#allocation11 + $0x118] sm:$0xff]
        %v2051 = vld [vmem:[#allocation11 + $0x120] sm:$0xff]
        %v2052 = vld [vmem:[#allocation11 + $0x128] sm:$0xff]
        %v2053 = vld [vmem:[#allocation11 + $0x130] sm:$0xff]
        %v2054 = vld [vmem:[#allocation11 + $0x138] sm:$0xff]
        %v2055 = vld [vmem:[#allocation11 + $0x140] sm:$0xff]
        %v2056 = vld [vmem:[#allocation11 + $0x148] sm:$0xff]
        %v2057 = vld [vmem:[#allocation11 + $0x150] sm:$0xff]
        %v2058 = vld [vmem:[#allocation11 + $0x158] sm:$0xff]
        %v2059 = vld [vmem:[#allocation11 + $0x160] sm:$0xff]
        %v2060 = vld [vmem:[#allocation11 + $0x168] sm:$0xff]
        %v2061 = vld [vmem:[#allocation11 + $0x170] sm:$0xff]
        %v2062 = vld [vmem:[#allocation11 + $0x178] sm:$0xff]
        %v2063 = vld [vmem:[#allocation11 + $0x180] sm:$0xff]
        %v2064 = vld [vmem:[#allocation11 + $0x188] sm:$0xff]
        %v2065 = vld [vmem:[#allocation11 + $0x190] sm:$0xff]
        %v2066 = vld [vmem:[#allocation11 + $0x198] sm:$0xff]
        %v2067 = vld [vmem:[#allocation11 + $0x1a0] sm:$0xff]
        %v2068 = vld [vmem:[#allocation11 + $0x1a8] sm:$0xff]
        %v2069 = vld [vmem:[#allocation11 + $0x1b0] sm:$0xff]
        %v2070 = vld [vmem:[#allocation11 + $0x1b8] sm:$0xff]
        %v2071 = vld [vmem:[#allocation11 + $0x1c0] sm:$0xff]
        %v2072 = vld [vmem:[#allocation11 + $0x1c8] sm:$0xff]
        %v2073 = vld [vmem:[#allocation11 + $0x1d0] sm:$0xff]
        %v2074 = vld [vmem:[#allocation11 + $0x1d8] sm:$0xff]
        %v2075 = vld [vmem:[#allocation11 + $0x1e0] sm:$0xff]
        %v2076 = vld [vmem:[#allocation11 + $0x1e8] sm:$0xff]
        %v2077 = vld [vmem:[#allocation11 + $0x1f0] sm:$0xff]
        %v2078 = vld [vmem:[#allocation11 + $0x1f8] sm:$0xff]
        %v2079 = vld [vmem:[#allocation11 + $0x200] sm:$0xff]
        %v2080 = vld [vmem:[#allocation11 + $0x208] sm:$0xff]
        %v2081 = vld [vmem:[#allocation11 + $0x210] sm:$0xff]
        %v2082 = vld [vmem:[#allocation11 + $0x218] sm:$0xff]
        %v2083 = vld [vmem:[#allocation11 + $0x220] sm:$0xff]
        %v2084 = vld [vmem:[#allocation11 + $0x228] sm:$0xff]
        %v2085 = vld [vmem:[#allocation11 + $0x230] sm:$0xff]
        %v2086 = vld [vmem:[#allocation11 + $0x238] sm:$0xff]
        %v2087 = vld [vmem:[#allocation11 + $0x240] sm:$0xff]
        %v2088 = vld [vmem:[#allocation11 + $0x248] sm:$0xff]
        %v2089 = vld [vmem:[#allocation11 + $0x250] sm:$0xff]
        %v2090 = vld [vmem:[#allocation11 + $0x258] sm:$0xff]
        %v2091 = vld [vmem:[#allocation11 + $0x260] sm:$0xff]
        %v2092 = vld [vmem:[#allocation11 + $0x268] sm:$0xff]
        %v2093 = vld [vmem:[#allocation11 + $0x270] sm:$0xff]
        %v2094 = vld [vmem:[#allocation11 + $0x278] sm:$0xff]
        %v2095 = vld [vmem:[#allocation11 + $0x280] sm:$0xff]
        %v2096 = vld [vmem:[#allocation11 + $0x288] sm:$0xff]
        %v2097 = vld [vmem:[#allocation11 + $0x290] sm:$0xff]
        %v2098 = vld [vmem:[#allocation11 + $0x298] sm:$0xff]
        %v2099 = vld [vmem:[#allocation11 + $0x2a0] sm:$0xff]
        %v2100 = vld [vmem:[#allocation11 + $0x2a8] sm:$0xff]
        %v2101 = vld [vmem:[#allocation11 + $0x2b0] sm:$0xff]
        %v2102 = vld [vmem:[#allocation11 + $0x2b8] sm:$0xff]
        %v2103 = vld [vmem:[#allocation11 + $0x2c0] sm:$0xff]
        %v2104 = vld [vmem:[#allocation11 + $0x2c8] sm:$0xff]
        %v2105 = vld [vmem:[#allocation11 + $0x2d0] sm:$0xff]
        %v2106 = vld [vmem:[#allocation11 + $0x2d8] sm:$0xff]
        %v2107 = vld [vmem:[#allocation11 + $0x2e0] sm:$0xff]
        %v2108 = vld [vmem:[#allocation11 + $0x2e8] sm:$0xff]
        %v2109 = vld [vmem:[#allocation11 + $0x2f0] sm:$0xff]
        %v2110 = vld [vmem:[#allocation11 + $0x2f8] sm:$0xff]
        %v2111 = vld [vmem:[#allocation11 + $0x300] sm:$0xff]
        %v2112 = vld [vmem:[#allocation11 + $0x308] sm:$0xff]
        %v2113 = vld [vmem:[#allocation11 + $0x310] sm:$0xff]
        %v2114 = vld [vmem:[#allocation11 + $0x318] sm:$0xff]
        %v2115 = vld [vmem:[#allocation11 + $0x320] sm:$0xff]
        %v2116 = vld [vmem:[#allocation11 + $0x328] sm:$0xff]
        %v2117 = vld [vmem:[#allocation11 + $0x330] sm:$0xff]
        %v2118 = vld [vmem:[#allocation11 + $0x338] sm:$0xff]
        %v2119 = vld [vmem:[#allocation11 + $0x340] sm:$0xff]
        %v2120 = vld [vmem:[#allocation11 + $0x348] sm:$0xff]
        %v2121 = vld [vmem:[#allocation11 + $0x350] sm:$0xff]
        %v2122 = vld [vmem:[#allocation11 + $0x358] sm:$0xff]
        %v2123 = vld [vmem:[#allocation11 + $0x360] sm:$0xff]
        %v2124 = vld [vmem:[#allocation11 + $0x368] sm:$0xff]
        %v2125 = vld [vmem:[#allocation11 + $0x370] sm:$0xff]
        %v2126 = vld [vmem:[#allocation11 + $0x378] sm:$0xff]
        %v2127 = vld [vmem:[#allocation11 + $0x380] sm:$0xff]
        %v2128 = vld [vmem:[#allocation11 + $0x388] sm:$0xff]
        %v2129 = vld [vmem:[#allocation11 + $0x390] sm:$0xff]
        %v2130 = vld [vmem:[#allocation11 + $0x398] sm:$0xff]
        %v2131 = vld [vmem:[#allocation11 + $0x3a0] sm:$0xff]
        %v2132 = vld [vmem:[#allocation11 + $0x3a8] sm:$0xff]
        %v2133 = vld [vmem:[#allocation11 + $0x3b0] sm:$0xff]
        %v2134 = vld [vmem:[#allocation11 + $0x3b8] sm:$0xff]
        %v2135 = vld [vmem:[#allocation11 + $0x3c0] sm:$0xff]
        %v2136 = vld [vmem:[#allocation11 + $0x3c8] sm:$0xff]
        %v2137 = vld [vmem:[#allocation11 + $0x3d0] sm:$0xff]
        %v2138 = vld [vmem:[#allocation11 + $0x3d8] sm:$0xff]
        %v2139 = vld [vmem:[#allocation11 + $0x3e0] sm:$0xff]
        %v2140 = vld [vmem:[#allocation11 + $0x3e8] sm:$0xff]
        %v2141 = vld [vmem:[#allocation11 + $0x3f0] sm:$0xff]
        %v2142 = vld [vmem:[#allocation11 + $0x3f8] sm:$0xff]
        %v2143 = vld [vmem:[#allocation11 + $0x400] sm:$0xff]
        %v2144 = vld [vmem:[#allocation11 + $0x408] sm:$0xff]
        %v2145 = vld [vmem:[#allocation11 + $0x410] sm:$0xff]
        %v2146 = vld [vmem:[#allocation11 + $0x418] sm:$0xff]
        %v2147 = vld [vmem:[#allocation11 + $0x420] sm:$0xff]
        %v2148 = vld [vmem:[#allocation11 + $0x428] sm:$0xff]
        %v2149 = vld [vmem:[#allocation11 + $0x430] sm:$0xff]
        %v2150 = vld [vmem:[#allocation11 + $0x438] sm:$0xff]
        %v2151 = vld [vmem:[#allocation11 + $0x440] sm:$0xff]
        %v2152 = vld [vmem:[#allocation11 + $0x448] sm:$0xff]
        %v2153 = vld [vmem:[#allocation11 + $0x450] sm:$0xff]
        %v2154 = vld [vmem:[#allocation11 + $0x458] sm:$0xff]
        %v2155 = vld [vmem:[#allocation11 + $0x460] sm:$0xff]
        %v2156 = vld [vmem:[#allocation11 + $0x468] sm:$0xff]
        %v2157 = vld [vmem:[#allocation11 + $0x470] sm:$0xff]
        %v2158 = vld [vmem:[#allocation11 + $0x478] sm:$0xff]
        %v2159 = vld [vmem:[#allocation11 + $0x480] sm:$0xff]
        %v2160 = vld [vmem:[#allocation11 + $0x488] sm:$0xff]
        %v2161 = vld [vmem:[#allocation11 + $0x490] sm:$0xff]
        %v2162 = vld [vmem:[#allocation11 + $0x498] sm:$0xff]
        %v2163 = vld [vmem:[#allocation11 + $0x4a0] sm:$0xff]
        %v2164 = vld [vmem:[#allocation11 + $0x4a8] sm:$0xff]
        %v2165 = vld [vmem:[#allocation11 + $0x4b0] sm:$0xff]
        %v2166 = vld [vmem:[#allocation11 + $0x4b8] sm:$0xff]
        %v2167 = vld [vmem:[#allocation11 + $0x4c0] sm:$0xff]
        %v2168 = vld [vmem:[#allocation11 + $0x4c8] sm:$0xff]
        %v2169 = vld [vmem:[#allocation11 + $0x4d0] sm:$0xff]
        %v2170 = vld [vmem:[#allocation11 + $0x4d8] sm:$0xff]
        %v2171 = vld [vmem:[#allocation11 + $0x4e0] sm:$0xff]
        %v2172 = vld [vmem:[#allocation11 + $0x4e8] sm:$0xff]
        %v2173 = vld [vmem:[#allocation11 + $0x4f0] sm:$0xff]
        %v2174 = vld [vmem:[#allocation11 + $0x4f8] sm:$0xff]
        %v2175 = vld [vmem:[#allocation11 + $0x500] sm:$0xff]
        %v2176 = vld [vmem:[#allocation11 + $0x508] sm:$0xff]
        %v2177 = vld [vmem:[#allocation11 + $0x510] sm:$0xff]
        %v2178 = vld [vmem:[#allocation11 + $0x518] sm:$0xff]
        %v2179 = vld [vmem:[#allocation11 + $0x520] sm:$0xff]
        %v2180 = vld [vmem:[#allocation11 + $0x528] sm:$0xff]
        %v2181 = vld [vmem:[#allocation11 + $0x530] sm:$0xff]
        %v2182 = vld [vmem:[#allocation11 + $0x538] sm:$0xff]
        %v2183 = vld [vmem:[#allocation11 + $0x540] sm:$0xff]
        %v2184 = vld [vmem:[#allocation11 + $0x548] sm:$0xff]
        %v2185 = vld [vmem:[#allocation11 + $0x550] sm:$0xff]
        %v2186 = vld [vmem:[#allocation11 + $0x558] sm:$0xff]
        %v2187 = vld [vmem:[#allocation11 + $0x560] sm:$0xff]
        %v2188 = vld [vmem:[#allocation11 + $0x568] sm:$0xff]
        %v2189 = vld [vmem:[#allocation11 + $0x570] sm:$0xff]
        %v2190 = vld [vmem:[#allocation11 + $0x578] sm:$0xff]
        %v2191 = vld [vmem:[#allocation11 + $0x580] sm:$0xff]
        %v2192 = vld [vmem:[#allocation11 + $0x588] sm:$0xff]
        %v2193 = vld [vmem:[#allocation11 + $0x590] sm:$0xff]
        %v2194 = vld [vmem:[#allocation11 + $0x598] sm:$0xff]
        %v2195 = vld [vmem:[#allocation11 + $0x5a0] sm:$0xff]
        %v2196 = vld [vmem:[#allocation11 + $0x5a8] sm:$0xff]
        %v2197 = vld [vmem:[#allocation11 + $0x5b0] sm:$0xff]
        %v2198 = vld [vmem:[#allocation11 + $0x5b8] sm:$0xff]
        %v2199 = vld [vmem:[#allocation11 + $0x5c0] sm:$0xff]
        %v2200 = vld [vmem:[#allocation11 + $0x5c8] sm:$0xff]
        %v2201 = vld [vmem:[#allocation11 + $0x5d0] sm:$0xff]
        %v2202 = vld [vmem:[#allocation11 + $0x5d8] sm:$0xff]
        %v2203 = vld [vmem:[#allocation11 + $0x5e0] sm:$0xff]
        %v2204 = vld [vmem:[#allocation11 + $0x5e8] sm:$0xff]
        %v2205 = vld [vmem:[#allocation11 + $0x5f0] sm:$0xff]
        %v2206 = vld [vmem:[#allocation11 + $0x5f8] sm:$0xff]
        %v2207 = vld [vmem:[#allocation11 + $0x600] sm:$0xff]
        %v2208 = vld [vmem:[#allocation11 + $0x608] sm:$0xff]
        %v2209 = vld [vmem:[#allocation11 + $0x610] sm:$0xff]
        %v2210 = vld [vmem:[#allocation11 + $0x618] sm:$0xff]
        %v2211 = vld [vmem:[#allocation11 + $0x620] sm:$0xff]
        %v2212 = vld [vmem:[#allocation11 + $0x628] sm:$0xff]
        %v2213 = vld [vmem:[#allocation11 + $0x630] sm:$0xff]
        %v2214 = vld [vmem:[#allocation11 + $0x638] sm:$0xff]
        %v2215 = vld [vmem:[#allocation11 + $0x640] sm:$0xff]
        %v2216 = vld [vmem:[#allocation11 + $0x648] sm:$0xff]
        %v2217 = vld [vmem:[#allocation11 + $0x650] sm:$0xff]
        %v2218 = vld [vmem:[#allocation11 + $0x658] sm:$0xff]
        %v2219 = vld [vmem:[#allocation11 + $0x660] sm:$0xff]
        %v2220 = vld [vmem:[#allocation11 + $0x668] sm:$0xff]
        %v2221 = vld [vmem:[#allocation11 + $0x670] sm:$0xff]
        %v2222 = vld [vmem:[#allocation11 + $0x678] sm:$0xff]
        %v2223 = vld [vmem:[#allocation11 + $0x680] sm:$0xff]
        %v2224 = vld [vmem:[#allocation11 + $0x688] sm:$0xff]
        %v2225 = vld [vmem:[#allocation11 + $0x690] sm:$0xff]
        %v2226 = vld [vmem:[#allocation11 + $0x698] sm:$0xff]
        %v2227 = vld [vmem:[#allocation11 + $0x6a0] sm:$0xff]
        %v2228 = vld [vmem:[#allocation11 + $0x6a8] sm:$0xff]
        %v2229 = vld [vmem:[#allocation11 + $0x6b0] sm:$0xff]
        %v2230 = vld [vmem:[#allocation11 + $0x6b8] sm:$0xff]
        %v2231 = vld [vmem:[#allocation11 + $0x6c0] sm:$0xff]
        %v2232 = vld [vmem:[#allocation11 + $0x6c8] sm:$0xff]
        %v2233 = vld [vmem:[#allocation11 + $0x6d0] sm:$0xff]
        %v2234 = vld [vmem:[#allocation11 + $0x6d8] sm:$0xff]
        %v2235 = vld [vmem:[#allocation11 + $0x6e0] sm:$0xff]
        %v2236 = vld [vmem:[#allocation11 + $0x6e8] sm:$0xff]
        %v2237 = vld [vmem:[#allocation11 + $0x6f0] sm:$0xff]
        %v2238 = vld [vmem:[#allocation11 + $0x6f8] sm:$0xff]
        %v2239 = vld [vmem:[#allocation11 + $0x700] sm:$0xff]
        %v2240 = vld [vmem:[#allocation11 + $0x708] sm:$0xff]
        %v2241 = vld [vmem:[#allocation11 + $0x710] sm:$0xff]
        %v2242 = vld [vmem:[#allocation11 + $0x718] sm:$0xff]
        %v2243 = vld [vmem:[#allocation11 + $0x720] sm:$0xff]
        %v2244 = vld [vmem:[#allocation11 + $0x728] sm:$0xff]
        %v2245 = vld [vmem:[#allocation11 + $0x730] sm:$0xff]
        %v2246 = vld [vmem:[#allocation11 + $0x738] sm:$0xff]
        %v2247 = vld [vmem:[#allocation11 + $0x740] sm:$0xff]
        %v2248 = vld [vmem:[#allocation11 + $0x748] sm:$0xff]
        %v2249 = vld [vmem:[#allocation11 + $0x750] sm:$0xff]
        %v2250 = vld [vmem:[#allocation11 + $0x758] sm:$0xff]
        %v2251 = vld [vmem:[#allocation11 + $0x760] sm:$0xff]
        %v2252 = vld [vmem:[#allocation11 + $0x768] sm:$0xff]
        %v2253 = vld [vmem:[#allocation11 + $0x770] sm:$0xff]
        %v2254 = vld [vmem:[#allocation11 + $0x778] sm:$0xff]
        %v2255 = vld [vmem:[#allocation11 + $0x780] sm:$0xff]
        %v2256 = vld [vmem:[#allocation11 + $0x788] sm:$0xff]
        %v2257 = vld [vmem:[#allocation11 + $0x790] sm:$0xff]
        %v2258 = vld [vmem:[#allocation11 + $0x798] sm:$0xff]
        %v2259 = vld [vmem:[#allocation11 + $0x7a0] sm:$0xff]
        %v2260 = vld [vmem:[#allocation11 + $0x7a8] sm:$0xff]
        %v2261 = vld [vmem:[#allocation11 + $0x7b0] sm:$0xff]
        %v2262 = vld [vmem:[#allocation11 + $0x7b8] sm:$0xff]
        %v2263 = vld [vmem:[#allocation11 + $0x7c0] sm:$0xff]
        %v2264 = vld [vmem:[#allocation11 + $0x7c8] sm:$0xff]
        %v2265 = vld [vmem:[#allocation11 + $0x7d0] sm:$0xff]
        %v2266 = vld [vmem:[#allocation11 + $0x7d8] sm:$0xff]
        %v2267 = vld [vmem:[#allocation11 + $0x7e0] sm:$0xff]
        %v2268 = vld [vmem:[#allocation11 + $0x7e8] sm:$0xff]
        %v2269 = vld [vmem:[#allocation11 + $0x7f0] sm:$0xff]
        %v2270 = vld [vmem:[#allocation11 + $0x7f8] sm:$0xff]
        %v2271 = vld [vmem:[%s11] sm:$0xff]
        %v2272 = vld [vmem:[%s11 + $0x8] sm:$0xff]
        %v2273 = vld [vmem:[%s11 + $0x10] sm:$0xff]
        %v2274 = vld [vmem:[%s11 + $0x18] sm:$0xff]
        %v2279 = vlaneseq
        %v2280 = vshrl.u32 %v2279, 7
        %v2281 = vsub.s32 0, %v2280
        %v2282 = vrot.slane %v2271, %v2281
        %v2283 = vlaneseq
        %v2284 = vshrl.u32 %v2283, 7
        %v2285 = vsub.s32 1, %v2284
        %v2286 = vrot.slane %v2271, %v2285
        %v2287 = vlaneseq
        %v2288 = vshrl.u32 %v2287, 7
        %v2289 = vsub.s32 2, %v2288
        %v2290 = vrot.slane %v2271, %v2289
        %v2291 = vlaneseq
        %v2292 = vshrl.u32 %v2291, 7
        %v2293 = vsub.s32 3, %v2292
        %v2294 = vrot.slane %v2271, %v2293
        %v2295 = vlaneseq
        %v2296 = vshrl.u32 %v2295, 7
        %v2297 = vsub.s32 4, %v2296
        %v2298 = vrot.slane %v2271, %v2297
        %v2299 = vlaneseq
        %v2300 = vshrl.u32 %v2299, 7
        %v2301 = vsub.s32 5, %v2300
        %v2302 = vrot.slane %v2271, %v2301
        %v2303 = vlaneseq
        %v2304 = vshrl.u32 %v2303, 7
        %v2305 = vsub.s32 6, %v2304
        %v2306 = vrot.slane %v2271, %v2305
        %v2307 = vlaneseq
        %v2308 = vshrl.u32 %v2307, 7
        %v2309 = vsub.s32 7, %v2308
        %v2310 = vrot.slane %v2271, %v2309
        %v2311 = vlaneseq
        %v2312 = vshrl.u32 %v2311, 7
        %v2313 = vsub.s32 0, %v2312
        %v2314 = vrot.slane %v2272, %v2313
        %v2315 = vlaneseq
        %v2316 = vshrl.u32 %v2315, 7
        %v2317 = vsub.s32 1, %v2316
        %v2318 = vrot.slane %v2272, %v2317
        %v2319 = vlaneseq
        %v2320 = vshrl.u32 %v2319, 7
        %v2321 = vsub.s32 2, %v2320
        %v2322 = vrot.slane %v2272, %v2321
        %v2323 = vlaneseq
        %v2324 = vshrl.u32 %v2323, 7
        %v2325 = vsub.s32 3, %v2324
        %v2326 = vrot.slane %v2272, %v2325
        %v2327 = vlaneseq
        %v2328 = vshrl.u32 %v2327, 7
        %v2329 = vsub.s32 4, %v2328
        %v2330 = vrot.slane %v2272, %v2329
        %v2331 = vlaneseq
        %v2332 = vshrl.u32 %v2331, 7
        %v2333 = vsub.s32 5, %v2332
        %v2334 = vrot.slane %v2272, %v2333
        %v2335 = vlaneseq
        %v2336 = vshrl.u32 %v2335, 7
        %v2337 = vsub.s32 6, %v2336
        %v2338 = vrot.slane %v2272, %v2337
        %v2339 = vlaneseq
        %v2340 = vshrl.u32 %v2339, 7
        %v2341 = vsub.s32 7, %v2340
        %v2342 = vrot.slane %v2272, %v2341
        %v2343 = vlaneseq
        %v2344 = vshrl.u32 %v2343, 7
        %v2345 = vsub.s32 0, %v2344
        %v2346 = vrot.slane %v2273, %v2345
        %v2347 = vlaneseq
        %v2348 = vshrl.u32 %v2347, 7
        %v2349 = vsub.s32 1, %v2348
        %v2350 = vrot.slane %v2273, %v2349
        %v2351 = vlaneseq
        %v2352 = vshrl.u32 %v2351, 7
        %v2353 = vsub.s32 2, %v2352
        %v2354 = vrot.slane %v2273, %v2353
        %v2355 = vlaneseq
        %v2356 = vshrl.u32 %v2355, 7
        %v2357 = vsub.s32 3, %v2356
        %v2358 = vrot.slane %v2273, %v2357
        %v2359 = vlaneseq
        %v2360 = vshrl.u32 %v2359, 7
        %v2361 = vsub.s32 4, %v2360
        %v2362 = vrot.slane %v2273, %v2361
        %v2363 = vlaneseq
        %v2364 = vshrl.u32 %v2363, 7
        %v2365 = vsub.s32 5, %v2364
        %v2366 = vrot.slane %v2273, %v2365
        %v2367 = vlaneseq
        %v2368 = vshrl.u32 %v2367, 7
        %v2369 = vsub.s32 6, %v2368
        %v2370 = vrot.slane %v2273, %v2369
        %v2371 = vlaneseq
        %v2372 = vshrl.u32 %v2371, 7
        %v2373 = vsub.s32 7, %v2372
        %v2374 = vrot.slane %v2273, %v2373
        %v2375 = vlaneseq
        %v2376 = vshrl.u32 %v2375, 7
        %v2377 = vsub.s32 0, %v2376
        %v2378 = vrot.slane %v2274, %v2377
        %v2379 = vlaneseq
        %v2380 = vshrl.u32 %v2379, 7
        %v2381 = vsub.s32 1, %v2380
        %v2382 = vrot.slane %v2274, %v2381
        %v2383 = vlaneseq
        %v2384 = vshrl.u32 %v2383, 7
        %v2385 = vsub.s32 2, %v2384
        %v2386 = vrot.slane %v2274, %v2385
        %v2387 = vlaneseq
        %v2388 = vshrl.u32 %v2387, 7
        %v2389 = vsub.s32 3, %v2388
        %v2390 = vrot.slane %v2274, %v2389
        %v2391 = vlaneseq
        %v2392 = vshrl.u32 %v2391, 7
        %v2393 = vsub.s32 4, %v2392
        %v2394 = vrot.slane %v2274, %v2393
        %v2395 = vlaneseq
        %v2396 = vshrl.u32 %v2395, 7
        %v2397 = vsub.s32 5, %v2396
        %v2398 = vrot.slane %v2274, %v2397
        %v2399 = vlaneseq
        %v2400 = vshrl.u32 %v2399, 7
        %v2401 = vsub.s32 6, %v2400
        %v2402 = vrot.slane %v2274, %v2401
        %v2403 = vlaneseq
        %v2404 = vshrl.u32 %v2403, 7
        %v2405 = vsub.s32 7, %v2404
        %v2406 = vrot.slane %v2274, %v2405
        %v2695 = vunpack.c.l.b16 %v2015
        %v2696 = vunpack.c.h.b16 %v2015
        %v2697 = vunpack.c.l.b16 %v2016
        %v2698 = vunpack.c.h.b16 %v2016
        %v2699 = vunpack.c.l.b16 %v2017
        %v2700 = vunpack.c.h.b16 %v2017
        %v2701 = vunpack.c.l.b16 %v2018
        %v2702 = vunpack.c.h.b16 %v2018
        %v2703 = vunpack.c.l.b16 %v2019
        %v2704 = vunpack.c.h.b16 %v2019
        %v2705 = vunpack.c.l.b16 %v2020
        %v2706 = vunpack.c.h.b16 %v2020
        %v2707 = vunpack.c.l.b16 %v2021
        %v2708 = vunpack.c.h.b16 %v2021
        %v2709 = vunpack.c.l.b16 %v2022
        %v2710 = vunpack.c.h.b16 %v2022
        %v2711 = vunpack.c.l.b16 %v2023
        %v2712 = vunpack.c.h.b16 %v2023
        %v2713 = vunpack.c.l.b16 %v2024
        %v2714 = vunpack.c.h.b16 %v2024
        %v2715 = vunpack.c.l.b16 %v2025
        %v2716 = vunpack.c.h.b16 %v2025
        %v2717 = vunpack.c.l.b16 %v2026
        %v2718 = vunpack.c.h.b16 %v2026
        %v2719 = vunpack.c.l.b16 %v2027
        %v2720 = vunpack.c.h.b16 %v2027
        %v2721 = vunpack.c.l.b16 %v2028
        %v2722 = vunpack.c.h.b16 %v2028
        %v2723 = vunpack.c.l.b16 %v2029
        %v2724 = vunpack.c.h.b16 %v2029
        %v2725 = vunpack.c.l.b16 %v2030
        %v2726 = vunpack.c.h.b16 %v2030
        %v2727 = vunpack.c.l.b16 %v2031
        %v2728 = vunpack.c.h.b16 %v2031
        %v2729 = vunpack.c.l.b16 %v2032
        %v2730 = vunpack.c.h.b16 %v2032
        %v2731 = vunpack.c.l.b16 %v2033
        %v2732 = vunpack.c.h.b16 %v2033
        %v2733 = vunpack.c.l.b16 %v2034
        %v2734 = vunpack.c.h.b16 %v2034
        %v2735 = vunpack.c.l.b16 %v2035
        %v2736 = vunpack.c.h.b16 %v2035
        %v2737 = vunpack.c.l.b16 %v2036
        %v2738 = vunpack.c.h.b16 %v2036
        %v2739 = vunpack.c.l.b16 %v2037
        %v2740 = vunpack.c.h.b16 %v2037
        %v2741 = vunpack.c.l.b16 %v2038
        %v2742 = vunpack.c.h.b16 %v2038
        %v2743 = vunpack.c.l.b16 %v2039
        %v2744 = vunpack.c.h.b16 %v2039
        %v2745 = vunpack.c.l.b16 %v2040
        %v2746 = vunpack.c.h.b16 %v2040
        %v2747 = vunpack.c.l.b16 %v2041
        %v2748 = vunpack.c.h.b16 %v2041
        %v2749 = vunpack.c.l.b16 %v2042
        %v2750 = vunpack.c.h.b16 %v2042
        %v2751 = vunpack.c.l.b16 %v2043
        %v2752 = vunpack.c.h.b16 %v2043
        %v2753 = vunpack.c.l.b16 %v2044
        %v2754 = vunpack.c.h.b16 %v2044
        %v2755 = vunpack.c.l.b16 %v2045
        %v2756 = vunpack.c.h.b16 %v2045
        %v2757 = vunpack.c.l.b16 %v2046
        %v2758 = vunpack.c.h.b16 %v2046
        %v2759 = vunpack.c.l.b16 %v2047
        %v2760 = vunpack.c.h.b16 %v2047
        %v2761 = vunpack.c.l.b16 %v2048
        %v2762 = vunpack.c.h.b16 %v2048
        %v2763 = vunpack.c.l.b16 %v2049
        %v2764 = vunpack.c.h.b16 %v2049
        %v2765 = vunpack.c.l.b16 %v2050
        %v2766 = vunpack.c.h.b16 %v2050
        %v2767 = vunpack.c.l.b16 %v2051
        %v2768 = vunpack.c.h.b16 %v2051
        %v2769 = vunpack.c.l.b16 %v2052
        %v2770 = vunpack.c.h.b16 %v2052
        %v2771 = vunpack.c.l.b16 %v2053
        %v2772 = vunpack.c.h.b16 %v2053
        %v2773 = vunpack.c.l.b16 %v2054
        %v2774 = vunpack.c.h.b16 %v2054
        %v2775 = vunpack.c.l.b16 %v2055
        %v2776 = vunpack.c.h.b16 %v2055
        %v2777 = vunpack.c.l.b16 %v2056
        %v2778 = vunpack.c.h.b16 %v2056
        %v2779 = vunpack.c.l.b16 %v2057
        %v2780 = vunpack.c.h.b16 %v2057
        %v2781 = vunpack.c.l.b16 %v2058
        %v2782 = vunpack.c.h.b16 %v2058
        %v2783 = vunpack.c.l.b16 %v2059
        %v2784 = vunpack.c.h.b16 %v2059
        %v2785 = vunpack.c.l.b16 %v2060
        %v2786 = vunpack.c.h.b16 %v2060
        %v2787 = vunpack.c.l.b16 %v2061
        %v2788 = vunpack.c.h.b16 %v2061
        %v2789 = vunpack.c.l.b16 %v2062
        %v2790 = vunpack.c.h.b16 %v2062
        %v2791 = vunpack.c.l.b16 %v2063
        %v2792 = vunpack.c.h.b16 %v2063
        %v2793 = vunpack.c.l.b16 %v2064
        %v2794 = vunpack.c.h.b16 %v2064
        %v2795 = vunpack.c.l.b16 %v2065
        %v2796 = vunpack.c.h.b16 %v2065
        %v2797 = vunpack.c.l.b16 %v2066
        %v2798 = vunpack.c.h.b16 %v2066
        %v2799 = vunpack.c.l.b16 %v2067
        %v2800 = vunpack.c.h.b16 %v2067
        %v2801 = vunpack.c.l.b16 %v2068
        %v2802 = vunpack.c.h.b16 %v2068
        %v2803 = vunpack.c.l.b16 %v2069
        %v2804 = vunpack.c.h.b16 %v2069
        %v2805 = vunpack.c.l.b16 %v2070
        %v2806 = vunpack.c.h.b16 %v2070
        %v2807 = vunpack.c.l.b16 %v2071
        %v2808 = vunpack.c.h.b16 %v2071
        %v2809 = vunpack.c.l.b16 %v2072
        %v2810 = vunpack.c.h.b16 %v2072
        %v2811 = vunpack.c.l.b16 %v2073
        %v2812 = vunpack.c.h.b16 %v2073
        %v2813 = vunpack.c.l.b16 %v2074
        %v2814 = vunpack.c.h.b16 %v2074
        %v2815 = vunpack.c.l.b16 %v2075
        %v2816 = vunpack.c.h.b16 %v2075
        %v2817 = vunpack.c.l.b16 %v2076
        %v2818 = vunpack.c.h.b16 %v2076
        %v2819 = vunpack.c.l.b16 %v2077
        %v2820 = vunpack.c.h.b16 %v2077
        %v2821 = vunpack.c.l.b16 %v2078
        %v2822 = vunpack.c.h.b16 %v2078
        %v2823 = vunpack.c.l.b16 %v2079
        %v2824 = vunpack.c.h.b16 %v2079
        %v2825 = vunpack.c.l.b16 %v2080
        %v2826 = vunpack.c.h.b16 %v2080
        %v2827 = vunpack.c.l.b16 %v2081
        %v2828 = vunpack.c.h.b16 %v2081
        %v2829 = vunpack.c.l.b16 %v2082
        %v2830 = vunpack.c.h.b16 %v2082
        %v2831 = vunpack.c.l.b16 %v2083
        %v2832 = vunpack.c.h.b16 %v2083
        %v2833 = vunpack.c.l.b16 %v2084
        %v2834 = vunpack.c.h.b16 %v2084
        %v2835 = vunpack.c.l.b16 %v2085
        %v2836 = vunpack.c.h.b16 %v2085
        %v2837 = vunpack.c.l.b16 %v2086
        %v2838 = vunpack.c.h.b16 %v2086
        %v2839 = vunpack.c.l.b16 %v2087
        %v2840 = vunpack.c.h.b16 %v2087
        %v2841 = vunpack.c.l.b16 %v2088
        %v2842 = vunpack.c.h.b16 %v2088
        %v2843 = vunpack.c.l.b16 %v2089
        %v2844 = vunpack.c.h.b16 %v2089
        %v2845 = vunpack.c.l.b16 %v2090
        %v2846 = vunpack.c.h.b16 %v2090
        %v2847 = vunpack.c.l.b16 %v2091
        %v2848 = vunpack.c.h.b16 %v2091
        %v2849 = vunpack.c.l.b16 %v2092
        %v2850 = vunpack.c.h.b16 %v2092
        %v2851 = vunpack.c.l.b16 %v2093
        %v2852 = vunpack.c.h.b16 %v2093
        %v2853 = vunpack.c.l.b16 %v2094
        %v2854 = vunpack.c.h.b16 %v2094
        %v2855 = vunpack.c.l.b16 %v2095
        %v2856 = vunpack.c.h.b16 %v2095
        %v2857 = vunpack.c.l.b16 %v2096
        %v2858 = vunpack.c.h.b16 %v2096
        %v2859 = vunpack.c.l.b16 %v2097
        %v2860 = vunpack.c.h.b16 %v2097
        %v2861 = vunpack.c.l.b16 %v2098
        %v2862 = vunpack.c.h.b16 %v2098
        %v2863 = vunpack.c.l.b16 %v2099
        %v2864 = vunpack.c.h.b16 %v2099
        %v2865 = vunpack.c.l.b16 %v2100
        %v2866 = vunpack.c.h.b16 %v2100
        %v2867 = vunpack.c.l.b16 %v2101
        %v2868 = vunpack.c.h.b16 %v2101
        %v2869 = vunpack.c.l.b16 %v2102
        %v2870 = vunpack.c.h.b16 %v2102
        %v2871 = vunpack.c.l.b16 %v2103
        %v2872 = vunpack.c.h.b16 %v2103
        %v2873 = vunpack.c.l.b16 %v2104
        %v2874 = vunpack.c.h.b16 %v2104
        %v2875 = vunpack.c.l.b16 %v2105
        %v2876 = vunpack.c.h.b16 %v2105
        %v2877 = vunpack.c.l.b16 %v2106
        %v2878 = vunpack.c.h.b16 %v2106
        %v2879 = vunpack.c.l.b16 %v2107
        %v2880 = vunpack.c.h.b16 %v2107
        %v2881 = vunpack.c.l.b16 %v2108
        %v2882 = vunpack.c.h.b16 %v2108
        %v2883 = vunpack.c.l.b16 %v2109
        %v2884 = vunpack.c.h.b16 %v2109
        %v2885 = vunpack.c.l.b16 %v2110
        %v2886 = vunpack.c.h.b16 %v2110
        %v2887 = vunpack.c.l.b16 %v2111
        %v2888 = vunpack.c.h.b16 %v2111
        %v2889 = vunpack.c.l.b16 %v2112
        %v2890 = vunpack.c.h.b16 %v2112
        %v2891 = vunpack.c.l.b16 %v2113
        %v2892 = vunpack.c.h.b16 %v2113
        %v2893 = vunpack.c.l.b16 %v2114
        %v2894 = vunpack.c.h.b16 %v2114
        %v2895 = vunpack.c.l.b16 %v2115
        %v2896 = vunpack.c.h.b16 %v2115
        %v2897 = vunpack.c.l.b16 %v2116
        %v2898 = vunpack.c.h.b16 %v2116
        %v2899 = vunpack.c.l.b16 %v2117
        %v2900 = vunpack.c.h.b16 %v2117
        %v2901 = vunpack.c.l.b16 %v2118
        %v2902 = vunpack.c.h.b16 %v2118
        %v2903 = vunpack.c.l.b16 %v2119
        %v2904 = vunpack.c.h.b16 %v2119
        %v2905 = vunpack.c.l.b16 %v2120
        %v2906 = vunpack.c.h.b16 %v2120
        %v2907 = vunpack.c.l.b16 %v2121
        %v2908 = vunpack.c.h.b16 %v2121
        %v2909 = vunpack.c.l.b16 %v2122
        %v2910 = vunpack.c.h.b16 %v2122
        %v2911 = vunpack.c.l.b16 %v2123
        %v2912 = vunpack.c.h.b16 %v2123
        %v2913 = vunpack.c.l.b16 %v2124
        %v2914 = vunpack.c.h.b16 %v2124
        %v2915 = vunpack.c.l.b16 %v2125
        %v2916 = vunpack.c.h.b16 %v2125
        %v2917 = vunpack.c.l.b16 %v2126
        %v2918 = vunpack.c.h.b16 %v2126
        %v2919 = vunpack.c.l.b16 %v2127
        %v2920 = vunpack.c.h.b16 %v2127
        %v2921 = vunpack.c.l.b16 %v2128
        %v2922 = vunpack.c.h.b16 %v2128
        %v2923 = vunpack.c.l.b16 %v2129
        %v2924 = vunpack.c.h.b16 %v2129
        %v2925 = vunpack.c.l.b16 %v2130
        %v2926 = vunpack.c.h.b16 %v2130
        %v2927 = vunpack.c.l.b16 %v2131
        %v2928 = vunpack.c.h.b16 %v2131
        %v2929 = vunpack.c.l.b16 %v2132
        %v2930 = vunpack.c.h.b16 %v2132
        %v2931 = vunpack.c.l.b16 %v2133
        %v2932 = vunpack.c.h.b16 %v2133
        %v2933 = vunpack.c.l.b16 %v2134
        %v2934 = vunpack.c.h.b16 %v2134
        %v2935 = vunpack.c.l.b16 %v2135
        %v2936 = vunpack.c.h.b16 %v2135
        %v2937 = vunpack.c.l.b16 %v2136
        %v2938 = vunpack.c.h.b16 %v2136
        %v2939 = vunpack.c.l.b16 %v2137
        %v2940 = vunpack.c.h.b16 %v2137
        %v2941 = vunpack.c.l.b16 %v2138
        %v2942 = vunpack.c.h.b16 %v2138
        %v2943 = vunpack.c.l.b16 %v2139
        %v2944 = vunpack.c.h.b16 %v2139
        %v2945 = vunpack.c.l.b16 %v2140
        %v2946 = vunpack.c.h.b16 %v2140
        %v2947 = vunpack.c.l.b16 %v2141
        %v2948 = vunpack.c.h.b16 %v2141
        %v2949 = vunpack.c.l.b16 %v2142
        %v2950 = vunpack.c.h.b16 %v2142
        %v2951 = vunpack.c.l.b16 %v2143
        %v2952 = vunpack.c.h.b16 %v2143
        %v2953 = vunpack.c.l.b16 %v2144
        %v2954 = vunpack.c.h.b16 %v2144
        %v2955 = vunpack.c.l.b16 %v2145
        %v2956 = vunpack.c.h.b16 %v2145
        %v2957 = vunpack.c.l.b16 %v2146
        %v2958 = vunpack.c.h.b16 %v2146
        %v2959 = vunpack.c.l.b16 %v2147
        %v2960 = vunpack.c.h.b16 %v2147
        %v2961 = vunpack.c.l.b16 %v2148
        %v2962 = vunpack.c.h.b16 %v2148
        %v2963 = vunpack.c.l.b16 %v2149
        %v2964 = vunpack.c.h.b16 %v2149
        %v2965 = vunpack.c.l.b16 %v2150
        %v2966 = vunpack.c.h.b16 %v2150
        %v2967 = vunpack.c.l.b16 %v2151
        %v2968 = vunpack.c.h.b16 %v2151
        %v2969 = vunpack.c.l.b16 %v2152
        %v2970 = vunpack.c.h.b16 %v2152
        %v2971 = vunpack.c.l.b16 %v2153
        %v2972 = vunpack.c.h.b16 %v2153
        %v2973 = vunpack.c.l.b16 %v2154
        %v2974 = vunpack.c.h.b16 %v2154
        %v2975 = vunpack.c.l.b16 %v2155
        %v2976 = vunpack.c.h.b16 %v2155
        %v2977 = vunpack.c.l.b16 %v2156
        %v2978 = vunpack.c.h.b16 %v2156
        %v2979 = vunpack.c.l.b16 %v2157
        %v2980 = vunpack.c.h.b16 %v2157
        %v2981 = vunpack.c.l.b16 %v2158
        %v2982 = vunpack.c.h.b16 %v2158
        %v2983 = vunpack.c.l.b16 %v2159
        %v2984 = vunpack.c.h.b16 %v2159
        %v2985 = vunpack.c.l.b16 %v2160
        %v2986 = vunpack.c.h.b16 %v2160
        %v2987 = vunpack.c.l.b16 %v2161
        %v2988 = vunpack.c.h.b16 %v2161
        %v2989 = vunpack.c.l.b16 %v2162
        %v2990 = vunpack.c.h.b16 %v2162
        %v2991 = vunpack.c.l.b16 %v2163
        %v2992 = vunpack.c.h.b16 %v2163
        %v2993 = vunpack.c.l.b16 %v2164
        %v2994 = vunpack.c.h.b16 %v2164
        %v2995 = vunpack.c.l.b16 %v2165
        %v2996 = vunpack.c.h.b16 %v2165
        %v2997 = vunpack.c.l.b16 %v2166
        %v2998 = vunpack.c.h.b16 %v2166
        %v2999 = vunpack.c.l.b16 %v2167
        %v3000 = vunpack.c.h.b16 %v2167
        %v3001 = vunpack.c.l.b16 %v2168
        %v3002 = vunpack.c.h.b16 %v2168
        %v3003 = vunpack.c.l.b16 %v2169
        %v3004 = vunpack.c.h.b16 %v2169
        %v3005 = vunpack.c.l.b16 %v2170
        %v3006 = vunpack.c.h.b16 %v2170
        %v3007 = vunpack.c.l.b16 %v2171
        %v3008 = vunpack.c.h.b16 %v2171
        %v3009 = vunpack.c.l.b16 %v2172
        %v3010 = vunpack.c.h.b16 %v2172
        %v3011 = vunpack.c.l.b16 %v2173
        %v3012 = vunpack.c.h.b16 %v2173
        %v3013 = vunpack.c.l.b16 %v2174
        %v3014 = vunpack.c.h.b16 %v2174
        %v3015 = vunpack.c.l.b16 %v2175
        %v3016 = vunpack.c.h.b16 %v2175
        %v3017 = vunpack.c.l.b16 %v2176
        %v3018 = vunpack.c.h.b16 %v2176
        %v3019 = vunpack.c.l.b16 %v2177
        %v3020 = vunpack.c.h.b16 %v2177
        %v3021 = vunpack.c.l.b16 %v2178
        %v3022 = vunpack.c.h.b16 %v2178
        %v3023 = vunpack.c.l.b16 %v2179
        %v3024 = vunpack.c.h.b16 %v2179
        %v3025 = vunpack.c.l.b16 %v2180
        %v3026 = vunpack.c.h.b16 %v2180
        %v3027 = vunpack.c.l.b16 %v2181
        %v3028 = vunpack.c.h.b16 %v2181
        %v3029 = vunpack.c.l.b16 %v2182
        %v3030 = vunpack.c.h.b16 %v2182
        %v3031 = vunpack.c.l.b16 %v2183
        %v3032 = vunpack.c.h.b16 %v2183
        %v3033 = vunpack.c.l.b16 %v2184
        %v3034 = vunpack.c.h.b16 %v2184
        %v3035 = vunpack.c.l.b16 %v2185
        %v3036 = vunpack.c.h.b16 %v2185
        %v3037 = vunpack.c.l.b16 %v2186
        %v3038 = vunpack.c.h.b16 %v2186
        %v3039 = vunpack.c.l.b16 %v2187
        %v3040 = vunpack.c.h.b16 %v2187
        %v3041 = vunpack.c.l.b16 %v2188
        %v3042 = vunpack.c.h.b16 %v2188
        %v3043 = vunpack.c.l.b16 %v2189
        %v3044 = vunpack.c.h.b16 %v2189
        %v3045 = vunpack.c.l.b16 %v2190
        %v3046 = vunpack.c.h.b16 %v2190
        %v3047 = vunpack.c.l.b16 %v2191
        %v3048 = vunpack.c.h.b16 %v2191
        %v3049 = vunpack.c.l.b16 %v2192
        %v3050 = vunpack.c.h.b16 %v2192
        %v3051 = vunpack.c.l.b16 %v2193
        %v3052 = vunpack.c.h.b16 %v2193
        %v3053 = vunpack.c.l.b16 %v2194
        %v3054 = vunpack.c.h.b16 %v2194
        %v3055 = vunpack.c.l.b16 %v2195
        %v3056 = vunpack.c.h.b16 %v2195
        %v3057 = vunpack.c.l.b16 %v2196
        %v3058 = vunpack.c.h.b16 %v2196
        %v3059 = vunpack.c.l.b16 %v2197
        %v3060 = vunpack.c.h.b16 %v2197
        %v3061 = vunpack.c.l.b16 %v2198
        %v3062 = vunpack.c.h.b16 %v2198
        %v3063 = vunpack.c.l.b16 %v2199
        %v3064 = vunpack.c.h.b16 %v2199
        %v3065 = vunpack.c.l.b16 %v2200
        %v3066 = vunpack.c.h.b16 %v2200
        %v3067 = vunpack.c.l.b16 %v2201
        %v3068 = vunpack.c.h.b16 %v2201
        %v3069 = vunpack.c.l.b16 %v2202
        %v3070 = vunpack.c.h.b16 %v2202
        %v3071 = vunpack.c.l.b16 %v2203
        %v3072 = vunpack.c.h.b16 %v2203
        %v3073 = vunpack.c.l.b16 %v2204
        %v3074 = vunpack.c.h.b16 %v2204
        %v3075 = vunpack.c.l.b16 %v2205
        %v3076 = vunpack.c.h.b16 %v2205
        %v3077 = vunpack.c.l.b16 %v2206
        %v3078 = vunpack.c.h.b16 %v2206
        %v3079 = vunpack.c.l.b16 %v2207
        %v3080 = vunpack.c.h.b16 %v2207
        %v3081 = vunpack.c.l.b16 %v2208
        %v3082 = vunpack.c.h.b16 %v2208
        %v3083 = vunpack.c.l.b16 %v2209
        %v3084 = vunpack.c.h.b16 %v2209
        %v3085 = vunpack.c.l.b16 %v2210
        %v3086 = vunpack.c.h.b16 %v2210
        %v3087 = vunpack.c.l.b16 %v2211
        %v3088 = vunpack.c.h.b16 %v2211
        %v3089 = vunpack.c.l.b16 %v2212
        %v3090 = vunpack.c.h.b16 %v2212
        %v3091 = vunpack.c.l.b16 %v2213
        %v3092 = vunpack.c.h.b16 %v2213
        %v3093 = vunpack.c.l.b16 %v2214
        %v3094 = vunpack.c.h.b16 %v2214
        %v3095 = vunpack.c.l.b16 %v2215
        %v3096 = vunpack.c.h.b16 %v2215
        %v3097 = vunpack.c.l.b16 %v2216
        %v3098 = vunpack.c.h.b16 %v2216
        %v3099 = vunpack.c.l.b16 %v2217
        %v3100 = vunpack.c.h.b16 %v2217
        %v3101 = vunpack.c.l.b16 %v2218
        %v3102 = vunpack.c.h.b16 %v2218
        %v3103 = vunpack.c.l.b16 %v2219
        %v3104 = vunpack.c.h.b16 %v2219
        %v3105 = vunpack.c.l.b16 %v2220
        %v3106 = vunpack.c.h.b16 %v2220
        %v3107 = vunpack.c.l.b16 %v2221
        %v3108 = vunpack.c.h.b16 %v2221
        %v3109 = vunpack.c.l.b16 %v2222
        %v3110 = vunpack.c.h.b16 %v2222
        %v3111 = vunpack.c.l.b16 %v2223
        %v3112 = vunpack.c.h.b16 %v2223
        %v3113 = vunpack.c.l.b16 %v2224
        %v3114 = vunpack.c.h.b16 %v2224
        %v3115 = vunpack.c.l.b16 %v2225
        %v3116 = vunpack.c.h.b16 %v2225
        %v3117 = vunpack.c.l.b16 %v2226
        %v3118 = vunpack.c.h.b16 %v2226
        %v3119 = vunpack.c.l.b16 %v2227
        %v3120 = vunpack.c.h.b16 %v2227
        %v3121 = vunpack.c.l.b16 %v2228
        %v3122 = vunpack.c.h.b16 %v2228
        %v3123 = vunpack.c.l.b16 %v2229
        %v3124 = vunpack.c.h.b16 %v2229
        %v3125 = vunpack.c.l.b16 %v2230
        %v3126 = vunpack.c.h.b16 %v2230
        %v3127 = vunpack.c.l.b16 %v2231
        %v3128 = vunpack.c.h.b16 %v2231
        %v3129 = vunpack.c.l.b16 %v2232
        %v3130 = vunpack.c.h.b16 %v2232
        %v3131 = vunpack.c.l.b16 %v2233
        %v3132 = vunpack.c.h.b16 %v2233
        %v3133 = vunpack.c.l.b16 %v2234
        %v3134 = vunpack.c.h.b16 %v2234
        %v3135 = vunpack.c.l.b16 %v2235
        %v3136 = vunpack.c.h.b16 %v2235
        %v3137 = vunpack.c.l.b16 %v2236
        %v3138 = vunpack.c.h.b16 %v2236
        %v3139 = vunpack.c.l.b16 %v2237
        %v3140 = vunpack.c.h.b16 %v2237
        %v3141 = vunpack.c.l.b16 %v2238
        %v3142 = vunpack.c.h.b16 %v2238
        %v3143 = vunpack.c.l.b16 %v2239
        %v3144 = vunpack.c.h.b16 %v2239
        %v3145 = vunpack.c.l.b16 %v2240
        %v3146 = vunpack.c.h.b16 %v2240
        %v3147 = vunpack.c.l.b16 %v2241
        %v3148 = vunpack.c.h.b16 %v2241
        %v3149 = vunpack.c.l.b16 %v2242
        %v3150 = vunpack.c.h.b16 %v2242
        %v3151 = vunpack.c.l.b16 %v2243
        %v3152 = vunpack.c.h.b16 %v2243
        %v3153 = vunpack.c.l.b16 %v2244
        %v3154 = vunpack.c.h.b16 %v2244
        %v3155 = vunpack.c.l.b16 %v2245
        %v3156 = vunpack.c.h.b16 %v2245
        %v3157 = vunpack.c.l.b16 %v2246
        %v3158 = vunpack.c.h.b16 %v2246
        %v3159 = vunpack.c.l.b16 %v2247
        %v3160 = vunpack.c.h.b16 %v2247
        %v3161 = vunpack.c.l.b16 %v2248
        %v3162 = vunpack.c.h.b16 %v2248
        %v3163 = vunpack.c.l.b16 %v2249
        %v3164 = vunpack.c.h.b16 %v2249
        %v3165 = vunpack.c.l.b16 %v2250
        %v3166 = vunpack.c.h.b16 %v2250
        %v3167 = vunpack.c.l.b16 %v2251
        %v3168 = vunpack.c.h.b16 %v2251
        %v3169 = vunpack.c.l.b16 %v2252
        %v3170 = vunpack.c.h.b16 %v2252
        %v3171 = vunpack.c.l.b16 %v2253
        %v3172 = vunpack.c.h.b16 %v2253
        %v3173 = vunpack.c.l.b16 %v2254
        %v3174 = vunpack.c.h.b16 %v2254
        %v3175 = vunpack.c.l.b16 %v2255
        %v3176 = vunpack.c.h.b16 %v2255
        %v3177 = vunpack.c.l.b16 %v2256
        %v3178 = vunpack.c.h.b16 %v2256
        %v3179 = vunpack.c.l.b16 %v2257
        %v3180 = vunpack.c.h.b16 %v2257
        %v3181 = vunpack.c.l.b16 %v2258
        %v3182 = vunpack.c.h.b16 %v2258
        %v3183 = vunpack.c.l.b16 %v2259
        %v3184 = vunpack.c.h.b16 %v2259
        %v3185 = vunpack.c.l.b16 %v2260
        %v3186 = vunpack.c.h.b16 %v2260
        %v3187 = vunpack.c.l.b16 %v2261
        %v3188 = vunpack.c.h.b16 %v2261
        %v3189 = vunpack.c.l.b16 %v2262
        %v3190 = vunpack.c.h.b16 %v2262
        %v3191 = vunpack.c.l.b16 %v2263
        %v3192 = vunpack.c.h.b16 %v2263
        %v3193 = vunpack.c.l.b16 %v2264
        %v3194 = vunpack.c.h.b16 %v2264
        %v3195 = vunpack.c.l.b16 %v2265
        %v3196 = vunpack.c.h.b16 %v2265
        %v3197 = vunpack.c.l.b16 %v2266
        %v3198 = vunpack.c.h.b16 %v2266
        %v3199 = vunpack.c.l.b16 %v2267
        %v3200 = vunpack.c.h.b16 %v2267
        %v3201 = vunpack.c.l.b16 %v2268
        %v3202 = vunpack.c.h.b16 %v2268
        %v3203 = vunpack.c.l.b16 %v2269
        %v3204 = vunpack.c.h.b16 %v2269
        %v3205 = vunpack.c.l.b16 %v2270
        %v3206 = vunpack.c.h.b16 %v2270
        %v3207 = vpack.c.b16 %v2727, %v2695
        %v3208 = vpack.c.b16 %v2728, %v2696
        %v3209 = vpack.c.b16 %v2729, %v2697
        %v3210 = vpack.c.b16 %v2730, %v2698
        %v3211 = vpack.c.b16 %v2731, %v2699
        %v3212 = vpack.c.b16 %v2732, %v2700
        %v3213 = vpack.c.b16 %v2733, %v2701
        %v3214 = vpack.c.b16 %v2734, %v2702
        %v3215 = vpack.c.b16 %v2735, %v2703
        %v3216 = vpack.c.b16 %v2736, %v2704
        %v3217 = vpack.c.b16 %v2737, %v2705
        %v3218 = vpack.c.b16 %v2738, %v2706
        %v3219 = vpack.c.b16 %v2739, %v2707
        %v3220 = vpack.c.b16 %v2740, %v2708
        %v3221 = vpack.c.b16 %v2741, %v2709
        %v3222 = vpack.c.b16 %v2742, %v2710
        %v3223 = vpack.c.b16 %v2743, %v2711
        %v3224 = vpack.c.b16 %v2744, %v2712
        %v3225 = vpack.c.b16 %v2745, %v2713
        %v3226 = vpack.c.b16 %v2746, %v2714
        %v3227 = vpack.c.b16 %v2747, %v2715
        %v3228 = vpack.c.b16 %v2748, %v2716
        %v3229 = vpack.c.b16 %v2749, %v2717
        %v3230 = vpack.c.b16 %v2750, %v2718
        %v3231 = vpack.c.b16 %v2751, %v2719
        %v3232 = vpack.c.b16 %v2752, %v2720
        %v3233 = vpack.c.b16 %v2753, %v2721
        %v3234 = vpack.c.b16 %v2754, %v2722
        %v3235 = vpack.c.b16 %v2755, %v2723
        %v3236 = vpack.c.b16 %v2756, %v2724
        %v3237 = vpack.c.b16 %v2757, %v2725
        %v3238 = vpack.c.b16 %v2758, %v2726
        %v3239 = vpack.c.b16 %v2791, %v2759
        %v3240 = vpack.c.b16 %v2792, %v2760
        %v3241 = vpack.c.b16 %v2793, %v2761
        %v3242 = vpack.c.b16 %v2794, %v2762
        %v3243 = vpack.c.b16 %v2795, %v2763
        %v3244 = vpack.c.b16 %v2796, %v2764
        %v3245 = vpack.c.b16 %v2797, %v2765
        %v3246 = vpack.c.b16 %v2798, %v2766
        %v3247 = vpack.c.b16 %v2799, %v2767
        %v3248 = vpack.c.b16 %v2800, %v2768
        %v3249 = vpack.c.b16 %v2801, %v2769
        %v3250 = vpack.c.b16 %v2802, %v2770
        %v3251 = vpack.c.b16 %v2803, %v2771
        %v3252 = vpack.c.b16 %v2804, %v2772
        %v3253 = vpack.c.b16 %v2805, %v2773
        %v3254 = vpack.c.b16 %v2806, %v2774
        %v3255 = vpack.c.b16 %v2807, %v2775
        %v3256 = vpack.c.b16 %v2808, %v2776
        %v3257 = vpack.c.b16 %v2809, %v2777
        %v3258 = vpack.c.b16 %v2810, %v2778
        %v3259 = vpack.c.b16 %v2811, %v2779
        %v3260 = vpack.c.b16 %v2812, %v2780
        %v3261 = vpack.c.b16 %v2813, %v2781
        %v3262 = vpack.c.b16 %v2814, %v2782
        %v3263 = vpack.c.b16 %v2815, %v2783
        %v3264 = vpack.c.b16 %v2816, %v2784
        %v3265 = vpack.c.b16 %v2817, %v2785
        %v3266 = vpack.c.b16 %v2818, %v2786
        %v3267 = vpack.c.b16 %v2819, %v2787
        %v3268 = vpack.c.b16 %v2820, %v2788
        %v3269 = vpack.c.b16 %v2821, %v2789
        %v3270 = vpack.c.b16 %v2822, %v2790
        %v3271 = vpack.c.b16 %v2855, %v2823
        %v3272 = vpack.c.b16 %v2856, %v2824
        %v3273 = vpack.c.b16 %v2857, %v2825
        %v3274 = vpack.c.b16 %v2858, %v2826
        %v3275 = vpack.c.b16 %v2859, %v2827
        %v3276 = vpack.c.b16 %v2860, %v2828
        %v3277 = vpack.c.b16 %v2861, %v2829
        %v3278 = vpack.c.b16 %v2862, %v2830
        %v3279 = vpack.c.b16 %v2863, %v2831
        %v3280 = vpack.c.b16 %v2864, %v2832
        %v3281 = vpack.c.b16 %v2865, %v2833
        %v3282 = vpack.c.b16 %v2866, %v2834
        %v3283 = vpack.c.b16 %v2867, %v2835
        %v3284 = vpack.c.b16 %v2868, %v2836
        %v3285 = vpack.c.b16 %v2869, %v2837
        %v3286 = vpack.c.b16 %v2870, %v2838
        %v3287 = vpack.c.b16 %v2871, %v2839
        %v3288 = vpack.c.b16 %v2872, %v2840
        %v3289 = vpack.c.b16 %v2873, %v2841
        %v3290 = vpack.c.b16 %v2874, %v2842
        %v3291 = vpack.c.b16 %v2875, %v2843
        %v3292 = vpack.c.b16 %v2876, %v2844
        %v3293 = vpack.c.b16 %v2877, %v2845
        %v3294 = vpack.c.b16 %v2878, %v2846
        %v3295 = vpack.c.b16 %v2879, %v2847
        %v3296 = vpack.c.b16 %v2880, %v2848
        %v3297 = vpack.c.b16 %v2881, %v2849
        %v3298 = vpack.c.b16 %v2882, %v2850
        %v3299 = vpack.c.b16 %v2883, %v2851
        %v3300 = vpack.c.b16 %v2884, %v2852
        %v3301 = vpack.c.b16 %v2885, %v2853
        %v3302 = vpack.c.b16 %v2886, %v2854
        %v3303 = vpack.c.b16 %v2919, %v2887
        %v3304 = vpack.c.b16 %v2920, %v2888
        %v3305 = vpack.c.b16 %v2921, %v2889
        %v3306 = vpack.c.b16 %v2922, %v2890
        %v3307 = vpack.c.b16 %v2923, %v2891
        %v3308 = vpack.c.b16 %v2924, %v2892
        %v3309 = vpack.c.b16 %v2925, %v2893
        %v3310 = vpack.c.b16 %v2926, %v2894
        %v3311 = vpack.c.b16 %v2927, %v2895
        %v3312 = vpack.c.b16 %v2928, %v2896
        %v3313 = vpack.c.b16 %v2929, %v2897
        %v3314 = vpack.c.b16 %v2930, %v2898
        %v3315 = vpack.c.b16 %v2931, %v2899
        %v3316 = vpack.c.b16 %v2932, %v2900
        %v3317 = vpack.c.b16 %v2933, %v2901
        %v3318 = vpack.c.b16 %v2934, %v2902
        %v3319 = vpack.c.b16 %v2935, %v2903
        %v3320 = vpack.c.b16 %v2936, %v2904
        %v3321 = vpack.c.b16 %v2937, %v2905
        %v3322 = vpack.c.b16 %v2938, %v2906
        %v3323 = vpack.c.b16 %v2939, %v2907
        %v3324 = vpack.c.b16 %v2940, %v2908
        %v3325 = vpack.c.b16 %v2941, %v2909
        %v3326 = vpack.c.b16 %v2942, %v2910
        %v3327 = vpack.c.b16 %v2943, %v2911
        %v3328 = vpack.c.b16 %v2944, %v2912
        %v3329 = vpack.c.b16 %v2945, %v2913
        %v3330 = vpack.c.b16 %v2946, %v2914
        %v3331 = vpack.c.b16 %v2947, %v2915
        %v3332 = vpack.c.b16 %v2948, %v2916
        %v3333 = vpack.c.b16 %v2949, %v2917
        %v3334 = vpack.c.b16 %v2950, %v2918
        %v3335 = vpack.c.b16 %v2983, %v2951
        %v3336 = vpack.c.b16 %v2984, %v2952
        %v3337 = vpack.c.b16 %v2985, %v2953
        %v3338 = vpack.c.b16 %v2986, %v2954
        %v3339 = vpack.c.b16 %v2987, %v2955
        %v3340 = vpack.c.b16 %v2988, %v2956
        %v3341 = vpack.c.b16 %v2989, %v2957
        %v3342 = vpack.c.b16 %v2990, %v2958
        %v3343 = vpack.c.b16 %v2991, %v2959
        %v3344 = vpack.c.b16 %v2992, %v2960
        %v3345 = vpack.c.b16 %v2993, %v2961
        %v3346 = vpack.c.b16 %v2994, %v2962
        %v3347 = vpack.c.b16 %v2995, %v2963
        %v3348 = vpack.c.b16 %v2996, %v2964
        %v3349 = vpack.c.b16 %v2997, %v2965
        %v3350 = vpack.c.b16 %v2998, %v2966
        %v3351 = vpack.c.b16 %v2999, %v2967
        %v3352 = vpack.c.b16 %v3000, %v2968
        %v3353 = vpack.c.b16 %v3001, %v2969
        %v3354 = vpack.c.b16 %v3002, %v2970
        %v3355 = vpack.c.b16 %v3003, %v2971
        %v3356 = vpack.c.b16 %v3004, %v2972
        %v3357 = vpack.c.b16 %v3005, %v2973
        %v3358 = vpack.c.b16 %v3006, %v2974
        %v3359 = vpack.c.b16 %v3007, %v2975
        %v3360 = vpack.c.b16 %v3008, %v2976
        %v3361 = vpack.c.b16 %v3009, %v2977
        %v3362 = vpack.c.b16 %v3010, %v2978
        %v3363 = vpack.c.b16 %v3011, %v2979
        %v3364 = vpack.c.b16 %v3012, %v2980
        %v3365 = vpack.c.b16 %v3013, %v2981
        %v3366 = vpack.c.b16 %v3014, %v2982
        %v3367 = vpack.c.b16 %v3047, %v3015
        %v3368 = vpack.c.b16 %v3048, %v3016
        %v3369 = vpack.c.b16 %v3049, %v3017
        %v3370 = vpack.c.b16 %v3050, %v3018
        %v3371 = vpack.c.b16 %v3051, %v3019
        %v3372 = vpack.c.b16 %v3052, %v3020
        %v3373 = vpack.c.b16 %v3053, %v3021
        %v3374 = vpack.c.b16 %v3054, %v3022
        %v3375 = vpack.c.b16 %v3055, %v3023
        %v3376 = vpack.c.b16 %v3056, %v3024
        %v3377 = vpack.c.b16 %v3057, %v3025
        %v3378 = vpack.c.b16 %v3058, %v3026
        %v3379 = vpack.c.b16 %v3059, %v3027
        %v3380 = vpack.c.b16 %v3060, %v3028
        %v3381 = vpack.c.b16 %v3061, %v3029
        %v3382 = vpack.c.b16 %v3062, %v3030
        %v3383 = vpack.c.b16 %v3063, %v3031
        %v3384 = vpack.c.b16 %v3064, %v3032
        %v3385 = vpack.c.b16 %v3065, %v3033
        %v3386 = vpack.c.b16 %v3066, %v3034
        %v3387 = vpack.c.b16 %v3067, %v3035
        %v3388 = vpack.c.b16 %v3068, %v3036
        %v3389 = vpack.c.b16 %v3069, %v3037
        %v3390 = vpack.c.b16 %v3070, %v3038
        %v3391 = vpack.c.b16 %v3071, %v3039
        %v3392 = vpack.c.b16 %v3072, %v3040
        %v3393 = vpack.c.b16 %v3073, %v3041
        %v3394 = vpack.c.b16 %v3074, %v3042
        %v3395 = vpack.c.b16 %v3075, %v3043
        %v3396 = vpack.c.b16 %v3076, %v3044
        %v3397 = vpack.c.b16 %v3077, %v3045
        %v3398 = vpack.c.b16 %v3078, %v3046
        %v3399 = vpack.c.b16 %v3111, %v3079
        %v3400 = vpack.c.b16 %v3112, %v3080
        %v3401 = vpack.c.b16 %v3113, %v3081
        %v3402 = vpack.c.b16 %v3114, %v3082
        %v3403 = vpack.c.b16 %v3115, %v3083
        %v3404 = vpack.c.b16 %v3116, %v3084
        %v3405 = vpack.c.b16 %v3117, %v3085
        %v3406 = vpack.c.b16 %v3118, %v3086
        %v3407 = vpack.c.b16 %v3119, %v3087
        %v3408 = vpack.c.b16 %v3120, %v3088
        %v3409 = vpack.c.b16 %v3121, %v3089
        %v3410 = vpack.c.b16 %v3122, %v3090
        %v3411 = vpack.c.b16 %v3123, %v3091
        %v3412 = vpack.c.b16 %v3124, %v3092
        %v3413 = vpack.c.b16 %v3125, %v3093
        %v3414 = vpack.c.b16 %v3126, %v3094
        %v3415 = vpack.c.b16 %v3127, %v3095
        %v3416 = vpack.c.b16 %v3128, %v3096
        %v3417 = vpack.c.b16 %v3129, %v3097
        %v3418 = vpack.c.b16 %v3130, %v3098
        %v3419 = vpack.c.b16 %v3131, %v3099
        %v3420 = vpack.c.b16 %v3132, %v3100
        %v3421 = vpack.c.b16 %v3133, %v3101
        %v3422 = vpack.c.b16 %v3134, %v3102
        %v3423 = vpack.c.b16 %v3135, %v3103
        %v3424 = vpack.c.b16 %v3136, %v3104
        %v3425 = vpack.c.b16 %v3137, %v3105
        %v3426 = vpack.c.b16 %v3138, %v3106
        %v3427 = vpack.c.b16 %v3139, %v3107
        %v3428 = vpack.c.b16 %v3140, %v3108
        %v3429 = vpack.c.b16 %v3141, %v3109
        %v3430 = vpack.c.b16 %v3142, %v3110
        %v3431 = vpack.c.b16 %v3175, %v3143
        %v3432 = vpack.c.b16 %v3176, %v3144
        %v3433 = vpack.c.b16 %v3177, %v3145
        %v3434 = vpack.c.b16 %v3178, %v3146
        %v3435 = vpack.c.b16 %v3179, %v3147
        %v3436 = vpack.c.b16 %v3180, %v3148
        %v3437 = vpack.c.b16 %v3181, %v3149
        %v3438 = vpack.c.b16 %v3182, %v3150
        %v3439 = vpack.c.b16 %v3183, %v3151
        %v3440 = vpack.c.b16 %v3184, %v3152
        %v3441 = vpack.c.b16 %v3185, %v3153
        %v3442 = vpack.c.b16 %v3186, %v3154
        %v3443 = vpack.c.b16 %v3187, %v3155
        %v3444 = vpack.c.b16 %v3188, %v3156
        %v3445 = vpack.c.b16 %v3189, %v3157
        %v3446 = vpack.c.b16 %v3190, %v3158
        %v3447 = vpack.c.b16 %v3191, %v3159
        %v3448 = vpack.c.b16 %v3192, %v3160
        %v3449 = vpack.c.b16 %v3193, %v3161
        %v3450 = vpack.c.b16 %v3194, %v3162
        %v3451 = vpack.c.b16 %v3195, %v3163
        %v3452 = vpack.c.b16 %v3196, %v3164
        %v3453 = vpack.c.b16 %v3197, %v3165
        %v3454 = vpack.c.b16 %v3198, %v3166
        %v3455 = vpack.c.b16 %v3199, %v3167
        %v3456 = vpack.c.b16 %v3200, %v3168
        %v3457 = vpack.c.b16 %v3201, %v3169
        %v3458 = vpack.c.b16 %v3202, %v3170
        %v3459 = vpack.c.b16 %v3203, %v3171
        %v3460 = vpack.c.b16 %v3204, %v3172
        %v3461 = vpack.c.b16 %v3205, %v3173
        %v3462 = vpack.c.b16 %v3206, %v3174
        %3719 = vmatprep.subr.bf16.mxu0 %v3208
        %3720 = vmatpush1.bf16.msra.mxu0 %v3207
        %3721 = vmatprep.subr.bf16.mxu0 %v3240
        %3722 = vmatpush1.bf16.msra.mxu0 %v3239
        %3723 = vmatprep.subr.bf16.mxu0 %v3272
        %3724 = vmatpush1.bf16.msra.mxu0 %v3271
        %3725 = vmatprep.subr.bf16.mxu0 %v3304
        %3726 = vmatpush1.bf16.msra.mxu0 %v3303
        %3727 = vmatprep.subr.bf16.mxu0 %v3336
        %3728 = vmatpush1.bf16.msra.mxu0 %v3335
        %3729 = vmatprep.subr.bf16.mxu0 %v3368
        %3730 = vmatpush1.bf16.msra.mxu0 %v3367
        %3731 = vmatprep.subr.bf16.mxu0 %v3400
        %3732 = vmatpush1.bf16.msra.mxu0 %v3399
        %3733 = vmatprep.subr.bf16.mxu0 %v3432
        %3734 = vmatpush1.bf16.msra.mxu0 %v3431
        %3735 = vmatprep.subr.bf16.mxu0 0
        %3736 = vmatpush1.bf16.msra.mxu0 0
        %3737 = vmatprep.subr.bf16.mxu0 0
        %3738 = vmatpush1.bf16.msra.mxu0 0
        %3739 = vmatprep.subr.bf16.mxu0 0
        %3740 = vmatpush1.bf16.msra.mxu0 0
        %3741 = vmatprep.subr.bf16.mxu0 0
        %3742 = vmatpush1.bf16.msra.mxu0 0
        %3743 = vmatprep.subr.bf16.mxu0 0
        %3744 = vmatpush1.bf16.msra.mxu0 0
        %3745 = vmatprep.subr.bf16.mxu0 0
        %3746 = vmatpush1.bf16.msra.mxu0 0
        %3747 = vmatprep.subr.bf16.mxu0 0
        %3748 = vmatpush1.bf16.msra.mxu0 0
        %3749 = vmatprep.subr.bf16.mxu0 0
        %3750 = vmatpush1.bf16.msra.mxu0 0
        %3751 = vmatprep.mubr.bf16.mxu0 0
        %3752 = vmatmul.mubr.bf16.gmra.mrb[0].mxu0 %v1710
        %v3753 = vpop.f32.mrb[0].mxu0
        %v3754 = vadd.f32 %v2282, %v3753
        %v3755 = vpop.f32.mrb[0].mxu0
        %v3756 = vadd.f32 %v2286, %v3755
        %v3757 = vpop.f32.mrb[0].mxu0
        %v3758 = vpop.f32.mrb[0].mxu0
        %3759 = vdwg.mxu0
        %3760 = vmatprep.subr.bf16.mxu0 %v3210
        %3761 = vmatpush1.bf16.msra.mxu0 %v3209
        %3762 = vmatprep.subr.bf16.mxu0 %v3242
        %3763 = vmatpush1.bf16.msra.mxu0 %v3241
        %3764 = vmatprep.subr.bf16.mxu0 %v3274
        %3765 = vmatpush1.bf16.msra.mxu0 %v3273
        %3766 = vmatprep.subr.bf16.mxu0 %v3306
        %3767 = vmatpush1.bf16.msra.mxu0 %v3305
        %3768 = vmatprep.subr.bf16.mxu0 %v3338
        %3769 = vmatpush1.bf16.msra.mxu0 %v3337
        %3770 = vmatprep.subr.bf16.mxu0 %v3370
        %3771 = vmatpush1.bf16.msra.mxu0 %v3369
        %3772 = vmatprep.subr.bf16.mxu0 %v3402
        %3773 = vmatpush1.bf16.msra.mxu0 %v3401
        %3774 = vmatprep.subr.bf16.mxu0 %v3434
        %3775 = vmatpush1.bf16.msra.mxu0 %v3433
        %3776 = vmatprep.subr.bf16.mxu0 0
        %3777 = vmatpush1.bf16.msra.mxu0 0
        %3778 = vmatprep.subr.bf16.mxu0 0
        %3779 = vmatpush1.bf16.msra.mxu0 0
        %3780 = vmatprep.subr.bf16.mxu0 0
        %3781 = vmatpush1.bf16.msra.mxu0 0
        %3782 = vmatprep.subr.bf16.mxu0 0
        %3783 = vmatpush1.bf16.msra.mxu0 0
        %3784 = vmatprep.subr.bf16.mxu0 0
        %3785 = vmatpush1.bf16.msra.mxu0 0
        %3786 = vmatprep.subr.bf16.mxu0 0
        %3787 = vmatpush1.bf16.msra.mxu0 0
        %3788 = vmatprep.subr.bf16.mxu0 0
        %3789 = vmatpush1.bf16.msra.mxu0 0
        %3790 = vmatprep.subr.bf16.mxu0 0
        %3791 = vmatpush1.bf16.msra.mxu0 0
        %3792 = vmatprep.mubr.bf16.mxu0 0
        %3793 = vmatmul.mubr.bf16.gmra.mrb[0].mxu0 %v1710
        %v3794 = vpop.f32.mrb[0].mxu0
        %v3795 = vadd.f32 %v2290, %v3794
        %v3796 = vpop.f32.mrb[0].mxu0
        %v3797 = vadd.f32 %v2294, %v3796
        %v3798 = vpop.f32.mrb[0].mxu0
        %v3799 = vpop.f32.mrb[0].mxu0
        %3800 = vdwg.mxu0
        %3801 = vmatprep.subr.bf16.mxu0 %v3212
        %3802 = vmatpush1.bf16.msra.mxu0 %v3211
        %3803 = vmatprep.subr.bf16.mxu0 %v3244
        %3804 = vmatpush1.bf16.msra.mxu0 %v3243
        %3805 = vmatprep.subr.bf16.mxu0 %v3276
        %3806 = vmatpush1.bf16.msra.mxu0 %v3275
        %3807 = vmatprep.subr.bf16.mxu0 %v3308
        %3808 = vmatpush1.bf16.msra.mxu0 %v3307
        %3809 = vmatprep.subr.bf16.mxu0 %v3340
        %3810 = vmatpush1.bf16.msra.mxu0 %v3339
        %3811 = vmatprep.subr.bf16.mxu0 %v3372
        %3812 = vmatpush1.bf16.msra.mxu0 %v3371
        %3813 = vmatprep.subr.bf16.mxu0 %v3404
        %3814 = vmatpush1.bf16.msra.mxu0 %v3403
        %3815 = vmatprep.subr.bf16.mxu0 %v3436
        %3816 = vmatpush1.bf16.msra.mxu0 %v3435
        %3817 = vmatprep.subr.bf16.mxu0 0
        %3818 = vmatpush1.bf16.msra.mxu0 0
        %3819 = vmatprep.subr.bf16.mxu0 0
        %3820 = vmatpush1.bf16.msra.mxu0 0
        %3821 = vmatprep.subr.bf16.mxu0 0
        %3822 = vmatpush1.bf16.msra.mxu0 0
        %3823 = vmatprep.subr.bf16.mxu0 0
        %3824 = vmatpush1.bf16.msra.mxu0 0
        %3825 = vmatprep.subr.bf16.mxu0 0
        %3826 = vmatpush1.bf16.msra.mxu0 0
        %3827 = vmatprep.subr.bf16.mxu0 0
        %3828 = vmatpush1.bf16.msra.mxu0 0
        %3829 = vmatprep.subr.bf16.mxu0 0
        %3830 = vmatpush1.bf16.msra.mxu0 0
        %3831 = vmatprep.subr.bf16.mxu0 0
        %3832 = vmatpush1.bf16.msra.mxu0 0
        %3833 = vmatprep.mubr.bf16.mxu0 0
        %3834 = vmatmul.mubr.bf16.gmra.mrb[0].mxu0 %v1710
        %v3835 = vpop.f32.mrb[0].mxu0
        %v3836 = vadd.f32 %v2298, %v3835
        %v3837 = vpop.f32.mrb[0].mxu0
        %v3838 = vadd.f32 %v2302, %v3837
        %v3839 = vpop.f32.mrb[0].mxu0
        %v3840 = vpop.f32.mrb[0].mxu0
        %3841 = vdwg.mxu0
        %3842 = vmatprep.subr.bf16.mxu0 %v3214
        %3843 = vmatpush1.bf16.msra.mxu0 %v3213
        %3844 = vmatprep.subr.bf16.mxu0 %v3246
        %3845 = vmatpush1.bf16.msra.mxu0 %v3245
        %3846 = vmatprep.subr.bf16.mxu0 %v3278
        %3847 = vmatpush1.bf16.msra.mxu0 %v3277
        %3848 = vmatprep.subr.bf16.mxu0 %v3310
        %3849 = vmatpush1.bf16.msra.mxu0 %v3309
        %3850 = vmatprep.subr.bf16.mxu0 %v3342
        %3851 = vmatpush1.bf16.msra.mxu0 %v3341
        %3852 = vmatprep.subr.bf16.mxu0 %v3374
        %3853 = vmatpush1.bf16.msra.mxu0 %v3373
        %3854 = vmatprep.subr.bf16.mxu0 %v3406
        %3855 = vmatpush1.bf16.msra.mxu0 %v3405
        %3856 = vmatprep.subr.bf16.mxu0 %v3438
        %3857 = vmatpush1.bf16.msra.mxu0 %v3437
        %3858 = vmatprep.subr.bf16.mxu0 0
        %3859 = vmatpush1.bf16.msra.mxu0 0
        %3860 = vmatprep.subr.bf16.mxu0 0
        %3861 = vmatpush1.bf16.msra.mxu0 0
        %3862 = vmatprep.subr.bf16.mxu0 0
        %3863 = vmatpush1.bf16.msra.mxu0 0
        %3864 = vmatprep.subr.bf16.mxu0 0
        %3865 = vmatpush1.bf16.msra.mxu0 0
        %3866 = vmatprep.subr.bf16.mxu0 0
        %3867 = vmatpush1.bf16.msra.mxu0 0
        %3868 = vmatprep.subr.bf16.mxu0 0
        %3869 = vmatpush1.bf16.msra.mxu0 0
        %3870 = vmatprep.subr.bf16.mxu0 0
        %3871 = vmatpush1.bf16.msra.mxu0 0
        %3872 = vmatprep.subr.bf16.mxu0 0
        %3873 = vmatpush1.bf16.msra.mxu0 0
        %3874 = vmatprep.mubr.bf16.mxu0 0
        %3875 = vmatmul.mubr.bf16.gmra.mrb[0].mxu0 %v1710
        %v3876 = vpop.f32.mrb[0].mxu0
        %v3877 = vadd.f32 %v2306, %v3876
        %v3878 = vpop.f32.mrb[0].mxu0
        %v3879 = vadd.f32 %v2310, %v3878
        %v3880 = vpop.f32.mrb[0].mxu0
        %v3881 = vpop.f32.mrb[0].mxu0
        %3882 = vdwg.mxu0
        %3883 = vmatprep.subr.bf16.mxu0 %v3216
        %3884 = vmatpush1.bf16.msra.mxu0 %v3215
        %3885 = vmatprep.subr.bf16.mxu0 %v3248
        %3886 = vmatpush1.bf16.msra.mxu0 %v3247
        %3887 = vmatprep.subr.bf16.mxu0 %v3280
        %3888 = vmatpush1.bf16.msra.mxu0 %v3279
        %3889 = vmatprep.subr.bf16.mxu0 %v3312
        %3890 = vmatpush1.bf16.msra.mxu0 %v3311
        %3891 = vmatprep.subr.bf16.mxu0 %v3344
        %3892 = vmatpush1.bf16.msra.mxu0 %v3343
        %3893 = vmatprep.subr.bf16.mxu0 %v3376
        %3894 = vmatpush1.bf16.msra.mxu0 %v3375
        %3895 = vmatprep.subr.bf16.mxu0 %v3408
        %3896 = vmatpush1.bf16.msra.mxu0 %v3407
        %3897 = vmatprep.subr.bf16.mxu0 %v3440
        %3898 = vmatpush1.bf16.msra.mxu0 %v3439
        %3899 = vmatprep.subr.bf16.mxu0 0
        %3900 = vmatpush1.bf16.msra.mxu0 0
        %3901 = vmatprep.subr.bf16.mxu0 0
        %3902 = vmatpush1.bf16.msra.mxu0 0
        %3903 = vmatprep.subr.bf16.mxu0 0
        %3904 = vmatpush1.bf16.msra.mxu0 0
        %3905 = vmatprep.subr.bf16.mxu0 0
        %3906 = vmatpush1.bf16.msra.mxu0 0
        %3907 = vmatprep.subr.bf16.mxu0 0
        %3908 = vmatpush1.bf16.msra.mxu0 0
        %3909 = vmatprep.subr.bf16.mxu0 0
        %3910 = vmatpush1.bf16.msra.mxu0 0
        %3911 = vmatprep.subr.bf16.mxu0 0
        %3912 = vmatpush1.bf16.msra.mxu0 0
        %3913 = vmatprep.subr.bf16.mxu0 0
        %3914 = vmatpush1.bf16.msra.mxu0 0
        %3915 = vmatprep.mubr.bf16.mxu0 0
        %3916 = vmatmul.mubr.bf16.gmra.mrb[0].mxu0 %v1710
        %v3917 = vpop.f32.mrb[0].mxu0
        %v3918 = vadd.f32 %v2314, %v3917
        %v3919 = vpop.f32.mrb[0].mxu0
        %v3920 = vadd.f32 %v2318, %v3919
        %v3921 = vpop.f32.mrb[0].mxu0
        %v3922 = vpop.f32.mrb[0].mxu0
        %3923 = vdwg.mxu0
        %3924 = vmatprep.subr.bf16.mxu0 %v3218
        %3925 = vmatpush1.bf16.msra.mxu0 %v3217
        %3926 = vmatprep.subr.bf16.mxu0 %v3250
        %3927 = vmatpush1.bf16.msra.mxu0 %v3249
        %3928 = vmatprep.subr.bf16.mxu0 %v3282
        %3929 = vmatpush1.bf16.msra.mxu0 %v3281
        %3930 = vmatprep.subr.bf16.mxu0 %v3314
        %3931 = vmatpush1.bf16.msra.mxu0 %v3313
        %3932 = vmatprep.subr.bf16.mxu0 %v3346
        %3933 = vmatpush1.bf16.msra.mxu0 %v3345
        %3934 = vmatprep.subr.bf16.mxu0 %v3378
        %3935 = vmatpush1.bf16.msra.mxu0 %v3377
        %3936 = vmatprep.subr.bf16.mxu0 %v3410
        %3937 = vmatpush1.bf16.msra.mxu0 %v3409
        %3938 = vmatprep.subr.bf16.mxu0 %v3442
        %3939 = vmatpush1.bf16.msra.mxu0 %v3441
        %3940 = vmatprep.subr.bf16.mxu0 0
        %3941 = vmatpush1.bf16.msra.mxu0 0
        %3942 = vmatprep.subr.bf16.mxu0 0
        %3943 = vmatpush1.bf16.msra.mxu0 0
        %3944 = vmatprep.subr.bf16.mxu0 0
        %3945 = vmatpush1.bf16.msra.mxu0 0
        %3946 = vmatprep.subr.bf16.mxu0 0
        %3947 = vmatpush1.bf16.msra.mxu0 0
        %3948 = vmatprep.subr.bf16.mxu0 0
        %3949 = vmatpush1.bf16.msra.mxu0 0
        %3950 = vmatprep.subr.bf16.mxu0 0
        %3951 = vmatpush1.bf16.msra.mxu0 0
        %3952 = vmatprep.subr.bf16.mxu0 0
        %3953 = vmatpush1.bf16.msra.mxu0 0
        %3954 = vmatprep.subr.bf16.mxu0 0
        %3955 = vmatpush1.bf16.msra.mxu0 0
        %3956 = vmatprep.mubr.bf16.mxu0 0
        %3957 = vmatmul.mubr.bf16.gmra.mrb[0].mxu0 %v1710
        %v3958 = vpop.f32.mrb[0].mxu0
        %v3959 = vadd.f32 %v2322, %v3958
        %v3960 = vpop.f32.mrb[0].mxu0
        %v3961 = vadd.f32 %v2326, %v3960
        %v3962 = vpop.f32.mrb[0].mxu0
        %v3963 = vpop.f32.mrb[0].mxu0
        %3964 = vdwg.mxu0
        %3965 = vmatprep.subr.bf16.mxu0 %v3220
        %3966 = vmatpush1.bf16.msra.mxu0 %v3219
        %3967 = vmatprep.subr.bf16.mxu0 %v3252
        %3968 = vmatpush1.bf16.msra.mxu0 %v3251
        %3969 = vmatprep.subr.bf16.mxu0 %v3284
        %3970 = vmatpush1.bf16.msra.mxu0 %v3283
        %3971 = vmatprep.subr.bf16.mxu0 %v3316
        %3972 = vmatpush1.bf16.msra.mxu0 %v3315
        %3973 = vmatprep.subr.bf16.mxu0 %v3348
        %3974 = vmatpush1.bf16.msra.mxu0 %v3347
        %3975 = vmatprep.subr.bf16.mxu0 %v3380
        %3976 = vmatpush1.bf16.msra.mxu0 %v3379
        %3977 = vmatprep.subr.bf16.mxu0 %v3412
        %3978 = vmatpush1.bf16.msra.mxu0 %v3411
        %3979 = vmatprep.subr.bf16.mxu0 %v3444
        %3980 = vmatpush1.bf16.msra.mxu0 %v3443
        %3981 = vmatprep.subr.bf16.mxu0 0
        %3982 = vmatpush1.bf16.msra.mxu0 0
        %3983 = vmatprep.subr.bf16.mxu0 0
        %3984 = vmatpush1.bf16.msra.mxu0 0
        %3985 = vmatprep.subr.bf16.mxu0 0
        %3986 = vmatpush1.bf16.msra.mxu0 0
        %3987 = vmatprep.subr.bf16.mxu0 0
        %3988 = vmatpush1.bf16.msra.mxu0 0
        %3989 = vmatprep.subr.bf16.mxu0 0
        %3990 = vmatpush1.bf16.msra.mxu0 0
        %3991 = vmatprep.subr.bf16.mxu0 0
        %3992 = vmatpush1.bf16.msra.mxu0 0
        %3993 = vmatprep.subr.bf16.mxu0 0
        %3994 = vmatpush1.bf16.msra.mxu0 0
        %3995 = vmatprep.subr.bf16.mxu0 0
        %3996 = vmatpush1.bf16.msra.mxu0 0
        %3997 = vmatprep.mubr.bf16.mxu0 0
        %3998 = vmatmul.mubr.bf16.gmra.mrb[0].mxu0 %v1710
        %v3999 = vpop.f32.mrb[0].mxu0
        %v4000 = vadd.f32 %v2330, %v3999
        %v4001 = vpop.f32.mrb[0].mxu0
        %v4002 = vadd.f32 %v2334, %v4001
        %v4003 = vpop.f32.mrb[0].mxu0
        %v4004 = vpop.f32.mrb[0].mxu0
        %4005 = vdwg.mxu0
        %4006 = vmatprep.subr.bf16.mxu0 %v3222
        %4007 = vmatpush1.bf16.msra.mxu0 %v3221
        %4008 = vmatprep.subr.bf16.mxu0 %v3254
        %4009 = vmatpush1.bf16.msra.mxu0 %v3253
        %4010 = vmatprep.subr.bf16.mxu0 %v3286
        %4011 = vmatpush1.bf16.msra.mxu0 %v3285
        %4012 = vmatprep.subr.bf16.mxu0 %v3318
        %4013 = vmatpush1.bf16.msra.mxu0 %v3317
        %4014 = vmatprep.subr.bf16.mxu0 %v3350
        %4015 = vmatpush1.bf16.msra.mxu0 %v3349
        %4016 = vmatprep.subr.bf16.mxu0 %v3382
        %4017 = vmatpush1.bf16.msra.mxu0 %v3381
        %4018 = vmatprep.subr.bf16.mxu0 %v3414
        %4019 = vmatpush1.bf16.msra.mxu0 %v3413
        %4020 = vmatprep.subr.bf16.mxu0 %v3446
        %4021 = vmatpush1.bf16.msra.mxu0 %v3445
        %4022 = vmatprep.subr.bf16.mxu0 0
        %4023 = vmatpush1.bf16.msra.mxu0 0
        %4024 = vmatprep.subr.bf16.mxu0 0
        %4025 = vmatpush1.bf16.msra.mxu0 0
        %4026 = vmatprep.subr.bf16.mxu0 0
        %4027 = vmatpush1.bf16.msra.mxu0 0
        %4028 = vmatprep.subr.bf16.mxu0 0
        %4029 = vmatpush1.bf16.msra.mxu0 0
        %4030 = vmatprep.subr.bf16.mxu0 0
        %4031 = vmatpush1.bf16.msra.mxu0 0
        %4032 = vmatprep.subr.bf16.mxu0 0
        %4033 = vmatpush1.bf16.msra.mxu0 0
        %4034 = vmatprep.subr.bf16.mxu0 0
        %4035 = vmatpush1.bf16.msra.mxu0 0
        %4036 = vmatprep.subr.bf16.mxu0 0
        %4037 = vmatpush1.bf16.msra.mxu0 0
        %4038 = vmatprep.mubr.bf16.mxu0 0
        %4039 = vmatmul.mubr.bf16.gmra.mrb[0].mxu0 %v1710
        %v4040 = vpop.f32.mrb[0].mxu0
        %v4041 = vadd.f32 %v2338, %v4040
        %v4042 = vpop.f32.mrb[0].mxu0
        %v4043 = vadd.f32 %v2342, %v4042
        %v4044 = vpop.f32.mrb[0].mxu0
        %v4045 = vpop.f32.mrb[0].mxu0
        %4046 = vdwg.mxu0
        %4047 = vmatprep.subr.bf16.mxu0 %v3224
        %4048 = vmatpush1.bf16.msra.mxu0 %v3223
        %4049 = vmatprep.subr.bf16.mxu0 %v3256
        %4050 = vmatpush1.bf16.msra.mxu0 %v3255
        %4051 = vmatprep.subr.bf16.mxu0 %v3288
        %4052 = vmatpush1.bf16.msra.mxu0 %v3287
        %4053 = vmatprep.subr.bf16.mxu0 %v3320
        %4054 = vmatpush1.bf16.msra.mxu0 %v3319
        %4055 = vmatprep.subr.bf16.mxu0 %v3352
        %4056 = vmatpush1.bf16.msra.mxu0 %v3351
        %4057 = vmatprep.subr.bf16.mxu0 %v3384
        %4058 = vmatpush1.bf16.msra.mxu0 %v3383
        %4059 = vmatprep.subr.bf16.mxu0 %v3416
        %4060 = vmatpush1.bf16.msra.mxu0 %v3415
        %4061 = vmatprep.subr.bf16.mxu0 %v3448
        %4062 = vmatpush1.bf16.msra.mxu0 %v3447
        %4063 = vmatprep.subr.bf16.mxu0 0
        %4064 = vmatpush1.bf16.msra.mxu0 0
        %4065 = vmatprep.subr.bf16.mxu0 0
        %4066 = vmatpush1.bf16.msra.mxu0 0
        %4067 = vmatprep.subr.bf16.mxu0 0
        %4068 = vmatpush1.bf16.msra.mxu0 0
        %4069 = vmatprep.subr.bf16.mxu0 0
        %4070 = vmatpush1.bf16.msra.mxu0 0
        %4071 = vmatprep.subr.bf16.mxu0 0
        %4072 = vmatpush1.bf16.msra.mxu0 0
        %4073 = vmatprep.subr.bf16.mxu0 0
        %4074 = vmatpush1.bf16.msra.mxu0 0
        %4075 = vmatprep.subr.bf16.mxu0 0
        %4076 = vmatpush1.bf16.msra.mxu0 0
        %4077 = vmatprep.subr.bf16.mxu0 0
        %4078 = vmatpush1.bf16.msra.mxu0 0
        %4079 = vmatprep.mubr.bf16.mxu0 0
        %4080 = vmatmul.mubr.bf16.gmra.mrb[0].mxu0 %v1710
        %v4081 = vpop.f32.mrb[0].mxu0
        %v4082 = vadd.f32 %v2346, %v4081
        %v4083 = vpop.f32.mrb[0].mxu0
        %v4084 = vadd.f32 %v2350, %v4083
        %v4085 = vpop.f32.mrb[0].mxu0
        %v4086 = vpop.f32.mrb[0].mxu0
        %4087 = vdwg.mxu0
        %4088 = vmatprep.subr.bf16.mxu0 %v3226
        %4089 = vmatpush1.bf16.msra.mxu0 %v3225
        %4090 = vmatprep.subr.bf16.mxu0 %v3258
        %4091 = vmatpush1.bf16.msra.mxu0 %v3257
        %4092 = vmatprep.subr.bf16.mxu0 %v3290
        %4093 = vmatpush1.bf16.msra.mxu0 %v3289
        %4094 = vmatprep.subr.bf16.mxu0 %v3322
        %4095 = vmatpush1.bf16.msra.mxu0 %v3321
        %4096 = vmatprep.subr.bf16.mxu0 %v3354
        %4097 = vmatpush1.bf16.msra.mxu0 %v3353
        %4098 = vmatprep.subr.bf16.mxu0 %v3386
        %4099 = vmatpush1.bf16.msra.mxu0 %v3385
        %4100 = vmatprep.subr.bf16.mxu0 %v3418
        %4101 = vmatpush1.bf16.msra.mxu0 %v3417
        %4102 = vmatprep.subr.bf16.mxu0 %v3450
        %4103 = vmatpush1.bf16.msra.mxu0 %v3449
        %4104 = vmatprep.subr.bf16.mxu0 0
        %4105 = vmatpush1.bf16.msra.mxu0 0
        %4106 = vmatprep.subr.bf16.mxu0 0
        %4107 = vmatpush1.bf16.msra.mxu0 0
        %4108 = vmatprep.subr.bf16.mxu0 0
        %4109 = vmatpush1.bf16.msra.mxu0 0
        %4110 = vmatprep.subr.bf16.mxu0 0
        %4111 = vmatpush1.bf16.msra.mxu0 0
        %4112 = vmatprep.subr.bf16.mxu0 0
        %4113 = vmatpush1.bf16.msra.mxu0 0
        %4114 = vmatprep.subr.bf16.mxu0 0
        %4115 = vmatpush1.bf16.msra.mxu0 0
        %4116 = vmatprep.subr.bf16.mxu0 0
        %4117 = vmatpush1.bf16.msra.mxu0 0
        %4118 = vmatprep.subr.bf16.mxu0 0
        %4119 = vmatpush1.bf16.msra.mxu0 0
        %4120 = vmatprep.mubr.bf16.mxu0 0
        %4121 = vmatmul.mubr.bf16.gmra.mrb[0].mxu0 %v1710
        %v4122 = vpop.f32.mrb[0].mxu0
        %v4123 = vadd.f32 %v2354, %v4122
        %v4124 = vpop.f32.mrb[0].mxu0
        %v4125 = vadd.f32 %v2358, %v4124
        %v4126 = vpop.f32.mrb[0].mxu0
        %v4127 = vpop.f32.mrb[0].mxu0
        %4128 = vdwg.mxu0
        %4129 = vmatprep.subr.bf16.mxu0 %v3228
        %4130 = vmatpush1.bf16.msra.mxu0 %v3227
        %4131 = vmatprep.subr.bf16.mxu0 %v3260
        %4132 = vmatpush1.bf16.msra.mxu0 %v3259
        %4133 = vmatprep.subr.bf16.mxu0 %v3292
        %4134 = vmatpush1.bf16.msra.mxu0 %v3291
        %4135 = vmatprep.subr.bf16.mxu0 %v3324
        %4136 = vmatpush1.bf16.msra.mxu0 %v3323
        %4137 = vmatprep.subr.bf16.mxu0 %v3356
        %4138 = vmatpush1.bf16.msra.mxu0 %v3355
        %4139 = vmatprep.subr.bf16.mxu0 %v3388
        %4140 = vmatpush1.bf16.msra.mxu0 %v3387
        %4141 = vmatprep.subr.bf16.mxu0 %v3420
        %4142 = vmatpush1.bf16.msra.mxu0 %v3419
        %4143 = vmatprep.subr.bf16.mxu0 %v3452
        %4144 = vmatpush1.bf16.msra.mxu0 %v3451
        %4145 = vmatprep.subr.bf16.mxu0 0
        %4146 = vmatpush1.bf16.msra.mxu0 0
        %4147 = vmatprep.subr.bf16.mxu0 0
        %4148 = vmatpush1.bf16.msra.mxu0 0
        %4149 = vmatprep.subr.bf16.mxu0 0
        %4150 = vmatpush1.bf16.msra.mxu0 0
        %4151 = vmatprep.subr.bf16.mxu0 0
        %4152 = vmatpush1.bf16.msra.mxu0 0
        %4153 = vmatprep.subr.bf16.mxu0 0
        %4154 = vmatpush1.bf16.msra.mxu0 0
        %4155 = vmatprep.subr.bf16.mxu0 0
        %4156 = vmatpush1.bf16.msra.mxu0 0
        %4157 = vmatprep.subr.bf16.mxu0 0
        %4158 = vmatpush1.bf16.msra.mxu0 0
        %4159 = vmatprep.subr.bf16.mxu0 0
        %4160 = vmatpush1.bf16.msra.mxu0 0
        %4161 = vmatprep.mubr.bf16.mxu0 0
        %4162 = vmatmul.mubr.bf16.gmra.mrb[0].mxu0 %v1710
        %v4163 = vpop.f32.mrb[0].mxu0
        %v4164 = vadd.f32 %v2362, %v4163
        %v4165 = vpop.f32.mrb[0].mxu0
        %v4166 = vadd.f32 %v2366, %v4165
        %v4167 = vpop.f32.mrb[0].mxu0
        %v4168 = vpop.f32.mrb[0].mxu0
        %4169 = vdwg.mxu0
        %4170 = vmatprep.subr.bf16.mxu0 %v3230
        %4171 = vmatpush1.bf16.msra.mxu0 %v3229
        %4172 = vmatprep.subr.bf16.mxu0 %v3262
        %4173 = vmatpush1.bf16.msra.mxu0 %v3261
        %4174 = vmatprep.subr.bf16.mxu0 %v3294
        %4175 = vmatpush1.bf16.msra.mxu0 %v3293
        %4176 = vmatprep.subr.bf16.mxu0 %v3326
        %4177 = vmatpush1.bf16.msra.mxu0 %v3325
        %4178 = vmatprep.subr.bf16.mxu0 %v3358
        %4179 = vmatpush1.bf16.msra.mxu0 %v3357
        %4180 = vmatprep.subr.bf16.mxu0 %v3390
        %4181 = vmatpush1.bf16.msra.mxu0 %v3389
        %4182 = vmatprep.subr.bf16.mxu0 %v3422
        %4183 = vmatpush1.bf16.msra.mxu0 %v3421
        %4184 = vmatprep.subr.bf16.mxu0 %v3454
        %4185 = vmatpush1.bf16.msra.mxu0 %v3453
        %4186 = vmatprep.subr.bf16.mxu0 0
        %4187 = vmatpush1.bf16.msra.mxu0 0
        %4188 = vmatprep.subr.bf16.mxu0 0
        %4189 = vmatpush1.bf16.msra.mxu0 0
        %4190 = vmatprep.subr.bf16.mxu0 0
        %4191 = vmatpush1.bf16.msra.mxu0 0
        %4192 = vmatprep.subr.bf16.mxu0 0
        %4193 = vmatpush1.bf16.msra.mxu0 0
        %4194 = vmatprep.subr.bf16.mxu0 0
        %4195 = vmatpush1.bf16.msra.mxu0 0
        %4196 = vmatprep.subr.bf16.mxu0 0
        %4197 = vmatpush1.bf16.msra.mxu0 0
        %4198 = vmatprep.subr.bf16.mxu0 0
        %4199 = vmatpush1.bf16.msra.mxu0 0
        %4200 = vmatprep.subr.bf16.mxu0 0
        %4201 = vmatpush1.bf16.msra.mxu0 0
        %4202 = vmatprep.mubr.bf16.mxu0 0
        %4203 = vmatmul.mubr.bf16.gmra.mrb[0].mxu0 %v1710
        %v4204 = vpop.f32.mrb[0].mxu0
        %v4205 = vadd.f32 %v2370, %v4204
        %v4206 = vpop.f32.mrb[0].mxu0
        %v4207 = vadd.f32 %v2374, %v4206
        %v4208 = vpop.f32.mrb[0].mxu0
        %v4209 = vpop.f32.mrb[0].mxu0
        %4210 = vdwg.mxu0
        %4211 = vmatprep.subr.bf16.mxu0 %v3232
        %4212 = vmatpush1.bf16.msra.mxu0 %v3231
        %4213 = vmatprep.subr.bf16.mxu0 %v3264
        %4214 = vmatpush1.bf16.msra.mxu0 %v3263
        %4215 = vmatprep.subr.bf16.mxu0 %v3296
        %4216 = vmatpush1.bf16.msra.mxu0 %v3295
        %4217 = vmatprep.subr.bf16.mxu0 %v3328
        %4218 = vmatpush1.bf16.msra.mxu0 %v3327
        %4219 = vmatprep.subr.bf16.mxu0 %v3360
        %4220 = vmatpush1.bf16.msra.mxu0 %v3359
        %4221 = vmatprep.subr.bf16.mxu0 %v3392
        %4222 = vmatpush1.bf16.msra.mxu0 %v3391
        %4223 = vmatprep.subr.bf16.mxu0 %v3424
        %4224 = vmatpush1.bf16.msra.mxu0 %v3423
        %4225 = vmatprep.subr.bf16.mxu0 %v3456
        %4226 = vmatpush1.bf16.msra.mxu0 %v3455
        %4227 = vmatprep.subr.bf16.mxu0 0
        %4228 = vmatpush1.bf16.msra.mxu0 0
        %4229 = vmatprep.subr.bf16.mxu0 0
        %4230 = vmatpush1.bf16.msra.mxu0 0
        %4231 = vmatprep.subr.bf16.mxu0 0
        %4232 = vmatpush1.bf16.msra.mxu0 0
        %4233 = vmatprep.subr.bf16.mxu0 0
        %4234 = vmatpush1.bf16.msra.mxu0 0
        %4235 = vmatprep.subr.bf16.mxu0 0
        %4236 = vmatpush1.bf16.msra.mxu0 0
        %4237 = vmatprep.subr.bf16.mxu0 0
        %4238 = vmatpush1.bf16.msra.mxu0 0
        %4239 = vmatprep.subr.bf16.mxu0 0
        %4240 = vmatpush1.bf16.msra.mxu0 0
        %4241 = vmatprep.subr.bf16.mxu0 0
        %4242 = vmatpush1.bf16.msra.mxu0 0
        %4243 = vmatprep.mubr.bf16.mxu0 0
        %4244 = vmatmul.mubr.bf16.gmra.mrb[0].mxu0 %v1710
        %v4245 = vpop.f32.mrb[0].mxu0
        %v4246 = vadd.f32 %v2378, %v4245
        %v4247 = vpop.f32.mrb[0].mxu0
        %v4248 = vadd.f32 %v2382, %v4247
        %v4249 = vpop.f32.mrb[0].mxu0
        %v4250 = vpop.f32.mrb[0].mxu0
        %4251 = vdwg.mxu0
        %4252 = vmatprep.subr.bf16.mxu0 %v3234
        %4253 = vmatpush1.bf16.msra.mxu0 %v3233
        %4254 = vmatprep.subr.bf16.mxu0 %v3266
        %4255 = vmatpush1.bf16.msra.mxu0 %v3265
        %4256 = vmatprep.subr.bf16.mxu0 %v3298
        %4257 = vmatpush1.bf16.msra.mxu0 %v3297
        %4258 = vmatprep.subr.bf16.mxu0 %v3330
        %4259 = vmatpush1.bf16.msra.mxu0 %v3329
        %4260 = vmatprep.subr.bf16.mxu0 %v3362
        %4261 = vmatpush1.bf16.msra.mxu0 %v3361
        %4262 = vmatprep.subr.bf16.mxu0 %v3394
        %4263 = vmatpush1.bf16.msra.mxu0 %v3393
        %4264 = vmatprep.subr.bf16.mxu0 %v3426
        %4265 = vmatpush1.bf16.msra.mxu0 %v3425
        %4266 = vmatprep.subr.bf16.mxu0 %v3458
        %4267 = vmatpush1.bf16.msra.mxu0 %v3457
        %4268 = vmatprep.subr.bf16.mxu0 0
        %4269 = vmatpush1.bf16.msra.mxu0 0
        %4270 = vmatprep.subr.bf16.mxu0 0
        %4271 = vmatpush1.bf16.msra.mxu0 0
        %4272 = vmatprep.subr.bf16.mxu0 0
        %4273 = vmatpush1.bf16.msra.mxu0 0
        %4274 = vmatprep.subr.bf16.mxu0 0
        %4275 = vmatpush1.bf16.msra.mxu0 0
        %4276 = vmatprep.subr.bf16.mxu0 0
        %4277 = vmatpush1.bf16.msra.mxu0 0
        %4278 = vmatprep.subr.bf16.mxu0 0
        %4279 = vmatpush1.bf16.msra.mxu0 0
        %4280 = vmatprep.subr.bf16.mxu0 0
        %4281 = vmatpush1.bf16.msra.mxu0 0
        %4282 = vmatprep.subr.bf16.mxu0 0
        %4283 = vmatpush1.bf16.msra.mxu0 0
        %4284 = vmatprep.mubr.bf16.mxu0 0
        %4285 = vmatmul.mubr.bf16.gmra.mrb[0].mxu0 %v1710
        %v4286 = vpop.f32.mrb[0].mxu0
        %v4287 = vadd.f32 %v2386, %v4286
        %v4288 = vpop.f32.mrb[0].mxu0
        %v4289 = vadd.f32 %v2390, %v4288
        %v4290 = vpop.f32.mrb[0].mxu0
        %v4291 = vpop.f32.mrb[0].mxu0
        %4292 = vdwg.mxu0
        %4293 = vmatprep.subr.bf16.mxu0 %v3236
        %4294 = vmatpush1.bf16.msra.mxu0 %v3235
        %4295 = vmatprep.subr.bf16.mxu0 %v3268
        %4296 = vmatpush1.bf16.msra.mxu0 %v3267
        %4297 = vmatprep.subr.bf16.mxu0 %v3300
        %4298 = vmatpush1.bf16.msra.mxu0 %v3299
        %4299 = vmatprep.subr.bf16.mxu0 %v3332
        %4300 = vmatpush1.bf16.msra.mxu0 %v3331
        %4301 = vmatprep.subr.bf16.mxu0 %v3364
        %4302 = vmatpush1.bf16.msra.mxu0 %v3363
        %4303 = vmatprep.subr.bf16.mxu0 %v3396
        %4304 = vmatpush1.bf16.msra.mxu0 %v3395
        %4305 = vmatprep.subr.bf16.mxu0 %v3428
        %4306 = vmatpush1.bf16.msra.mxu0 %v3427
        %4307 = vmatprep.subr.bf16.mxu0 %v3460
        %4308 = vmatpush1.bf16.msra.mxu0 %v3459
        %4309 = vmatprep.subr.bf16.mxu0 0
        %4310 = vmatpush1.bf16.msra.mxu0 0
        %4311 = vmatprep.subr.bf16.mxu0 0
        %4312 = vmatpush1.bf16.msra.mxu0 0
        %4313 = vmatprep.subr.bf16.mxu0 0
        %4314 = vmatpush1.bf16.msra.mxu0 0
        %4315 = vmatprep.subr.bf16.mxu0 0
        %4316 = vmatpush1.bf16.msra.mxu0 0
        %4317 = vmatprep.subr.bf16.mxu0 0
        %4318 = vmatpush1.bf16.msra.mxu0 0
        %4319 = vmatprep.subr.bf16.mxu0 0
        %4320 = vmatpush1.bf16.msra.mxu0 0
        %4321 = vmatprep.subr.bf16.mxu0 0
        %4322 = vmatpush1.bf16.msra.mxu0 0
        %4323 = vmatprep.subr.bf16.mxu0 0
        %4324 = vmatpush1.bf16.msra.mxu0 0
        %4325 = vmatprep.mubr.bf16.mxu0 0
        %4326 = vmatmul.mubr.bf16.gmra.mrb[0].mxu0 %v1710
        %v4327 = vpop.f32.mrb[0].mxu0
        %v4328 = vadd.f32 %v2394, %v4327
        %v4329 = vpop.f32.mrb[0].mxu0
        %v4330 = vadd.f32 %v2398, %v4329
        %v4331 = vpop.f32.mrb[0].mxu0
        %v4332 = vpop.f32.mrb[0].mxu0
        %4333 = vdwg.mxu0
        %4334 = vmatprep.subr.bf16.mxu0 %v3238
        %4335 = vmatpush1.bf16.msra.mxu0 %v3237
        %4336 = vmatprep.subr.bf16.mxu0 %v3270
        %4337 = vmatpush1.bf16.msra.mxu0 %v3269
        %4338 = vmatprep.subr.bf16.mxu0 %v3302
        %4339 = vmatpush1.bf16.msra.mxu0 %v3301
        %4340 = vmatprep.subr.bf16.mxu0 %v3334
        %4341 = vmatpush1.bf16.msra.mxu0 %v3333
        %4342 = vmatprep.subr.bf16.mxu0 %v3366
        %4343 = vmatpush1.bf16.msra.mxu0 %v3365
        %4344 = vmatprep.subr.bf16.mxu0 %v3398
        %4345 = vmatpush1.bf16.msra.mxu0 %v3397
        %4346 = vmatprep.subr.bf16.mxu0 %v3430
        %4347 = vmatpush1.bf16.msra.mxu0 %v3429
        %4348 = vmatprep.subr.bf16.mxu0 %v3462
        %4349 = vmatpush1.bf16.msra.mxu0 %v3461
        %4350 = vmatprep.subr.bf16.mxu0 0
        %4351 = vmatpush1.bf16.msra.mxu0 0
        %4352 = vmatprep.subr.bf16.mxu0 0
        %4353 = vmatpush1.bf16.msra.mxu0 0
        %4354 = vmatprep.subr.bf16.mxu0 0
        %4355 = vmatpush1.bf16.msra.mxu0 0
        %4356 = vmatprep.subr.bf16.mxu0 0
        %4357 = vmatpush1.bf16.msra.mxu0 0
        %4358 = vmatprep.subr.bf16.mxu0 0
        %4359 = vmatpush1.bf16.msra.mxu0 0
        %4360 = vmatprep.subr.bf16.mxu0 0
        %4361 = vmatpush1.bf16.msra.mxu0 0
        %4362 = vmatprep.subr.bf16.mxu0 0
        %4363 = vmatpush1.bf16.msra.mxu0 0
        %4364 = vmatprep.subr.bf16.mxu0 0
        %4365 = vmatpush1.bf16.msra.mxu0 0
        %4366 = vmatprep.mubr.bf16.mxu0 0
        %4367 = vmatmul.mubr.bf16.gmra.mrb[0].mxu0 %v1710
        %v4368 = vpop.f32.mrb[0].mxu0
        %v4369 = vadd.f32 %v2402, %v4368
        %v4370 = vpop.f32.mrb[0].mxu0
        %v4371 = vadd.f32 %v2406, %v4370
        %v4372 = vpop.f32.mrb[0].mxu0
        %v4373 = vpop.f32.mrb[0].mxu0
        %4374 = vdwg.mxu0
        %v4375 = vmax.f32 %v3754, %v3836
        %v4376 = vmax.f32 %v3756, %v3838
        %v4377 = vmax.f32 %v3795, %v3877
        %v4378 = vmax.f32 %v3797, %v3879
        %v4379 = vmax.f32 %v4375, %v3918
        %v4380 = vmax.f32 %v4376, %v3920
        %v4381 = vmax.f32 %v4377, %v3959
        %v4382 = vmax.f32 %v4378, %v3961
        %v4383 = vmax.f32 %v4379, %v4000
        %v4384 = vmax.f32 %v4380, %v4002
        %v4385 = vmax.f32 %v4381, %v4041
        %v4386 = vmax.f32 %v4382, %v4043
        %v4387 = vmax.f32 %v4383, %v4082
        %v4388 = vmax.f32 %v4384, %v4084
        %v4389 = vmax.f32 %v4385, %v4123
        %v4390 = vmax.f32 %v4386, %v4125
        %v4391 = vmax.f32 %v4387, %v4164
        %v4392 = vmax.f32 %v4388, %v4166
        %v4393 = vmax.f32 %v4389, %v4205
        %v4394 = vmax.f32 %v4390, %v4207
        %v4395 = vmax.f32 %v4391, %v4246
        %v4396 = vmax.f32 %v4392, %v4248
        %v4397 = vmax.f32 %v4393, %v4287
        %v4398 = vmax.f32 %v4394, %v4289
        %v4399 = vmax.f32 %v4395, %v4328
        %v4400 = vmax.f32 %v4396, %v4330
        %v4401 = vmax.f32 %v4397, %v4369
        %v4402 = vmax.f32 %v4398, %v4371
        %v4403 = vmax.f32 %v4399, %v4400
        %v4404 = vmax.f32 %v4401, %v4402
        %v4405 = vmax.f32 %v4403, %v4404
        %4406 = vmax.xlane.f32.xlu0 %v4405
        %v4407 = vpop.xlane.xlu0 %4406
        %v4408 = vsub.f32 %v3754, %v4407
        %v4409 = vsub.f32 %v3756, %v4407
        %v4410 = vsub.f32 %v3795, %v4407
        %v4411 = vsub.f32 %v3797, %v4407
        %v4412 = vsub.f32 %v3836, %v4407
        %v4413 = vsub.f32 %v3838, %v4407
        %v4414 = vsub.f32 %v3877, %v4407
        %v4415 = vsub.f32 %v3879, %v4407
        %v4416 = vsub.f32 %v3918, %v4407
        %v4417 = vsub.f32 %v3920, %v4407
        %v4418 = vsub.f32 %v3959, %v4407
        %v4419 = vsub.f32 %v3961, %v4407
        %v4420 = vsub.f32 %v4000, %v4407
        %v4421 = vsub.f32 %v4002, %v4407
        %v4422 = vsub.f32 %v4041, %v4407
        %v4423 = vsub.f32 %v4043, %v4407
        %v4424 = vsub.f32 %v4082, %v4407
        %v4425 = vsub.f32 %v4084, %v4407
        %v4426 = vsub.f32 %v4123, %v4407
        %v4427 = vsub.f32 %v4125, %v4407
        %v4428 = vsub.f32 %v4164, %v4407
        %v4429 = vsub.f32 %v4166, %v4407
        %v4430 = vsub.f32 %v4205, %v4407
        %v4431 = vsub.f32 %v4207, %v4407
        %v4432 = vsub.f32 %v4246, %v4407
        %v4433 = vsub.f32 %v4248, %v4407
        %v4434 = vsub.f32 %v4287, %v4407
        %v4435 = vsub.f32 %v4289, %v4407
        %v4436 = vsub.f32 %v4328, %v4407
        %v4437 = vsub.f32 %v4330, %v4407
        %v4438 = vsub.f32 %v4369, %v4407
        %v4439 = vsub.f32 %v4371, %v4407
        %v4440 = vmul.f32 %v4408, 1.442695
        %v4441 = vpow.pop %v4440
        %v4442 = vmul.f32 %v4409, 1.442695
        %v4443 = vpow.pop %v4442
        %v4444 = vmul.f32 %v4410, 1.442695
        %v4445 = vpow.pop %v4444
        %v4446 = vmul.f32 %v4411, 1.442695
        %v4447 = vpow.pop %v4446
        %v4448 = vmul.f32 %v4412, 1.442695
        %v4449 = vpow.pop %v4448
        %v4450 = vmul.f32 %v4413, 1.442695
        %v4451 = vpow.pop %v4450
        %v4452 = vmul.f32 %v4414, 1.442695
        %v4453 = vpow.pop %v4452
        %v4454 = vmul.f32 %v4415, 1.442695
        %v4455 = vpow.pop %v4454
        %v4456 = vmul.f32 %v4416, 1.442695
        %v4457 = vpow.pop %v4456
        %v4458 = vmul.f32 %v4417, 1.442695
        %v4459 = vpow.pop %v4458
        %v4460 = vmul.f32 %v4418, 1.442695
        %v4461 = vpow.pop %v4460
        %v4462 = vmul.f32 %v4419, 1.442695
        %v4463 = vpow.pop %v4462
        %v4464 = vmul.f32 %v4420, 1.442695
        %v4465 = vpow.pop %v4464
        %v4466 = vmul.f32 %v4421, 1.442695
        %v4467 = vpow.pop %v4466
        %v4468 = vmul.f32 %v4422, 1.442695
        %v4469 = vpow.pop %v4468
        %v4470 = vmul.f32 %v4423, 1.442695
        %v4471 = vpow.pop %v4470
        %v4472 = vmul.f32 %v4424, 1.442695
        %v4473 = vpow.pop %v4472
        %v4474 = vmul.f32 %v4425, 1.442695
        %v4475 = vpow.pop %v4474
        %v4476 = vmul.f32 %v4426, 1.442695
        %v4477 = vpow.pop %v4476
        %v4478 = vmul.f32 %v4427, 1.442695
        %v4479 = vpow.pop %v4478
        %v4480 = vmul.f32 %v4428, 1.442695
        %v4481 = vpow.pop %v4480
        %v4482 = vmul.f32 %v4429, 1.442695
        %v4483 = vpow.pop %v4482
        %v4484 = vmul.f32 %v4430, 1.442695
        %v4485 = vpow.pop %v4484
        %v4486 = vmul.f32 %v4431, 1.442695
        %v4487 = vpow.pop %v4486
        %v4488 = vmul.f32 %v4432, 1.442695
        %v4489 = vpow.pop %v4488
        %v4490 = vmul.f32 %v4433, 1.442695
        %v4491 = vpow.pop %v4490
        %v4492 = vmul.f32 %v4434, 1.442695
        %v4493 = vpow.pop %v4492
        %v4494 = vmul.f32 %v4435, 1.442695
        %v4495 = vpow.pop %v4494
        %v4496 = vmul.f32 %v4436, 1.442695
        %v4497 = vpow.pop %v4496
        %v4498 = vmul.f32 %v4437, 1.442695
        %v4499 = vpow.pop %v4498
        %v4500 = vmul.f32 %v4438, 1.442695
        %v4501 = vpow.pop %v4500
        %v4502 = vmul.f32 %v4439, 1.442695
        %v4503 = vpow.pop %v4502
        %v4504 = vpack.c.bf16 %v4441, %v4441
        %v4505 = vpack.c.bf16 %v4443, %v4443
        %v4506 = vpack.c.bf16 %v4445, %v4445
        %v4507 = vpack.c.bf16 %v4447, %v4447
        %v4508 = vpack.c.bf16 %v4449, %v4449
        %v4509 = vpack.c.bf16 %v4451, %v4451
        %v4510 = vpack.c.bf16 %v4453, %v4453
        %v4511 = vpack.c.bf16 %v4455, %v4455
        %v4512 = vpack.c.bf16 %v4457, %v4457
        %v4513 = vpack.c.bf16 %v4459, %v4459
        %v4514 = vpack.c.bf16 %v4461, %v4461
        %v4515 = vpack.c.bf16 %v4463, %v4463
        %v4516 = vpack.c.bf16 %v4465, %v4465
        %v4517 = vpack.c.bf16 %v4467, %v4467
        %v4518 = vpack.c.bf16 %v4469, %v4469
        %v4519 = vpack.c.bf16 %v4471, %v4471
        %v4520 = vpack.c.bf16 %v4473, %v4473
        %v4521 = vpack.c.bf16 %v4475, %v4475
        %v4522 = vpack.c.bf16 %v4477, %v4477
        %v4523 = vpack.c.bf16 %v4479, %v4479
        %v4524 = vpack.c.bf16 %v4481, %v4481
        %v4525 = vpack.c.bf16 %v4483, %v4483
        %v4526 = vpack.c.bf16 %v4485, %v4485
        %v4527 = vpack.c.bf16 %v4487, %v4487
        %v4528 = vpack.c.bf16 %v4489, %v4489
        %v4529 = vpack.c.bf16 %v4491, %v4491
        %v4530 = vpack.c.bf16 %v4493, %v4493
        %v4531 = vpack.c.bf16 %v4495, %v4495
        %v4532 = vpack.c.bf16 %v4497, %v4497
        %v4533 = vpack.c.bf16 %v4499, %v4499
        %v4534 = vpack.c.bf16 %v4501, %v4501
        %v4535 = vpack.c.bf16 %v4503, %v4503
        %v4568 = vunpack.c.l.b16 %v4504
        %v4569 = vunpack.c.l.b16 %v4505
        %v4570 = vunpack.c.l.b16 %v4506
        %v4571 = vunpack.c.l.b16 %v4507
        %v4572 = vunpack.c.l.b16 %v4508
        %v4573 = vunpack.c.l.b16 %v4509
        %v4574 = vunpack.c.l.b16 %v4510
        %v4575 = vunpack.c.l.b16 %v4511
        %v4576 = vunpack.c.l.b16 %v4512
        %v4577 = vunpack.c.l.b16 %v4513
        %v4578 = vunpack.c.l.b16 %v4514
        %v4579 = vunpack.c.l.b16 %v4515
        %v4580 = vunpack.c.l.b16 %v4516
        %v4581 = vunpack.c.l.b16 %v4517
        %v4582 = vunpack.c.l.b16 %v4518
        %v4583 = vunpack.c.l.b16 %v4519
        %v4584 = vunpack.c.l.b16 %v4520
        %v4585 = vunpack.c.l.b16 %v4521
        %v4586 = vunpack.c.l.b16 %v4522
        %v4587 = vunpack.c.l.b16 %v4523
        %v4588 = vunpack.c.l.b16 %v4524
        %v4589 = vunpack.c.l.b16 %v4525
        %v4590 = vunpack.c.l.b16 %v4526
        %v4591 = vunpack.c.l.b16 %v4527
        %v4592 = vunpack.c.l.b16 %v4528
        %v4593 = vunpack.c.l.b16 %v4529
        %v4594 = vunpack.c.l.b16 %v4530
        %v4595 = vunpack.c.l.b16 %v4531
        %v4596 = vunpack.c.l.b16 %v4532
        %v4597 = vunpack.c.l.b16 %v4533
        %v4598 = vunpack.c.l.b16 %v4534
        %v4599 = vunpack.c.l.b16 %v4535
        %v4600 = vpack.c.b16 %v4569, %v4568
        %v4601 = vpack.c.b16 %v4571, %v4570
        %v4602 = vpack.c.b16 %v4573, %v4572
        %v4603 = vpack.c.b16 %v4575, %v4574
        %v4604 = vpack.c.b16 %v4577, %v4576
        %v4605 = vpack.c.b16 %v4579, %v4578
        %v4606 = vpack.c.b16 %v4581, %v4580
        %v4607 = vpack.c.b16 %v4583, %v4582
        %v4608 = vpack.c.b16 %v4585, %v4584
        %v4609 = vpack.c.b16 %v4587, %v4586
        %v4610 = vpack.c.b16 %v4589, %v4588
        %v4611 = vpack.c.b16 %v4591, %v4590
        %v4612 = vpack.c.b16 %v4593, %v4592
        %v4613 = vpack.c.b16 %v4595, %v4594
        %v4614 = vpack.c.b16 %v4597, %v4596
        %v4615 = vpack.c.b16 %v4599, %v4598
        %4632 = vst [vmem:[%s540] sm:$0xff] %v4600
        %4633 = vst [vmem:[%s540 + $0x8] sm:$0xff] %v4601
        %4634 = vst [vmem:[%s540 + $0x10] sm:$0xff] %v4602
        %4635 = vst [vmem:[%s540 + $0x18] sm:$0xff] %v4603
        %4636 = vst [vmem:[%s540 + $0x20] sm:$0xff] %v4604
        %4637 = vst [vmem:[%s540 + $0x28] sm:$0xff] %v4605
        %4638 = vst [vmem:[%s540 + $0x30] sm:$0xff] %v4606
        %4639 = vst [vmem:[%s540 + $0x38] sm:$0xff] %v4607
        %4640 = vst [vmem:[%s540 + $0x40] sm:$0xff] %v4608
        %4641 = vst [vmem:[%s540 + $0x48] sm:$0xff] %v4609
        %4642 = vst [vmem:[%s540 + $0x50] sm:$0xff] %v4610
        %4643 = vst [vmem:[%s540 + $0x58] sm:$0xff] %v4611
        %4644 = vst [vmem:[%s540 + $0x60] sm:$0xff] %v4612
        %4645 = vst [vmem:[%s540 + $0x68] sm:$0xff] %v4613
        %4646 = vst [vmem:[%s540 + $0x70] sm:$0xff] %v4614
        %4647 = vst [vmem:[%s540 + $0x78] sm:$0xff] %v4615
        %v4648 = vld [vmem:[%s540] sm:$0xff]
        %v4649 = vld [vmem:[%s540 + $0x8] sm:$0xff]
        %v4650 = vld [vmem:[%s540 + $0x10] sm:$0xff]
        %v4651 = vld [vmem:[%s540 + $0x18] sm:$0xff]
        %v4652 = vld [vmem:[%s540 + $0x20] sm:$0xff]
        %v4653 = vld [vmem:[%s540 + $0x28] sm:$0xff]
        %v4654 = vld [vmem:[%s540 + $0x30] sm:$0xff]
        %v4655 = vld [vmem:[%s540 + $0x38] sm:$0xff]
        %v4656 = vld [vmem:[%s540 + $0x40] sm:$0xff]
        %v4657 = vld [vmem:[%s540 + $0x48] sm:$0xff]
        %v4658 = vld [vmem:[%s540 + $0x50] sm:$0xff]
        %v4659 = vld [vmem:[%s540 + $0x58] sm:$0xff]
        %v4660 = vld [vmem:[%s540 + $0x60] sm:$0xff]
        %v4661 = vld [vmem:[%s540 + $0x68] sm:$0xff]
        %v4662 = vld [vmem:[%s540 + $0x70] sm:$0xff]
        %v4663 = vld [vmem:[%s540 + $0x78] sm:$0xff]
        %v4664 = vunpack.c.l.bf16 %v4648
        %v4665 = vunpack.c.h.bf16 %v4648
        %v4666 = vunpack.c.l.bf16 %v4649
        %v4667 = vunpack.c.h.bf16 %v4649
        %v4668 = vunpack.c.l.bf16 %v4650
        %v4669 = vunpack.c.h.bf16 %v4650
        %v4670 = vunpack.c.l.bf16 %v4651
        %v4671 = vunpack.c.h.bf16 %v4651
        %v4672 = vunpack.c.l.bf16 %v4652
        %v4673 = vunpack.c.h.bf16 %v4652
        %v4674 = vunpack.c.l.bf16 %v4653
        %v4675 = vunpack.c.h.bf16 %v4653
        %v4676 = vunpack.c.l.bf16 %v4654
        %v4677 = vunpack.c.h.bf16 %v4654
        %v4678 = vunpack.c.l.bf16 %v4655
        %v4679 = vunpack.c.h.bf16 %v4655
        %v4680 = vunpack.c.l.bf16 %v4656
        %v4681 = vunpack.c.h.bf16 %v4656
        %v4682 = vunpack.c.l.bf16 %v4657
        %v4683 = vunpack.c.h.bf16 %v4657
        %v4684 = vunpack.c.l.bf16 %v4658
        %v4685 = vunpack.c.h.bf16 %v4658
        %v4686 = vunpack.c.l.bf16 %v4659
        %v4687 = vunpack.c.h.bf16 %v4659
        %v4688 = vunpack.c.l.bf16 %v4660
        %v4689 = vunpack.c.h.bf16 %v4660
        %v4690 = vunpack.c.l.bf16 %v4661
        %v4691 = vunpack.c.h.bf16 %v4661
        %v4692 = vunpack.c.l.bf16 %v4662
        %v4693 = vunpack.c.h.bf16 %v4662
        %v4694 = vunpack.c.l.bf16 %v4663
        %v4695 = vunpack.c.h.bf16 %v4663
        %v4696 = vadd.f32 %v4664, %v4665
        %v4697 = vadd.f32 %v4696, %v4666
        %v4698 = vadd.f32 %v4697, %v4667
        %v4699 = vadd.f32 %v4698, %v4668
        %v4700 = vadd.f32 %v4699, %v4669
        %v4701 = vadd.f32 %v4700, %v4670
        %v4702 = vadd.f32 %v4701, %v4671
        %v4703 = vadd.f32 %v4702, %v4672
        %v4704 = vadd.f32 %v4703, %v4673
        %v4705 = vadd.f32 %v4704, %v4674
        %v4706 = vadd.f32 %v4705, %v4675
        %v4707 = vadd.f32 %v4706, %v4676
        %v4708 = vadd.f32 %v4707, %v4677
        %v4709 = vadd.f32 %v4708, %v4678
        %v4710 = vadd.f32 %v4709, %v4679
        %v4711 = vadd.f32 %v4710, %v4680
        %v4712 = vadd.f32 %v4711, %v4681
        %v4713 = vadd.f32 %v4712, %v4682
        %v4714 = vadd.f32 %v4713, %v4683
        %v4715 = vadd.f32 %v4714, %v4684
        %v4716 = vadd.f32 %v4715, %v4685
        %v4717 = vadd.f32 %v4716, %v4686
        %v4718 = vadd.f32 %v4717, %v4687
        %v4719 = vadd.f32 %v4718, %v4688
        %v4720 = vadd.f32 %v4719, %v4689
        %v4721 = vadd.f32 %v4720, %v4690
        %v4722 = vadd.f32 %v4721, %v4691
        %v4723 = vadd.f32 %v4722, %v4692
        %v4724 = vadd.f32 %v4723, %v4693
        %v4725 = vadd.f32 %v4724, %v4694
        %v4726 = vadd.f32 %v4725, %v4695
        %4727 = vadd.xlane.f32.xlu0 %v4726
        %v4728 = vpop.xlane.xlu0 %4727
        %v4729 = vrcp.pop %v4728
        %v4730 = vmul.f32 %v4664, %v4729
        %v4731 = vmul.f32 %v4665, %v4729
        %v4732 = vmul.f32 %v4666, %v4729
        %v4733 = vmul.f32 %v4667, %v4729
        %v4734 = vmul.f32 %v4668, %v4729
        %v4735 = vmul.f32 %v4669, %v4729
        %v4736 = vmul.f32 %v4670, %v4729
        %v4737 = vmul.f32 %v4671, %v4729
        %v4738 = vmul.f32 %v4672, %v4729
        %v4739 = vmul.f32 %v4673, %v4729
        %v4740 = vmul.f32 %v4674, %v4729
        %v4741 = vmul.f32 %v4675, %v4729
        %v4742 = vmul.f32 %v4676, %v4729
        %v4743 = vmul.f32 %v4677, %v4729
        %v4744 = vmul.f32 %v4678, %v4729
        %v4745 = vmul.f32 %v4679, %v4729
        %v4746 = vmul.f32 %v4680, %v4729
        %v4747 = vmul.f32 %v4681, %v4729
        %v4748 = vmul.f32 %v4682, %v4729
        %v4749 = vmul.f32 %v4683, %v4729
        %v4750 = vmul.f32 %v4684, %v4729
        %v4751 = vmul.f32 %v4685, %v4729
        %v4752 = vmul.f32 %v4686, %v4729
        %v4753 = vmul.f32 %v4687, %v4729
        %v4754 = vmul.f32 %v4688, %v4729
        %v4755 = vmul.f32 %v4689, %v4729
        %v4756 = vmul.f32 %v4690, %v4729
        %v4757 = vmul.f32 %v4691, %v4729
        %v4758 = vmul.f32 %v4692, %v4729
        %v4759 = vmul.f32 %v4693, %v4729
        %v4760 = vmul.f32 %v4694, %v4729
        %v4761 = vmul.f32 %v4695, %v4729
        %v4762 = vpack.c.bf16 %v4730, %v4730
        %v4763 = vpack.c.bf16 %v4731, %v4731
        %v4764 = vpack.c.bf16 %v4732, %v4732
        %v4765 = vpack.c.bf16 %v4733, %v4733
        %v4766 = vpack.c.bf16 %v4734, %v4734
        %v4767 = vpack.c.bf16 %v4735, %v4735
        %v4768 = vpack.c.bf16 %v4736, %v4736
        %v4769 = vpack.c.bf16 %v4737, %v4737
        %v4770 = vpack.c.bf16 %v4738, %v4738
        %v4771 = vpack.c.bf16 %v4739, %v4739
        %v4772 = vpack.c.bf16 %v4740, %v4740
        %v4773 = vpack.c.bf16 %v4741, %v4741
        %v4774 = vpack.c.bf16 %v4742, %v4742
        %v4775 = vpack.c.bf16 %v4743, %v4743
        %v4776 = vpack.c.bf16 %v4744, %v4744
        %v4777 = vpack.c.bf16 %v4745, %v4745
        %v4778 = vpack.c.bf16 %v4746, %v4746
        %v4779 = vpack.c.bf16 %v4747, %v4747
        %v4780 = vpack.c.bf16 %v4748, %v4748
        %v4781 = vpack.c.bf16 %v4749, %v4749
        %v4782 = vpack.c.bf16 %v4750, %v4750
        %v4783 = vpack.c.bf16 %v4751, %v4751
        %v4784 = vpack.c.bf16 %v4752, %v4752
        %v4785 = vpack.c.bf16 %v4753, %v4753
        %v4786 = vpack.c.bf16 %v4754, %v4754
        %v4787 = vpack.c.bf16 %v4755, %v4755
        %v4788 = vpack.c.bf16 %v4756, %v4756
        %v4789 = vpack.c.bf16 %v4757, %v4757
        %v4790 = vpack.c.bf16 %v4758, %v4758
        %v4791 = vpack.c.bf16 %v4759, %v4759
        %v4792 = vpack.c.bf16 %v4760, %v4760
        %v4793 = vpack.c.bf16 %v4761, %v4761
        %v4826 = vunpack.c.l.b16 %v4762
        %v4827 = vunpack.c.l.b16 %v4763
        %v4828 = vunpack.c.l.b16 %v4764
        %v4829 = vunpack.c.l.b16 %v4765
        %v4830 = vunpack.c.l.b16 %v4766
        %v4831 = vunpack.c.l.b16 %v4767
        %v4832 = vunpack.c.l.b16 %v4768
        %v4833 = vunpack.c.l.b16 %v4769
        %v4834 = vunpack.c.l.b16 %v4770
        %v4835 = vunpack.c.l.b16 %v4771
        %v4836 = vunpack.c.l.b16 %v4772
        %v4837 = vunpack.c.l.b16 %v4773
        %v4838 = vunpack.c.l.b16 %v4774
        %v4839 = vunpack.c.l.b16 %v4775
        %v4840 = vunpack.c.l.b16 %v4776
        %v4841 = vunpack.c.l.b16 %v4777
        %v4842 = vunpack.c.l.b16 %v4778
        %v4843 = vunpack.c.l.b16 %v4779
        %v4844 = vunpack.c.l.b16 %v4780
        %v4845 = vunpack.c.l.b16 %v4781
        %v4846 = vunpack.c.l.b16 %v4782
        %v4847 = vunpack.c.l.b16 %v4783
        %v4848 = vunpack.c.l.b16 %v4784
        %v4849 = vunpack.c.l.b16 %v4785
        %v4850 = vunpack.c.l.b16 %v4786
        %v4851 = vunpack.c.l.b16 %v4787
        %v4852 = vunpack.c.l.b16 %v4788
        %v4853 = vunpack.c.l.b16 %v4789
        %v4854 = vunpack.c.l.b16 %v4790
        %v4855 = vunpack.c.l.b16 %v4791
        %v4856 = vunpack.c.l.b16 %v4792
        %v4857 = vunpack.c.l.b16 %v4793
        %v4858 = vpack.c.b16 %v4827, %v4826
        %v4859 = vpack.c.b16 %v4829, %v4828
        %v4860 = vpack.c.b16 %v4831, %v4830
        %v4861 = vpack.c.b16 %v4833, %v4832
        %v4862 = vpack.c.b16 %v4835, %v4834
        %v4863 = vpack.c.b16 %v4837, %v4836
        %v4864 = vpack.c.b16 %v4839, %v4838
        %v4865 = vpack.c.b16 %v4841, %v4840
        %v4866 = vpack.c.b16 %v4843, %v4842
        %v4867 = vpack.c.b16 %v4845, %v4844
        %v4868 = vpack.c.b16 %v4847, %v4846
        %v4869 = vpack.c.b16 %v4849, %v4848
        %v4870 = vpack.c.b16 %v4851, %v4850
        %v4871 = vpack.c.b16 %v4853, %v4852
        %v4872 = vpack.c.b16 %v4855, %v4854
        %v4873 = vpack.c.b16 %v4857, %v4856
        %4890 = vst [vmem:[%s540] sm:$0xff] %v4858
        %4891 = vst [vmem:[%s540 + $0x8] sm:$0xff] %v4859
        %4892 = vst [vmem:[%s540 + $0x10] sm:$0xff] %v4860
        %4893 = vst [vmem:[%s540 + $0x18] sm:$0xff] %v4861
        %4894 = vst [vmem:[%s540 + $0x20] sm:$0xff] %v4862
        %4895 = vst [vmem:[%s540 + $0x28] sm:$0xff] %v4863
        %4896 = vst [vmem:[%s540 + $0x30] sm:$0xff] %v4864
        %4897 = vst [vmem:[%s540 + $0x38] sm:$0xff] %v4865
        %4898 = vst [vmem:[%s540 + $0x40] sm:$0xff] %v4866
        %4899 = vst [vmem:[%s540 + $0x48] sm:$0xff] %v4867
        %4900 = vst [vmem:[%s540 + $0x50] sm:$0xff] %v4868
        %4901 = vst [vmem:[%s540 + $0x58] sm:$0xff] %v4869
        %4902 = vst [vmem:[%s540 + $0x60] sm:$0xff] %v4870
        %4903 = vst [vmem:[%s540 + $0x68] sm:$0xff] %v4871
        %4904 = vst [vmem:[%s540 + $0x70] sm:$0xff] %v4872
        %4905 = vst [vmem:[%s540 + $0x78] sm:$0xff] %v4873
        %s4906 = sand.u32 %s302, 1
        %s4907 = scalar_lea.sflag [#allocation4], %s4906
        %s4908 = sand.u32 %s302, 1
        %s4909 = smul.addr %s4908, 8
        %s4910 = scalar_lea.vmem [#allocation13], %s4909
        %s4911 = sand.u32 %s328, 1
        %s4912 = scalar_lea.sflag [#allocation15], %s4911
        %s4913 = sand.u32 %s328, 1
        %s4914 = smul.addr %s4913, 128
        %s4915 = scalar_lea.vmem [#allocation14], %s4914
        // Predicated region
        $region93: #{tpu_custom_call.1} parent=67 // pred_check
          %p4916 = pneg %p312
        $region94: #{tpu_custom_call.1} parent=67 // pred_check_branch
          %4918 = sbr.rel (%p4916) target = $region96
        $region95: #{tpu_custom_call.1} parent=67 // pred_region
          %s4920 = ssub.s32 128, 128
          %4921 = vsyncadd %s4907, %s4920
          %s4922 = smul.addr %s37, 128
          %s4923 = scalar_lea.hbm %s12, %s4922
          %s4925 = sshll.u32 %s4910, 4
          %s4926 = int_to_ptr.vmem [resolvable:$true] %s4925
          %4928 = dma.vmem_to_hbm [thread:$0]  %s4926, 128, %s4923, %s4907
        $region96: #{tpu_custom_call.1} parent=67 // pred_fallthru
          _
        // Predicated region
        $region97: #{tpu_custom_call.1} parent=67 // pred_check
          %p4929 = pneg %p338
        $region98: #{tpu_custom_call.1} parent=67 // pred_check_branch
          %4931 = sbr.rel (%p4929) target = $region100
        $region99: #{tpu_custom_call.1} parent=67 // pred_region
          %s4933 = ssub.s32 2048, 2048
          %4934 = vsyncadd %s4912, %s4933
          %s4935 = smul.addr %s37, 32
          %s4936 = smul.addr %s4935, 64
          %s4937 = scalar_lea.hbm %s13, %s4936
          %s4939 = sshll.u32 %s4915, 4
          %s4940 = int_to_ptr.vmem [resolvable:$true] %s4939
          %4942 = dma.vmem_to_hbm [thread:$0]  %s4940, 2048, %s4937, %s4912
        $region100: #{tpu_custom_call.1} parent=67 // pred_fallthru
          _
      $region68: #{tpu_custom_call.1} parent=5 // pred_fallthru
        _
      %p4943 = scmp.le.s32.totalorder 2, %s32
      // Predicated region
      $region101: #{tpu_custom_call.1} parent=5 // pred_check
        %p4944 = pneg %p4943
      $region102: #{tpu_custom_call.1} parent=5 // pred_check_branch
        %4946 = sbr.rel (%p4944) target = $region104
      $region103: #{tpu_custom_call.1} parent=5 // pred_region
        %s4947 = ssub.s32 %s32, 2
        // Predicated region
        $region105: #{tpu_custom_call.1} parent=103 // pred_check
          %p4948 = pneg %p318
        $region106: #{tpu_custom_call.1} parent=103 // pred_check_branch
          %4950 = sbr.rel (%p4948) target = $region108
        $region107: #{tpu_custom_call.1} parent=103 // pred_region
          %s4951 = sand.u32 %s303, 1
          %s4952 = scalar_lea.sflag [#allocation4], %s4951
          %s4953 = sand.u32 %s303, 1
          %s4954 = smul.addr %s4953, 8
          %s4955 = scalar_lea.vmem [#allocation13], %s4954
          %4956 = dma.done %s4952, 128
        $region108: #{tpu_custom_call.1} parent=103 // pred_fallthru
          _
        // Predicated region
        $region109: #{tpu_custom_call.1} parent=103 // pred_check
          %p4957 = pneg %p344
        $region110: #{tpu_custom_call.1} parent=103 // pred_check_branch
          %4959 = sbr.rel (%p4957) target = $region112
        $region111: #{tpu_custom_call.1} parent=103 // pred_region
          %s4960 = sand.u32 %s329, 1
          %s4961 = scalar_lea.sflag [#allocation15], %s4960
          %s4962 = sand.u32 %s329, 1
          %s4963 = smul.addr %s4962, 128
          %s4964 = scalar_lea.vmem [#allocation14], %s4963
          %4965 = dma.done %s4961, 2048
        $region112: #{tpu_custom_call.1} parent=103 // pred_fallthru
          _
      $region104: #{tpu_custom_call.1} parent=5 // pred_fallthru
        _
    $region6: #{tpu_custom_call.1} parent=1 // loop_footer
      %s36 = sadd.s32 1, %s32
    $region7: #{tpu_custom_call.1} parent=1 // loop_footer_branch
      %31 = sbr.rel target = $region3
    $region8: #{tpu_custom_call.1} parent=1 // loop_exit
      _
    %4966 = vsyncpa [#allocation3], 1
    %s4967 = scalar_lea.sflag [#allocation3], 1
    %4968 = vsyncpa %s4967, 1
    %4969 = vsyncpa [#allocation6], 1
    %4970 = vsyncpa [#allocation9], 1
    %4971 = vsyncpa [#allocation12], 1
    %4972 = vsyncpa [#allocation4], 1
    %s4973 = scalar_lea.sflag [#allocation4], 1
    %4974 = vsyncpa %s4973, 1
    %4975 = vsyncpa [#allocation15], 1
    %s4976 = scalar_lea.sflag [#allocation15], 1
    %4977 = vsyncpa %s4976, 1

</llo_original>
